<compile_context>
chip_gen: v6e
topology: v6e:2x2x1
jax: 0.10.0
libtpu: 0.0.40
codegen_flags: <defaults>
</compile_context>

<pallas_src>
import functools

import jax
import jax.numpy as jnp
from jax.experimental import pallas as pl
from jax.experimental.pallas import tpu as pltpu

# ---------------------------------------------------------------------------
# Config (scaled-down but structurally faithful to FasterRCNN(resnet50))
# ---------------------------------------------------------------------------
NUM_CLASSES = 4
N_CLASS = NUM_CLASSES + 1          # head n_class = num_classes + 1
FEAT_STRIDE = 16                   # total extractor stride
ANCHOR_SCALES = (8, 16, 32)
RATIOS = (0.5, 1.0, 2.0)
N_ANCHOR = len(ANCHOR_SCALES) * len(RATIOS)   # 9
ROI_SIZE = 14                      # Resnet50RoIHead roi_size
N_POST = 16                        # proposals kept per image (scaled down)
MIN_SIZE = 16.0

C_FEAT = 32                        # stand-in for resnet50's 1024-ch feature
RPN_MID = 32                       # stand-in for the 512-ch RPN mid conv
HEAD_C = 64                        # stand-in for layer4 / 2048-d classifier

LANE = 128                         # lane width: output slabs padded to this
TM_MAX = 1024                      # row tile upper bound (mult of 16 for bf16)
TK = 1152                          # K tile (9*128) used only when it divides K


def _round_up(x, m):
    return ((x + m - 1) // m) * m


# ---------------------------------------------------------------------------
# Pallas matmul + bias (+ ReLU) kernel — the hot path for every conv
# ---------------------------------------------------------------------------
def _mm_kernel(x_ref, w_ref, b_ref, o_ref, acc_ref, *, relu):
    # bf16 x bf16 -> f32 accumulate on the MXU; bias/ReLU fused in f32 epilogue.
    @pl.when(pl.program_id(1) == 0)
    def _():
        acc_ref[...] = jnp.zeros_like(acc_ref)

    acc_ref[...] += jnp.dot(x_ref[...], w_ref[...],
                            preferred_element_type=jnp.float32)

    @pl.when(pl.program_id(1) == pl.num_programs(1) - 1)
    def _():
        out = acc_ref[...] + b_ref[...]
        if relu:
            out = jnp.maximum(out, 0.0)
        o_ref[...] = out.astype(o_ref.dtype)


def pallas_matmul_bias(x, w, b, relu=False, out_dtype=jnp.bfloat16):
    """x: (M, K), w: (K, N) bf16 (N padded to a 128 multiple by the caller),
    b: (1, N) f32 -> (M, N) out_dtype.

    M is tiled on a "parallel" grid axis (pipelined DMA, shardable across
    v7x's two TensorCores); K is an "arbitrary" reduction axis with an f32
    VMEM accumulator (single block at these stand-in sizes, ready for real
    ResNet50 K).  N is lane-dense so output stores are unmasked.
    """
    x = x.astype(jnp.bfloat16)
    w = w.astype(jnp.bfloat16)
    M, K = x.shape
    K2, N = w.shape
    assert K == K2 and b.shape == (1, N)

    if M <= 256:
        tm = M                                   # small M -> single full block
    else:
        # >=2 blocks so both v7x TensorCores get work, capped at TM_MAX.
        tm = min(TM_MAX, _round_up(pl.cdiv(M, 2), 16))
    grid_m = pl.cdiv(M, tm)

    if K > TK and K % TK == 0:
        tk, grid_k = TK, K // TK
    else:
        tk, grid_k = K, 1
    # TODO(synk): at real ResNet50 scale also set vmem_limit_bytes and use
    # pl.Buffered(1) on the constant-index bias spec to trim VMEM on v7x.

    return pl.pallas_call(
        functools.partial(_mm_kernel, relu=relu),
        out_shape=jax.ShapeDtypeStruct((M, N), out_dtype),
        grid=(grid_m, grid_k),
        in_specs=[
            pl.BlockSpec((tm, tk), lambda i, k: (i, k)),
            pl.BlockSpec((tk, N), lambda i, k: (k, 0)),
            pl.BlockSpec((1, N), lambda i, k: (0, 0)),
        ],
        out_specs=pl.BlockSpec((tm, N), lambda i, k: (i, 0)),
        scratch_shapes=[pltpu.VMEM((tm, N), jnp.float32)],
        compiler_params=pltpu.CompilerParams(
            dimension_semantics=("parallel", "arbitrary")),
    )(x, w, b)


def conv2d(x_nhwc, p, stride=1, padding=1, relu=False):
    """Conv via im2col + Pallas matmul. p['w'] is (KH*KW*Cin, Npad) bf16 with
    Npad a 128 multiple; the padded lanes are sliced off before returning."""
    kh, kw, cin, cout = p["kh"], p["kw"], p["cin"], p["cout"]
    x = x_nhwc.astype(jnp.bfloat16)            # halve the im2col HBM footprint
    if padding:
        x = jnp.pad(x, ((0, 0), (padding, padding), (padding, padding), (0, 0)))
    B, H, W, _ = x.shape
    oh = (H - kh) // stride + 1
    ow = (W - kw) // stride + 1
    if kh == 1 and kw == 1 and stride == 1:
        cols = x.reshape(B * oh * ow, cin)     # 1x1 conv: no im2col at all
    else:
        # TODO(synk): im2col is still materialized in XLA (kh*kw-fold HBM
        # duplication); moving the shifted windows into the kernel needs
        # halo / strided-window BlockSpecs for the stride-2 convs.
        patches = []
        for i in range(kh):
            for j in range(kw):
                patches.append(
                    x[:, i:i + stride * (oh - 1) + 1:stride,
                      j:j + stride * (ow - 1) + 1:stride, :])
        cols = jnp.concatenate(patches, axis=-1).reshape(B * oh * ow, kh * kw * cin)
    out = pallas_matmul_bias(cols, p["w"], p["b"], relu=relu,
                             out_dtype=jnp.bfloat16)
    return out[:, :cout].reshape(B, oh, ow, cout)


# ---------------------------------------------------------------------------
# Fused RPN kernel: 3x3 mid conv -> ReLU -> fused 1x1 loc/score heads.
# Both matmuls chain in VMEM; the mid activation never hits HBM and only one
# (tiny, M = B*hh*ww) pallas_call is launched for the whole RPN.
# ---------------------------------------------------------------------------
def _rpn_fused_kernel(x_ref, wm_ref, bm_ref, wh_ref, bh_ref, o_ref):
    mid = jnp.dot(x_ref[...], wm_ref[...], preferred_element_type=jnp.float32)
    mid = jnp.maximum(mid + bm_ref[...], 0.0).astype(jnp.bfloat16)
    out = jnp.dot(mid, wh_ref[...], preferred_element_type=jnp.float32)
    o_ref[...] = out + bh_ref[...]


def rpn_fused(base_feature, rpn):
    x = jnp.pad(base_feature.astype(jnp.bfloat16),
                ((0, 0), (1, 1), (1, 1), (0, 0)))
    B, H, W, C = x.shape
    oh, ow = H - 2, W - 2
    patches = [x[:, i:i + oh, j:j + ow, :] for i in range(3) for j in range(3)]
    cols = jnp.concatenate(patches, axis=-1).reshape(B * oh * ow, 9 * C)
    out = pl.pallas_call(
        _rpn_fused_kernel,
        out_shape=jax.ShapeDtypeStruct((B * oh * ow, N_ANCHOR * 6), jnp.float32),
    )(cols, rpn["w_mid"], rpn["b_mid"], rpn["w_head"], rpn["b_head"])
    return out.reshape(B, oh, ow, N_ANCHOR * 6)


# ---------------------------------------------------------------------------
# RPN anchor machinery (glue, matches faster-rcnn anchor conventions)
# ---------------------------------------------------------------------------
def generate_anchor_base(base_size=16, ratios=RATIOS, scales=ANCHOR_SCALES):
    rows = []
    for r in ratios:
        for s in scales:
            h = base_size * s * (r ** 0.5)
            w = base_size * s * ((1.0 / r) ** 0.5)
            rows.append([-w / 2.0, -h / 2.0, w / 2.0, h / 2.0])
    return jnp.asarray(rows, jnp.float32)          # (9, 4) as (x1, y1, x2, y2)


def enumerate_shifted_anchor(anchor_base, feat_stride, hh, ww):
    shift_x = jnp.arange(ww, dtype=jnp.float32) * feat_stride
    shift_y = jnp.arange(hh, dtype=jnp.float32) * feat_stride
    sx, sy = jnp.meshgrid(shift_x, shift_y)        # (hh, ww)
    shift = jnp.stack([sx.ravel(), sy.ravel(), sx.ravel(), sy.ravel()], axis=1)
    anchors = anchor_base[None, :, :] + shift[:, None, :]
    return anchors.reshape(-1, 4)                  # (hh*ww*9, 4)


def loc2bbox(src_bbox, loc):
    w = src_bbox[:, 2] - src_bbox[:, 0]
    h = src_bbox[:, 3] - src_bbox[:, 1]
    cx = src_bbox[:, 0] + 0.5 * w
    cy = src_bbox[:, 1] + 0.5 * h
    dx, dy, dw, dh = loc[:, 0], loc[:, 1], loc[:, 2], loc[:, 3]
    ncx = dx * w + cx
    ncy = dy * h + cy
    nw = jnp.exp(dw) * w
    nh = jnp.exp(dh) * h
    return jnp.stack(
        [ncx - 0.5 * nw, ncy - 0.5 * nh, ncx + 0.5 * nw, ncy + 0.5 * nh], axis=1)


def proposal_layer(loc, fg_score, anchors, img_size, scale, n_post):
    img_h, img_w = img_size
    roi = loc2bbox(anchors, loc)
    roi = jnp.stack([jnp.clip(roi[:, 0], 0.0, img_w),
                     jnp.clip(roi[:, 1], 0.0, img_h),
                     jnp.clip(roi[:, 2], 0.0, img_w),
                     jnp.clip(roi[:, 3], 0.0, img_h)], axis=1)
    ms = MIN_SIZE * scale
    keep = ((roi[:, 2] - roi[:, 0]) >= ms) & ((roi[:, 3] - roi[:, 1]) >= ms)
    # finite sentinel (not -inf): if fewer than n_post boxes survive, top_k
    # still returns valid clipped boxes rather than arbitrary -inf entries.
    score = jnp.where(keep, fg_score, jnp.float32(-1e9))
    # TODO(synk): the original ProposalCreator applies NMS here; replaced by plain top-k.
    _, idx = jax.lax.top_k(score, n_post)
    return roi[idx]


# ---------------------------------------------------------------------------
# RoI pooling (glue): one bilinear sample per output bin
# ---------------------------------------------------------------------------
def roi_pool(feat, rois_fm, roi_indices, roi_size):
    # TODO(synk): torchvision RoIPool does per-bin max pooling; approximated by
    # a single bilinear sample at each bin center (RoIAlign-style).
    R = rois_fm.shape[0]
    _, FH, FW, _ = feat.shape
    x1, y1, x2, y2 = rois_fm[:, 0], rois_fm[:, 1], rois_fm[:, 2], rois_fm[:, 3]
    bw = (x2 - x1) / roi_size
    bh = (y2 - y1) / roi_size
    centers = jnp.arange(roi_size, dtype=jnp.float32) + 0.5
    sx = x1[:, None] + centers[None, :] * bw[:, None]      # (R, P)
    sy = y1[:, None] + centers[None, :] * bh[:, None]      # (R, P)

    def axis_coords(c, size):
        c = jnp.clip(c, 0.0, size - 1.0)
        lo = jnp.floor(c)
        hi = jnp.minimum(lo + 1.0, size - 1.0)
        return lo.astype(jnp.int32), hi.astype(jnp.int32), c - lo

    x_lo, x_hi, x_f = axis_coords(sx, FW)
    y_lo, y_hi, y_f = axis_coords(sy, FH)

    # TODO(synk): this XLA gather copies the feature map per-RoI; at real
    # feature sizes replace with a scalar-prefetch (PrefetchScalarGridSpec)
    # Pallas kernel that DMAs only the sampled bins per RoI.
    feat_r = feat[roi_indices]                              # (R, FH, FW, C)
    rr = jnp.arange(R)[:, None, None]

    def gather(yi, xi):
        return feat_r[rr, yi[:, :, None], xi[:, None, :], :]

    v00 = gather(y_lo, x_lo)
    v01 = gather(y_lo, x_hi)
    v10 = gather(y_hi, x_lo)
    v11 = gather(y_hi, x_hi)
    wx = x_f[:, None, :, None]
    wy = y_f[:, :, None, None]
    return (v00 * (1 - wy) * (1 - wx) + v01 * (1 - wy) * wx
            + v10 * wy * (1 - wx) + v11 * wy * wx)          # (R, P, P, C)


# ---------------------------------------------------------------------------
# Parameters (deterministic, synthetic) — matmul-ready bf16 weights, f32 bias.
# Conv weight slabs are zero-padded on N to a 128 multiple (lane-dense store).
# ---------------------------------------------------------------------------
def _conv_param(key, kh, kw, cin, cout, std):
    w = jax.random.normal(key, (kh, kw, cin, cout), jnp.float32) * std
    w = w.reshape(kh * kw * cin, cout)
    n_pad = _round_up(cout, LANE)
    w = jnp.pad(w, ((0, 0), (0, n_pad - cout)))
    return {"w": w.astype(jnp.bfloat16),
            "b": jnp.zeros((1, n_pad), jnp.float32),
            "kh": kh, "kw": kw, "cin": cin, "cout": cout}


def init_params(key):
    keys = jax.random.split(key, 16)
    # TODO(synk): full ResNet50 extractor / layer4 classifier replaced by a
    # small synthetic conv stack with the same stride-16 / stride-2 structure.
    extractor = [
        _conv_param(keys[0], 3, 3, 3, 8, 0.05),
        _conv_param(keys[1], 3, 3, 8, 16, 0.05),
        _conv_param(keys[2], 3, 3, 16, 32, 0.05),
        _conv_param(keys[3], 3, 3, 32, C_FEAT, 0.05),
    ]

    # RPN: 3x3 mid conv + fused 1x1 loc (9*4) / score (9*2) heads, one kernel.
    w_mid = jax.random.normal(keys[4], (3 * 3 * C_FEAT, RPN_MID), jnp.float32) * 0.01
    w_loc = jax.random.normal(keys[5], (RPN_MID, N_ANCHOR * 4), jnp.float32) * 0.01
    w_scr = jax.random.normal(keys[6], (RPN_MID, N_ANCHOR * 2), jnp.float32) * 0.01
    rpn = {"w_mid": w_mid.astype(jnp.bfloat16),
           "b_mid": jnp.zeros((1, RPN_MID), jnp.float32),
           "w_head": jnp.concatenate([w_loc, w_scr], axis=-1).astype(jnp.bfloat16),
           "b_head": jnp.zeros((1, N_ANCHOR * 6), jnp.float32)}

    # RoI head: cls_loc (n_class*4) and score (n_class) linears fused; this
    # matmul is only M=32 so it stays a plain XLA dot (launch cost > compute).
    w_cls = jax.random.normal(keys[8], (HEAD_C, N_CLASS * 4), jnp.float32) * 0.001
    w_sco = jax.random.normal(keys[9], (HEAD_C, N_CLASS), jnp.float32) * 0.01
    fc = {"w": jnp.concatenate([w_cls, w_sco], axis=-1).astype(jnp.bfloat16),
          "b": jnp.zeros((1, N_CLASS * 5), jnp.float32)}

    return {
        "extractor": extractor,
        "rpn": rpn,
        "head_conv": _conv_param(keys[7], 3, 3, C_FEAT, HEAD_C, 0.05),
        "fc": fc,
    }


ANCHOR_BASE = generate_anchor_base(base_size=16)


# ---------------------------------------------------------------------------
# Forward pass  (mirrors FasterRCNN.forward)
# ---------------------------------------------------------------------------
def faster_rcnn_forward(params, x_nchw, scale=1.0):
    img_h, img_w = x_nchw.shape[2], x_nchw.shape[3]          # img_size = x.shape[2:]
    x = jnp.transpose(x_nchw, (0, 2, 3, 1))                  # NCHW -> NHWC

    # ---- extractor: base_feature = self.extractor(x) ----
    f = x
    for p in params["extractor"]:
        f = conv2d(f, p, stride=2, padding=1, relu=True)
    base_feature = f                                         # (B, H/16, W/16, C_FEAT) bf16
    B, hh, ww, _ = base_feature.shape

    # ---- RPN: _, _, rois, roi_indices, _ = self.rpn(base_feature, img_size, scale) ----
    rpn_out = rpn_fused(base_feature, params["rpn"])         # (B,hh,ww,54) f32
    rpn_locs = rpn_out[..., :N_ANCHOR * 4]                   # (B,hh,ww,36)
    rpn_scores = rpn_out[..., N_ANCHOR * 4:]                 # (B,hh,ww,18)

    locs = rpn_locs.reshape(B, -1, 4)
    scores = rpn_scores.reshape(B, hh, ww, N_ANCHOR, 2)
    fg_scores = jax.nn.softmax(scores, axis=-1)[..., 1].reshape(B, -1)
    anchor = enumerate_shifted_anchor(ANCHOR_BASE, FEAT_STRIDE, hh, ww)

    prop = functools.partial(proposal_layer, anchors=anchor,
                             img_size=(float(img_h), float(img_w)),
                             scale=scale, n_post=N_POST)
    rois = jax.vmap(prop)(locs, fg_scores).reshape(B * N_POST, 4)      # (B*N_POST,4)
    roi_indices = jnp.repeat(jnp.arange(B, dtype=jnp.int32), N_POST)   # (B*N_POST,)

    # ---- head: roi_cls_locs, roi_scores = self.head(base_feature, rois, roi_indices, img_size)
    rois_fm = jnp.stack([rois[:, 0] / img_w * ww,
                         rois[:, 1] / img_h * hh,
                         rois[:, 2] / img_w * ww,
                         rois[:, 3] / img_h * hh], axis=1)
    pooled = roi_pool(base_feature, rois_fm, roi_indices, ROI_SIZE)    # (R,14,14,C_FEAT)
    h = conv2d(pooled, params["head_conv"], stride=2, padding=1, relu=True)  # (R,7,7,HEAD_C) bf16
    h = jnp.mean(h.astype(jnp.float32), axis=(1, 2))                   # (R, HEAD_C)
    # final fused cls_loc/score linear: M=32, stays in XLA (review item).
    head_out = jnp.dot(h.astype(jnp.bfloat16), params["fc"]["w"],
                       preferred_element_type=jnp.float32) + params["fc"]["b"]
    roi_cls_locs = head_out[:, :N_CLASS * 4]                           # (R, n_class*4)
    roi_scores = head_out[:, N_CLASS * 4:]                             # (R, n_class)

    return roi_cls_locs, roi_scores, rois, roi_indices


# ---------------------------------------------------------------------------
if __name__ == "__main__":
    key = jax.random.PRNGKey(0)
    k_in, k_par = jax.random.split(key)
    x = jax.random.normal(k_in, (2, 3, 64, 64), jnp.float32)   # NCHW like PyTorch
    params = init_params(k_par)

    fwd = jax.jit(functools.partial(faster_rcnn_forward, params))
    roi_cls_locs, roi_scores, rois, roi_indices = fwd(x)
    jax.block_until_ready((roi_cls_locs, roi_scores, rois, roi_indices))

    assert roi_cls_locs.shape == (2 * N_POST, N_CLASS * 4)
    assert roi_scores.shape == (2 * N_POST, N_CLASS)
    assert rois.shape == (2 * N_POST, 4)
    assert roi_indices.shape == (2 * N_POST,)
    print("KERNEL_OK")
</pallas_src>

<mosaic_0001>
module attributes {stable_mosaic.version = 11 : i64} {
  func.func @_mm_kernel(%arg0: i32, %arg1: i32, %arg2: memref<1024x27xbf16, #tpu.memory_space<vmem>>, %arg3: memref<27x128xbf16, #tpu.memory_space<vmem>>, %arg4: memref<1x128xf32, #tpu.memory_space<vmem>>, %arg5: memref<1024x128xbf16, #tpu.memory_space<vmem>>, %arg6: memref<1024x128xf32, #tpu.memory_space<vmem>>) attributes {dimension_semantics = [#tpu.dimension_semantics<parallel>, #tpu.dimension_semantics<arbitrary>], iteration_bounds = array<i64: 2, 1>, scalar_prefetch = 0 : i64, scratch_operands = 1 : i64, tpu.core_type = #tpu.core_type<tc>, window_params = [{transform_indices = @transform_0, window_bounds = array<i64: 1024, 27>}, {transform_indices = @transform_1, window_bounds = array<i64: 27, 128>}, {pipeline_mode = #tpu.pipeline_mode<synchronous>, transform_indices = @transform_2, window_bounds = array<i64: 1, 128>}, {transform_indices = @transform_3, window_bounds = array<i64: 1024, 128>}]} {
    %c0_i32 = arith.constant 0 : i32
    %0 = arith.cmpi eq, %arg1, %c0_i32 : i32
    %1 = arith.extui %0 : i1 to i32
    %c0_i32_0 = arith.constant 0 : i32
    %2 = arith.cmpi ne, %1, %c0_i32_0 : i32
    scf.if %2 {
      %cst_10 = arith.constant 0.000000e+00 : f32
      %12 = vector.broadcast %cst_10 : f32 to vector<1024x128xf32>
      %c0_11 = arith.constant 0 : index
      %c0_12 = arith.constant 0 : index
      %13 = vector.load %arg6[%c0_11, %c0_12] : memref<1024x128xf32, #tpu.memory_space<vmem>>, vector<1024x128xf32>
      tpu.vector_store %arg6[%c0_11, %c0_12], %12 {strides = array<i32>} : memref<1024x128xf32, #tpu.memory_space<vmem>>, vector<1024x128xf32>,
    } else {
    }
    %c0 = arith.constant 0 : index
    %c0_1 = arith.constant 0 : index
    %3 = vector.load %arg6[%c0, %c0_1] : memref<1024x128xf32, #tpu.memory_space<vmem>>, vector<1024x128xf32>
    %c0_2 = arith.constant 0 : index
    %c0_3 = arith.constant 0 : index
    %4 = vector.load %arg2[%c0_2, %c0_3] : memref<1024x27xbf16, #tpu.memory_space<vmem>>, vector<1024x27xbf16>
    %c0_4 = arith.constant 0 : index
    %c0_5 = arith.constant 0 : index
    %5 = vector.load %arg3[%c0_4, %c0_5] : memref<27x128xbf16, #tpu.memory_space<vmem>>, vector<27x128xbf16>
    %cst = arith.constant dense<0.000000e+00> : vector<1024x128xf32>
    %6 = tpu.matmul %4, %5, %cst {dimension_numbers = #tpu.dot_dimension_numbers<[1], [0], [0], [1], [0, 0, 1, 1], [], []>} : vector<1024x27xbf16>, vector<27x128xbf16>, vector<1024x128xf32> -> vector<1024x128xf32>
    %7 = arith.addf %3, %6 : vector<1024x128xf32>
    %c0_6 = arith.constant 0 : index
    %c0_7 = arith.constant 0 : index
    %8 = vector.load %arg6[%c0_6, %c0_7] : memref<1024x128xf32, #tpu.memory_space<vmem>>, vector<1024x128xf32>
    tpu.vector_store %arg6[%c0_6, %c0_7], %7 {strides = array<i32>} : memref<1024x128xf32, #tpu.memory_space<vmem>>, vector<1024x128xf32>,
    %c0_i32_8 = arith.constant 0 : i32
    %9 = arith.cmpi eq, %arg1, %c0_i32_8 : i32
    %10 = arith.extui %9 : i1 to i32
    %c0_i32_9 = arith.constant 0 : i32
    %11 = arith.cmpi ne, %10, %c0_i32_9 : i32
    scf.if %11 {
      %c0_10 = arith.constant 0 : index
      %c0_11 = arith.constant 0 : index
      %12 = vector.load %arg6[%c0_10, %c0_11] : memref<1024x128xf32, #tpu.memory_space<vmem>>, vector<1024x128xf32>
      %c0_12 = arith.constant 0 : index
      %c0_13 = arith.constant 0 : index
      %13 = vector.load %arg4[%c0_12, %c0_13] : memref<1x128xf32, #tpu.memory_space<vmem>>, vector<1x128xf32>
      %14 = vector.broadcast %13 : vector<1x128xf32> to vector<1024x128xf32>
      %15 = arith.addf %12, %14 : vector<1024x128xf32>
      %cst_14 = arith.constant 0.000000e+00 : f32
      %16 = vector.broadcast %cst_14 : f32 to vector<1024x128xf32>
      %17 = arith.maximumf %15, %16 : vector<1024x128xf32>
      %18 = arith.truncf %17 : vector<1024x128xf32> to vector<1024x128xbf16>
      %c0_15 = arith.constant 0 : index
      %c0_16 = arith.constant 0 : index
      %19 = vector.load %arg5[%c0_15, %c0_16] : memref<1024x128xbf16, #tpu.memory_space<vmem>>, vector<1024x128xbf16>
      tpu.vector_store %arg5[%c0_15, %c0_16], %18 {strides = array<i32>} : memref<1024x128xbf16, #tpu.memory_space<vmem>>, vector<1024x128xbf16>,
    } else {
    }
    return
  }
  func.func @transform_0(%arg0: i32, %arg1: i32) -> (i32, i32) {
    %c0_i32 = arith.constant 0 : i32
    return %arg0, %arg1 : i32, i32
  }
  func.func @transform_1(%arg0: i32, %arg1: i32) -> (i32, i32) {
    %c0_i32 = arith.constant 0 : i32
    %c0_i32_0 = arith.constant 0 : i32
    return %arg1, %c0_i32 : i32, i32
  }
  func.func @transform_2(%arg0: i32, %arg1: i32) -> (i32, i32) {
    %c0_i32 = arith.constant 0 : i32
    %c0_i32_0 = arith.constant 0 : i32
    %c0_i32_1 = arith.constant 0 : i32
    return %c0_i32, %c0_i32_0 : i32, i32
  }
  func.func @transform_3(%arg0: i32, %arg1: i32) -> (i32, i32) {
    %c0_i32 = arith.constant 0 : i32
    %c0_i32_0 = arith.constant 0 : i32
    return %arg0, %c0_i32 : i32, i32
  }
}

module attributes {stable_mosaic.version = 11 : i64} {
  func.func @_mm_kernel(%arg0: i32, %arg1: i32, %arg2: memref<256x72xbf16, #tpu.memory_space<vmem>>, %arg3: memref<72x128xbf16, #tpu.memory_space<vmem>>, %arg4: memref<1x128xf32, #tpu.memory_space<vmem>>, %arg5: memref<256x128xbf16, #tpu.memory_space<vmem>>, %arg6: memref<256x128xf32, #tpu.memory_space<vmem>>) attributes {dimension_semantics = [#tpu.dimension_semantics<parallel>, #tpu.dimension_semantics<arbitrary>], iteration_bounds = array<i64: 2, 1>, scalar_prefetch = 0 : i64, scratch_operands = 1 : i64, tpu.core_type = #tpu.core_type<tc>, window_params = [{transform_indices = @transform_0, window_bounds = array<i64: 256, 72>}, {transform_indices = @transform_1, window_bounds = array<i64: 72, 128>}, {pipeline_mode = #tpu.pipeline_mode<synchronous>, transform_indices = @transform_2, window_bounds = array<i64: 1, 128>}, {transform_indices = @transform_3, window_bounds = array<i64: 256, 128>}]} {
    %c0_i32 = arith.constant 0 : i32
    %0 = arith.cmpi eq, %arg1, %c0_i32 : i32
    %1 = arith.extui %0 : i1 to i32
    %c0_i32_0 = arith.constant 0 : i32
    %2 = arith.cmpi ne, %1, %c0_i32_0 : i32
    scf.if %2 {
      %cst_10 = arith.constant 0.000000e+00 : f32
      %12 = vector.broadcast %cst_10 : f32 to vector<256x128xf32>
      %c0_11 = arith.constant 0 : index
      %c0_12 = arith.constant 0 : index
      %13 = vector.load %arg6[%c0_11, %c0_12] : memref<256x128xf32, #tpu.memory_space<vmem>>, vector<256x128xf32>
      tpu.vector_store %arg6[%c0_11, %c0_12], %12 {strides = array<i32>} : memref<256x128xf32, #tpu.memory_space<vmem>>, vector<256x128xf32>,
    } else {
    }
    %c0 = arith.constant 0 : index
    %c0_1 = arith.constant 0 : index
    %3 = vector.load %arg6[%c0, %c0_1] : memref<256x128xf32, #tpu.memory_space<vmem>>, vector<256x128xf32>
    %c0_2 = arith.constant 0 : index
    %c0_3 = arith.constant 0 : index
    %4 = vector.load %arg2[%c0_2, %c0_3] : memref<256x72xbf16, #tpu.memory_space<vmem>>, vector<256x72xbf16>
    %c0_4 = arith.constant 0 : index
    %c0_5 = arith.constant 0 : index
    %5 = vector.load %arg3[%c0_4, %c0_5] : memref<72x128xbf16, #tpu.memory_space<vmem>>, vector<72x128xbf16>
    %cst = arith.constant dense<0.000000e+00> : vector<256x128xf32>
    %6 = tpu.matmul %4, %5, %cst {dimension_numbers = #tpu.dot_dimension_numbers<[1], [0], [0], [1], [0, 0, 1, 1], [], []>} : vector<256x72xbf16>, vector<72x128xbf16>, vector<256x128xf32> -> vector<256x128xf32>
    %7 = arith.addf %3, %6 : vector<256x128xf32>
    %c0_6 = arith.constant 0 : index
    %c0_7 = arith.constant 0 : index
    %8 = vector.load %arg6[%c0_6, %c0_7] : memref<256x128xf32, #tpu.memory_space<vmem>>, vector<256x128xf32>
    tpu.vector_store %arg6[%c0_6, %c0_7], %7 {strides = array<i32>} : memref<256x128xf32, #tpu.memory_space<vmem>>, vector<256x128xf32>,
    %c0_i32_8 = arith.constant 0 : i32
    %9 = arith.cmpi eq, %arg1, %c0_i32_8 : i32
    %10 = arith.extui %9 : i1 to i32
    %c0_i32_9 = arith.constant 0 : i32
    %11 = arith.cmpi ne, %10, %c0_i32_9 : i32
    scf.if %11 {
      %c0_10 = arith.constant 0 : index
      %c0_11 = arith.constant 0 : index
      %12 = vector.load %arg6[%c0_10, %c0_11] : memref<256x128xf32, #tpu.memory_space<vmem>>, vector<256x128xf32>
      %c0_12 = arith.constant 0 : index
      %c0_13 = arith.constant 0 : index
      %13 = vector.load %arg4[%c0_12, %c0_13] : memref<1x128xf32, #tpu.memory_space<vmem>>, vector<1x128xf32>
      %14 = vector.broadcast %13 : vector<1x128xf32> to vector<256x128xf32>
      %15 = arith.addf %12, %14 : vector<256x128xf32>
      %cst_14 = arith.constant 0.000000e+00 : f32
      %16 = vector.broadcast %cst_14 : f32 to vector<256x128xf32>
      %17 = arith.maximumf %15, %16 : vector<256x128xf32>
      %18 = arith.truncf %17 : vector<256x128xf32> to vector<256x128xbf16>
      %c0_15 = arith.constant 0 : index
      %c0_16 = arith.constant 0 : index
      %19 = vector.load %arg5[%c0_15, %c0_16] : memref<256x128xbf16, #tpu.memory_space<vmem>>, vector<256x128xbf16>
      tpu.vector_store %arg5[%c0_15, %c0_16], %18 {strides = array<i32>} : memref<256x128xbf16, #tpu.memory_space<vmem>>, vector<256x128xbf16>,
    } else {
    }
    return
  }
  func.func @transform_0(%arg0: i32, %arg1: i32) -> (i32, i32) {
    %c0_i32 = arith.constant 0 : i32
    return %arg0, %arg1 : i32, i32
  }
  func.func @transform_1(%arg0: i32, %arg1: i32) -> (i32, i32) {
    %c0_i32 = arith.constant 0 : i32
    %c0_i32_0 = arith.constant 0 : i32
    return %arg1, %c0_i32 : i32, i32
  }
  func.func @transform_2(%arg0: i32, %arg1: i32) -> (i32, i32) {
    %c0_i32 = arith.constant 0 : i32
    %c0_i32_0 = arith.constant 0 : i32
    %c0_i32_1 = arith.constant 0 : i32
    return %c0_i32, %c0_i32_0 : i32, i32
  }
  func.func @transform_3(%arg0: i32, %arg1: i32) -> (i32, i32) {
    %c0_i32 = arith.constant 0 : i32
    %c0_i32_0 = arith.constant 0 : i32
    return %arg0, %c0_i32 : i32, i32
  }
}

module attributes {stable_mosaic.version = 11 : i64} {
  func.func @_mm_kernel(%arg0: i32, %arg1: i32, %arg2: memref<128x144xbf16, #tpu.memory_space<vmem>>, %arg3: memref<144x128xbf16, #tpu.memory_space<vmem>>, %arg4: memref<1x128xf32, #tpu.memory_space<vmem>>, %arg5: memref<128x128xbf16, #tpu.memory_space<vmem>>, %arg6: memref<128x128xf32, #tpu.memory_space<vmem>>) attributes {dimension_semantics = [#tpu.dimension_semantics<parallel>, #tpu.dimension_semantics<arbitrary>], iteration_bounds = array<i64: 1, 1>, scalar_prefetch = 0 : i64, scratch_operands = 1 : i64, tpu.core_type = #tpu.core_type<tc>, window_params = [{transform_indices = @transform_0, window_bounds = array<i64: 128, 144>}, {transform_indices = @transform_1, window_bounds = array<i64: 144, 128>}, {pipeline_mode = #tpu.pipeline_mode<synchronous>, transform_indices = @transform_2, window_bounds = array<i64: 1, 128>}, {transform_indices = @transform_3, window_bounds = array<i64: 128, 128>}]} {
    %c0_i32 = arith.constant 0 : i32
    %0 = arith.cmpi eq, %arg1, %c0_i32 : i32
    %1 = arith.extui %0 : i1 to i32
    %c0_i32_0 = arith.constant 0 : i32
    %2 = arith.cmpi ne, %1, %c0_i32_0 : i32
    scf.if %2 {
      %cst_10 = arith.constant 0.000000e+00 : f32
      %12 = vector.broadcast %cst_10 : f32 to vector<128x128xf32>
      %c0_11 = arith.constant 0 : index
      %c0_12 = arith.constant 0 : index
      %13 = vector.load %arg6[%c0_11, %c0_12] : memref<128x128xf32, #tpu.memory_space<vmem>>, vector<128x128xf32>
      tpu.vector_store %arg6[%c0_11, %c0_12], %12 {strides = array<i32>} : memref<128x128xf32, #tpu.memory_space<vmem>>, vector<128x128xf32>,
    } else {
    }
    %c0 = arith.constant 0 : index
    %c0_1 = arith.constant 0 : index
    %3 = vector.load %arg6[%c0, %c0_1] : memref<128x128xf32, #tpu.memory_space<vmem>>, vector<128x128xf32>
    %c0_2 = arith.constant 0 : index
    %c0_3 = arith.constant 0 : index
    %4 = vector.load %arg2[%c0_2, %c0_3] : memref<128x144xbf16, #tpu.memory_space<vmem>>, vector<128x144xbf16>
    %c0_4 = arith.constant 0 : index
    %c0_5 = arith.constant 0 : index
    %5 = vector.load %arg3[%c0_4, %c0_5] : memref<144x128xbf16, #tpu.memory_space<vmem>>, vector<144x128xbf16>
    %cst = arith.constant dense<0.000000e+00> : vector<128x128xf32>
    %6 = tpu.matmul %4, %5, %cst {dimension_numbers = #tpu.dot_dimension_numbers<[1], [0], [0], [1], [0, 0, 1, 1], [], []>} : vector<128x144xbf16>, vector<144x128xbf16>, vector<128x128xf32> -> vector<128x128xf32>
    %7 = arith.addf %3, %6 : vector<128x128xf32>
    %c0_6 = arith.constant 0 : index
    %c0_7 = arith.constant 0 : index
    %8 = vector.load %arg6[%c0_6, %c0_7] : memref<128x128xf32, #tpu.memory_space<vmem>>, vector<128x128xf32>
    tpu.vector_store %arg6[%c0_6, %c0_7], %7 {strides = array<i32>} : memref<128x128xf32, #tpu.memory_space<vmem>>, vector<128x128xf32>,
    %c0_i32_8 = arith.constant 0 : i32
    %9 = arith.cmpi eq, %arg1, %c0_i32_8 : i32
    %10 = arith.extui %9 : i1 to i32
    %c0_i32_9 = arith.constant 0 : i32
    %11 = arith.cmpi ne, %10, %c0_i32_9 : i32
    scf.if %11 {
      %c0_10 = arith.constant 0 : index
      %c0_11 = arith.constant 0 : index
      %12 = vector.load %arg6[%c0_10, %c0_11] : memref<128x128xf32, #tpu.memory_space<vmem>>, vector<128x128xf32>
      %c0_12 = arith.constant 0 : index
      %c0_13 = arith.constant 0 : index
      %13 = vector.load %arg4[%c0_12, %c0_13] : memref<1x128xf32, #tpu.memory_space<vmem>>, vector<1x128xf32>
      %14 = vector.broadcast %13 : vector<1x128xf32> to vector<128x128xf32>
      %15 = arith.addf %12, %14 : vector<128x128xf32>
      %cst_14 = arith.constant 0.000000e+00 : f32
      %16 = vector.broadcast %cst_14 : f32 to vector<128x128xf32>
      %17 = arith.maximumf %15, %16 : vector<128x128xf32>
      %18 = arith.truncf %17 : vector<128x128xf32> to vector<128x128xbf16>
      %c0_15 = arith.constant 0 : index
      %c0_16 = arith.constant 0 : index
      %19 = vector.load %arg5[%c0_15, %c0_16] : memref<128x128xbf16, #tpu.memory_space<vmem>>, vector<128x128xbf16>
      tpu.vector_store %arg5[%c0_15, %c0_16], %18 {strides = array<i32>} : memref<128x128xbf16, #tpu.memory_space<vmem>>, vector<128x128xbf16>,
    } else {
    }
    return
  }
  func.func @transform_0(%arg0: i32, %arg1: i32) -> (i32, i32) {
    %c0_i32 = arith.constant 0 : i32
    return %arg0, %arg1 : i32, i32
  }
  func.func @transform_1(%arg0: i32, %arg1: i32) -> (i32, i32) {
    %c0_i32 = arith.constant 0 : i32
    %c0_i32_0 = arith.constant 0 : i32
    return %arg1, %c0_i32 : i32, i32
  }
  func.func @transform_2(%arg0: i32, %arg1: i32) -> (i32, i32) {
    %c0_i32 = arith.constant 0 : i32
    %c0_i32_0 = arith.constant 0 : i32
    %c0_i32_1 = arith.constant 0 : i32
    return %c0_i32, %c0_i32_0 : i32, i32
  }
  func.func @transform_3(%arg0: i32, %arg1: i32) -> (i32, i32) {
    %c0_i32 = arith.constant 0 : i32
    %c0_i32_0 = arith.constant 0 : i32
    return %arg0, %c0_i32 : i32, i32
  }
}

module attributes {stable_mosaic.version = 11 : i64} {
  func.func @_mm_kernel(%arg0: i32, %arg1: i32, %arg2: memref<32x288xbf16, #tpu.memory_space<vmem>>, %arg3: memref<288x128xbf16, #tpu.memory_space<vmem>>, %arg4: memref<1x128xf32, #tpu.memory_space<vmem>>, %arg5: memref<32x128xbf16, #tpu.memory_space<vmem>>, %arg6: memref<32x128xf32, #tpu.memory_space<vmem>>) attributes {dimension_semantics = [#tpu.dimension_semantics<parallel>, #tpu.dimension_semantics<arbitrary>], iteration_bounds = array<i64: 1, 1>, scalar_prefetch = 0 : i64, scratch_operands = 1 : i64, tpu.core_type = #tpu.core_type<tc>, window_params = [{transform_indices = @transform_0, window_bounds = array<i64: 32, 288>}, {transform_indices = @transform_1, window_bounds = array<i64: 288, 128>}, {pipeline_mode = #tpu.pipeline_mode<synchronous>, transform_indices = @transform_2, window_bounds = array<i64: 1, 128>}, {transform_indices = @transform_3, window_bounds = array<i64: 32, 128>}]} {
    %c0_i32 = arith.constant 0 : i32
    %0 = arith.cmpi eq, %arg1, %c0_i32 : i32
    %1 = arith.extui %0 : i1 to i32
    %c0_i32_0 = arith.constant 0 : i32
    %2 = arith.cmpi ne, %1, %c0_i32_0 : i32
    scf.if %2 {
      %cst_10 = arith.constant 0.000000e+00 : f32
      %12 = vector.broadcast %cst_10 : f32 to vector<32x128xf32>
      %c0_11 = arith.constant 0 : index
      %c0_12 = arith.constant 0 : index
      %13 = vector.load %arg6[%c0_11, %c0_12] : memref<32x128xf32, #tpu.memory_space<vmem>>, vector<32x128xf32>
      tpu.vector_store %arg6[%c0_11, %c0_12], %12 {strides = array<i32>} : memref<32x128xf32, #tpu.memory_space<vmem>>, vector<32x128xf32>,
    } else {
    }
    %c0 = arith.constant 0 : index
    %c0_1 = arith.constant 0 : index
    %3 = vector.load %arg6[%c0, %c0_1] : memref<32x128xf32, #tpu.memory_space<vmem>>, vector<32x128xf32>
    %c0_2 = arith.constant 0 : index
    %c0_3 = arith.constant 0 : index
    %4 = vector.load %arg2[%c0_2, %c0_3] : memref<32x288xbf16, #tpu.memory_space<vmem>>, vector<32x288xbf16>
    %c0_4 = arith.constant 0 : index
    %c0_5 = arith.constant 0 : index
    %5 = vector.load %arg3[%c0_4, %c0_5] : memref<288x128xbf16, #tpu.memory_space<vmem>>, vector<288x128xbf16>
    %cst = arith.constant dense<0.000000e+00> : vector<32x128xf32>
    %6 = tpu.matmul %4, %5, %cst {dimension_numbers = #tpu.dot_dimension_numbers<[1], [0], [0], [1], [0, 0, 1, 1], [], []>} : vector<32x288xbf16>, vector<288x128xbf16>, vector<32x128xf32> -> vector<32x128xf32>
    %7 = arith.addf %3, %6 : vector<32x128xf32>
    %c0_6 = arith.constant 0 : index
    %c0_7 = arith.constant 0 : index
    %8 = vector.load %arg6[%c0_6, %c0_7] : memref<32x128xf32, #tpu.memory_space<vmem>>, vector<32x128xf32>
    tpu.vector_store %arg6[%c0_6, %c0_7], %7 {strides = array<i32>} : memref<32x128xf32, #tpu.memory_space<vmem>>, vector<32x128xf32>,
    %c0_i32_8 = arith.constant 0 : i32
    %9 = arith.cmpi eq, %arg1, %c0_i32_8 : i32
    %10 = arith.extui %9 : i1 to i32
    %c0_i32_9 = arith.constant 0 : i32
    %11 = arith.cmpi ne, %10, %c0_i32_9 : i32
    scf.if %11 {
      %c0_10 = arith.constant 0 : index
      %c0_11 = arith.constant 0 : index
      %12 = vector.load %arg6[%c0_10, %c0_11] : memref<32x128xf32, #tpu.memory_space<vmem>>, vector<32x128xf32>
      %c0_12 = arith.constant 0 : index
      %c0_13 = arith.constant 0 : index
      %13 = vector.load %arg4[%c0_12, %c0_13] : memref<1x128xf32, #tpu.memory_space<vmem>>, vector<1x128xf32>
      %14 = vector.broadcast %13 : vector<1x128xf32> to vector<32x128xf32>
      %15 = arith.addf %12, %14 : vector<32x128xf32>
      %cst_14 = arith.constant 0.000000e+00 : f32
      %16 = vector.broadcast %cst_14 : f32 to vector<32x128xf32>
      %17 = arith.maximumf %15, %16 : vector<32x128xf32>
      %18 = arith.truncf %17 : vector<32x128xf32> to vector<32x128xbf16>
      %c0_15 = arith.constant 0 : index
      %c0_16 = arith.constant 0 : index
      %19 = vector.load %arg5[%c0_15, %c0_16] : memref<32x128xbf16, #tpu.memory_space<vmem>>, vector<32x128xbf16>
      tpu.vector_store %arg5[%c0_15, %c0_16], %18 {strides = array<i32>} : memref<32x128xbf16, #tpu.memory_space<vmem>>, vector<32x128xbf16>,
    } else {
    }
    return
  }
  func.func @transform_0(%arg0: i32, %arg1: i32) -> (i32, i32) {
    %c0_i32 = arith.constant 0 : i32
    return %arg0, %arg1 : i32, i32
  }
  func.func @transform_1(%arg0: i32, %arg1: i32) -> (i32, i32) {
    %c0_i32 = arith.constant 0 : i32
    %c0_i32_0 = arith.constant 0 : i32
    return %arg1, %c0_i32 : i32, i32
  }
  func.func @transform_2(%arg0: i32, %arg1: i32) -> (i32, i32) {
    %c0_i32 = arith.constant 0 : i32
    %c0_i32_0 = arith.constant 0 : i32
    %c0_i32_1 = arith.constant 0 : i32
    return %c0_i32, %c0_i32_0 : i32, i32
  }
  func.func @transform_3(%arg0: i32, %arg1: i32) -> (i32, i32) {
    %c0_i32 = arith.constant 0 : i32
    %c0_i32_0 = arith.constant 0 : i32
    return %arg0, %c0_i32 : i32, i32
  }
}

module attributes {stable_mosaic.version = 11 : i64} {
  func.func @_rpn_fused_kernel(%arg0: memref<32x288xbf16, #tpu.memory_space<vmem>>, %arg1: memref<288x32xbf16, #tpu.memory_space<vmem>>, %arg2: memref<1x32xf32, #tpu.memory_space<vmem>>, %arg3: memref<32x54xbf16, #tpu.memory_space<vmem>>, %arg4: memref<1x54xf32, #tpu.memory_space<vmem>>, %arg5: memref<32x54xf32, #tpu.memory_space<vmem>>) attributes {dimension_semantics = [], scalar_prefetch = 0 : i64, scratch_operands = 0 : i64, tpu.core_type = #tpu.core_type<tc>} {
    %c0 = arith.constant 0 : index
    %c0_0 = arith.constant 0 : index
    %0 = vector.load %arg0[%c0, %c0_0] : memref<32x288xbf16, #tpu.memory_space<vmem>>, vector<32x288xbf16>
    %c0_1 = arith.constant 0 : index
    %c0_2 = arith.constant 0 : index
    %1 = vector.load %arg1[%c0_1, %c0_2] : memref<288x32xbf16, #tpu.memory_space<vmem>>, vector<288x32xbf16>
    %cst = arith.constant dense<0.000000e+00> : vector<32x32xf32>
    %2 = tpu.matmul %0, %1, %cst {dimension_numbers = #tpu.dot_dimension_numbers<[1], [0], [0], [1], [0, 0, 1, 1], [], []>} : vector<32x288xbf16>, vector<288x32xbf16>, vector<32x32xf32> -> vector<32x32xf32>
    %c0_3 = arith.constant 0 : index
    %c0_4 = arith.constant 0 : index
    %3 = vector.load %arg2[%c0_3, %c0_4] : memref<1x32xf32, #tpu.memory_space<vmem>>, vector<1x32xf32>
    %4 = vector.broadcast %3 : vector<1x32xf32> to vector<32x32xf32>
    %5 = arith.addf %2, %4 : vector<32x32xf32>
    %cst_5 = arith.constant 0.000000e+00 : f32
    %6 = vector.broadcast %cst_5 : f32 to vector<32x32xf32>
    %7 = arith.maximumf %5, %6 : vector<32x32xf32>
    %8 = arith.truncf %7 : vector<32x32xf32> to vector<32x32xbf16>
    %c0_6 = arith.constant 0 : index
    %c0_7 = arith.constant 0 : index
    %9 = vector.load %arg3[%c0_6, %c0_7] : memref<32x54xbf16, #tpu.memory_space<vmem>>, vector<32x54xbf16>
    %cst_8 = arith.constant dense<0.000000e+00> : vector<32x54xf32>
    %10 = tpu.matmul %8, %9, %cst_8 {dimension_numbers = #tpu.dot_dimension_numbers<[1], [0], [0], [1], [0, 0, 1, 1], [], []>} : vector<32x32xbf16>, vector<32x54xbf16>, vector<32x54xf32> -> vector<32x54xf32>
    %c0_9 = arith.constant 0 : index
    %c0_10 = arith.constant 0 : index
    %11 = vector.load %arg4[%c0_9, %c0_10] : memref<1x54xf32, #tpu.memory_space<vmem>>, vector<1x54xf32>
    %12 = vector.broadcast %11 : vector<1x54xf32> to vector<32x54xf32>
    %13 = arith.addf %10, %12 : vector<32x54xf32>
    %c0_11 = arith.constant 0 : index
    %c0_12 = arith.constant 0 : index
    %14 = vector.load %arg5[%c0_11, %c0_12] : memref<32x54xf32, #tpu.memory_space<vmem>>, vector<32x54xf32>
    tpu.vector_store %arg5[%c0_11, %c0_12], %13 {strides = array<i32>} : memref<32x54xf32, #tpu.memory_space<vmem>>, vector<32x54xf32>,
    return
  }
}

module attributes {stable_mosaic.version = 11 : i64} {
  func.func @_mm_kernel(%arg0: i32, %arg1: i32, %arg2: memref<784x288xbf16, #tpu.memory_space<vmem>>, %arg3: memref<288x128xbf16, #tpu.memory_space<vmem>>, %arg4: memref<1x128xf32, #tpu.memory_space<vmem>>, %arg5: memref<784x128xbf16, #tpu.memory_space<vmem>>, %arg6: memref<784x128xf32, #tpu.memory_space<vmem>>) attributes {dimension_semantics = [#tpu.dimension_semantics<parallel>, #tpu.dimension_semantics<arbitrary>], iteration_bounds = array<i64: 2, 1>, scalar_prefetch = 0 : i64, scratch_operands = 1 : i64, tpu.core_type = #tpu.core_type<tc>, window_params = [{transform_indices = @transform_0, window_bounds = array<i64: 784, 288>}, {transform_indices = @transform_1, window_bounds = array<i64: 288, 128>}, {pipeline_mode = #tpu.pipeline_mode<synchronous>, transform_indices = @transform_2, window_bounds = array<i64: 1, 128>}, {transform_indices = @transform_3, window_bounds = array<i64: 784, 128>}]} {
    %c0_i32 = arith.constant 0 : i32
    %0 = arith.cmpi eq, %arg1, %c0_i32 : i32
    %1 = arith.extui %0 : i1 to i32
    %c0_i32_0 = arith.constant 0 : i32
    %2 = arith.cmpi ne, %1, %c0_i32_0 : i32
    scf.if %2 {
      %cst_10 = arith.constant 0.000000e+00 : f32
      %12 = vector.broadcast %cst_10 : f32 to vector<784x128xf32>
      %c0_11 = arith.constant 0 : index
      %c0_12 = arith.constant 0 : index
      %13 = vector.load %arg6[%c0_11, %c0_12] : memref<784x128xf32, #tpu.memory_space<vmem>>, vector<784x128xf32>
      tpu.vector_store %arg6[%c0_11, %c0_12], %12 {strides = array<i32>} : memref<784x128xf32, #tpu.memory_space<vmem>>, vector<784x128xf32>,
    } else {
    }
    %c0 = arith.constant 0 : index
    %c0_1 = arith.constant 0 : index
    %3 = vector.load %arg6[%c0, %c0_1] : memref<784x128xf32, #tpu.memory_space<vmem>>, vector<784x128xf32>
    %c0_2 = arith.constant 0 : index
    %c0_3 = arith.constant 0 : index
    %4 = vector.load %arg2[%c0_2, %c0_3] : memref<784x288xbf16, #tpu.memory_space<vmem>>, vector<784x288xbf16>
    %c0_4 = arith.constant 0 : index
    %c0_5 = arith.constant 0 : index
    %5 = vector.load %arg3[%c0_4, %c0_5] : memref<288x128xbf16, #tpu.memory_space<vmem>>, vector<288x128xbf16>
    %cst = arith.constant dense<0.000000e+00> : vector<784x128xf32>
    %6 = tpu.matmul %4, %5, %cst {dimension_numbers = #tpu.dot_dimension_numbers<[1], [0], [0], [1], [0, 0, 1, 1], [], []>} : vector<784x288xbf16>, vector<288x128xbf16>, vector<784x128xf32> -> vector<784x128xf32>
    %7 = arith.addf %3, %6 : vector<784x128xf32>
    %c0_6 = arith.constant 0 : index
    %c0_7 = arith.constant 0 : index
    %8 = vector.load %arg6[%c0_6, %c0_7] : memref<784x128xf32, #tpu.memory_space<vmem>>, vector<784x128xf32>
    tpu.vector_store %arg6[%c0_6, %c0_7], %7 {strides = array<i32>} : memref<784x128xf32, #tpu.memory_space<vmem>>, vector<784x128xf32>,
    %c0_i32_8 = arith.constant 0 : i32
    %9 = arith.cmpi eq, %arg1, %c0_i32_8 : i32
    %10 = arith.extui %9 : i1 to i32
    %c0_i32_9 = arith.constant 0 : i32
    %11 = arith.cmpi ne, %10, %c0_i32_9 : i32
    scf.if %11 {
      %c0_10 = arith.constant 0 : index
      %c0_11 = arith.constant 0 : index
      %12 = vector.load %arg6[%c0_10, %c0_11] : memref<784x128xf32, #tpu.memory_space<vmem>>, vector<784x128xf32>
      %c0_12 = arith.constant 0 : index
      %c0_13 = arith.constant 0 : index
      %13 = vector.load %arg4[%c0_12, %c0_13] : memref<1x128xf32, #tpu.memory_space<vmem>>, vector<1x128xf32>
      %14 = vector.broadcast %13 : vector<1x128xf32> to vector<784x128xf32>
      %15 = arith.addf %12, %14 : vector<784x128xf32>
      %cst_14 = arith.constant 0.000000e+00 : f32
      %16 = vector.broadcast %cst_14 : f32 to vector<784x128xf32>
      %17 = arith.maximumf %15, %16 : vector<784x128xf32>
      %18 = arith.truncf %17 : vector<784x128xf32> to vector<784x128xbf16>
      %c0_15 = arith.constant 0 : index
      %c0_16 = arith.constant 0 : index
      %19 = vector.load %arg5[%c0_15, %c0_16] : memref<784x128xbf16, #tpu.memory_space<vmem>>, vector<784x128xbf16>
      tpu.vector_store %arg5[%c0_15, %c0_16], %18 {strides = array<i32>} : memref<784x128xbf16, #tpu.memory_space<vmem>>, vector<784x128xbf16>,
    } else {
    }
    return
  }
  func.func @transform_0(%arg0: i32, %arg1: i32) -> (i32, i32) {
    %c0_i32 = arith.constant 0 : i32
    return %arg0, %arg1 : i32, i32
  }
  func.func @transform_1(%arg0: i32, %arg1: i32) -> (i32, i32) {
    %c0_i32 = arith.constant 0 : i32
    %c0_i32_0 = arith.constant 0 : i32
    return %arg1, %c0_i32 : i32, i32
  }
  func.func @transform_2(%arg0: i32, %arg1: i32) -> (i32, i32) {
    %c0_i32 = arith.constant 0 : i32
    %c0_i32_0 = arith.constant 0 : i32
    %c0_i32_1 = arith.constant 0 : i32
    return %c0_i32, %c0_i32_0 : i32, i32
  }
  func.func @transform_3(%arg0: i32, %arg1: i32) -> (i32, i32) {
    %c0_i32 = arith.constant 0 : i32
    %c0_i32_0 = arith.constant 0 : i32
    return %arg0, %c0_i32 : i32, i32
  }
}

</mosaic_0001>

<llo_original>
// kernel: faster_rcnn_forward.6
$region0: #{faster_rcnn_forward.6}
  #allocation0 [shape = 'u32[]', space=smem, size = 0x4, offset = 0x4, fixed_abs, tag = 'smem constant byte address 0x4 - core index']
  #allocation1 [shape = 'u32[144,128]{1,0:T(1,128)}', space=vmem, size = 0x12000, scoped, tag = 'internal scratch']
  #allocation2 [shape = 'f32[1024,128]{1,0:T(8,128)}', space=vmem, size = 0x80000, scoped, tag = 'scratch operand']
  %s0 = inlined_call_operand.vmem [shape: bf16[2048,27], index: 0, kind: input, shape index: {}]
  %s1 = inlined_call_operand.hbm [shape: bf16[27,128], index: 1, kind: input, shape index: {}]
  %s2 = inlined_call_operand.vmem [shape: f32[1,128], index: 2, kind: input, shape index: {}]
  %s3 = inlined_call_operand.vmem [shape: bf16[2048,128], index: 3, kind: output, shape index: {}]
  %s4 = sld [smem:[#allocation0]]
  $region57: #{faster_rcnn_forward.6} parent=0
    _
  %s6 = ssub.s32 1, %s4
  %s7 = scalar_select 0, %s6, %s4
  $region1: #{faster_rcnn_forward.6} parent=0
    #allocation3 [shape = 'u8[8192]{0}', space=vmem, size = 0x2000, scoped, tag = 'input window, operand 1, single buffered']
    #allocation4 [shape = 's32[2]{0}', space=sflag, size = 0x8, scoped, tag = 'scoped memory for faster_rcnn_forward.6']
    %8 = vsyncpa [#allocation4], 0
    loop: start=0, step=1, limit=4
    $region2: #{faster_rcnn_forward.6} parent=1 // loop_pre_header
      _
    $region3: #{faster_rcnn_forward.6} parent=1 // loop_header
      %s10 = sphi 0, %s14
      %p11 = scmp.ge.s32.totalorder %s10, 4
      %s17 = sphi 0, %s29
      %s18 = sphi 0, %s25
      %s19 = sphi 0, %s17
      %s20 = sphi 0, %s18
      %s21 = sphi 0, %s19
      %s22 = sphi 0, %s20
      %s34 = sphi 0, %s36
      %s37 = sphi 0, %s34
      %s38 = sphi 0, %s37
      %s54 = sphi 0, %s38
      %s60 = sphi 0, %s62
      %s63 = sphi 0, %s60
      %s64 = sphi 0, %s63
      %s80 = sphi 0, %s64
      %s84 = sphi 0, %s84
      %s86 = sphi 0, %s84
      %s87 = sphi 0, %s86
      %s101 = sphi 0, %s87
      %s107 = sphi 0, %s109
      %s110 = sphi 0, %s107
      %s111 = sphi 0, %s110
      %s127 = sphi 0, %s111
    $region4: #{faster_rcnn_forward.6} parent=1 // loop_header_branch
      %13 = sbr.rel (%p11) target = $region8
    $region5: #{faster_rcnn_forward.6} parent=1 // loop_body
      %s15 = ssub.s32 %s10, 1
      %s16 = ssub.s32 %s10, 2
      %s23 = sadd.s32 1, %s18
      %p24 = scmp.ge.s32.totalorder %s23, 1
      %s25 = scalar_select %p24, 0, %s23
      %s26 = sadd.s32 1, %s17
      %s27 = scalar_select %p24, %s26, %s17
      %p28 = scmp.ge.s32.totalorder %s27, 2
      %s29 = scalar_select %p28, 0, %s27
      %s30 = ssub.s32 %s17, %s29
      %s31 = ssub.s32 %s18, %s25
      %s32 = sor.u32 %s30, %s31
      %p33 = scmp.eq.s32.totalorder %s32, 0
      %s35 = sadd.s32 %s34, 1
      %s36 = scalar_select %p33, %s34, %s35
      %p39 = pneg %p33
      %p40 = scmp.eq.s32.totalorder %s10, 1
      %p41 = por %p39, %p40
      %p42 = scmp.ne.s32.totalorder %s34, %s37
      %p43 = scmp.eq.s32.totalorder %s10, 0
      %p44 = por %p42, %p43
      %p45 = scmp.ne.s32.totalorder %s34, %s37
      %p46 = scmp.eq.s32.totalorder %s15, 1
      %p47 = por %p45, %p46
      %p48 = scmp.ne.s32.totalorder %s37, %s38
      %p49 = scmp.eq.s32.totalorder %s15, 0
      %p50 = por %p48, %p49
      %p51 = scmp.ne.s32.totalorder %s37, %s38
      %p52 = scmp.eq.s32.totalorder %s16, 1
      %p53 = por %p51, %p52
      %p55 = scmp.ne.s32.totalorder %s38, %s54
      %p56 = scmp.eq.s32.totalorder %s16, 0
      %p57 = por %p55, %p56
      %s58 = ssub.s32 %s18, %s25
      %p59 = scmp.eq.s32.totalorder %s58, 0
      %s61 = sadd.s32 %s60, 1
      %s62 = scalar_select %p59, %s60, %s61
      %p65 = pneg %p59
      %p66 = scmp.eq.s32.totalorder %s10, 1
      %p67 = por %p65, %p66
      %p68 = scmp.ne.s32.totalorder %s60, %s63
      %p69 = scmp.eq.s32.totalorder %s10, 0
      %p70 = por %p68, %p69
      %p71 = scmp.ne.s32.totalorder %s60, %s63
      %p72 = scmp.eq.s32.totalorder %s15, 1
      %p73 = por %p71, %p72
      %p74 = scmp.ne.s32.totalorder %s63, %s64
      %p75 = scmp.eq.s32.totalorder %s15, 0
      %p76 = por %p74, %p75
      %p77 = scmp.ne.s32.totalorder %s63, %s64
      %p78 = scmp.eq.s32.totalorder %s16, 1
      %p79 = por %p77, %p78
      %p81 = scmp.ne.s32.totalorder %s64, %s80
      %p82 = scmp.eq.s32.totalorder %s16, 0
      %p83 = por %p81, %p82
      %s85 = sadd.s32 %s84, 1
      %p88 = scmp.eq.s32.totalorder %s10, 1
      %p89 = scmp.ne.s32.totalorder %s84, %s86
      %p90 = scmp.eq.s32.totalorder %s10, 0
      %p91 = por %p89, %p90
      %p92 = scmp.ne.s32.totalorder %s84, %s86
      %p93 = scmp.eq.s32.totalorder %s15, 1
      %p94 = por %p92, %p93
      %p95 = scmp.ne.s32.totalorder %s86, %s87
      %p96 = scmp.eq.s32.totalorder %s15, 0
      %p97 = por %p95, %p96
      %p98 = scmp.ne.s32.totalorder %s86, %s87
      %p99 = scmp.eq.s32.totalorder %s16, 1
      %p100 = por %p98, %p99
      %p102 = scmp.ne.s32.totalorder %s87, %s101
      %p103 = scmp.eq.s32.totalorder %s16, 0
      %p104 = por %p102, %p103
      %s105 = ssub.s32 %s17, %s29
      %p106 = scmp.eq.s32.totalorder %s105, 0
      %s108 = sadd.s32 %s107, 1
      %s109 = scalar_select %p106, %s107, %s108
      %p112 = pneg %p106
      %p113 = scmp.eq.s32.totalorder %s10, 1
      %p114 = por %p112, %p113
      %p115 = scmp.ne.s32.totalorder %s107, %s110
      %p116 = scmp.eq.s32.totalorder %s10, 0
      %p117 = por %p115, %p116
      %p118 = scmp.ne.s32.totalorder %s107, %s110
      %p119 = scmp.eq.s32.totalorder %s15, 1
      %p120 = por %p118, %p119
      %p121 = scmp.ne.s32.totalorder %s110, %s111
      %p122 = scmp.eq.s32.totalorder %s15, 0
      %p123 = por %p121, %p122
      %p124 = scmp.ne.s32.totalorder %s110, %s111
      %p125 = scmp.eq.s32.totalorder %s16, 1
      %p126 = por %p124, %p125
      %p128 = scmp.ne.s32.totalorder %s111, %s127
      %p129 = scmp.eq.s32.totalorder %s16, 0
      %p130 = por %p128, %p129
      %p131 = scmp.le.s32.totalorder 1, %s10
      %p132 = scmp.lt.s32.totalorder %s10, 3
      %p133 = pnand %p131, %p132
      %p134 = pneg %p133
      // Predicated region
      $region9: #{faster_rcnn_forward.6} parent=5 // pred_check
        _
      $region10: #{faster_rcnn_forward.6} parent=5 // pred_check_branch
        %136 = sbr.rel (%p133) target = $region12
      $region11: #{faster_rcnn_forward.6} parent=5 // pred_region
        %s137 = ssub.s32 %s10, 1
        // Predicated region
        $region13: #{faster_rcnn_forward.6} parent=11 // pred_check
          %p138 = pneg %p76
        $region14: #{faster_rcnn_forward.6} parent=11 // pred_check_branch
          %140 = sbr.rel (%p138) target = $region16
        $region15: #{faster_rcnn_forward.6} parent=11 // pred_region
          %s141 = smul.u32 4, %s20
          %s143 = ssub.s32 256, 256
          %144 = vsyncadd [#allocation4], %s143
          %s145 = smul.addr %s141, 64
          %s146 = scalar_lea.hbm %s1, %s145
          %s147 = sshll.u32 [#allocation3], 4
          %s148 = int_to_ptr.vmem [resolvable:$true] %s147
          %153 = dma.hbm_to_vmem [thread:$0]  %s146, 256, %s148, [#allocation4], 64, 64, 4
        $region16: #{faster_rcnn_forward.6} parent=11 // pred_fallthru
          _
        // Predicated region
        $region17: #{faster_rcnn_forward.6} parent=11 // pred_check
          %p154 = pneg %p97
        $region18: #{faster_rcnn_forward.6} parent=11 // pred_check_branch
          %156 = sbr.rel (%p154) target = $region20
        $region19: #{faster_rcnn_forward.6} parent=11 // pred_region
          _
        $region20: #{faster_rcnn_forward.6} parent=11 // pred_fallthru
          _
      $region12: #{faster_rcnn_forward.6} parent=5 // pred_fallthru
        _
      %p157 = scmp.lt.s32.totalorder %s10, 2
      // Predicated region
      $region21: #{faster_rcnn_forward.6} parent=5 // pred_check
        %p158 = pneg %p157
      $region22: #{faster_rcnn_forward.6} parent=5 // pred_check_branch
        %160 = sbr.rel (%p158) target = $region24
      $region23: #{faster_rcnn_forward.6} parent=5 // pred_region
        // Predicated region
        $region25: #{faster_rcnn_forward.6} parent=23 // pred_check
          %p161 = pneg %p44
        $region26: #{faster_rcnn_forward.6} parent=23 // pred_check_branch
          %163 = sbr.rel (%p161) target = $region28
        $region27: #{faster_rcnn_forward.6} parent=23 // pred_region
          %s164 = smul.u32 128, %s17
          %p165 = scmp.lt.s32.totalorder %s164, 255
          %s166 = scalar_select %p165, %s164, 255
          %p167 = scmp.lt.s32.totalorder %s18, 0
          %s168 = scalar_select %p167, %s18, 0
          %s169 = sadd.s32 %s168, %s166
          %s170 = smul.addr %s169, 4
          %s171 = scalar_lea.vmem %s0, %s170
          %s172 = smul.u32 128, %s17
        $region28: #{faster_rcnn_forward.6} parent=23 // pred_fallthru
          _
      $region24: #{faster_rcnn_forward.6} parent=5 // pred_fallthru
        _
      %p173 = scmp.le.s32.totalorder 1, %s10
      %p174 = scmp.lt.s32.totalorder %s10, 3
      %p175 = pnand %p173, %p174
      %p176 = pneg %p175
      // Predicated region
      $region29: #{faster_rcnn_forward.6} parent=5 // pred_check
        _
      $region30: #{faster_rcnn_forward.6} parent=5 // pred_check_branch
        %178 = sbr.rel (%p175) target = $region32
      $region31: #{faster_rcnn_forward.6} parent=5 // pred_region
        %s179 = ssub.s32 %s10, 1
        // Predicated region
        $region33: #{faster_rcnn_forward.6} parent=31 // pred_check
          %p180 = pneg %p76
        $region34: #{faster_rcnn_forward.6} parent=31 // pred_check_branch
          %182 = sbr.rel (%p180) target = $region36
        $region35: #{faster_rcnn_forward.6} parent=31 // pred_region
          %183 = dma.done [#allocation4], 256
        $region36: #{faster_rcnn_forward.6} parent=31 // pred_fallthru
          _
        %s184 = smul.u32 128, %s19
        %p185 = scmp.lt.s32.totalorder %s184, 255
        %s186 = scalar_select %p185, %s184, 255
        %p187 = scmp.lt.s32.totalorder %s20, 0
        %s188 = scalar_select %p187, %s20, 0
        %s189 = sadd.s32 %s188, %s186
        %s190 = smul.addr %s189, 4
        %s191 = scalar_lea.vmem %s0, %s190
        %p192 = pneg %p50
        %p193 = pneg %p47
        %p194 = pneg %p76
        %p195 = pneg %p73
        %p196 = pneg %p97
        %p197 = pneg %p94
        %p198 = pneg %p123
        %p199 = pneg %p120
        %s200 = smul.u32 128, %s19
        %p201 = scmp.lt.s32.totalorder %s200, 255
        %s202 = scalar_select %p201, %s200, 255
        %s203 = smul.addr %s202, 4
        %s204 = scalar_lea.vmem %s3, %s203
        %s205 = smul.u32 128, %s19
        %p206 = scmp.lt.s32.totalorder %s205, 255
        %s207 = scalar_select %p206, %s205, 255
        %p208 = scmp.lt.s32.totalorder %s20, 0
        %s209 = scalar_select %p208, %s20, 0
        %s210 = sadd.s32 %s209, %s207
        %s211 = smul.addr %s210, 4
        %s212 = scalar_lea.vmem %s0, %s211
        %s213 = smul.u32 128, %s19
        %s214 = smul.u32 4, %s20
        %s215 = smul.u32 128, %s19
        %p216 = scmp.lt.s32.totalorder %s215, 255
        %s217 = scalar_select %p216, %s215, 255
        %s218 = smul.addr %s217, 4
        %s219 = scalar_lea.vmem %s3, %s218
        %s220 = smul.u32 128, %s19
        %p222 = scmp.eq.s32.totalorder %s20, 0
        // Predicated region
        $region37: #{faster_rcnn_forward.6} parent=31 // pred_check
          %p223 = pneg %p222
        $region38: #{faster_rcnn_forward.6} parent=31 // pred_check_branch
          %225 = sbr.rel (%p223) target = $region40
        $region39: #{faster_rcnn_forward.6} parent=31 // pred_region
          %226 = vst [vmem:[#allocation2] sm:$0xff] 0.0
          %227 = vst [vmem:[#allocation2 + $0x8] sm:$0xff] 0.0
          %228 = vst [vmem:[#allocation2 + $0x10] sm:$0xff] 0.0
          %229 = vst [vmem:[#allocation2 + $0x18] sm:$0xff] 0.0
          %230 = vst [vmem:[#allocation2 + $0x20] sm:$0xff] 0.0
          %231 = vst [vmem:[#allocation2 + $0x28] sm:$0xff] 0.0
          %232 = vst [vmem:[#allocation2 + $0x30] sm:$0xff] 0.0
          %233 = vst [vmem:[#allocation2 + $0x38] sm:$0xff] 0.0
          %234 = vst [vmem:[#allocation2 + $0x40] sm:$0xff] 0.0
          %235 = vst [vmem:[#allocation2 + $0x48] sm:$0xff] 0.0
          %236 = vst [vmem:[#allocation2 + $0x50] sm:$0xff] 0.0
          %237 = vst [vmem:[#allocation2 + $0x58] sm:$0xff] 0.0
          %238 = vst [vmem:[#allocation2 + $0x60] sm:$0xff] 0.0
          %239 = vst [vmem:[#allocation2 + $0x68] sm:$0xff] 0.0
          %240 = vst [vmem:[#allocation2 + $0x70] sm:$0xff] 0.0
          %241 = vst [vmem:[#allocation2 + $0x78] sm:$0xff] 0.0
          %242 = vst [vmem:[#allocation2 + $0x80] sm:$0xff] 0.0
          %243 = vst [vmem:[#allocation2 + $0x88] sm:$0xff] 0.0
          %244 = vst [vmem:[#allocation2 + $0x90] sm:$0xff] 0.0
          %245 = vst [vmem:[#allocation2 + $0x98] sm:$0xff] 0.0
          %246 = vst [vmem:[#allocation2 + $0xa0] sm:$0xff] 0.0
          %247 = vst [vmem:[#allocation2 + $0xa8] sm:$0xff] 0.0
          %248 = vst [vmem:[#allocation2 + $0xb0] sm:$0xff] 0.0
          %249 = vst [vmem:[#allocation2 + $0xb8] sm:$0xff] 0.0
          %250 = vst [vmem:[#allocation2 + $0xc0] sm:$0xff] 0.0
          %251 = vst [vmem:[#allocation2 + $0xc8] sm:$0xff] 0.0
          %252 = vst [vmem:[#allocation2 + $0xd0] sm:$0xff] 0.0
          %253 = vst [vmem:[#allocation2 + $0xd8] sm:$0xff] 0.0
          %254 = vst [vmem:[#allocation2 + $0xe0] sm:$0xff] 0.0
          %255 = vst [vmem:[#allocation2 + $0xe8] sm:$0xff] 0.0
          %256 = vst [vmem:[#allocation2 + $0xf0] sm:$0xff] 0.0
          %257 = vst [vmem:[#allocation2 + $0xf8] sm:$0xff] 0.0
          %258 = vst [vmem:[#allocation2 + $0x100] sm:$0xff] 0.0
          %259 = vst [vmem:[#allocation2 + $0x108] sm:$0xff] 0.0
          %260 = vst [vmem:[#allocation2 + $0x110] sm:$0xff] 0.0
          %261 = vst [vmem:[#allocation2 + $0x118] sm:$0xff] 0.0
          %262 = vst [vmem:[#allocation2 + $0x120] sm:$0xff] 0.0
          %263 = vst [vmem:[#allocation2 + $0x128] sm:$0xff] 0.0
          %264 = vst [vmem:[#allocation2 + $0x130] sm:$0xff] 0.0
          %265 = vst [vmem:[#allocation2 + $0x138] sm:$0xff] 0.0
          %266 = vst [vmem:[#allocation2 + $0x140] sm:$0xff] 0.0
          %267 = vst [vmem:[#allocation2 + $0x148] sm:$0xff] 0.0
          %268 = vst [vmem:[#allocation2 + $0x150] sm:$0xff] 0.0
          %269 = vst [vmem:[#allocation2 + $0x158] sm:$0xff] 0.0
          %270 = vst [vmem:[#allocation2 + $0x160] sm:$0xff] 0.0
          %271 = vst [vmem:[#allocation2 + $0x168] sm:$0xff] 0.0
          %272 = vst [vmem:[#allocation2 + $0x170] sm:$0xff] 0.0
          %273 = vst [vmem:[#allocation2 + $0x178] sm:$0xff] 0.0
          %274 = vst [vmem:[#allocation2 + $0x180] sm:$0xff] 0.0
          %275 = vst [vmem:[#allocation2 + $0x188] sm:$0xff] 0.0
          %276 = vst [vmem:[#allocation2 + $0x190] sm:$0xff] 0.0
          %277 = vst [vmem:[#allocation2 + $0x198] sm:$0xff] 0.0
          %278 = vst [vmem:[#allocation2 + $0x1a0] sm:$0xff] 0.0
          %279 = vst [vmem:[#allocation2 + $0x1a8] sm:$0xff] 0.0
          %280 = vst [vmem:[#allocation2 + $0x1b0] sm:$0xff] 0.0
          %281 = vst [vmem:[#allocation2 + $0x1b8] sm:$0xff] 0.0
          %282 = vst [vmem:[#allocation2 + $0x1c0] sm:$0xff] 0.0
          %283 = vst [vmem:[#allocation2 + $0x1c8] sm:$0xff] 0.0
          %284 = vst [vmem:[#allocation2 + $0x1d0] sm:$0xff] 0.0
          %285 = vst [vmem:[#allocation2 + $0x1d8] sm:$0xff] 0.0
          %286 = vst [vmem:[#allocation2 + $0x1e0] sm:$0xff] 0.0
          %287 = vst [vmem:[#allocation2 + $0x1e8] sm:$0xff] 0.0
          %288 = vst [vmem:[#allocation2 + $0x1f0] sm:$0xff] 0.0
          %289 = vst [vmem:[#allocation2 + $0x1f8] sm:$0xff] 0.0
          %290 = vst [vmem:[#allocation2 + $0x200] sm:$0xff] 0.0
          %291 = vst [vmem:[#allocation2 + $0x208] sm:$0xff] 0.0
          %292 = vst [vmem:[#allocation2 + $0x210] sm:$0xff] 0.0
          %293 = vst [vmem:[#allocation2 + $0x218] sm:$0xff] 0.0
          %294 = vst [vmem:[#allocation2 + $0x220] sm:$0xff] 0.0
          %295 = vst [vmem:[#allocation2 + $0x228] sm:$0xff] 0.0
          %296 = vst [vmem:[#allocation2 + $0x230] sm:$0xff] 0.0
          %297 = vst [vmem:[#allocation2 + $0x238] sm:$0xff] 0.0
          %298 = vst [vmem:[#allocation2 + $0x240] sm:$0xff] 0.0
          %299 = vst [vmem:[#allocation2 + $0x248] sm:$0xff] 0.0
          %300 = vst [vmem:[#allocation2 + $0x250] sm:$0xff] 0.0
          %301 = vst [vmem:[#allocation2 + $0x258] sm:$0xff] 0.0
          %302 = vst [vmem:[#allocation2 + $0x260] sm:$0xff] 0.0
          %303 = vst [vmem:[#allocation2 + $0x268] sm:$0xff] 0.0
          %304 = vst [vmem:[#allocation2 + $0x270] sm:$0xff] 0.0
          %305 = vst [vmem:[#allocation2 + $0x278] sm:$0xff] 0.0
          %306 = vst [vmem:[#allocation2 + $0x280] sm:$0xff] 0.0
          %307 = vst [vmem:[#allocation2 + $0x288] sm:$0xff] 0.0
          %308 = vst [vmem:[#allocation2 + $0x290] sm:$0xff] 0.0
          %309 = vst [vmem:[#allocation2 + $0x298] sm:$0xff] 0.0
          %310 = vst [vmem:[#allocation2 + $0x2a0] sm:$0xff] 0.0
          %311 = vst [vmem:[#allocation2 + $0x2a8] sm:$0xff] 0.0
          %312 = vst [vmem:[#allocation2 + $0x2b0] sm:$0xff] 0.0
          %313 = vst [vmem:[#allocation2 + $0x2b8] sm:$0xff] 0.0
          %314 = vst [vmem:[#allocation2 + $0x2c0] sm:$0xff] 0.0
          %315 = vst [vmem:[#allocation2 + $0x2c8] sm:$0xff] 0.0
          %316 = vst [vmem:[#allocation2 + $0x2d0] sm:$0xff] 0.0
          %317 = vst [vmem:[#allocation2 + $0x2d8] sm:$0xff] 0.0
          %318 = vst [vmem:[#allocation2 + $0x2e0] sm:$0xff] 0.0
          %319 = vst [vmem:[#allocation2 + $0x2e8] sm:$0xff] 0.0
          %320 = vst [vmem:[#allocation2 + $0x2f0] sm:$0xff] 0.0
          %321 = vst [vmem:[#allocation2 + $0x2f8] sm:$0xff] 0.0
          %322 = vst [vmem:[#allocation2 + $0x300] sm:$0xff] 0.0
          %323 = vst [vmem:[#allocation2 + $0x308] sm:$0xff] 0.0
          %324 = vst [vmem:[#allocation2 + $0x310] sm:$0xff] 0.0
          %325 = vst [vmem:[#allocation2 + $0x318] sm:$0xff] 0.0
          %326 = vst [vmem:[#allocation2 + $0x320] sm:$0xff] 0.0
          %327 = vst [vmem:[#allocation2 + $0x328] sm:$0xff] 0.0
          %328 = vst [vmem:[#allocation2 + $0x330] sm:$0xff] 0.0
          %329 = vst [vmem:[#allocation2 + $0x338] sm:$0xff] 0.0
          %330 = vst [vmem:[#allocation2 + $0x340] sm:$0xff] 0.0
          %331 = vst [vmem:[#allocation2 + $0x348] sm:$0xff] 0.0
          %332 = vst [vmem:[#allocation2 + $0x350] sm:$0xff] 0.0
          %333 = vst [vmem:[#allocation2 + $0x358] sm:$0xff] 0.0
          %334 = vst [vmem:[#allocation2 + $0x360] sm:$0xff] 0.0
          %335 = vst [vmem:[#allocation2 + $0x368] sm:$0xff] 0.0
          %336 = vst [vmem:[#allocation2 + $0x370] sm:$0xff] 0.0
          %337 = vst [vmem:[#allocation2 + $0x378] sm:$0xff] 0.0
          %338 = vst [vmem:[#allocation2 + $0x380] sm:$0xff] 0.0
          %339 = vst [vmem:[#allocation2 + $0x388] sm:$0xff] 0.0
          %340 = vst [vmem:[#allocation2 + $0x390] sm:$0xff] 0.0
          %341 = vst [vmem:[#allocation2 + $0x398] sm:$0xff] 0.0
          %342 = vst [vmem:[#allocation2 + $0x3a0] sm:$0xff] 0.0
          %343 = vst [vmem:[#allocation2 + $0x3a8] sm:$0xff] 0.0
          %344 = vst [vmem:[#allocation2 + $0x3b0] sm:$0xff] 0.0
          %345 = vst [vmem:[#allocation2 + $0x3b8] sm:$0xff] 0.0
          %346 = vst [vmem:[#allocation2 + $0x3c0] sm:$0xff] 0.0
          %347 = vst [vmem:[#allocation2 + $0x3c8] sm:$0xff] 0.0
          %348 = vst [vmem:[#allocation2 + $0x3d0] sm:$0xff] 0.0
          %349 = vst [vmem:[#allocation2 + $0x3d8] sm:$0xff] 0.0
          %350 = vst [vmem:[#allocation2 + $0x3e0] sm:$0xff] 0.0
          %351 = vst [vmem:[#allocation2 + $0x3e8] sm:$0xff] 0.0
          %352 = vst [vmem:[#allocation2 + $0x3f0] sm:$0xff] 0.0
          %353 = vst [vmem:[#allocation2 + $0x3f8] sm:$0xff] 0.0
        $region40: #{faster_rcnn_forward.6} parent=31 // pred_fallthru
          _
        %v354 = vld [vmem:[#allocation2] sm:$0xff]
        %v355 = vld [vmem:[#allocation2 + $0x8] sm:$0xff]
        %v356 = vld [vmem:[#allocation2 + $0x10] sm:$0xff]
        %v357 = vld [vmem:[#allocation2 + $0x18] sm:$0xff]
        %v358 = vld [vmem:[#allocation2 + $0x20] sm:$0xff]
        %v359 = vld [vmem:[#allocation2 + $0x28] sm:$0xff]
        %v360 = vld [vmem:[#allocation2 + $0x30] sm:$0xff]
        %v361 = vld [vmem:[#allocation2 + $0x38] sm:$0xff]
        %v362 = vld [vmem:[#allocation2 + $0x40] sm:$0xff]
        %v363 = vld [vmem:[#allocation2 + $0x48] sm:$0xff]
        %v364 = vld [vmem:[#allocation2 + $0x50] sm:$0xff]
        %v365 = vld [vmem:[#allocation2 + $0x58] sm:$0xff]
        %v366 = vld [vmem:[#allocation2 + $0x60] sm:$0xff]
        %v367 = vld [vmem:[#allocation2 + $0x68] sm:$0xff]
        %v368 = vld [vmem:[#allocation2 + $0x70] sm:$0xff]
        %v369 = vld [vmem:[#allocation2 + $0x78] sm:$0xff]
        %v370 = vld [vmem:[#allocation2 + $0x80] sm:$0xff]
        %v371 = vld [vmem:[#allocation2 + $0x88] sm:$0xff]
        %v372 = vld [vmem:[#allocation2 + $0x90] sm:$0xff]
        %v373 = vld [vmem:[#allocation2 + $0x98] sm:$0xff]
        %v374 = vld [vmem:[#allocation2 + $0xa0] sm:$0xff]
        %v375 = vld [vmem:[#allocation2 + $0xa8] sm:$0xff]
        %v376 = vld [vmem:[#allocation2 + $0xb0] sm:$0xff]
        %v377 = vld [vmem:[#allocation2 + $0xb8] sm:$0xff]
        %v378 = vld [vmem:[#allocation2 + $0xc0] sm:$0xff]
        %v379 = vld [vmem:[#allocation2 + $0xc8] sm:$0xff]
        %v380 = vld [vmem:[#allocation2 + $0xd0] sm:$0xff]
        %v381 = vld [vmem:[#allocation2 + $0xd8] sm:$0xff]
        %v382 = vld [vmem:[#allocation2 + $0xe0] sm:$0xff]
        %v383 = vld [vmem:[#allocation2 + $0xe8] sm:$0xff]
        %v384 = vld [vmem:[#allocation2 + $0xf0] sm:$0xff]
        %v385 = vld [vmem:[#allocation2 + $0xf8] sm:$0xff]
        %v386 = vld [vmem:[#allocation2 + $0x100] sm:$0xff]
        %v387 = vld [vmem:[#allocation2 + $0x108] sm:$0xff]
        %v388 = vld [vmem:[#allocation2 + $0x110] sm:$0xff]
        %v389 = vld [vmem:[#allocation2 + $0x118] sm:$0xff]
        %v390 = vld [vmem:[#allocation2 + $0x120] sm:$0xff]
        %v391 = vld [vmem:[#allocation2 + $0x128] sm:$0xff]
        %v392 = vld [vmem:[#allocation2 + $0x130] sm:$0xff]
        %v393 = vld [vmem:[#allocation2 + $0x138] sm:$0xff]
        %v394 = vld [vmem:[#allocation2 + $0x140] sm:$0xff]
        %v395 = vld [vmem:[#allocation2 + $0x148] sm:$0xff]
        %v396 = vld [vmem:[#allocation2 + $0x150] sm:$0xff]
        %v397 = vld [vmem:[#allocation2 + $0x158] sm:$0xff]
        %v398 = vld [vmem:[#allocation2 + $0x160] sm:$0xff]
        %v399 = vld [vmem:[#allocation2 + $0x168] sm:$0xff]
        %v400 = vld [vmem:[#allocation2 + $0x170] sm:$0xff]
        %v401 = vld [vmem:[#allocation2 + $0x178] sm:$0xff]
        %v402 = vld [vmem:[#allocation2 + $0x180] sm:$0xff]
        %v403 = vld [vmem:[#allocation2 + $0x188] sm:$0xff]
        %v404 = vld [vmem:[#allocation2 + $0x190] sm:$0xff]
        %v405 = vld [vmem:[#allocation2 + $0x198] sm:$0xff]
        %v406 = vld [vmem:[#allocation2 + $0x1a0] sm:$0xff]
        %v407 = vld [vmem:[#allocation2 + $0x1a8] sm:$0xff]
        %v408 = vld [vmem:[#allocation2 + $0x1b0] sm:$0xff]
        %v409 = vld [vmem:[#allocation2 + $0x1b8] sm:$0xff]
        %v410 = vld [vmem:[#allocation2 + $0x1c0] sm:$0xff]
        %v411 = vld [vmem:[#allocation2 + $0x1c8] sm:$0xff]
        %v412 = vld [vmem:[#allocation2 + $0x1d0] sm:$0xff]
        %v413 = vld [vmem:[#allocation2 + $0x1d8] sm:$0xff]
        %v414 = vld [vmem:[#allocation2 + $0x1e0] sm:$0xff]
        %v415 = vld [vmem:[#allocation2 + $0x1e8] sm:$0xff]
        %v416 = vld [vmem:[#allocation2 + $0x1f0] sm:$0xff]
        %v417 = vld [vmem:[#allocation2 + $0x1f8] sm:$0xff]
        %v418 = vld [vmem:[#allocation2 + $0x200] sm:$0xff]
        %v419 = vld [vmem:[#allocation2 + $0x208] sm:$0xff]
        %v420 = vld [vmem:[#allocation2 + $0x210] sm:$0xff]
        %v421 = vld [vmem:[#allocation2 + $0x218] sm:$0xff]
        %v422 = vld [vmem:[#allocation2 + $0x220] sm:$0xff]
        %v423 = vld [vmem:[#allocation2 + $0x228] sm:$0xff]
        %v424 = vld [vmem:[#allocation2 + $0x230] sm:$0xff]
        %v425 = vld [vmem:[#allocation2 + $0x238] sm:$0xff]
        %v426 = vld [vmem:[#allocation2 + $0x240] sm:$0xff]
        %v427 = vld [vmem:[#allocation2 + $0x248] sm:$0xff]
        %v428 = vld [vmem:[#allocation2 + $0x250] sm:$0xff]
        %v429 = vld [vmem:[#allocation2 + $0x258] sm:$0xff]
        %v430 = vld [vmem:[#allocation2 + $0x260] sm:$0xff]
        %v431 = vld [vmem:[#allocation2 + $0x268] sm:$0xff]
        %v432 = vld [vmem:[#allocation2 + $0x270] sm:$0xff]
        %v433 = vld [vmem:[#allocation2 + $0x278] sm:$0xff]
        %v434 = vld [vmem:[#allocation2 + $0x280] sm:$0xff]
        %v435 = vld [vmem:[#allocation2 + $0x288] sm:$0xff]
        %v436 = vld [vmem:[#allocation2 + $0x290] sm:$0xff]
        %v437 = vld [vmem:[#allocation2 + $0x298] sm:$0xff]
        %v438 = vld [vmem:[#allocation2 + $0x2a0] sm:$0xff]
        %v439 = vld [vmem:[#allocation2 + $0x2a8] sm:$0xff]
        %v440 = vld [vmem:[#allocation2 + $0x2b0] sm:$0xff]
        %v441 = vld [vmem:[#allocation2 + $0x2b8] sm:$0xff]
        %v442 = vld [vmem:[#allocation2 + $0x2c0] sm:$0xff]
        %v443 = vld [vmem:[#allocation2 + $0x2c8] sm:$0xff]
        %v444 = vld [vmem:[#allocation2 + $0x2d0] sm:$0xff]
        %v445 = vld [vmem:[#allocation2 + $0x2d8] sm:$0xff]
        %v446 = vld [vmem:[#allocation2 + $0x2e0] sm:$0xff]
        %v447 = vld [vmem:[#allocation2 + $0x2e8] sm:$0xff]
        %v448 = vld [vmem:[#allocation2 + $0x2f0] sm:$0xff]
        %v449 = vld [vmem:[#allocation2 + $0x2f8] sm:$0xff]
        %v450 = vld [vmem:[#allocation2 + $0x300] sm:$0xff]
        %v451 = vld [vmem:[#allocation2 + $0x308] sm:$0xff]
        %v452 = vld [vmem:[#allocation2 + $0x310] sm:$0xff]
        %v453 = vld [vmem:[#allocation2 + $0x318] sm:$0xff]
        %v454 = vld [vmem:[#allocation2 + $0x320] sm:$0xff]
        %v455 = vld [vmem:[#allocation2 + $0x328] sm:$0xff]
        %v456 = vld [vmem:[#allocation2 + $0x330] sm:$0xff]
        %v457 = vld [vmem:[#allocation2 + $0x338] sm:$0xff]
        %v458 = vld [vmem:[#allocation2 + $0x340] sm:$0xff]
        %v459 = vld [vmem:[#allocation2 + $0x348] sm:$0xff]
        %v460 = vld [vmem:[#allocation2 + $0x350] sm:$0xff]
        %v461 = vld [vmem:[#allocation2 + $0x358] sm:$0xff]
        %v462 = vld [vmem:[#allocation2 + $0x360] sm:$0xff]
        %v463 = vld [vmem:[#allocation2 + $0x368] sm:$0xff]
        %v464 = vld [vmem:[#allocation2 + $0x370] sm:$0xff]
        %v465 = vld [vmem:[#allocation2 + $0x378] sm:$0xff]
        %v466 = vld [vmem:[#allocation2 + $0x380] sm:$0xff]
        %v467 = vld [vmem:[#allocation2 + $0x388] sm:$0xff]
        %v468 = vld [vmem:[#allocation2 + $0x390] sm:$0xff]
        %v469 = vld [vmem:[#allocation2 + $0x398] sm:$0xff]
        %v470 = vld [vmem:[#allocation2 + $0x3a0] sm:$0xff]
        %v471 = vld [vmem:[#allocation2 + $0x3a8] sm:$0xff]
        %v472 = vld [vmem:[#allocation2 + $0x3b0] sm:$0xff]
        %v473 = vld [vmem:[#allocation2 + $0x3b8] sm:$0xff]
        %v474 = vld [vmem:[#allocation2 + $0x3c0] sm:$0xff]
        %v475 = vld [vmem:[#allocation2 + $0x3c8] sm:$0xff]
        %v476 = vld [vmem:[#allocation2 + $0x3d0] sm:$0xff]
        %v477 = vld [vmem:[#allocation2 + $0x3d8] sm:$0xff]
        %v478 = vld [vmem:[#allocation2 + $0x3e0] sm:$0xff]
        %v479 = vld [vmem:[#allocation2 + $0x3e8] sm:$0xff]
        %v480 = vld [vmem:[#allocation2 + $0x3f0] sm:$0xff]
        %v481 = vld [vmem:[#allocation2 + $0x3f8] sm:$0xff]
        %v482 = vld [vmem:[%s212] sm:$0xf]
        %v483 = vld [vmem:[%s212 + $0x4] sm:$0xf]
        %v484 = vld [vmem:[%s212 + $0x8] sm:$0xf]
        %v485 = vld [vmem:[%s212 + $0xc] sm:$0xf]
        %v486 = vld [vmem:[%s212 + $0x10] sm:$0xf]
        %v487 = vld [vmem:[%s212 + $0x14] sm:$0xf]
        %v488 = vld [vmem:[%s212 + $0x18] sm:$0xf]
        %v489 = vld [vmem:[%s212 + $0x1c] sm:$0xf]
        %v490 = vld [vmem:[%s212 + $0x20] sm:$0xf]
        %v491 = vld [vmem:[%s212 + $0x24] sm:$0xf]
        %v492 = vld [vmem:[%s212 + $0x28] sm:$0xf]
        %v493 = vld [vmem:[%s212 + $0x2c] sm:$0xf]
        %v494 = vld [vmem:[%s212 + $0x30] sm:$0xf]
        %v495 = vld [vmem:[%s212 + $0x34] sm:$0xf]
        %v496 = vld [vmem:[%s212 + $0x38] sm:$0xf]
        %v497 = vld [vmem:[%s212 + $0x3c] sm:$0xf]
        %v498 = vld [vmem:[%s212 + $0x40] sm:$0xf]
        %v499 = vld [vmem:[%s212 + $0x44] sm:$0xf]
        %v500 = vld [vmem:[%s212 + $0x48] sm:$0xf]
        %v501 = vld [vmem:[%s212 + $0x4c] sm:$0xf]
        %v502 = vld [vmem:[%s212 + $0x50] sm:$0xf]
        %v503 = vld [vmem:[%s212 + $0x54] sm:$0xf]
        %v504 = vld [vmem:[%s212 + $0x58] sm:$0xf]
        %v505 = vld [vmem:[%s212 + $0x5c] sm:$0xf]
        %v506 = vld [vmem:[%s212 + $0x60] sm:$0xf]
        %v507 = vld [vmem:[%s212 + $0x64] sm:$0xf]
        %v508 = vld [vmem:[%s212 + $0x68] sm:$0xf]
        %v509 = vld [vmem:[%s212 + $0x6c] sm:$0xf]
        %v510 = vld [vmem:[%s212 + $0x70] sm:$0xf]
        %v511 = vld [vmem:[%s212 + $0x74] sm:$0xf]
        %v512 = vld [vmem:[%s212 + $0x78] sm:$0xf]
        %v513 = vld [vmem:[%s212 + $0x7c] sm:$0xf]
        %v514 = vld [vmem:[%s212 + $0x80] sm:$0xf]
        %v515 = vld [vmem:[%s212 + $0x84] sm:$0xf]
        %v516 = vld [vmem:[%s212 + $0x88] sm:$0xf]
        %v517 = vld [vmem:[%s212 + $0x8c] sm:$0xf]
        %v518 = vld [vmem:[%s212 + $0x90] sm:$0xf]
        %v519 = vld [vmem:[%s212 + $0x94] sm:$0xf]
        %v520 = vld [vmem:[%s212 + $0x98] sm:$0xf]
        %v521 = vld [vmem:[%s212 + $0x9c] sm:$0xf]
        %v522 = vld [vmem:[%s212 + $0xa0] sm:$0xf]
        %v523 = vld [vmem:[%s212 + $0xa4] sm:$0xf]
        %v524 = vld [vmem:[%s212 + $0xa8] sm:$0xf]
        %v525 = vld [vmem:[%s212 + $0xac] sm:$0xf]
        %v526 = vld [vmem:[%s212 + $0xb0] sm:$0xf]
        %v527 = vld [vmem:[%s212 + $0xb4] sm:$0xf]
        %v528 = vld [vmem:[%s212 + $0xb8] sm:$0xf]
        %v529 = vld [vmem:[%s212 + $0xbc] sm:$0xf]
        %v530 = vld [vmem:[%s212 + $0xc0] sm:$0xf]
        %v531 = vld [vmem:[%s212 + $0xc4] sm:$0xf]
        %v532 = vld [vmem:[%s212 + $0xc8] sm:$0xf]
        %v533 = vld [vmem:[%s212 + $0xcc] sm:$0xf]
        %v534 = vld [vmem:[%s212 + $0xd0] sm:$0xf]
        %v535 = vld [vmem:[%s212 + $0xd4] sm:$0xf]
        %v536 = vld [vmem:[%s212 + $0xd8] sm:$0xf]
        %v537 = vld [vmem:[%s212 + $0xdc] sm:$0xf]
        %v538 = vld [vmem:[%s212 + $0xe0] sm:$0xf]
        %v539 = vld [vmem:[%s212 + $0xe4] sm:$0xf]
        %v540 = vld [vmem:[%s212 + $0xe8] sm:$0xf]
        %v541 = vld [vmem:[%s212 + $0xec] sm:$0xf]
        %v542 = vld [vmem:[%s212 + $0xf0] sm:$0xf]
        %v543 = vld [vmem:[%s212 + $0xf4] sm:$0xf]
        %v544 = vld [vmem:[%s212 + $0xf8] sm:$0xf]
        %v545 = vld [vmem:[%s212 + $0xfc] sm:$0xf]
        %v546 = vld [vmem:[%s212 + $0x100] sm:$0xf]
        %v547 = vld [vmem:[%s212 + $0x104] sm:$0xf]
        %v548 = vld [vmem:[%s212 + $0x108] sm:$0xf]
        %v549 = vld [vmem:[%s212 + $0x10c] sm:$0xf]
        %v550 = vld [vmem:[%s212 + $0x110] sm:$0xf]
        %v551 = vld [vmem:[%s212 + $0x114] sm:$0xf]
        %v552 = vld [vmem:[%s212 + $0x118] sm:$0xf]
        %v553 = vld [vmem:[%s212 + $0x11c] sm:$0xf]
        %v554 = vld [vmem:[%s212 + $0x120] sm:$0xf]
        %v555 = vld [vmem:[%s212 + $0x124] sm:$0xf]
        %v556 = vld [vmem:[%s212 + $0x128] sm:$0xf]
        %v557 = vld [vmem:[%s212 + $0x12c] sm:$0xf]
        %v558 = vld [vmem:[%s212 + $0x130] sm:$0xf]
        %v559 = vld [vmem:[%s212 + $0x134] sm:$0xf]
        %v560 = vld [vmem:[%s212 + $0x138] sm:$0xf]
        %v561 = vld [vmem:[%s212 + $0x13c] sm:$0xf]
        %v562 = vld [vmem:[%s212 + $0x140] sm:$0xf]
        %v563 = vld [vmem:[%s212 + $0x144] sm:$0xf]
        %v564 = vld [vmem:[%s212 + $0x148] sm:$0xf]
        %v565 = vld [vmem:[%s212 + $0x14c] sm:$0xf]
        %v566 = vld [vmem:[%s212 + $0x150] sm:$0xf]
        %v567 = vld [vmem:[%s212 + $0x154] sm:$0xf]
        %v568 = vld [vmem:[%s212 + $0x158] sm:$0xf]
        %v569 = vld [vmem:[%s212 + $0x15c] sm:$0xf]
        %v570 = vld [vmem:[%s212 + $0x160] sm:$0xf]
        %v571 = vld [vmem:[%s212 + $0x164] sm:$0xf]
        %v572 = vld [vmem:[%s212 + $0x168] sm:$0xf]
        %v573 = vld [vmem:[%s212 + $0x16c] sm:$0xf]
        %v574 = vld [vmem:[%s212 + $0x170] sm:$0xf]
        %v575 = vld [vmem:[%s212 + $0x174] sm:$0xf]
        %v576 = vld [vmem:[%s212 + $0x178] sm:$0xf]
        %v577 = vld [vmem:[%s212 + $0x17c] sm:$0xf]
        %v578 = vld [vmem:[%s212 + $0x180] sm:$0xf]
        %v579 = vld [vmem:[%s212 + $0x184] sm:$0xf]
        %v580 = vld [vmem:[%s212 + $0x188] sm:$0xf]
        %v581 = vld [vmem:[%s212 + $0x18c] sm:$0xf]
        %v582 = vld [vmem:[%s212 + $0x190] sm:$0xf]
        %v583 = vld [vmem:[%s212 + $0x194] sm:$0xf]
        %v584 = vld [vmem:[%s212 + $0x198] sm:$0xf]
        %v585 = vld [vmem:[%s212 + $0x19c] sm:$0xf]
        %v586 = vld [vmem:[%s212 + $0x1a0] sm:$0xf]
        %v587 = vld [vmem:[%s212 + $0x1a4] sm:$0xf]
        %v588 = vld [vmem:[%s212 + $0x1a8] sm:$0xf]
        %v589 = vld [vmem:[%s212 + $0x1ac] sm:$0xf]
        %v590 = vld [vmem:[%s212 + $0x1b0] sm:$0xf]
        %v591 = vld [vmem:[%s212 + $0x1b4] sm:$0xf]
        %v592 = vld [vmem:[%s212 + $0x1b8] sm:$0xf]
        %v593 = vld [vmem:[%s212 + $0x1bc] sm:$0xf]
        %v594 = vld [vmem:[%s212 + $0x1c0] sm:$0xf]
        %v595 = vld [vmem:[%s212 + $0x1c4] sm:$0xf]
        %v596 = vld [vmem:[%s212 + $0x1c8] sm:$0xf]
        %v597 = vld [vmem:[%s212 + $0x1cc] sm:$0xf]
        %v598 = vld [vmem:[%s212 + $0x1d0] sm:$0xf]
        %v599 = vld [vmem:[%s212 + $0x1d4] sm:$0xf]
        %v600 = vld [vmem:[%s212 + $0x1d8] sm:$0xf]
        %v601 = vld [vmem:[%s212 + $0x1dc] sm:$0xf]
        %v602 = vld [vmem:[%s212 + $0x1e0] sm:$0xf]
        %v603 = vld [vmem:[%s212 + $0x1e4] sm:$0xf]
        %v604 = vld [vmem:[%s212 + $0x1e8] sm:$0xf]
        %v605 = vld [vmem:[%s212 + $0x1ec] sm:$0xf]
        %v606 = vld [vmem:[%s212 + $0x1f0] sm:$0xf]
        %v607 = vld [vmem:[%s212 + $0x1f4] sm:$0xf]
        %v608 = vld [vmem:[%s212 + $0x1f8] sm:$0xf]
        %v609 = vld [vmem:[%s212 + $0x1fc] sm:$0xf]
        %v610 = vld [vmem:[#allocation3] sm:$0xf]
        %v611 = vld [vmem:[#allocation3 + $0x4] sm:$0xf]
        %v612 = vld [vmem:[#allocation3 + $0x8] sm:$0xf]
        %v613 = vld [vmem:[#allocation3 + $0xc] sm:$0x3]
        %v742 = vunpack.c.l.b16 %v482
        %v743 = vunpack.c.l.b16 %v483
        %v744 = vunpack.c.l.b16 %v484
        %v745 = vunpack.c.l.b16 %v485
        %v746 = vunpack.c.l.b16 %v486
        %v747 = vunpack.c.l.b16 %v487
        %v748 = vunpack.c.l.b16 %v488
        %v749 = vunpack.c.l.b16 %v489
        %v750 = vunpack.c.l.b16 %v490
        %v751 = vunpack.c.l.b16 %v491
        %v752 = vunpack.c.l.b16 %v492
        %v753 = vunpack.c.l.b16 %v493
        %v754 = vunpack.c.l.b16 %v494
        %v755 = vunpack.c.l.b16 %v495
        %v756 = vunpack.c.l.b16 %v496
        %v757 = vunpack.c.l.b16 %v497
        %v758 = vunpack.c.l.b16 %v498
        %v759 = vunpack.c.l.b16 %v499
        %v760 = vunpack.c.l.b16 %v500
        %v761 = vunpack.c.l.b16 %v501
        %v762 = vunpack.c.l.b16 %v502
        %v763 = vunpack.c.l.b16 %v503
        %v764 = vunpack.c.l.b16 %v504
        %v765 = vunpack.c.l.b16 %v505
        %v766 = vunpack.c.l.b16 %v506
        %v767 = vunpack.c.l.b16 %v507
        %v768 = vunpack.c.l.b16 %v508
        %v769 = vunpack.c.l.b16 %v509
        %v770 = vunpack.c.l.b16 %v510
        %v771 = vunpack.c.l.b16 %v511
        %v772 = vunpack.c.l.b16 %v512
        %v773 = vunpack.c.l.b16 %v513
        %v774 = vunpack.c.l.b16 %v514
        %v775 = vunpack.c.l.b16 %v515
        %v776 = vunpack.c.l.b16 %v516
        %v777 = vunpack.c.l.b16 %v517
        %v778 = vunpack.c.l.b16 %v518
        %v779 = vunpack.c.l.b16 %v519
        %v780 = vunpack.c.l.b16 %v520
        %v781 = vunpack.c.l.b16 %v521
        %v782 = vunpack.c.l.b16 %v522
        %v783 = vunpack.c.l.b16 %v523
        %v784 = vunpack.c.l.b16 %v524
        %v785 = vunpack.c.l.b16 %v525
        %v786 = vunpack.c.l.b16 %v526
        %v787 = vunpack.c.l.b16 %v527
        %v788 = vunpack.c.l.b16 %v528
        %v789 = vunpack.c.l.b16 %v529
        %v790 = vunpack.c.l.b16 %v530
        %v791 = vunpack.c.l.b16 %v531
        %v792 = vunpack.c.l.b16 %v532
        %v793 = vunpack.c.l.b16 %v533
        %v794 = vunpack.c.l.b16 %v534
        %v795 = vunpack.c.l.b16 %v535
        %v796 = vunpack.c.l.b16 %v536
        %v797 = vunpack.c.l.b16 %v537
        %v798 = vunpack.c.l.b16 %v538
        %v799 = vunpack.c.l.b16 %v539
        %v800 = vunpack.c.l.b16 %v540
        %v801 = vunpack.c.l.b16 %v541
        %v802 = vunpack.c.l.b16 %v542
        %v803 = vunpack.c.l.b16 %v543
        %v804 = vunpack.c.l.b16 %v544
        %v805 = vunpack.c.l.b16 %v545
        %v806 = vunpack.c.l.b16 %v546
        %v807 = vunpack.c.l.b16 %v547
        %v808 = vunpack.c.l.b16 %v548
        %v809 = vunpack.c.l.b16 %v549
        %v810 = vunpack.c.l.b16 %v550
        %v811 = vunpack.c.l.b16 %v551
        %v812 = vunpack.c.l.b16 %v552
        %v813 = vunpack.c.l.b16 %v553
        %v814 = vunpack.c.l.b16 %v554
        %v815 = vunpack.c.l.b16 %v555
        %v816 = vunpack.c.l.b16 %v556
        %v817 = vunpack.c.l.b16 %v557
        %v818 = vunpack.c.l.b16 %v558
        %v819 = vunpack.c.l.b16 %v559
        %v820 = vunpack.c.l.b16 %v560
        %v821 = vunpack.c.l.b16 %v561
        %v822 = vunpack.c.l.b16 %v562
        %v823 = vunpack.c.l.b16 %v563
        %v824 = vunpack.c.l.b16 %v564
        %v825 = vunpack.c.l.b16 %v565
        %v826 = vunpack.c.l.b16 %v566
        %v827 = vunpack.c.l.b16 %v567
        %v828 = vunpack.c.l.b16 %v568
        %v829 = vunpack.c.l.b16 %v569
        %v830 = vunpack.c.l.b16 %v570
        %v831 = vunpack.c.l.b16 %v571
        %v832 = vunpack.c.l.b16 %v572
        %v833 = vunpack.c.l.b16 %v573
        %v834 = vunpack.c.l.b16 %v574
        %v835 = vunpack.c.l.b16 %v575
        %v836 = vunpack.c.l.b16 %v576
        %v837 = vunpack.c.l.b16 %v577
        %v838 = vunpack.c.l.b16 %v578
        %v839 = vunpack.c.l.b16 %v579
        %v840 = vunpack.c.l.b16 %v580
        %v841 = vunpack.c.l.b16 %v581
        %v842 = vunpack.c.l.b16 %v582
        %v843 = vunpack.c.l.b16 %v583
        %v844 = vunpack.c.l.b16 %v584
        %v845 = vunpack.c.l.b16 %v585
        %v846 = vunpack.c.l.b16 %v586
        %v847 = vunpack.c.l.b16 %v587
        %v848 = vunpack.c.l.b16 %v588
        %v849 = vunpack.c.l.b16 %v589
        %v850 = vunpack.c.l.b16 %v590
        %v851 = vunpack.c.l.b16 %v591
        %v852 = vunpack.c.l.b16 %v592
        %v853 = vunpack.c.l.b16 %v593
        %v854 = vunpack.c.l.b16 %v594
        %v855 = vunpack.c.l.b16 %v595
        %v856 = vunpack.c.l.b16 %v596
        %v857 = vunpack.c.l.b16 %v597
        %v858 = vunpack.c.l.b16 %v598
        %v859 = vunpack.c.l.b16 %v599
        %v860 = vunpack.c.l.b16 %v600
        %v861 = vunpack.c.l.b16 %v601
        %v862 = vunpack.c.l.b16 %v602
        %v863 = vunpack.c.l.b16 %v603
        %v864 = vunpack.c.l.b16 %v604
        %v865 = vunpack.c.l.b16 %v605
        %v866 = vunpack.c.l.b16 %v606
        %v867 = vunpack.c.l.b16 %v607
        %v868 = vunpack.c.l.b16 %v608
        %v869 = vunpack.c.l.b16 %v609
        %v870 = vpack.c.b16 %v743, %v742
        %v871 = vpack.c.b16 %v745, %v744
        %v872 = vpack.c.b16 %v747, %v746
        %v873 = vpack.c.b16 %v749, %v748
        %v874 = vpack.c.b16 %v751, %v750
        %v875 = vpack.c.b16 %v753, %v752
        %v876 = vpack.c.b16 %v755, %v754
        %v877 = vpack.c.b16 %v757, %v756
        %v878 = vpack.c.b16 %v759, %v758
        %v879 = vpack.c.b16 %v761, %v760
        %v880 = vpack.c.b16 %v763, %v762
        %v881 = vpack.c.b16 %v765, %v764
        %v882 = vpack.c.b16 %v767, %v766
        %v883 = vpack.c.b16 %v769, %v768
        %v884 = vpack.c.b16 %v771, %v770
        %v885 = vpack.c.b16 %v773, %v772
        %v886 = vpack.c.b16 %v775, %v774
        %v887 = vpack.c.b16 %v777, %v776
        %v888 = vpack.c.b16 %v779, %v778
        %v889 = vpack.c.b16 %v781, %v780
        %v890 = vpack.c.b16 %v783, %v782
        %v891 = vpack.c.b16 %v785, %v784
        %v892 = vpack.c.b16 %v787, %v786
        %v893 = vpack.c.b16 %v789, %v788
        %v894 = vpack.c.b16 %v791, %v790
        %v895 = vpack.c.b16 %v793, %v792
        %v896 = vpack.c.b16 %v795, %v794
        %v897 = vpack.c.b16 %v797, %v796
        %v898 = vpack.c.b16 %v799, %v798
        %v899 = vpack.c.b16 %v801, %v800
        %v900 = vpack.c.b16 %v803, %v802
        %v901 = vpack.c.b16 %v805, %v804
        %v902 = vpack.c.b16 %v807, %v806
        %v903 = vpack.c.b16 %v809, %v808
        %v904 = vpack.c.b16 %v811, %v810
        %v905 = vpack.c.b16 %v813, %v812
        %v906 = vpack.c.b16 %v815, %v814
        %v907 = vpack.c.b16 %v817, %v816
        %v908 = vpack.c.b16 %v819, %v818
        %v909 = vpack.c.b16 %v821, %v820
        %v910 = vpack.c.b16 %v823, %v822
        %v911 = vpack.c.b16 %v825, %v824
        %v912 = vpack.c.b16 %v827, %v826
        %v913 = vpack.c.b16 %v829, %v828
        %v914 = vpack.c.b16 %v831, %v830
        %v915 = vpack.c.b16 %v833, %v832
        %v916 = vpack.c.b16 %v835, %v834
        %v917 = vpack.c.b16 %v837, %v836
        %v918 = vpack.c.b16 %v839, %v838
        %v919 = vpack.c.b16 %v841, %v840
        %v920 = vpack.c.b16 %v843, %v842
        %v921 = vpack.c.b16 %v845, %v844
        %v922 = vpack.c.b16 %v847, %v846
        %v923 = vpack.c.b16 %v849, %v848
        %v924 = vpack.c.b16 %v851, %v850
        %v925 = vpack.c.b16 %v853, %v852
        %v926 = vpack.c.b16 %v855, %v854
        %v927 = vpack.c.b16 %v857, %v856
        %v928 = vpack.c.b16 %v859, %v858
        %v929 = vpack.c.b16 %v861, %v860
        %v930 = vpack.c.b16 %v863, %v862
        %v931 = vpack.c.b16 %v865, %v864
        %v932 = vpack.c.b16 %v867, %v866
        %v933 = vpack.c.b16 %v869, %v868
        %v938 = vunpack.c.l.b16 %v610
        %v939 = vunpack.c.l.b16 %v611
        %v940 = vunpack.c.l.b16 %v612
        %v941 = vunpack.c.l.b16 %v613
        %v942 = vpack.c.b16 %v939, %v938
        %v943 = vpack.c.b16 %v941, %v940
        %vm945 = vcmask 220160
        %v947 = vsel %vm945, %v870, 0
        %v950 = vsel %vm945, %v871, 0
        %v953 = vsel %vm945, %v872, 0
        %v956 = vsel %vm945, %v873, 0
        %v959 = vsel %vm945, %v874, 0
        %v962 = vsel %vm945, %v875, 0
        %v965 = vsel %vm945, %v876, 0
        %v968 = vsel %vm945, %v877, 0
        %v971 = vsel %vm945, %v878, 0
        %v974 = vsel %vm945, %v879, 0
        %v977 = vsel %vm945, %v880, 0
        %v980 = vsel %vm945, %v881, 0
        %v983 = vsel %vm945, %v882, 0
        %v986 = vsel %vm945, %v883, 0
        %v989 = vsel %vm945, %v884, 0
        %v992 = vsel %vm945, %v885, 0
        %v995 = vsel %vm945, %v886, 0
        %v998 = vsel %vm945, %v887, 0
        %v1001 = vsel %vm945, %v888, 0
        %v1004 = vsel %vm945, %v889, 0
        %v1007 = vsel %vm945, %v890, 0
        %v1010 = vsel %vm945, %v891, 0
        %v1013 = vsel %vm945, %v892, 0
        %v1016 = vsel %vm945, %v893, 0
        %v1019 = vsel %vm945, %v894, 0
        %v1022 = vsel %vm945, %v895, 0
        %v1025 = vsel %vm945, %v896, 0
        %v1028 = vsel %vm945, %v897, 0
        %v1031 = vsel %vm945, %v898, 0
        %v1034 = vsel %vm945, %v899, 0
        %v1037 = vsel %vm945, %v900, 0
        %v1040 = vsel %vm945, %v901, 0
        %v1043 = vsel %vm945, %v902, 0
        %v1046 = vsel %vm945, %v903, 0
        %v1049 = vsel %vm945, %v904, 0
        %v1052 = vsel %vm945, %v905, 0
        %v1055 = vsel %vm945, %v906, 0
        %v1058 = vsel %vm945, %v907, 0
        %v1061 = vsel %vm945, %v908, 0
        %v1064 = vsel %vm945, %v909, 0
        %v1067 = vsel %vm945, %v910, 0
        %v1070 = vsel %vm945, %v911, 0
        %v1073 = vsel %vm945, %v912, 0
        %v1076 = vsel %vm945, %v913, 0
        %v1079 = vsel %vm945, %v914, 0
        %v1082 = vsel %vm945, %v915, 0
        %v1085 = vsel %vm945, %v916, 0
        %v1088 = vsel %vm945, %v917, 0
        %v1091 = vsel %vm945, %v918, 0
        %v1094 = vsel %vm945, %v919, 0
        %v1097 = vsel %vm945, %v920, 0
        %v1100 = vsel %vm945, %v921, 0
        %v1103 = vsel %vm945, %v922, 0
        %v1106 = vsel %vm945, %v923, 0
        %v1109 = vsel %vm945, %v924, 0
        %v1112 = vsel %vm945, %v925, 0
        %v1115 = vsel %vm945, %v926, 0
        %v1118 = vsel %vm945, %v927, 0
        %v1121 = vsel %vm945, %v928, 0
        %v1124 = vsel %vm945, %v929, 0
        %v1127 = vsel %vm945, %v930, 0
        %v1130 = vsel %vm945, %v931, 0
        %v1133 = vsel %vm945, %v932, 0
        %v1136 = vsel %vm945, %v933, 0
        %vm1138 = vcmask 1044480
        %vm1139 = vcmask 1045504
        %v1140 = vsel %vm1138, 4294967295, 65535
        %v1141 = vsel %vm1139, %v1140, 0
        %v1143 = vand.u32 %v943, %v1141
        %1145 = vmatprep.subr.bf16.mxu0 0
        %1146 = vmatpush1.bf16.msra.mxu0 0
        %1147 = vmatprep.subr.bf16.mxu0 0
        %1148 = vmatpush1.bf16.msra.mxu0 0
        %1149 = vmatprep.subr.bf16.mxu0 0
        %1150 = vmatpush1.bf16.msra.mxu0 0
        %1151 = vmatprep.subr.bf16.mxu0 0
        %1152 = vmatpush1.bf16.msra.mxu0 0
        %1153 = vmatprep.subr.bf16.mxu0 0
        %1154 = vmatpush1.bf16.msra.mxu0 0
        %1155 = vmatprep.subr.bf16.mxu0 0
        %1156 = vmatpush1.bf16.msra.mxu0 0
        %1157 = vmatprep.subr.bf16.mxu0 0
        %1158 = vmatpush1.bf16.msra.mxu0 %v1143
        %1159 = vmatprep.subr.bf16.mxu0 0
        %1160 = vmatpush1.bf16.msra.mxu0 %v942
        %1161 = vmatprep.subr.bf16.mxu0 0
        %1162 = vmatpush2.bf16.msra.mxu0 0
        %1163 = vmatprep.subr.bf16.mxu0 0
        %1164 = vmatpush2.bf16.msra.mxu0 0
        %1165 = vmatprep.subr.bf16.mxu0 0
        %1166 = vmatpush2.bf16.msra.mxu0 0
        %1167 = vmatprep.subr.bf16.mxu0 0
        %1168 = vmatpush2.bf16.msra.mxu0 0
        %1169 = vmatprep.subr.bf16.mxu0 0
        %1170 = vmatpush2.bf16.msra.mxu0 0
        %1171 = vmatprep.subr.bf16.mxu0 0
        %1172 = vmatpush2.bf16.msra.mxu0 0
        %1173 = vmatprep.subr.bf16.mxu0 0
        %1174 = vmatpush2.bf16.msra.mxu0 0
        %1175 = vmatprep.subr.bf16.mxu0 0
        %1176 = vmatpush2.bf16.msra.mxu0 0
        %1177 = vmatprep.mubr.bf16.mxu0 0
        %1178 = vmatmul.mubr.bf16.gmra.mxu0 %v947
        %v1179 = vpop.f32.mrf.mxu0
        %v1180 = vadd.f32 0.0, %v1179
        %v1181 = vpop.f32.mrf.mxu0
        %v1182 = vpop.f32.mrf.mxu0
        %v1183 = vadd.f32 0.0, %v1182
        %v1184 = vpop.f32.mrf.mxu0
        %1185 = vmatprep.mubr.bf16.mxu0 0
        %1186 = vmatmul.mubr.bf16.gmra.mxu0 %v950
        %v1187 = vpop.f32.mrf.mxu0
        %v1188 = vadd.f32 0.0, %v1187
        %v1189 = vpop.f32.mrf.mxu0
        %v1190 = vpop.f32.mrf.mxu0
        %v1191 = vadd.f32 0.0, %v1190
        %v1192 = vpop.f32.mrf.mxu0
        %1193 = vmatprep.mubr.bf16.mxu0 0
        %1194 = vmatmul.mubr.bf16.gmra.mxu0 %v953
        %v1195 = vpop.f32.mrf.mxu0
        %v1196 = vadd.f32 0.0, %v1195
        %v1197 = vpop.f32.mrf.mxu0
        %v1198 = vpop.f32.mrf.mxu0
        %v1199 = vadd.f32 0.0, %v1198
        %v1200 = vpop.f32.mrf.mxu0
        %1201 = vmatprep.mubr.bf16.mxu0 0
        %1202 = vmatmul.mubr.bf16.gmra.mxu0 %v956
        %v1203 = vpop.f32.mrf.mxu0
        %v1204 = vadd.f32 0.0, %v1203
        %v1205 = vpop.f32.mrf.mxu0
        %v1206 = vpop.f32.mrf.mxu0
        %v1207 = vadd.f32 0.0, %v1206
        %v1208 = vpop.f32.mrf.mxu0
        %1209 = vmatprep.mubr.bf16.mxu0 0
        %1210 = vmatmul.mubr.bf16.gmra.mxu0 %v959
        %v1211 = vpop.f32.mrf.mxu0
        %v1212 = vadd.f32 0.0, %v1211
        %v1213 = vpop.f32.mrf.mxu0
        %v1214 = vpop.f32.mrf.mxu0
        %v1215 = vadd.f32 0.0, %v1214
        %v1216 = vpop.f32.mrf.mxu0
        %1217 = vmatprep.mubr.bf16.mxu0 0
        %1218 = vmatmul.mubr.bf16.gmra.mxu0 %v962
        %v1219 = vpop.f32.mrf.mxu0
        %v1220 = vadd.f32 0.0, %v1219
        %v1221 = vpop.f32.mrf.mxu0
        %v1222 = vpop.f32.mrf.mxu0
        %v1223 = vadd.f32 0.0, %v1222
        %v1224 = vpop.f32.mrf.mxu0
        %1225 = vmatprep.mubr.bf16.mxu0 0
        %1226 = vmatmul.mubr.bf16.gmra.mxu0 %v965
        %v1227 = vpop.f32.mrf.mxu0
        %v1228 = vadd.f32 0.0, %v1227
        %v1229 = vpop.f32.mrf.mxu0
        %v1230 = vpop.f32.mrf.mxu0
        %v1231 = vadd.f32 0.0, %v1230
        %v1232 = vpop.f32.mrf.mxu0
        %1233 = vmatprep.mubr.bf16.mxu0 0
        %1234 = vmatmul.mubr.bf16.gmra.mxu0 %v968
        %v1235 = vpop.f32.mrf.mxu0
        %v1236 = vadd.f32 0.0, %v1235
        %v1237 = vpop.f32.mrf.mxu0
        %v1238 = vpop.f32.mrf.mxu0
        %v1239 = vadd.f32 0.0, %v1238
        %v1240 = vpop.f32.mrf.mxu0
        %1241 = vmatprep.mubr.bf16.mxu0 0
        %1242 = vmatmul.mubr.bf16.gmra.mxu0 %v971
        %v1243 = vpop.f32.mrf.mxu0
        %v1244 = vadd.f32 0.0, %v1243
        %v1245 = vpop.f32.mrf.mxu0
        %v1246 = vpop.f32.mrf.mxu0
        %v1247 = vadd.f32 0.0, %v1246
        %v1248 = vpop.f32.mrf.mxu0
        %1249 = vmatprep.mubr.bf16.mxu0 0
        %1250 = vmatmul.mubr.bf16.gmra.mxu0 %v974
        %v1251 = vpop.f32.mrf.mxu0
        %v1252 = vadd.f32 0.0, %v1251
        %v1253 = vpop.f32.mrf.mxu0
        %v1254 = vpop.f32.mrf.mxu0
        %v1255 = vadd.f32 0.0, %v1254
        %v1256 = vpop.f32.mrf.mxu0
        %1257 = vmatprep.mubr.bf16.mxu0 0
        %1258 = vmatmul.mubr.bf16.gmra.mxu0 %v977
        %v1259 = vpop.f32.mrf.mxu0
        %v1260 = vadd.f32 0.0, %v1259
        %v1261 = vpop.f32.mrf.mxu0
        %v1262 = vpop.f32.mrf.mxu0
        %v1263 = vadd.f32 0.0, %v1262
        %v1264 = vpop.f32.mrf.mxu0
        %1265 = vmatprep.mubr.bf16.mxu0 0
        %1266 = vmatmul.mubr.bf16.gmra.mxu0 %v980
        %v1267 = vpop.f32.mrf.mxu0
        %v1268 = vadd.f32 0.0, %v1267
        %v1269 = vpop.f32.mrf.mxu0
        %v1270 = vpop.f32.mrf.mxu0
        %v1271 = vadd.f32 0.0, %v1270
        %v1272 = vpop.f32.mrf.mxu0
        %1273 = vmatprep.mubr.bf16.mxu0 0
        %1274 = vmatmul.mubr.bf16.gmra.mxu0 %v983
        %v1275 = vpop.f32.mrf.mxu0
        %v1276 = vadd.f32 0.0, %v1275
        %v1277 = vpop.f32.mrf.mxu0
        %v1278 = vpop.f32.mrf.mxu0
        %v1279 = vadd.f32 0.0, %v1278
        %v1280 = vpop.f32.mrf.mxu0
        %1281 = vmatprep.mubr.bf16.mxu0 0
        %1282 = vmatmul.mubr.bf16.gmra.mxu0 %v986
        %v1283 = vpop.f32.mrf.mxu0
        %v1284 = vadd.f32 0.0, %v1283
        %v1285 = vpop.f32.mrf.mxu0
        %v1286 = vpop.f32.mrf.mxu0
        %v1287 = vadd.f32 0.0, %v1286
        %v1288 = vpop.f32.mrf.mxu0
        %1289 = vmatprep.mubr.bf16.mxu0 0
        %1290 = vmatmul.mubr.bf16.gmra.mxu0 %v989
        %v1291 = vpop.f32.mrf.mxu0
        %v1292 = vadd.f32 0.0, %v1291
        %v1293 = vpop.f32.mrf.mxu0
        %v1294 = vpop.f32.mrf.mxu0
        %v1295 = vadd.f32 0.0, %v1294
        %v1296 = vpop.f32.mrf.mxu0
        %1297 = vmatprep.mubr.bf16.mxu0 0
        %1298 = vmatmul.mubr.bf16.gmra.mxu0 %v992
        %v1299 = vpop.f32.mrf.mxu0
        %v1300 = vadd.f32 0.0, %v1299
        %v1301 = vpop.f32.mrf.mxu0
        %v1302 = vpop.f32.mrf.mxu0
        %v1303 = vadd.f32 0.0, %v1302
        %v1304 = vpop.f32.mrf.mxu0
        %1305 = vmatprep.mubr.bf16.mxu0 0
        %1306 = vmatmul.mubr.bf16.gmra.mxu0 %v995
        %v1307 = vpop.f32.mrf.mxu0
        %v1308 = vadd.f32 0.0, %v1307
        %v1309 = vpop.f32.mrf.mxu0
        %v1310 = vpop.f32.mrf.mxu0
        %v1311 = vadd.f32 0.0, %v1310
        %v1312 = vpop.f32.mrf.mxu0
        %1313 = vmatprep.mubr.bf16.mxu0 0
        %1314 = vmatmul.mubr.bf16.gmra.mxu0 %v998
        %v1315 = vpop.f32.mrf.mxu0
        %v1316 = vadd.f32 0.0, %v1315
        %v1317 = vpop.f32.mrf.mxu0
        %v1318 = vpop.f32.mrf.mxu0
        %v1319 = vadd.f32 0.0, %v1318
        %v1320 = vpop.f32.mrf.mxu0
        %1321 = vmatprep.mubr.bf16.mxu0 0
        %1322 = vmatmul.mubr.bf16.gmra.mxu0 %v1001
        %v1323 = vpop.f32.mrf.mxu0
        %v1324 = vadd.f32 0.0, %v1323
        %v1325 = vpop.f32.mrf.mxu0
        %v1326 = vpop.f32.mrf.mxu0
        %v1327 = vadd.f32 0.0, %v1326
        %v1328 = vpop.f32.mrf.mxu0
        %1329 = vmatprep.mubr.bf16.mxu0 0
        %1330 = vmatmul.mubr.bf16.gmra.mxu0 %v1004
        %v1331 = vpop.f32.mrf.mxu0
        %v1332 = vadd.f32 0.0, %v1331
        %v1333 = vpop.f32.mrf.mxu0
        %v1334 = vpop.f32.mrf.mxu0
        %v1335 = vadd.f32 0.0, %v1334
        %v1336 = vpop.f32.mrf.mxu0
        %1337 = vmatprep.mubr.bf16.mxu0 0
        %1338 = vmatmul.mubr.bf16.gmra.mxu0 %v1007
        %v1339 = vpop.f32.mrf.mxu0
        %v1340 = vadd.f32 0.0, %v1339
        %v1341 = vpop.f32.mrf.mxu0
        %v1342 = vpop.f32.mrf.mxu0
        %v1343 = vadd.f32 0.0, %v1342
        %v1344 = vpop.f32.mrf.mxu0
        %1345 = vmatprep.mubr.bf16.mxu0 0
        %1346 = vmatmul.mubr.bf16.gmra.mxu0 %v1010
        %v1347 = vpop.f32.mrf.mxu0
        %v1348 = vadd.f32 0.0, %v1347
        %v1349 = vpop.f32.mrf.mxu0
        %v1350 = vpop.f32.mrf.mxu0
        %v1351 = vadd.f32 0.0, %v1350
        %v1352 = vpop.f32.mrf.mxu0
        %1353 = vmatprep.mubr.bf16.mxu0 0
        %1354 = vmatmul.mubr.bf16.gmra.mxu0 %v1013
        %v1355 = vpop.f32.mrf.mxu0
        %v1356 = vadd.f32 0.0, %v1355
        %v1357 = vpop.f32.mrf.mxu0
        %v1358 = vpop.f32.mrf.mxu0
        %v1359 = vadd.f32 0.0, %v1358
        %v1360 = vpop.f32.mrf.mxu0
        %1361 = vmatprep.mubr.bf16.mxu0 0
        %1362 = vmatmul.mubr.bf16.gmra.mxu0 %v1016
        %v1363 = vpop.f32.mrf.mxu0
        %v1364 = vadd.f32 0.0, %v1363
        %v1365 = vpop.f32.mrf.mxu0
        %v1366 = vpop.f32.mrf.mxu0
        %v1367 = vadd.f32 0.0, %v1366
        %v1368 = vpop.f32.mrf.mxu0
        %1369 = vmatprep.mubr.bf16.mxu0 0
        %1370 = vmatmul.mubr.bf16.gmra.mxu0 %v1019
        %v1371 = vpop.f32.mrf.mxu0
        %v1372 = vadd.f32 0.0, %v1371
        %v1373 = vpop.f32.mrf.mxu0
        %v1374 = vpop.f32.mrf.mxu0
        %v1375 = vadd.f32 0.0, %v1374
        %v1376 = vpop.f32.mrf.mxu0
        %1377 = vmatprep.mubr.bf16.mxu0 0
        %1378 = vmatmul.mubr.bf16.gmra.mxu0 %v1022
        %v1379 = vpop.f32.mrf.mxu0
        %v1380 = vadd.f32 0.0, %v1379
        %v1381 = vpop.f32.mrf.mxu0
        %v1382 = vpop.f32.mrf.mxu0
        %v1383 = vadd.f32 0.0, %v1382
        %v1384 = vpop.f32.mrf.mxu0
        %1385 = vmatprep.mubr.bf16.mxu0 0
        %1386 = vmatmul.mubr.bf16.gmra.mxu0 %v1025
        %v1387 = vpop.f32.mrf.mxu0
        %v1388 = vadd.f32 0.0, %v1387
        %v1389 = vpop.f32.mrf.mxu0
        %v1390 = vpop.f32.mrf.mxu0
        %v1391 = vadd.f32 0.0, %v1390
        %v1392 = vpop.f32.mrf.mxu0
        %1393 = vmatprep.mubr.bf16.mxu0 0
        %1394 = vmatmul.mubr.bf16.gmra.mxu0 %v1028
        %v1395 = vpop.f32.mrf.mxu0
        %v1396 = vadd.f32 0.0, %v1395
        %v1397 = vpop.f32.mrf.mxu0
        %v1398 = vpop.f32.mrf.mxu0
        %v1399 = vadd.f32 0.0, %v1398
        %v1400 = vpop.f32.mrf.mxu0
        %1401 = vmatprep.mubr.bf16.mxu0 0
        %1402 = vmatmul.mubr.bf16.gmra.mxu0 %v1031
        %v1403 = vpop.f32.mrf.mxu0
        %v1404 = vadd.f32 0.0, %v1403
        %v1405 = vpop.f32.mrf.mxu0
        %v1406 = vpop.f32.mrf.mxu0
        %v1407 = vadd.f32 0.0, %v1406
        %v1408 = vpop.f32.mrf.mxu0
        %1409 = vmatprep.mubr.bf16.mxu0 0
        %1410 = vmatmul.mubr.bf16.gmra.mxu0 %v1034
        %v1411 = vpop.f32.mrf.mxu0
        %v1412 = vadd.f32 0.0, %v1411
        %v1413 = vpop.f32.mrf.mxu0
        %v1414 = vpop.f32.mrf.mxu0
        %v1415 = vadd.f32 0.0, %v1414
        %v1416 = vpop.f32.mrf.mxu0
        %1417 = vmatprep.mubr.bf16.mxu0 0
        %1418 = vmatmul.mubr.bf16.gmra.mxu0 %v1037
        %v1419 = vpop.f32.mrf.mxu0
        %v1420 = vadd.f32 0.0, %v1419
        %v1421 = vpop.f32.mrf.mxu0
        %v1422 = vpop.f32.mrf.mxu0
        %v1423 = vadd.f32 0.0, %v1422
        %v1424 = vpop.f32.mrf.mxu0
        %1425 = vmatprep.mubr.bf16.mxu0 0
        %1426 = vmatmul.mubr.bf16.gmra.mxu0 %v1040
        %v1427 = vpop.f32.mrf.mxu0
        %v1428 = vadd.f32 0.0, %v1427
        %v1429 = vpop.f32.mrf.mxu0
        %v1430 = vpop.f32.mrf.mxu0
        %v1431 = vadd.f32 0.0, %v1430
        %v1432 = vpop.f32.mrf.mxu0
        %1433 = vmatprep.mubr.bf16.mxu0 0
        %1434 = vmatmul.mubr.bf16.gmra.mxu0 %v1043
        %v1435 = vpop.f32.mrf.mxu0
        %v1436 = vadd.f32 0.0, %v1435
        %v1437 = vpop.f32.mrf.mxu0
        %v1438 = vpop.f32.mrf.mxu0
        %v1439 = vadd.f32 0.0, %v1438
        %v1440 = vpop.f32.mrf.mxu0
        %1441 = vmatprep.mubr.bf16.mxu0 0
        %1442 = vmatmul.mubr.bf16.gmra.mxu0 %v1046
        %v1443 = vpop.f32.mrf.mxu0
        %v1444 = vadd.f32 0.0, %v1443
        %v1445 = vpop.f32.mrf.mxu0
        %v1446 = vpop.f32.mrf.mxu0
        %v1447 = vadd.f32 0.0, %v1446
        %v1448 = vpop.f32.mrf.mxu0
        %1449 = vmatprep.mubr.bf16.mxu0 0
        %1450 = vmatmul.mubr.bf16.gmra.mxu0 %v1049
        %v1451 = vpop.f32.mrf.mxu0
        %v1452 = vadd.f32 0.0, %v1451
        %v1453 = vpop.f32.mrf.mxu0
        %v1454 = vpop.f32.mrf.mxu0
        %v1455 = vadd.f32 0.0, %v1454
        %v1456 = vpop.f32.mrf.mxu0
        %1457 = vmatprep.mubr.bf16.mxu0 0
        %1458 = vmatmul.mubr.bf16.gmra.mxu0 %v1052
        %v1459 = vpop.f32.mrf.mxu0
        %v1460 = vadd.f32 0.0, %v1459
        %v1461 = vpop.f32.mrf.mxu0
        %v1462 = vpop.f32.mrf.mxu0
        %v1463 = vadd.f32 0.0, %v1462
        %v1464 = vpop.f32.mrf.mxu0
        %1465 = vmatprep.mubr.bf16.mxu0 0
        %1466 = vmatmul.mubr.bf16.gmra.mxu0 %v1055
        %v1467 = vpop.f32.mrf.mxu0
        %v1468 = vadd.f32 0.0, %v1467
        %v1469 = vpop.f32.mrf.mxu0
        %v1470 = vpop.f32.mrf.mxu0
        %v1471 = vadd.f32 0.0, %v1470
        %v1472 = vpop.f32.mrf.mxu0
        %1473 = vmatprep.mubr.bf16.mxu0 0
        %1474 = vmatmul.mubr.bf16.gmra.mxu0 %v1058
        %v1475 = vpop.f32.mrf.mxu0
        %v1476 = vadd.f32 0.0, %v1475
        %v1477 = vpop.f32.mrf.mxu0
        %v1478 = vpop.f32.mrf.mxu0
        %v1479 = vadd.f32 0.0, %v1478
        %v1480 = vpop.f32.mrf.mxu0
        %1481 = vmatprep.mubr.bf16.mxu0 0
        %1482 = vmatmul.mubr.bf16.gmra.mxu0 %v1061
        %v1483 = vpop.f32.mrf.mxu0
        %v1484 = vadd.f32 0.0, %v1483
        %v1485 = vpop.f32.mrf.mxu0
        %v1486 = vpop.f32.mrf.mxu0
        %v1487 = vadd.f32 0.0, %v1486
        %v1488 = vpop.f32.mrf.mxu0
        %1489 = vmatprep.mubr.bf16.mxu0 0
        %1490 = vmatmul.mubr.bf16.gmra.mxu0 %v1064
        %v1491 = vpop.f32.mrf.mxu0
        %v1492 = vadd.f32 0.0, %v1491
        %v1493 = vpop.f32.mrf.mxu0
        %v1494 = vpop.f32.mrf.mxu0
        %v1495 = vadd.f32 0.0, %v1494
        %v1496 = vpop.f32.mrf.mxu0
        %1497 = vmatprep.mubr.bf16.mxu0 0
        %1498 = vmatmul.mubr.bf16.gmra.mxu0 %v1067
        %v1499 = vpop.f32.mrf.mxu0
        %v1500 = vadd.f32 0.0, %v1499
        %v1501 = vpop.f32.mrf.mxu0
        %v1502 = vpop.f32.mrf.mxu0
        %v1503 = vadd.f32 0.0, %v1502
        %v1504 = vpop.f32.mrf.mxu0
        %1505 = vmatprep.mubr.bf16.mxu0 0
        %1506 = vmatmul.mubr.bf16.gmra.mxu0 %v1070
        %v1507 = vpop.f32.mrf.mxu0
        %v1508 = vadd.f32 0.0, %v1507
        %v1509 = vpop.f32.mrf.mxu0
        %v1510 = vpop.f32.mrf.mxu0
        %v1511 = vadd.f32 0.0, %v1510
        %v1512 = vpop.f32.mrf.mxu0
        %1513 = vmatprep.mubr.bf16.mxu0 0
        %1514 = vmatmul.mubr.bf16.gmra.mxu0 %v1073
        %v1515 = vpop.f32.mrf.mxu0
        %v1516 = vadd.f32 0.0, %v1515
        %v1517 = vpop.f32.mrf.mxu0
        %v1518 = vpop.f32.mrf.mxu0
        %v1519 = vadd.f32 0.0, %v1518
        %v1520 = vpop.f32.mrf.mxu0
        %1521 = vmatprep.mubr.bf16.mxu0 0
        %1522 = vmatmul.mubr.bf16.gmra.mxu0 %v1076
        %v1523 = vpop.f32.mrf.mxu0
        %v1524 = vadd.f32 0.0, %v1523
        %v1525 = vpop.f32.mrf.mxu0
        %v1526 = vpop.f32.mrf.mxu0
        %v1527 = vadd.f32 0.0, %v1526
        %v1528 = vpop.f32.mrf.mxu0
        %1529 = vmatprep.mubr.bf16.mxu0 0
        %1530 = vmatmul.mubr.bf16.gmra.mxu0 %v1079
        %v1531 = vpop.f32.mrf.mxu0
        %v1532 = vadd.f32 0.0, %v1531
        %v1533 = vpop.f32.mrf.mxu0
        %v1534 = vpop.f32.mrf.mxu0
        %v1535 = vadd.f32 0.0, %v1534
        %v1536 = vpop.f32.mrf.mxu0
        %1537 = vmatprep.mubr.bf16.mxu0 0
        %1538 = vmatmul.mubr.bf16.gmra.mxu0 %v1082
        %v1539 = vpop.f32.mrf.mxu0
        %v1540 = vadd.f32 0.0, %v1539
        %v1541 = vpop.f32.mrf.mxu0
        %v1542 = vpop.f32.mrf.mxu0
        %v1543 = vadd.f32 0.0, %v1542
        %v1544 = vpop.f32.mrf.mxu0
        %1545 = vmatprep.mubr.bf16.mxu0 0
        %1546 = vmatmul.mubr.bf16.gmra.mxu0 %v1085
        %v1547 = vpop.f32.mrf.mxu0
        %v1548 = vadd.f32 0.0, %v1547
        %v1549 = vpop.f32.mrf.mxu0
        %v1550 = vpop.f32.mrf.mxu0
        %v1551 = vadd.f32 0.0, %v1550
        %v1552 = vpop.f32.mrf.mxu0
        %1553 = vmatprep.mubr.bf16.mxu0 0
        %1554 = vmatmul.mubr.bf16.gmra.mxu0 %v1088
        %v1555 = vpop.f32.mrf.mxu0
        %v1556 = vadd.f32 0.0, %v1555
        %v1557 = vpop.f32.mrf.mxu0
        %v1558 = vpop.f32.mrf.mxu0
        %v1559 = vadd.f32 0.0, %v1558
        %v1560 = vpop.f32.mrf.mxu0
        %1561 = vmatprep.mubr.bf16.mxu0 0
        %1562 = vmatmul.mubr.bf16.gmra.mxu0 %v1091
        %v1563 = vpop.f32.mrf.mxu0
        %v1564 = vadd.f32 0.0, %v1563
        %v1565 = vpop.f32.mrf.mxu0
        %v1566 = vpop.f32.mrf.mxu0
        %v1567 = vadd.f32 0.0, %v1566
        %v1568 = vpop.f32.mrf.mxu0
        %1569 = vmatprep.mubr.bf16.mxu0 0
        %1570 = vmatmul.mubr.bf16.gmra.mxu0 %v1094
        %v1571 = vpop.f32.mrf.mxu0
        %v1572 = vadd.f32 0.0, %v1571
        %v1573 = vpop.f32.mrf.mxu0
        %v1574 = vpop.f32.mrf.mxu0
        %v1575 = vadd.f32 0.0, %v1574
        %v1576 = vpop.f32.mrf.mxu0
        %1577 = vmatprep.mubr.bf16.mxu0 0
        %1578 = vmatmul.mubr.bf16.gmra.mxu0 %v1097
        %v1579 = vpop.f32.mrf.mxu0
        %v1580 = vadd.f32 0.0, %v1579
        %v1581 = vpop.f32.mrf.mxu0
        %v1582 = vpop.f32.mrf.mxu0
        %v1583 = vadd.f32 0.0, %v1582
        %v1584 = vpop.f32.mrf.mxu0
        %1585 = vmatprep.mubr.bf16.mxu0 0
        %1586 = vmatmul.mubr.bf16.gmra.mxu0 %v1100
        %v1587 = vpop.f32.mrf.mxu0
        %v1588 = vadd.f32 0.0, %v1587
        %v1589 = vpop.f32.mrf.mxu0
        %v1590 = vpop.f32.mrf.mxu0
        %v1591 = vadd.f32 0.0, %v1590
        %v1592 = vpop.f32.mrf.mxu0
        %1593 = vmatprep.mubr.bf16.mxu0 0
        %1594 = vmatmul.mubr.bf16.gmra.mxu0 %v1103
        %v1595 = vpop.f32.mrf.mxu0
        %v1596 = vadd.f32 0.0, %v1595
        %v1597 = vpop.f32.mrf.mxu0
        %v1598 = vpop.f32.mrf.mxu0
        %v1599 = vadd.f32 0.0, %v1598
        %v1600 = vpop.f32.mrf.mxu0
        %1601 = vmatprep.mubr.bf16.mxu0 0
        %1602 = vmatmul.mubr.bf16.gmra.mxu0 %v1106
        %v1603 = vpop.f32.mrf.mxu0
        %v1604 = vadd.f32 0.0, %v1603
        %v1605 = vpop.f32.mrf.mxu0
        %v1606 = vpop.f32.mrf.mxu0
        %v1607 = vadd.f32 0.0, %v1606
        %v1608 = vpop.f32.mrf.mxu0
        %1609 = vmatprep.mubr.bf16.mxu0 0
        %1610 = vmatmul.mubr.bf16.gmra.mxu0 %v1109
        %v1611 = vpop.f32.mrf.mxu0
        %v1612 = vadd.f32 0.0, %v1611
        %v1613 = vpop.f32.mrf.mxu0
        %v1614 = vpop.f32.mrf.mxu0
        %v1615 = vadd.f32 0.0, %v1614
        %v1616 = vpop.f32.mrf.mxu0
        %1617 = vmatprep.mubr.bf16.mxu0 0
        %1618 = vmatmul.mubr.bf16.gmra.mxu0 %v1112
        %v1619 = vpop.f32.mrf.mxu0
        %v1620 = vadd.f32 0.0, %v1619
        %v1621 = vpop.f32.mrf.mxu0
        %v1622 = vpop.f32.mrf.mxu0
        %v1623 = vadd.f32 0.0, %v1622
        %v1624 = vpop.f32.mrf.mxu0
        %1625 = vmatprep.mubr.bf16.mxu0 0
        %1626 = vmatmul.mubr.bf16.gmra.mxu0 %v1115
        %v1627 = vpop.f32.mrf.mxu0
        %v1628 = vadd.f32 0.0, %v1627
        %v1629 = vpop.f32.mrf.mxu0
        %v1630 = vpop.f32.mrf.mxu0
        %v1631 = vadd.f32 0.0, %v1630
        %v1632 = vpop.f32.mrf.mxu0
        %1633 = vmatprep.mubr.bf16.mxu0 0
        %1634 = vmatmul.mubr.bf16.gmra.mxu0 %v1118
        %v1635 = vpop.f32.mrf.mxu0
        %v1636 = vadd.f32 0.0, %v1635
        %v1637 = vpop.f32.mrf.mxu0
        %v1638 = vpop.f32.mrf.mxu0
        %v1639 = vadd.f32 0.0, %v1638
        %v1640 = vpop.f32.mrf.mxu0
        %1641 = vmatprep.mubr.bf16.mxu0 0
        %1642 = vmatmul.mubr.bf16.gmra.mxu0 %v1121
        %v1643 = vpop.f32.mrf.mxu0
        %v1644 = vadd.f32 0.0, %v1643
        %v1645 = vpop.f32.mrf.mxu0
        %v1646 = vpop.f32.mrf.mxu0
        %v1647 = vadd.f32 0.0, %v1646
        %v1648 = vpop.f32.mrf.mxu0
        %1649 = vmatprep.mubr.bf16.mxu0 0
        %1650 = vmatmul.mubr.bf16.gmra.mxu0 %v1124
        %v1651 = vpop.f32.mrf.mxu0
        %v1652 = vadd.f32 0.0, %v1651
        %v1653 = vpop.f32.mrf.mxu0
        %v1654 = vpop.f32.mrf.mxu0
        %v1655 = vadd.f32 0.0, %v1654
        %v1656 = vpop.f32.mrf.mxu0
        %1657 = vmatprep.mubr.bf16.mxu0 0
        %1658 = vmatmul.mubr.bf16.gmra.mxu0 %v1127
        %v1659 = vpop.f32.mrf.mxu0
        %v1660 = vadd.f32 0.0, %v1659
        %v1661 = vpop.f32.mrf.mxu0
        %v1662 = vpop.f32.mrf.mxu0
        %v1663 = vadd.f32 0.0, %v1662
        %v1664 = vpop.f32.mrf.mxu0
        %1665 = vmatprep.mubr.bf16.mxu0 0
        %1666 = vmatmul.mubr.bf16.gmra.mxu0 %v1130
        %v1667 = vpop.f32.mrf.mxu0
        %v1668 = vadd.f32 0.0, %v1667
        %v1669 = vpop.f32.mrf.mxu0
        %v1670 = vpop.f32.mrf.mxu0
        %v1671 = vadd.f32 0.0, %v1670
        %v1672 = vpop.f32.mrf.mxu0
        %1673 = vmatprep.mubr.bf16.mxu0 0
        %1674 = vmatmul.mubr.bf16.gmra.mxu0 %v1133
        %v1675 = vpop.f32.mrf.mxu0
        %v1676 = vadd.f32 0.0, %v1675
        %v1677 = vpop.f32.mrf.mxu0
        %v1678 = vpop.f32.mrf.mxu0
        %v1679 = vadd.f32 0.0, %v1678
        %v1680 = vpop.f32.mrf.mxu0
        %1681 = vmatprep.mubr.bf16.mxu0 0
        %1682 = vmatmul.mubr.bf16.gmra.mxu0 %v1136
        %v1683 = vpop.f32.mrf.mxu0
        %v1684 = vadd.f32 0.0, %v1683
        %v1685 = vpop.f32.mrf.mxu0
        %v1686 = vpop.f32.mrf.mxu0
        %v1687 = vadd.f32 0.0, %v1686
        %v1688 = vpop.f32.mrf.mxu0
        %1689 = vdwg.mxu0
        %v1690 = vadd.f32 %v354, %v1180
        %v1691 = vadd.f32 %v355, %v1183
        %v1692 = vadd.f32 %v356, %v1188
        %v1693 = vadd.f32 %v357, %v1191
        %v1694 = vadd.f32 %v358, %v1196
        %v1695 = vadd.f32 %v359, %v1199
        %v1696 = vadd.f32 %v360, %v1204
        %v1697 = vadd.f32 %v361, %v1207
        %v1698 = vadd.f32 %v362, %v1212
        %v1699 = vadd.f32 %v363, %v1215
        %v1700 = vadd.f32 %v364, %v1220
        %v1701 = vadd.f32 %v365, %v1223
        %v1702 = vadd.f32 %v366, %v1228
        %v1703 = vadd.f32 %v367, %v1231
        %v1704 = vadd.f32 %v368, %v1236
        %v1705 = vadd.f32 %v369, %v1239
        %v1706 = vadd.f32 %v370, %v1244
        %v1707 = vadd.f32 %v371, %v1247
        %v1708 = vadd.f32 %v372, %v1252
        %v1709 = vadd.f32 %v373, %v1255
        %v1710 = vadd.f32 %v374, %v1260
        %v1711 = vadd.f32 %v375, %v1263
        %v1712 = vadd.f32 %v376, %v1268
        %v1713 = vadd.f32 %v377, %v1271
        %v1714 = vadd.f32 %v378, %v1276
        %v1715 = vadd.f32 %v379, %v1279
        %v1716 = vadd.f32 %v380, %v1284
        %v1717 = vadd.f32 %v381, %v1287
        %v1718 = vadd.f32 %v382, %v1292
        %v1719 = vadd.f32 %v383, %v1295
        %v1720 = vadd.f32 %v384, %v1300
        %v1721 = vadd.f32 %v385, %v1303
        %v1722 = vadd.f32 %v386, %v1308
        %v1723 = vadd.f32 %v387, %v1311
        %v1724 = vadd.f32 %v388, %v1316
        %v1725 = vadd.f32 %v389, %v1319
        %v1726 = vadd.f32 %v390, %v1324
        %v1727 = vadd.f32 %v391, %v1327
        %v1728 = vadd.f32 %v392, %v1332
        %v1729 = vadd.f32 %v393, %v1335
        %v1730 = vadd.f32 %v394, %v1340
        %v1731 = vadd.f32 %v395, %v1343
        %v1732 = vadd.f32 %v396, %v1348
        %v1733 = vadd.f32 %v397, %v1351
        %v1734 = vadd.f32 %v398, %v1356
        %v1735 = vadd.f32 %v399, %v1359
        %v1736 = vadd.f32 %v400, %v1364
        %v1737 = vadd.f32 %v401, %v1367
        %v1738 = vadd.f32 %v402, %v1372
        %v1739 = vadd.f32 %v403, %v1375
        %v1740 = vadd.f32 %v404, %v1380
        %v1741 = vadd.f32 %v405, %v1383
        %v1742 = vadd.f32 %v406, %v1388
        %v1743 = vadd.f32 %v407, %v1391
        %v1744 = vadd.f32 %v408, %v1396
        %v1745 = vadd.f32 %v409, %v1399
        %v1746 = vadd.f32 %v410, %v1404
        %v1747 = vadd.f32 %v411, %v1407
        %v1748 = vadd.f32 %v412, %v1412
        %v1749 = vadd.f32 %v413, %v1415
        %v1750 = vadd.f32 %v414, %v1420
        %v1751 = vadd.f32 %v415, %v1423
        %v1752 = vadd.f32 %v416, %v1428
        %v1753 = vadd.f32 %v417, %v1431
        %v1754 = vadd.f32 %v418, %v1436
        %v1755 = vadd.f32 %v419, %v1439
        %v1756 = vadd.f32 %v420, %v1444
        %v1757 = vadd.f32 %v421, %v1447
        %v1758 = vadd.f32 %v422, %v1452
        %v1759 = vadd.f32 %v423, %v1455
        %v1760 = vadd.f32 %v424, %v1460
        %v1761 = vadd.f32 %v425, %v1463
        %v1762 = vadd.f32 %v426, %v1468
        %v1763 = vadd.f32 %v427, %v1471
        %v1764 = vadd.f32 %v428, %v1476
        %v1765 = vadd.f32 %v429, %v1479
        %v1766 = vadd.f32 %v430, %v1484
        %v1767 = vadd.f32 %v431, %v1487
        %v1768 = vadd.f32 %v432, %v1492
        %v1769 = vadd.f32 %v433, %v1495
        %v1770 = vadd.f32 %v434, %v1500
        %v1771 = vadd.f32 %v435, %v1503
        %v1772 = vadd.f32 %v436, %v1508
        %v1773 = vadd.f32 %v437, %v1511
        %v1774 = vadd.f32 %v438, %v1516
        %v1775 = vadd.f32 %v439, %v1519
        %v1776 = vadd.f32 %v440, %v1524
        %v1777 = vadd.f32 %v441, %v1527
        %v1778 = vadd.f32 %v442, %v1532
        %v1779 = vadd.f32 %v443, %v1535
        %v1780 = vadd.f32 %v444, %v1540
        %v1781 = vadd.f32 %v445, %v1543
        %v1782 = vadd.f32 %v446, %v1548
        %v1783 = vadd.f32 %v447, %v1551
        %v1784 = vadd.f32 %v448, %v1556
        %v1785 = vadd.f32 %v449, %v1559
        %v1786 = vadd.f32 %v450, %v1564
        %v1787 = vadd.f32 %v451, %v1567
        %v1788 = vadd.f32 %v452, %v1572
        %v1789 = vadd.f32 %v453, %v1575
        %v1790 = vadd.f32 %v454, %v1580
        %v1791 = vadd.f32 %v455, %v1583
        %v1792 = vadd.f32 %v456, %v1588
        %v1793 = vadd.f32 %v457, %v1591
        %v1794 = vadd.f32 %v458, %v1596
        %v1795 = vadd.f32 %v459, %v1599
        %v1796 = vadd.f32 %v460, %v1604
        %v1797 = vadd.f32 %v461, %v1607
        %v1798 = vadd.f32 %v462, %v1612
        %v1799 = vadd.f32 %v463, %v1615
        %v1800 = vadd.f32 %v464, %v1620
        %v1801 = vadd.f32 %v465, %v1623
        %v1802 = vadd.f32 %v466, %v1628
        %v1803 = vadd.f32 %v467, %v1631
        %v1804 = vadd.f32 %v468, %v1636
        %v1805 = vadd.f32 %v469, %v1639
        %v1806 = vadd.f32 %v470, %v1644
        %v1807 = vadd.f32 %v471, %v1647
        %v1808 = vadd.f32 %v472, %v1652
        %v1809 = vadd.f32 %v473, %v1655
        %v1810 = vadd.f32 %v474, %v1660
        %v1811 = vadd.f32 %v475, %v1663
        %v1812 = vadd.f32 %v476, %v1668
        %v1813 = vadd.f32 %v477, %v1671
        %v1814 = vadd.f32 %v478, %v1676
        %v1815 = vadd.f32 %v479, %v1679
        %v1816 = vadd.f32 %v480, %v1684
        %v1817 = vadd.f32 %v481, %v1687
        %1818 = vst [vmem:[#allocation2] sm:$0xff] %v1690
        %1819 = vst [vmem:[#allocation2 + $0x8] sm:$0xff] %v1691
        %1820 = vst [vmem:[#allocation2 + $0x10] sm:$0xff] %v1692
        %1821 = vst [vmem:[#allocation2 + $0x18] sm:$0xff] %v1693
        %1822 = vst [vmem:[#allocation2 + $0x20] sm:$0xff] %v1694
        %1823 = vst [vmem:[#allocation2 + $0x28] sm:$0xff] %v1695
        %1824 = vst [vmem:[#allocation2 + $0x30] sm:$0xff] %v1696
        %1825 = vst [vmem:[#allocation2 + $0x38] sm:$0xff] %v1697
        %1826 = vst [vmem:[#allocation2 + $0x40] sm:$0xff] %v1698
        %1827 = vst [vmem:[#allocation2 + $0x48] sm:$0xff] %v1699
        %1828 = vst [vmem:[#allocation2 + $0x50] sm:$0xff] %v1700
        %1829 = vst [vmem:[#allocation2 + $0x58] sm:$0xff] %v1701
        %1830 = vst [vmem:[#allocation2 + $0x60] sm:$0xff] %v1702
        %1831 = vst [vmem:[#allocation2 + $0x68] sm:$0xff] %v1703
        %1832 = vst [vmem:[#allocation2 + $0x70] sm:$0xff] %v1704
        %1833 = vst [vmem:[#allocation2 + $0x78] sm:$0xff] %v1705
        %1834 = vst [vmem:[#allocation2 + $0x80] sm:$0xff] %v1706
        %1835 = vst [vmem:[#allocation2 + $0x88] sm:$0xff] %v1707
        %1836 = vst [vmem:[#allocation2 + $0x90] sm:$0xff] %v1708
        %1837 = vst [vmem:[#allocation2 + $0x98] sm:$0xff] %v1709
        %1838 = vst [vmem:[#allocation2 + $0xa0] sm:$0xff] %v1710
        %1839 = vst [vmem:[#allocation2 + $0xa8] sm:$0xff] %v1711
        %1840 = vst [vmem:[#allocation2 + $0xb0] sm:$0xff] %v1712
        %1841 = vst [vmem:[#allocation2 + $0xb8] sm:$0xff] %v1713
        %1842 = vst [vmem:[#allocation2 + $0xc0] sm:$0xff] %v1714
        %1843 = vst [vmem:[#allocation2 + $0xc8] sm:$0xff] %v1715
        %1844 = vst [vmem:[#allocation2 + $0xd0] sm:$0xff] %v1716
        %1845 = vst [vmem:[#allocation2 + $0xd8] sm:$0xff] %v1717
        %1846 = vst [vmem:[#allocation2 + $0xe0] sm:$0xff] %v1718
        %1847 = vst [vmem:[#allocation2 + $0xe8] sm:$0xff] %v1719
        %1848 = vst [vmem:[#allocation2 + $0xf0] sm:$0xff] %v1720
        %1849 = vst [vmem:[#allocation2 + $0xf8] sm:$0xff] %v1721
        %1850 = vst [vmem:[#allocation2 + $0x100] sm:$0xff] %v1722
        %1851 = vst [vmem:[#allocation2 + $0x108] sm:$0xff] %v1723
        %1852 = vst [vmem:[#allocation2 + $0x110] sm:$0xff] %v1724
        %1853 = vst [vmem:[#allocation2 + $0x118] sm:$0xff] %v1725
        %1854 = vst [vmem:[#allocation2 + $0x120] sm:$0xff] %v1726
        %1855 = vst [vmem:[#allocation2 + $0x128] sm:$0xff] %v1727
        %1856 = vst [vmem:[#allocation2 + $0x130] sm:$0xff] %v1728
        %1857 = vst [vmem:[#allocation2 + $0x138] sm:$0xff] %v1729
        %1858 = vst [vmem:[#allocation2 + $0x140] sm:$0xff] %v1730
        %1859 = vst [vmem:[#allocation2 + $0x148] sm:$0xff] %v1731
        %1860 = vst [vmem:[#allocation2 + $0x150] sm:$0xff] %v1732
        %1861 = vst [vmem:[#allocation2 + $0x158] sm:$0xff] %v1733
        %1862 = vst [vmem:[#allocation2 + $0x160] sm:$0xff] %v1734
        %1863 = vst [vmem:[#allocation2 + $0x168] sm:$0xff] %v1735
        %1864 = vst [vmem:[#allocation2 + $0x170] sm:$0xff] %v1736
        %1865 = vst [vmem:[#allocation2 + $0x178] sm:$0xff] %v1737
        %1866 = vst [vmem:[#allocation2 + $0x180] sm:$0xff] %v1738
        %1867 = vst [vmem:[#allocation2 + $0x188] sm:$0xff] %v1739
        %1868 = vst [vmem:[#allocation2 + $0x190] sm:$0xff] %v1740
        %1869 = vst [vmem:[#allocation2 + $0x198] sm:$0xff] %v1741
        %1870 = vst [vmem:[#allocation2 + $0x1a0] sm:$0xff] %v1742
        %1871 = vst [vmem:[#allocation2 + $0x1a8] sm:$0xff] %v1743
        %1872 = vst [vmem:[#allocation2 + $0x1b0] sm:$0xff] %v1744
        %1873 = vst [vmem:[#allocation2 + $0x1b8] sm:$0xff] %v1745
        %1874 = vst [vmem:[#allocation2 + $0x1c0] sm:$0xff] %v1746
        %1875 = vst [vmem:[#allocation2 + $0x1c8] sm:$0xff] %v1747
        %1876 = vst [vmem:[#allocation2 + $0x1d0] sm:$0xff] %v1748
        %1877 = vst [vmem:[#allocation2 + $0x1d8] sm:$0xff] %v1749
        %1878 = vst [vmem:[#allocation2 + $0x1e0] sm:$0xff] %v1750
        %1879 = vst [vmem:[#allocation2 + $0x1e8] sm:$0xff] %v1751
        %1880 = vst [vmem:[#allocation2 + $0x1f0] sm:$0xff] %v1752
        %1881 = vst [vmem:[#allocation2 + $0x1f8] sm:$0xff] %v1753
        %1882 = vst [vmem:[#allocation2 + $0x200] sm:$0xff] %v1754
        %1883 = vst [vmem:[#allocation2 + $0x208] sm:$0xff] %v1755
        %1884 = vst [vmem:[#allocation2 + $0x210] sm:$0xff] %v1756
        %1885 = vst [vmem:[#allocation2 + $0x218] sm:$0xff] %v1757
        %1886 = vst [vmem:[#allocation2 + $0x220] sm:$0xff] %v1758
        %1887 = vst [vmem:[#allocation2 + $0x228] sm:$0xff] %v1759
        %1888 = vst [vmem:[#allocation2 + $0x230] sm:$0xff] %v1760
        %1889 = vst [vmem:[#allocation2 + $0x238] sm:$0xff] %v1761
        %1890 = vst [vmem:[#allocation2 + $0x240] sm:$0xff] %v1762
        %1891 = vst [vmem:[#allocation2 + $0x248] sm:$0xff] %v1763
        %1892 = vst [vmem:[#allocation2 + $0x250] sm:$0xff] %v1764
        %1893 = vst [vmem:[#allocation2 + $0x258] sm:$0xff] %v1765
        %1894 = vst [vmem:[#allocation2 + $0x260] sm:$0xff] %v1766
        %1895 = vst [vmem:[#allocation2 + $0x268] sm:$0xff] %v1767
        %1896 = vst [vmem:[#allocation2 + $0x270] sm:$0xff] %v1768
        %1897 = vst [vmem:[#allocation2 + $0x278] sm:$0xff] %v1769
        %1898 = vst [vmem:[#allocation2 + $0x280] sm:$0xff] %v1770
        %1899 = vst [vmem:[#allocation2 + $0x288] sm:$0xff] %v1771
        %1900 = vst [vmem:[#allocation2 + $0x290] sm:$0xff] %v1772
        %1901 = vst [vmem:[#allocation2 + $0x298] sm:$0xff] %v1773
        %1902 = vst [vmem:[#allocation2 + $0x2a0] sm:$0xff] %v1774
        %1903 = vst [vmem:[#allocation2 + $0x2a8] sm:$0xff] %v1775
        %1904 = vst [vmem:[#allocation2 + $0x2b0] sm:$0xff] %v1776
        %1905 = vst [vmem:[#allocation2 + $0x2b8] sm:$0xff] %v1777
        %1906 = vst [vmem:[#allocation2 + $0x2c0] sm:$0xff] %v1778
        %1907 = vst [vmem:[#allocation2 + $0x2c8] sm:$0xff] %v1779
        %1908 = vst [vmem:[#allocation2 + $0x2d0] sm:$0xff] %v1780
        %1909 = vst [vmem:[#allocation2 + $0x2d8] sm:$0xff] %v1781
        %1910 = vst [vmem:[#allocation2 + $0x2e0] sm:$0xff] %v1782
        %1911 = vst [vmem:[#allocation2 + $0x2e8] sm:$0xff] %v1783
        %1912 = vst [vmem:[#allocation2 + $0x2f0] sm:$0xff] %v1784
        %1913 = vst [vmem:[#allocation2 + $0x2f8] sm:$0xff] %v1785
        %1914 = vst [vmem:[#allocation2 + $0x300] sm:$0xff] %v1786
        %1915 = vst [vmem:[#allocation2 + $0x308] sm:$0xff] %v1787
        %1916 = vst [vmem:[#allocation2 + $0x310] sm:$0xff] %v1788
        %1917 = vst [vmem:[#allocation2 + $0x318] sm:$0xff] %v1789
        %1918 = vst [vmem:[#allocation2 + $0x320] sm:$0xff] %v1790
        %1919 = vst [vmem:[#allocation2 + $0x328] sm:$0xff] %v1791
        %1920 = vst [vmem:[#allocation2 + $0x330] sm:$0xff] %v1792
        %1921 = vst [vmem:[#allocation2 + $0x338] sm:$0xff] %v1793
        %1922 = vst [vmem:[#allocation2 + $0x340] sm:$0xff] %v1794
        %1923 = vst [vmem:[#allocation2 + $0x348] sm:$0xff] %v1795
        %1924 = vst [vmem:[#allocation2 + $0x350] sm:$0xff] %v1796
        %1925 = vst [vmem:[#allocation2 + $0x358] sm:$0xff] %v1797
        %1926 = vst [vmem:[#allocation2 + $0x360] sm:$0xff] %v1798
        %1927 = vst [vmem:[#allocation2 + $0x368] sm:$0xff] %v1799
        %1928 = vst [vmem:[#allocation2 + $0x370] sm:$0xff] %v1800
        %1929 = vst [vmem:[#allocation2 + $0x378] sm:$0xff] %v1801
        %1930 = vst [vmem:[#allocation2 + $0x380] sm:$0xff] %v1802
        %1931 = vst [vmem:[#allocation2 + $0x388] sm:$0xff] %v1803
        %1932 = vst [vmem:[#allocation2 + $0x390] sm:$0xff] %v1804
        %1933 = vst [vmem:[#allocation2 + $0x398] sm:$0xff] %v1805
        %1934 = vst [vmem:[#allocation2 + $0x3a0] sm:$0xff] %v1806
        %1935 = vst [vmem:[#allocation2 + $0x3a8] sm:$0xff] %v1807
        %1936 = vst [vmem:[#allocation2 + $0x3b0] sm:$0xff] %v1808
        %1937 = vst [vmem:[#allocation2 + $0x3b8] sm:$0xff] %v1809
        %1938 = vst [vmem:[#allocation2 + $0x3c0] sm:$0xff] %v1810
        %1939 = vst [vmem:[#allocation2 + $0x3c8] sm:$0xff] %v1811
        %1940 = vst [vmem:[#allocation2 + $0x3d0] sm:$0xff] %v1812
        %1941 = vst [vmem:[#allocation2 + $0x3d8] sm:$0xff] %v1813
        %1942 = vst [vmem:[#allocation2 + $0x3e0] sm:$0xff] %v1814
        %1943 = vst [vmem:[#allocation2 + $0x3e8] sm:$0xff] %v1815
        %1944 = vst [vmem:[#allocation2 + $0x3f0] sm:$0xff] %v1816
        %1945 = vst [vmem:[#allocation2 + $0x3f8] sm:$0xff] %v1817
        // Predicated region
        $region41: #{faster_rcnn_forward.6} parent=31 // pred_check
          %p1946 = pneg %p222
        $region42: #{faster_rcnn_forward.6} parent=31 // pred_check_branch
          %1948 = sbr.rel (%p1946) target = $region44
        $region43: #{faster_rcnn_forward.6} parent=31 // pred_region
          %v1949 = vld [vmem:[#allocation2] sm:$0xff]
          %v1950 = vld [vmem:[#allocation2 + $0x8] sm:$0xff]
          %v1951 = vld [vmem:[#allocation2 + $0x10] sm:$0xff]
          %v1952 = vld [vmem:[#allocation2 + $0x18] sm:$0xff]
          %v1953 = vld [vmem:[#allocation2 + $0x20] sm:$0xff]
          %v1954 = vld [vmem:[#allocation2 + $0x28] sm:$0xff]
          %v1955 = vld [vmem:[#allocation2 + $0x30] sm:$0xff]
          %v1956 = vld [vmem:[#allocation2 + $0x38] sm:$0xff]
          %v1957 = vld [vmem:[#allocation2 + $0x40] sm:$0xff]
          %v1958 = vld [vmem:[#allocation2 + $0x48] sm:$0xff]
          %v1959 = vld [vmem:[#allocation2 + $0x50] sm:$0xff]
          %v1960 = vld [vmem:[#allocation2 + $0x58] sm:$0xff]
          %v1961 = vld [vmem:[#allocation2 + $0x60] sm:$0xff]
          %v1962 = vld [vmem:[#allocation2 + $0x68] sm:$0xff]
          %v1963 = vld [vmem:[#allocation2 + $0x70] sm:$0xff]
          %v1964 = vld [vmem:[#allocation2 + $0x78] sm:$0xff]
          %v1965 = vld [vmem:[#allocation2 + $0x80] sm:$0xff]
          %v1966 = vld [vmem:[#allocation2 + $0x88] sm:$0xff]
          %v1967 = vld [vmem:[#allocation2 + $0x90] sm:$0xff]
          %v1968 = vld [vmem:[#allocation2 + $0x98] sm:$0xff]
          %v1969 = vld [vmem:[#allocation2 + $0xa0] sm:$0xff]
          %v1970 = vld [vmem:[#allocation2 + $0xa8] sm:$0xff]
          %v1971 = vld [vmem:[#allocation2 + $0xb0] sm:$0xff]
          %v1972 = vld [vmem:[#allocation2 + $0xb8] sm:$0xff]
          %v1973 = vld [vmem:[#allocation2 + $0xc0] sm:$0xff]
          %v1974 = vld [vmem:[#allocation2 + $0xc8] sm:$0xff]
          %v1975 = vld [vmem:[#allocation2 + $0xd0] sm:$0xff]
          %v1976 = vld [vmem:[#allocation2 + $0xd8] sm:$0xff]
          %v1977 = vld [vmem:[#allocation2 + $0xe0] sm:$0xff]
          %v1978 = vld [vmem:[#allocation2 + $0xe8] sm:$0xff]
          %v1979 = vld [vmem:[#allocation2 + $0xf0] sm:$0xff]
          %v1980 = vld [vmem:[#allocation2 + $0xf8] sm:$0xff]
          %v1981 = vld [vmem:[#allocation2 + $0x100] sm:$0xff]
          %v1982 = vld [vmem:[#allocation2 + $0x108] sm:$0xff]
          %v1983 = vld [vmem:[#allocation2 + $0x110] sm:$0xff]
          %v1984 = vld [vmem:[#allocation2 + $0x118] sm:$0xff]
          %v1985 = vld [vmem:[#allocation2 + $0x120] sm:$0xff]
          %v1986 = vld [vmem:[#allocation2 + $0x128] sm:$0xff]
          %v1987 = vld [vmem:[#allocation2 + $0x130] sm:$0xff]
          %v1988 = vld [vmem:[#allocation2 + $0x138] sm:$0xff]
          %v1989 = vld [vmem:[#allocation2 + $0x140] sm:$0xff]
          %v1990 = vld [vmem:[#allocation2 + $0x148] sm:$0xff]
          %v1991 = vld [vmem:[#allocation2 + $0x150] sm:$0xff]
          %v1992 = vld [vmem:[#allocation2 + $0x158] sm:$0xff]
          %v1993 = vld [vmem:[#allocation2 + $0x160] sm:$0xff]
          %v1994 = vld [vmem:[#allocation2 + $0x168] sm:$0xff]
          %v1995 = vld [vmem:[#allocation2 + $0x170] sm:$0xff]
          %v1996 = vld [vmem:[#allocation2 + $0x178] sm:$0xff]
          %v1997 = vld [vmem:[#allocation2 + $0x180] sm:$0xff]
          %v1998 = vld [vmem:[#allocation2 + $0x188] sm:$0xff]
          %v1999 = vld [vmem:[#allocation2 + $0x190] sm:$0xff]
          %v2000 = vld [vmem:[#allocation2 + $0x198] sm:$0xff]
          %v2001 = vld [vmem:[#allocation2 + $0x1a0] sm:$0xff]
          %v2002 = vld [vmem:[#allocation2 + $0x1a8] sm:$0xff]
          %v2003 = vld [vmem:[#allocation2 + $0x1b0] sm:$0xff]
          %v2004 = vld [vmem:[#allocation2 + $0x1b8] sm:$0xff]
          %v2005 = vld [vmem:[#allocation2 + $0x1c0] sm:$0xff]
          %v2006 = vld [vmem:[#allocation2 + $0x1c8] sm:$0xff]
          %v2007 = vld [vmem:[#allocation2 + $0x1d0] sm:$0xff]
          %v2008 = vld [vmem:[#allocation2 + $0x1d8] sm:$0xff]
          %v2009 = vld [vmem:[#allocation2 + $0x1e0] sm:$0xff]
          %v2010 = vld [vmem:[#allocation2 + $0x1e8] sm:$0xff]
          %v2011 = vld [vmem:[#allocation2 + $0x1f0] sm:$0xff]
          %v2012 = vld [vmem:[#allocation2 + $0x1f8] sm:$0xff]
          %v2013 = vld [vmem:[#allocation2 + $0x200] sm:$0xff]
          %v2014 = vld [vmem:[#allocation2 + $0x208] sm:$0xff]
          %v2015 = vld [vmem:[#allocation2 + $0x210] sm:$0xff]
          %v2016 = vld [vmem:[#allocation2 + $0x218] sm:$0xff]
          %v2017 = vld [vmem:[#allocation2 + $0x220] sm:$0xff]
          %v2018 = vld [vmem:[#allocation2 + $0x228] sm:$0xff]
          %v2019 = vld [vmem:[#allocation2 + $0x230] sm:$0xff]
          %v2020 = vld [vmem:[#allocation2 + $0x238] sm:$0xff]
          %v2021 = vld [vmem:[#allocation2 + $0x240] sm:$0xff]
          %v2022 = vld [vmem:[#allocation2 + $0x248] sm:$0xff]
          %v2023 = vld [vmem:[#allocation2 + $0x250] sm:$0xff]
          %v2024 = vld [vmem:[#allocation2 + $0x258] sm:$0xff]
          %v2025 = vld [vmem:[#allocation2 + $0x260] sm:$0xff]
          %v2026 = vld [vmem:[#allocation2 + $0x268] sm:$0xff]
          %v2027 = vld [vmem:[#allocation2 + $0x270] sm:$0xff]
          %v2028 = vld [vmem:[#allocation2 + $0x278] sm:$0xff]
          %v2029 = vld [vmem:[#allocation2 + $0x280] sm:$0xff]
          %v2030 = vld [vmem:[#allocation2 + $0x288] sm:$0xff]
          %v2031 = vld [vmem:[#allocation2 + $0x290] sm:$0xff]
          %v2032 = vld [vmem:[#allocation2 + $0x298] sm:$0xff]
          %v2033 = vld [vmem:[#allocation2 + $0x2a0] sm:$0xff]
          %v2034 = vld [vmem:[#allocation2 + $0x2a8] sm:$0xff]
          %v2035 = vld [vmem:[#allocation2 + $0x2b0] sm:$0xff]
          %v2036 = vld [vmem:[#allocation2 + $0x2b8] sm:$0xff]
          %v2037 = vld [vmem:[#allocation2 + $0x2c0] sm:$0xff]
          %v2038 = vld [vmem:[#allocation2 + $0x2c8] sm:$0xff]
          %v2039 = vld [vmem:[#allocation2 + $0x2d0] sm:$0xff]
          %v2040 = vld [vmem:[#allocation2 + $0x2d8] sm:$0xff]
          %v2041 = vld [vmem:[#allocation2 + $0x2e0] sm:$0xff]
          %v2042 = vld [vmem:[#allocation2 + $0x2e8] sm:$0xff]
          %v2043 = vld [vmem:[#allocation2 + $0x2f0] sm:$0xff]
          %v2044 = vld [vmem:[#allocation2 + $0x2f8] sm:$0xff]
          %v2045 = vld [vmem:[#allocation2 + $0x300] sm:$0xff]
          %v2046 = vld [vmem:[#allocation2 + $0x308] sm:$0xff]
          %v2047 = vld [vmem:[#allocation2 + $0x310] sm:$0xff]
          %v2048 = vld [vmem:[#allocation2 + $0x318] sm:$0xff]
          %v2049 = vld [vmem:[#allocation2 + $0x320] sm:$0xff]
          %v2050 = vld [vmem:[#allocation2 + $0x328] sm:$0xff]
          %v2051 = vld [vmem:[#allocation2 + $0x330] sm:$0xff]
          %v2052 = vld [vmem:[#allocation2 + $0x338] sm:$0xff]
          %v2053 = vld [vmem:[#allocation2 + $0x340] sm:$0xff]
          %v2054 = vld [vmem:[#allocation2 + $0x348] sm:$0xff]
          %v2055 = vld [vmem:[#allocation2 + $0x350] sm:$0xff]
          %v2056 = vld [vmem:[#allocation2 + $0x358] sm:$0xff]
          %v2057 = vld [vmem:[#allocation2 + $0x360] sm:$0xff]
          %v2058 = vld [vmem:[#allocation2 + $0x368] sm:$0xff]
          %v2059 = vld [vmem:[#allocation2 + $0x370] sm:$0xff]
          %v2060 = vld [vmem:[#allocation2 + $0x378] sm:$0xff]
          %v2061 = vld [vmem:[#allocation2 + $0x380] sm:$0xff]
          %v2062 = vld [vmem:[#allocation2 + $0x388] sm:$0xff]
          %v2063 = vld [vmem:[#allocation2 + $0x390] sm:$0xff]
          %v2064 = vld [vmem:[#allocation2 + $0x398] sm:$0xff]
          %v2065 = vld [vmem:[#allocation2 + $0x3a0] sm:$0xff]
          %v2066 = vld [vmem:[#allocation2 + $0x3a8] sm:$0xff]
          %v2067 = vld [vmem:[#allocation2 + $0x3b0] sm:$0xff]
          %v2068 = vld [vmem:[#allocation2 + $0x3b8] sm:$0xff]
          %v2069 = vld [vmem:[#allocation2 + $0x3c0] sm:$0xff]
          %v2070 = vld [vmem:[#allocation2 + $0x3c8] sm:$0xff]
          %v2071 = vld [vmem:[#allocation2 + $0x3d0] sm:$0xff]
          %v2072 = vld [vmem:[#allocation2 + $0x3d8] sm:$0xff]
          %v2073 = vld [vmem:[#allocation2 + $0x3e0] sm:$0xff]
          %v2074 = vld [vmem:[#allocation2 + $0x3e8] sm:$0xff]
          %v2075 = vld [vmem:[#allocation2 + $0x3f0] sm:$0xff]
          %v2076 = vld [vmem:[#allocation2 + $0x3f8] sm:$0xff]
          %v2077 = vld [vmem:[%s2] sm:$0x1]
          %v2079 = vlaneseq
          %v2080 = vshrl.u32 %v2079, 7
          %v2081 = vsub.s32 0, %v2080
          %v2082 = vrot.slane %v2077, %v2081
          %v2084 = vadd.f32 %v1949, %v2082
          %v2085 = vadd.f32 %v1950, %v2082
          %v2086 = vadd.f32 %v1951, %v2082
          %v2087 = vadd.f32 %v1952, %v2082
          %v2088 = vadd.f32 %v1953, %v2082
          %v2089 = vadd.f32 %v1954, %v2082
          %v2090 = vadd.f32 %v1955, %v2082
          %v2091 = vadd.f32 %v1956, %v2082
          %v2092 = vadd.f32 %v1957, %v2082
          %v2093 = vadd.f32 %v1958, %v2082
          %v2094 = vadd.f32 %v1959, %v2082
          %v2095 = vadd.f32 %v1960, %v2082
          %v2096 = vadd.f32 %v1961, %v2082
          %v2097 = vadd.f32 %v1962, %v2082
          %v2098 = vadd.f32 %v1963, %v2082
          %v2099 = vadd.f32 %v1964, %v2082
          %v2100 = vadd.f32 %v1965, %v2082
          %v2101 = vadd.f32 %v1966, %v2082
          %v2102 = vadd.f32 %v1967, %v2082
          %v2103 = vadd.f32 %v1968, %v2082
          %v2104 = vadd.f32 %v1969, %v2082
          %v2105 = vadd.f32 %v1970, %v2082
          %v2106 = vadd.f32 %v1971, %v2082
          %v2107 = vadd.f32 %v1972, %v2082
          %v2108 = vadd.f32 %v1973, %v2082
          %v2109 = vadd.f32 %v1974, %v2082
          %v2110 = vadd.f32 %v1975, %v2082
          %v2111 = vadd.f32 %v1976, %v2082
          %v2112 = vadd.f32 %v1977, %v2082
          %v2113 = vadd.f32 %v1978, %v2082
          %v2114 = vadd.f32 %v1979, %v2082
          %v2115 = vadd.f32 %v1980, %v2082
          %v2116 = vadd.f32 %v1981, %v2082
          %v2117 = vadd.f32 %v1982, %v2082
          %v2118 = vadd.f32 %v1983, %v2082
          %v2119 = vadd.f32 %v1984, %v2082
          %v2120 = vadd.f32 %v1985, %v2082
          %v2121 = vadd.f32 %v1986, %v2082
          %v2122 = vadd.f32 %v1987, %v2082
          %v2123 = vadd.f32 %v1988, %v2082
          %v2124 = vadd.f32 %v1989, %v2082
          %v2125 = vadd.f32 %v1990, %v2082
          %v2126 = vadd.f32 %v1991, %v2082
          %v2127 = vadd.f32 %v1992, %v2082
          %v2128 = vadd.f32 %v1993, %v2082
          %v2129 = vadd.f32 %v1994, %v2082
          %v2130 = vadd.f32 %v1995, %v2082
          %v2131 = vadd.f32 %v1996, %v2082
          %v2132 = vadd.f32 %v1997, %v2082
          %v2133 = vadd.f32 %v1998, %v2082
          %v2134 = vadd.f32 %v1999, %v2082
          %v2135 = vadd.f32 %v2000, %v2082
          %v2136 = vadd.f32 %v2001, %v2082
          %v2137 = vadd.f32 %v2002, %v2082
          %v2138 = vadd.f32 %v2003, %v2082
          %v2139 = vadd.f32 %v2004, %v2082
          %v2140 = vadd.f32 %v2005, %v2082
          %v2141 = vadd.f32 %v2006, %v2082
          %v2142 = vadd.f32 %v2007, %v2082
          %v2143 = vadd.f32 %v2008, %v2082
          %v2144 = vadd.f32 %v2009, %v2082
          %v2145 = vadd.f32 %v2010, %v2082
          %v2146 = vadd.f32 %v2011, %v2082
          %v2147 = vadd.f32 %v2012, %v2082
          %v2148 = vadd.f32 %v2013, %v2082
          %v2149 = vadd.f32 %v2014, %v2082
          %v2150 = vadd.f32 %v2015, %v2082
          %v2151 = vadd.f32 %v2016, %v2082
          %v2152 = vadd.f32 %v2017, %v2082
          %v2153 = vadd.f32 %v2018, %v2082
          %v2154 = vadd.f32 %v2019, %v2082
          %v2155 = vadd.f32 %v2020, %v2082
          %v2156 = vadd.f32 %v2021, %v2082
          %v2157 = vadd.f32 %v2022, %v2082
          %v2158 = vadd.f32 %v2023, %v2082
          %v2159 = vadd.f32 %v2024, %v2082
          %v2160 = vadd.f32 %v2025, %v2082
          %v2161 = vadd.f32 %v2026, %v2082
          %v2162 = vadd.f32 %v2027, %v2082
          %v2163 = vadd.f32 %v2028, %v2082
          %v2164 = vadd.f32 %v2029, %v2082
          %v2165 = vadd.f32 %v2030, %v2082
          %v2166 = vadd.f32 %v2031, %v2082
          %v2167 = vadd.f32 %v2032, %v2082
          %v2168 = vadd.f32 %v2033, %v2082
          %v2169 = vadd.f32 %v2034, %v2082
          %v2170 = vadd.f32 %v2035, %v2082
          %v2171 = vadd.f32 %v2036, %v2082
          %v2172 = vadd.f32 %v2037, %v2082
          %v2173 = vadd.f32 %v2038, %v2082
          %v2174 = vadd.f32 %v2039, %v2082
          %v2175 = vadd.f32 %v2040, %v2082
          %v2176 = vadd.f32 %v2041, %v2082
          %v2177 = vadd.f32 %v2042, %v2082
          %v2178 = vadd.f32 %v2043, %v2082
          %v2179 = vadd.f32 %v2044, %v2082
          %v2180 = vadd.f32 %v2045, %v2082
          %v2181 = vadd.f32 %v2046, %v2082
          %v2182 = vadd.f32 %v2047, %v2082
          %v2183 = vadd.f32 %v2048, %v2082
          %v2184 = vadd.f32 %v2049, %v2082
          %v2185 = vadd.f32 %v2050, %v2082
          %v2186 = vadd.f32 %v2051, %v2082
          %v2187 = vadd.f32 %v2052, %v2082
          %v2188 = vadd.f32 %v2053, %v2082
          %v2189 = vadd.f32 %v2054, %v2082
          %v2190 = vadd.f32 %v2055, %v2082
          %v2191 = vadd.f32 %v2056, %v2082
          %v2192 = vadd.f32 %v2057, %v2082
          %v2193 = vadd.f32 %v2058, %v2082
          %v2194 = vadd.f32 %v2059, %v2082
          %v2195 = vadd.f32 %v2060, %v2082
          %v2196 = vadd.f32 %v2061, %v2082
          %v2197 = vadd.f32 %v2062, %v2082
          %v2198 = vadd.f32 %v2063, %v2082
          %v2199 = vadd.f32 %v2064, %v2082
          %v2200 = vadd.f32 %v2065, %v2082
          %v2201 = vadd.f32 %v2066, %v2082
          %v2202 = vadd.f32 %v2067, %v2082
          %v2203 = vadd.f32 %v2068, %v2082
          %v2204 = vadd.f32 %v2069, %v2082
          %v2205 = vadd.f32 %v2070, %v2082
          %v2206 = vadd.f32 %v2071, %v2082
          %v2207 = vadd.f32 %v2072, %v2082
          %v2208 = vadd.f32 %v2073, %v2082
          %v2209 = vadd.f32 %v2074, %v2082
          %v2210 = vadd.f32 %v2075, %v2082
          %v2211 = vadd.f32 %v2076, %v2082
          %v2212 = vmax.f32 %v2084, 0.0
          %v2213 = vmax.f32 %v2085, 0.0
          %v2214 = vmax.f32 %v2086, 0.0
          %v2215 = vmax.f32 %v2087, 0.0
          %v2216 = vmax.f32 %v2088, 0.0
          %v2217 = vmax.f32 %v2089, 0.0
          %v2218 = vmax.f32 %v2090, 0.0
          %v2219 = vmax.f32 %v2091, 0.0
          %v2220 = vmax.f32 %v2092, 0.0
          %v2221 = vmax.f32 %v2093, 0.0
          %v2222 = vmax.f32 %v2094, 0.0
          %v2223 = vmax.f32 %v2095, 0.0
          %v2224 = vmax.f32 %v2096, 0.0
          %v2225 = vmax.f32 %v2097, 0.0
          %v2226 = vmax.f32 %v2098, 0.0
          %v2227 = vmax.f32 %v2099, 0.0
          %v2228 = vmax.f32 %v2100, 0.0
          %v2229 = vmax.f32 %v2101, 0.0
          %v2230 = vmax.f32 %v2102, 0.0
          %v2231 = vmax.f32 %v2103, 0.0
          %v2232 = vmax.f32 %v2104, 0.0
          %v2233 = vmax.f32 %v2105, 0.0
          %v2234 = vmax.f32 %v2106, 0.0
          %v2235 = vmax.f32 %v2107, 0.0
          %v2236 = vmax.f32 %v2108, 0.0
          %v2237 = vmax.f32 %v2109, 0.0
          %v2238 = vmax.f32 %v2110, 0.0
          %v2239 = vmax.f32 %v2111, 0.0
          %v2240 = vmax.f32 %v2112, 0.0
          %v2241 = vmax.f32 %v2113, 0.0
          %v2242 = vmax.f32 %v2114, 0.0
          %v2243 = vmax.f32 %v2115, 0.0
          %v2244 = vmax.f32 %v2116, 0.0
          %v2245 = vmax.f32 %v2117, 0.0
          %v2246 = vmax.f32 %v2118, 0.0
          %v2247 = vmax.f32 %v2119, 0.0
          %v2248 = vmax.f32 %v2120, 0.0
          %v2249 = vmax.f32 %v2121, 0.0
          %v2250 = vmax.f32 %v2122, 0.0
          %v2251 = vmax.f32 %v2123, 0.0
          %v2252 = vmax.f32 %v2124, 0.0
          %v2253 = vmax.f32 %v2125, 0.0
          %v2254 = vmax.f32 %v2126, 0.0
          %v2255 = vmax.f32 %v2127, 0.0
          %v2256 = vmax.f32 %v2128, 0.0
          %v2257 = vmax.f32 %v2129, 0.0
          %v2258 = vmax.f32 %v2130, 0.0
          %v2259 = vmax.f32 %v2131, 0.0
          %v2260 = vmax.f32 %v2132, 0.0
          %v2261 = vmax.f32 %v2133, 0.0
          %v2262 = vmax.f32 %v2134, 0.0
          %v2263 = vmax.f32 %v2135, 0.0
          %v2264 = vmax.f32 %v2136, 0.0
          %v2265 = vmax.f32 %v2137, 0.0
          %v2266 = vmax.f32 %v2138, 0.0
          %v2267 = vmax.f32 %v2139, 0.0
          %v2268 = vmax.f32 %v2140, 0.0
          %v2269 = vmax.f32 %v2141, 0.0
          %v2270 = vmax.f32 %v2142, 0.0
          %v2271 = vmax.f32 %v2143, 0.0
          %v2272 = vmax.f32 %v2144, 0.0
          %v2273 = vmax.f32 %v2145, 0.0
          %v2274 = vmax.f32 %v2146, 0.0
          %v2275 = vmax.f32 %v2147, 0.0
          %v2276 = vmax.f32 %v2148, 0.0
          %v2277 = vmax.f32 %v2149, 0.0
          %v2278 = vmax.f32 %v2150, 0.0
          %v2279 = vmax.f32 %v2151, 0.0
          %v2280 = vmax.f32 %v2152, 0.0
          %v2281 = vmax.f32 %v2153, 0.0
          %v2282 = vmax.f32 %v2154, 0.0
          %v2283 = vmax.f32 %v2155, 0.0
          %v2284 = vmax.f32 %v2156, 0.0
          %v2285 = vmax.f32 %v2157, 0.0
          %v2286 = vmax.f32 %v2158, 0.0
          %v2287 = vmax.f32 %v2159, 0.0
          %v2288 = vmax.f32 %v2160, 0.0
          %v2289 = vmax.f32 %v2161, 0.0
          %v2290 = vmax.f32 %v2162, 0.0
          %v2291 = vmax.f32 %v2163, 0.0
          %v2292 = vmax.f32 %v2164, 0.0
          %v2293 = vmax.f32 %v2165, 0.0
          %v2294 = vmax.f32 %v2166, 0.0
          %v2295 = vmax.f32 %v2167, 0.0
          %v2296 = vmax.f32 %v2168, 0.0
          %v2297 = vmax.f32 %v2169, 0.0
          %v2298 = vmax.f32 %v2170, 0.0
          %v2299 = vmax.f32 %v2171, 0.0
          %v2300 = vmax.f32 %v2172, 0.0
          %v2301 = vmax.f32 %v2173, 0.0
          %v2302 = vmax.f32 %v2174, 0.0
          %v2303 = vmax.f32 %v2175, 0.0
          %v2304 = vmax.f32 %v2176, 0.0
          %v2305 = vmax.f32 %v2177, 0.0
          %v2306 = vmax.f32 %v2178, 0.0
          %v2307 = vmax.f32 %v2179, 0.0
          %v2308 = vmax.f32 %v2180, 0.0
          %v2309 = vmax.f32 %v2181, 0.0
          %v2310 = vmax.f32 %v2182, 0.0
          %v2311 = vmax.f32 %v2183, 0.0
          %v2312 = vmax.f32 %v2184, 0.0
          %v2313 = vmax.f32 %v2185, 0.0
          %v2314 = vmax.f32 %v2186, 0.0
          %v2315 = vmax.f32 %v2187, 0.0
          %v2316 = vmax.f32 %v2188, 0.0
          %v2317 = vmax.f32 %v2189, 0.0
          %v2318 = vmax.f32 %v2190, 0.0
          %v2319 = vmax.f32 %v2191, 0.0
          %v2320 = vmax.f32 %v2192, 0.0
          %v2321 = vmax.f32 %v2193, 0.0
          %v2322 = vmax.f32 %v2194, 0.0
          %v2323 = vmax.f32 %v2195, 0.0
          %v2324 = vmax.f32 %v2196, 0.0
          %v2325 = vmax.f32 %v2197, 0.0
          %v2326 = vmax.f32 %v2198, 0.0
          %v2327 = vmax.f32 %v2199, 0.0
          %v2328 = vmax.f32 %v2200, 0.0
          %v2329 = vmax.f32 %v2201, 0.0
          %v2330 = vmax.f32 %v2202, 0.0
          %v2331 = vmax.f32 %v2203, 0.0
          %v2332 = vmax.f32 %v2204, 0.0
          %v2333 = vmax.f32 %v2205, 0.0
          %v2334 = vmax.f32 %v2206, 0.0
          %v2335 = vmax.f32 %v2207, 0.0
          %v2336 = vmax.f32 %v2208, 0.0
          %v2337 = vmax.f32 %v2209, 0.0
          %v2338 = vmax.f32 %v2210, 0.0
          %v2339 = vmax.f32 %v2211, 0.0
          %v2340 = vpack.c.bf16 %v2213, %v2212
          %v2341 = vpack.c.bf16 %v2215, %v2214
          %v2342 = vpack.c.bf16 %v2217, %v2216
          %v2343 = vpack.c.bf16 %v2219, %v2218
          %v2344 = vpack.c.bf16 %v2221, %v2220
          %v2345 = vpack.c.bf16 %v2223, %v2222
          %v2346 = vpack.c.bf16 %v2225, %v2224
          %v2347 = vpack.c.bf16 %v2227, %v2226
          %v2348 = vpack.c.bf16 %v2229, %v2228
          %v2349 = vpack.c.bf16 %v2231, %v2230
          %v2350 = vpack.c.bf16 %v2233, %v2232
          %v2351 = vpack.c.bf16 %v2235, %v2234
          %v2352 = vpack.c.bf16 %v2237, %v2236
          %v2353 = vpack.c.bf16 %v2239, %v2238
          %v2354 = vpack.c.bf16 %v2241, %v2240
          %v2355 = vpack.c.bf16 %v2243, %v2242
          %v2356 = vpack.c.bf16 %v2245, %v2244
          %v2357 = vpack.c.bf16 %v2247, %v2246
          %v2358 = vpack.c.bf16 %v2249, %v2248
          %v2359 = vpack.c.bf16 %v2251, %v2250
          %v2360 = vpack.c.bf16 %v2253, %v2252
          %v2361 = vpack.c.bf16 %v2255, %v2254
          %v2362 = vpack.c.bf16 %v2257, %v2256
          %v2363 = vpack.c.bf16 %v2259, %v2258
          %v2364 = vpack.c.bf16 %v2261, %v2260
          %v2365 = vpack.c.bf16 %v2263, %v2262
          %v2366 = vpack.c.bf16 %v2265, %v2264
          %v2367 = vpack.c.bf16 %v2267, %v2266
          %v2368 = vpack.c.bf16 %v2269, %v2268
          %v2369 = vpack.c.bf16 %v2271, %v2270
          %v2370 = vpack.c.bf16 %v2273, %v2272
          %v2371 = vpack.c.bf16 %v2275, %v2274
          %v2372 = vpack.c.bf16 %v2277, %v2276
          %v2373 = vpack.c.bf16 %v2279, %v2278
          %v2374 = vpack.c.bf16 %v2281, %v2280
          %v2375 = vpack.c.bf16 %v2283, %v2282
          %v2376 = vpack.c.bf16 %v2285, %v2284
          %v2377 = vpack.c.bf16 %v2287, %v2286
          %v2378 = vpack.c.bf16 %v2289, %v2288
          %v2379 = vpack.c.bf16 %v2291, %v2290
          %v2380 = vpack.c.bf16 %v2293, %v2292
          %v2381 = vpack.c.bf16 %v2295, %v2294
          %v2382 = vpack.c.bf16 %v2297, %v2296
          %v2383 = vpack.c.bf16 %v2299, %v2298
          %v2384 = vpack.c.bf16 %v2301, %v2300
          %v2385 = vpack.c.bf16 %v2303, %v2302
          %v2386 = vpack.c.bf16 %v2305, %v2304
          %v2387 = vpack.c.bf16 %v2307, %v2306
          %v2388 = vpack.c.bf16 %v2309, %v2308
          %v2389 = vpack.c.bf16 %v2311, %v2310
          %v2390 = vpack.c.bf16 %v2313, %v2312
          %v2391 = vpack.c.bf16 %v2315, %v2314
          %v2392 = vpack.c.bf16 %v2317, %v2316
          %v2393 = vpack.c.bf16 %v2319, %v2318
          %v2394 = vpack.c.bf16 %v2321, %v2320
          %v2395 = vpack.c.bf16 %v2323, %v2322
          %v2396 = vpack.c.bf16 %v2325, %v2324
          %v2397 = vpack.c.bf16 %v2327, %v2326
          %v2398 = vpack.c.bf16 %v2329, %v2328
          %v2399 = vpack.c.bf16 %v2331, %v2330
          %v2400 = vpack.c.bf16 %v2333, %v2332
          %v2401 = vpack.c.bf16 %v2335, %v2334
          %v2402 = vpack.c.bf16 %v2337, %v2336
          %v2403 = vpack.c.bf16 %v2339, %v2338
          %v2468 = vunpack.c.l.b16 %v2340
          %v2469 = vunpack.c.h.b16 %v2340
          %v2470 = vunpack.c.l.b16 %v2341
          %v2471 = vunpack.c.h.b16 %v2341
          %v2472 = vunpack.c.l.b16 %v2342
          %v2473 = vunpack.c.h.b16 %v2342
          %v2474 = vunpack.c.l.b16 %v2343
          %v2475 = vunpack.c.h.b16 %v2343
          %v2476 = vunpack.c.l.b16 %v2344
          %v2477 = vunpack.c.h.b16 %v2344
          %v2478 = vunpack.c.l.b16 %v2345
          %v2479 = vunpack.c.h.b16 %v2345
          %v2480 = vunpack.c.l.b16 %v2346
          %v2481 = vunpack.c.h.b16 %v2346
          %v2482 = vunpack.c.l.b16 %v2347
          %v2483 = vunpack.c.h.b16 %v2347
          %v2484 = vunpack.c.l.b16 %v2348
          %v2485 = vunpack.c.h.b16 %v2348
          %v2486 = vunpack.c.l.b16 %v2349
          %v2487 = vunpack.c.h.b16 %v2349
          %v2488 = vunpack.c.l.b16 %v2350
          %v2489 = vunpack.c.h.b16 %v2350
          %v2490 = vunpack.c.l.b16 %v2351
          %v2491 = vunpack.c.h.b16 %v2351
          %v2492 = vunpack.c.l.b16 %v2352
          %v2493 = vunpack.c.h.b16 %v2352
          %v2494 = vunpack.c.l.b16 %v2353
          %v2495 = vunpack.c.h.b16 %v2353
          %v2496 = vunpack.c.l.b16 %v2354
          %v2497 = vunpack.c.h.b16 %v2354
          %v2498 = vunpack.c.l.b16 %v2355
          %v2499 = vunpack.c.h.b16 %v2355
          %v2500 = vunpack.c.l.b16 %v2356
          %v2501 = vunpack.c.h.b16 %v2356
          %v2502 = vunpack.c.l.b16 %v2357
          %v2503 = vunpack.c.h.b16 %v2357
          %v2504 = vunpack.c.l.b16 %v2358
          %v2505 = vunpack.c.h.b16 %v2358
          %v2506 = vunpack.c.l.b16 %v2359
          %v2507 = vunpack.c.h.b16 %v2359
          %v2508 = vunpack.c.l.b16 %v2360
          %v2509 = vunpack.c.h.b16 %v2360
          %v2510 = vunpack.c.l.b16 %v2361
          %v2511 = vunpack.c.h.b16 %v2361
          %v2512 = vunpack.c.l.b16 %v2362
          %v2513 = vunpack.c.h.b16 %v2362
          %v2514 = vunpack.c.l.b16 %v2363
          %v2515 = vunpack.c.h.b16 %v2363
          %v2516 = vunpack.c.l.b16 %v2364
          %v2517 = vunpack.c.h.b16 %v2364
          %v2518 = vunpack.c.l.b16 %v2365
          %v2519 = vunpack.c.h.b16 %v2365
          %v2520 = vunpack.c.l.b16 %v2366
          %v2521 = vunpack.c.h.b16 %v2366
          %v2522 = vunpack.c.l.b16 %v2367
          %v2523 = vunpack.c.h.b16 %v2367
          %v2524 = vunpack.c.l.b16 %v2368
          %v2525 = vunpack.c.h.b16 %v2368
          %v2526 = vunpack.c.l.b16 %v2369
          %v2527 = vunpack.c.h.b16 %v2369
          %v2528 = vunpack.c.l.b16 %v2370
          %v2529 = vunpack.c.h.b16 %v2370
          %v2530 = vunpack.c.l.b16 %v2371
          %v2531 = vunpack.c.h.b16 %v2371
          %v2532 = vunpack.c.l.b16 %v2372
          %v2533 = vunpack.c.h.b16 %v2372
          %v2534 = vunpack.c.l.b16 %v2373
          %v2535 = vunpack.c.h.b16 %v2373
          %v2536 = vunpack.c.l.b16 %v2374
          %v2537 = vunpack.c.h.b16 %v2374
          %v2538 = vunpack.c.l.b16 %v2375
          %v2539 = vunpack.c.h.b16 %v2375
          %v2540 = vunpack.c.l.b16 %v2376
          %v2541 = vunpack.c.h.b16 %v2376
          %v2542 = vunpack.c.l.b16 %v2377
          %v2543 = vunpack.c.h.b16 %v2377
          %v2544 = vunpack.c.l.b16 %v2378
          %v2545 = vunpack.c.h.b16 %v2378
          %v2546 = vunpack.c.l.b16 %v2379
          %v2547 = vunpack.c.h.b16 %v2379
          %v2548 = vunpack.c.l.b16 %v2380
          %v2549 = vunpack.c.h.b16 %v2380
          %v2550 = vunpack.c.l.b16 %v2381
          %v2551 = vunpack.c.h.b16 %v2381
          %v2552 = vunpack.c.l.b16 %v2382
          %v2553 = vunpack.c.h.b16 %v2382
          %v2554 = vunpack.c.l.b16 %v2383
          %v2555 = vunpack.c.h.b16 %v2383
          %v2556 = vunpack.c.l.b16 %v2384
          %v2557 = vunpack.c.h.b16 %v2384
          %v2558 = vunpack.c.l.b16 %v2385
          %v2559 = vunpack.c.h.b16 %v2385
          %v2560 = vunpack.c.l.b16 %v2386
          %v2561 = vunpack.c.h.b16 %v2386
          %v2562 = vunpack.c.l.b16 %v2387
          %v2563 = vunpack.c.h.b16 %v2387
          %v2564 = vunpack.c.l.b16 %v2388
          %v2565 = vunpack.c.h.b16 %v2388
          %v2566 = vunpack.c.l.b16 %v2389
          %v2567 = vunpack.c.h.b16 %v2389
          %v2568 = vunpack.c.l.b16 %v2390
          %v2569 = vunpack.c.h.b16 %v2390
          %v2570 = vunpack.c.l.b16 %v2391
          %v2571 = vunpack.c.h.b16 %v2391
          %v2572 = vunpack.c.l.b16 %v2392
          %v2573 = vunpack.c.h.b16 %v2392
          %v2574 = vunpack.c.l.b16 %v2393
          %v2575 = vunpack.c.h.b16 %v2393
          %v2576 = vunpack.c.l.b16 %v2394
          %v2577 = vunpack.c.h.b16 %v2394
          %v2578 = vunpack.c.l.b16 %v2395
          %v2579 = vunpack.c.h.b16 %v2395
          %v2580 = vunpack.c.l.b16 %v2396
          %v2581 = vunpack.c.h.b16 %v2396
          %v2582 = vunpack.c.l.b16 %v2397
          %v2583 = vunpack.c.h.b16 %v2397
          %v2584 = vunpack.c.l.b16 %v2398
          %v2585 = vunpack.c.h.b16 %v2398
          %v2586 = vunpack.c.l.b16 %v2399
          %v2587 = vunpack.c.h.b16 %v2399
          %v2588 = vunpack.c.l.b16 %v2400
          %v2589 = vunpack.c.h.b16 %v2400
          %v2590 = vunpack.c.l.b16 %v2401
          %v2591 = vunpack.c.h.b16 %v2401
          %v2592 = vunpack.c.l.b16 %v2402
          %v2593 = vunpack.c.h.b16 %v2402
          %v2594 = vunpack.c.l.b16 %v2403
          %v2595 = vunpack.c.h.b16 %v2403
          %v2596 = vpack.c.b16 %v2468, %v2468
          %v2597 = vpack.c.b16 %v2469, %v2469
          %v2598 = vpack.c.b16 %v2470, %v2470
          %v2599 = vpack.c.b16 %v2471, %v2471
          %v2600 = vpack.c.b16 %v2472, %v2472
          %v2601 = vpack.c.b16 %v2473, %v2473
          %v2602 = vpack.c.b16 %v2474, %v2474
          %v2603 = vpack.c.b16 %v2475, %v2475
          %v2604 = vpack.c.b16 %v2476, %v2476
          %v2605 = vpack.c.b16 %v2477, %v2477
          %v2606 = vpack.c.b16 %v2478, %v2478
          %v2607 = vpack.c.b16 %v2479, %v2479
          %v2608 = vpack.c.b16 %v2480, %v2480
          %v2609 = vpack.c.b16 %v2481, %v2481
          %v2610 = vpack.c.b16 %v2482, %v2482
          %v2611 = vpack.c.b16 %v2483, %v2483
          %v2612 = vpack.c.b16 %v2484, %v2484
          %v2613 = vpack.c.b16 %v2485, %v2485
          %v2614 = vpack.c.b16 %v2486, %v2486
          %v2615 = vpack.c.b16 %v2487, %v2487
          %v2616 = vpack.c.b16 %v2488, %v2488
          %v2617 = vpack.c.b16 %v2489, %v2489
          %v2618 = vpack.c.b16 %v2490, %v2490
          %v2619 = vpack.c.b16 %v2491, %v2491
          %v2620 = vpack.c.b16 %v2492, %v2492
          %v2621 = vpack.c.b16 %v2493, %v2493
          %v2622 = vpack.c.b16 %v2494, %v2494
          %v2623 = vpack.c.b16 %v2495, %v2495
          %v2624 = vpack.c.b16 %v2496, %v2496
          %v2625 = vpack.c.b16 %v2497, %v2497
          %v2626 = vpack.c.b16 %v2498, %v2498
          %v2627 = vpack.c.b16 %v2499, %v2499
          %v2628 = vpack.c.b16 %v2500, %v2500
          %v2629 = vpack.c.b16 %v2501, %v2501
          %v2630 = vpack.c.b16 %v2502, %v2502
          %v2631 = vpack.c.b16 %v2503, %v2503
          %v2632 = vpack.c.b16 %v2504, %v2504
          %v2633 = vpack.c.b16 %v2505, %v2505
          %v2634 = vpack.c.b16 %v2506, %v2506
          %v2635 = vpack.c.b16 %v2507, %v2507
          %v2636 = vpack.c.b16 %v2508, %v2508
          %v2637 = vpack.c.b16 %v2509, %v2509
          %v2638 = vpack.c.b16 %v2510, %v2510
          %v2639 = vpack.c.b16 %v2511, %v2511
          %v2640 = vpack.c.b16 %v2512, %v2512
          %v2641 = vpack.c.b16 %v2513, %v2513
          %v2642 = vpack.c.b16 %v2514, %v2514
          %v2643 = vpack.c.b16 %v2515, %v2515
          %v2644 = vpack.c.b16 %v2516, %v2516
          %v2645 = vpack.c.b16 %v2517, %v2517
          %v2646 = vpack.c.b16 %v2518, %v2518
          %v2647 = vpack.c.b16 %v2519, %v2519
          %v2648 = vpack.c.b16 %v2520, %v2520
          %v2649 = vpack.c.b16 %v2521, %v2521
          %v2650 = vpack.c.b16 %v2522, %v2522
          %v2651 = vpack.c.b16 %v2523, %v2523
          %v2652 = vpack.c.b16 %v2524, %v2524
          %v2653 = vpack.c.b16 %v2525, %v2525
          %v2654 = vpack.c.b16 %v2526, %v2526
          %v2655 = vpack.c.b16 %v2527, %v2527
          %v2656 = vpack.c.b16 %v2528, %v2528
          %v2657 = vpack.c.b16 %v2529, %v2529
          %v2658 = vpack.c.b16 %v2530, %v2530
          %v2659 = vpack.c.b16 %v2531, %v2531
          %v2660 = vpack.c.b16 %v2532, %v2532
          %v2661 = vpack.c.b16 %v2533, %v2533
          %v2662 = vpack.c.b16 %v2534, %v2534
          %v2663 = vpack.c.b16 %v2535, %v2535
          %v2664 = vpack.c.b16 %v2536, %v2536
          %v2665 = vpack.c.b16 %v2537, %v2537
          %v2666 = vpack.c.b16 %v2538, %v2538
          %v2667 = vpack.c.b16 %v2539, %v2539
          %v2668 = vpack.c.b16 %v2540, %v2540
          %v2669 = vpack.c.b16 %v2541, %v2541
          %v2670 = vpack.c.b16 %v2542, %v2542
          %v2671 = vpack.c.b16 %v2543, %v2543
          %v2672 = vpack.c.b16 %v2544, %v2544
          %v2673 = vpack.c.b16 %v2545, %v2545
          %v2674 = vpack.c.b16 %v2546, %v2546
          %v2675 = vpack.c.b16 %v2547, %v2547
          %v2676 = vpack.c.b16 %v2548, %v2548
          %v2677 = vpack.c.b16 %v2549, %v2549
          %v2678 = vpack.c.b16 %v2550, %v2550
          %v2679 = vpack.c.b16 %v2551, %v2551
          %v2680 = vpack.c.b16 %v2552, %v2552
          %v2681 = vpack.c.b16 %v2553, %v2553
          %v2682 = vpack.c.b16 %v2554, %v2554
          %v2683 = vpack.c.b16 %v2555, %v2555
          %v2684 = vpack.c.b16 %v2556, %v2556
          %v2685 = vpack.c.b16 %v2557, %v2557
          %v2686 = vpack.c.b16 %v2558, %v2558
          %v2687 = vpack.c.b16 %v2559, %v2559
          %v2688 = vpack.c.b16 %v2560, %v2560
          %v2689 = vpack.c.b16 %v2561, %v2561
          %v2690 = vpack.c.b16 %v2562, %v2562
          %v2691 = vpack.c.b16 %v2563, %v2563
          %v2692 = vpack.c.b16 %v2564, %v2564
          %v2693 = vpack.c.b16 %v2565, %v2565
          %v2694 = vpack.c.b16 %v2566, %v2566
          %v2695 = vpack.c.b16 %v2567, %v2567
          %v2696 = vpack.c.b16 %v2568, %v2568
          %v2697 = vpack.c.b16 %v2569, %v2569
          %v2698 = vpack.c.b16 %v2570, %v2570
          %v2699 = vpack.c.b16 %v2571, %v2571
          %v2700 = vpack.c.b16 %v2572, %v2572
          %v2701 = vpack.c.b16 %v2573, %v2573
          %v2702 = vpack.c.b16 %v2574, %v2574
          %v2703 = vpack.c.b16 %v2575, %v2575
          %v2704 = vpack.c.b16 %v2576, %v2576
          %v2705 = vpack.c.b16 %v2577, %v2577
          %v2706 = vpack.c.b16 %v2578, %v2578
          %v2707 = vpack.c.b16 %v2579, %v2579
          %v2708 = vpack.c.b16 %v2580, %v2580
          %v2709 = vpack.c.b16 %v2581, %v2581
          %v2710 = vpack.c.b16 %v2582, %v2582
          %v2711 = vpack.c.b16 %v2583, %v2583
          %v2712 = vpack.c.b16 %v2584, %v2584
          %v2713 = vpack.c.b16 %v2585, %v2585
          %v2714 = vpack.c.b16 %v2586, %v2586
          %v2715 = vpack.c.b16 %v2587, %v2587
          %v2716 = vpack.c.b16 %v2588, %v2588
          %v2717 = vpack.c.b16 %v2589, %v2589
          %v2718 = vpack.c.b16 %v2590, %v2590
          %v2719 = vpack.c.b16 %v2591, %v2591
          %v2720 = vpack.c.b16 %v2592, %v2592
          %v2721 = vpack.c.b16 %v2593, %v2593
          %v2722 = vpack.c.b16 %v2594, %v2594
          %v2723 = vpack.c.b16 %v2595, %v2595
          %2852 = vst [vmem:[%s219] sm:$0xf] %v2596
          %2853 = vst [vmem:[%s219 + $0x4] sm:$0xf] %v2597
          %2854 = vst [vmem:[%s219 + $0x8] sm:$0xf] %v2598
          %2855 = vst [vmem:[%s219 + $0xc] sm:$0xf] %v2599
          %2856 = vst [vmem:[%s219 + $0x10] sm:$0xf] %v2600
          %2857 = vst [vmem:[%s219 + $0x14] sm:$0xf] %v2601
          %2858 = vst [vmem:[%s219 + $0x18] sm:$0xf] %v2602
          %2859 = vst [vmem:[%s219 + $0x1c] sm:$0xf] %v2603
          %2860 = vst [vmem:[%s219 + $0x20] sm:$0xf] %v2604
          %2861 = vst [vmem:[%s219 + $0x24] sm:$0xf] %v2605
          %2862 = vst [vmem:[%s219 + $0x28] sm:$0xf] %v2606
          %2863 = vst [vmem:[%s219 + $0x2c] sm:$0xf] %v2607
          %2864 = vst [vmem:[%s219 + $0x30] sm:$0xf] %v2608
          %2865 = vst [vmem:[%s219 + $0x34] sm:$0xf] %v2609
          %2866 = vst [vmem:[%s219 + $0x38] sm:$0xf] %v2610
          %2867 = vst [vmem:[%s219 + $0x3c] sm:$0xf] %v2611
          %2868 = vst [vmem:[%s219 + $0x40] sm:$0xf] %v2612
          %2869 = vst [vmem:[%s219 + $0x44] sm:$0xf] %v2613
          %2870 = vst [vmem:[%s219 + $0x48] sm:$0xf] %v2614
          %2871 = vst [vmem:[%s219 + $0x4c] sm:$0xf] %v2615
          %2872 = vst [vmem:[%s219 + $0x50] sm:$0xf] %v2616
          %2873 = vst [vmem:[%s219 + $0x54] sm:$0xf] %v2617
          %2874 = vst [vmem:[%s219 + $0x58] sm:$0xf] %v2618
          %2875 = vst [vmem:[%s219 + $0x5c] sm:$0xf] %v2619
          %2876 = vst [vmem:[%s219 + $0x60] sm:$0xf] %v2620
          %2877 = vst [vmem:[%s219 + $0x64] sm:$0xf] %v2621
          %2878 = vst [vmem:[%s219 + $0x68] sm:$0xf] %v2622
          %2879 = vst [vmem:[%s219 + $0x6c] sm:$0xf] %v2623
          %2880 = vst [vmem:[%s219 + $0x70] sm:$0xf] %v2624
          %2881 = vst [vmem:[%s219 + $0x74] sm:$0xf] %v2625
          %2882 = vst [vmem:[%s219 + $0x78] sm:$0xf] %v2626
          %2883 = vst [vmem:[%s219 + $0x7c] sm:$0xf] %v2627
          %2884 = vst [vmem:[%s219 + $0x80] sm:$0xf] %v2628
          %2885 = vst [vmem:[%s219 + $0x84] sm:$0xf] %v2629
          %2886 = vst [vmem:[%s219 + $0x88] sm:$0xf] %v2630
          %2887 = vst [vmem:[%s219 + $0x8c] sm:$0xf] %v2631
          %2888 = vst [vmem:[%s219 + $0x90] sm:$0xf] %v2632
          %2889 = vst [vmem:[%s219 + $0x94] sm:$0xf] %v2633
          %2890 = vst [vmem:[%s219 + $0x98] sm:$0xf] %v2634
          %2891 = vst [vmem:[%s219 + $0x9c] sm:$0xf] %v2635
          %2892 = vst [vmem:[%s219 + $0xa0] sm:$0xf] %v2636
          %2893 = vst [vmem:[%s219 + $0xa4] sm:$0xf] %v2637
          %2894 = vst [vmem:[%s219 + $0xa8] sm:$0xf] %v2638
          %2895 = vst [vmem:[%s219 + $0xac] sm:$0xf] %v2639
          %2896 = vst [vmem:[%s219 + $0xb0] sm:$0xf] %v2640
          %2897 = vst [vmem:[%s219 + $0xb4] sm:$0xf] %v2641
          %2898 = vst [vmem:[%s219 + $0xb8] sm:$0xf] %v2642
          %2899 = vst [vmem:[%s219 + $0xbc] sm:$0xf] %v2643
          %2900 = vst [vmem:[%s219 + $0xc0] sm:$0xf] %v2644
          %2901 = vst [vmem:[%s219 + $0xc4] sm:$0xf] %v2645
          %2902 = vst [vmem:[%s219 + $0xc8] sm:$0xf] %v2646
          %2903 = vst [vmem:[%s219 + $0xcc] sm:$0xf] %v2647
          %2904 = vst [vmem:[%s219 + $0xd0] sm:$0xf] %v2648
          %2905 = vst [vmem:[%s219 + $0xd4] sm:$0xf] %v2649
          %2906 = vst [vmem:[%s219 + $0xd8] sm:$0xf] %v2650
          %2907 = vst [vmem:[%s219 + $0xdc] sm:$0xf] %v2651
          %2908 = vst [vmem:[%s219 + $0xe0] sm:$0xf] %v2652
          %2909 = vst [vmem:[%s219 + $0xe4] sm:$0xf] %v2653
          %2910 = vst [vmem:[%s219 + $0xe8] sm:$0xf] %v2654
          %2911 = vst [vmem:[%s219 + $0xec] sm:$0xf] %v2655
          %2912 = vst [vmem:[%s219 + $0xf0] sm:$0xf] %v2656
          %2913 = vst [vmem:[%s219 + $0xf4] sm:$0xf] %v2657
          %2914 = vst [vmem:[%s219 + $0xf8] sm:$0xf] %v2658
          %2915 = vst [vmem:[%s219 + $0xfc] sm:$0xf] %v2659
          %2916 = vst [vmem:[%s219 + $0x100] sm:$0xf] %v2660
          %2917 = vst [vmem:[%s219 + $0x104] sm:$0xf] %v2661
          %2918 = vst [vmem:[%s219 + $0x108] sm:$0xf] %v2662
          %2919 = vst [vmem:[%s219 + $0x10c] sm:$0xf] %v2663
          %2920 = vst [vmem:[%s219 + $0x110] sm:$0xf] %v2664
          %2921 = vst [vmem:[%s219 + $0x114] sm:$0xf] %v2665
          %2922 = vst [vmem:[%s219 + $0x118] sm:$0xf] %v2666
          %2923 = vst [vmem:[%s219 + $0x11c] sm:$0xf] %v2667
          %2924 = vst [vmem:[%s219 + $0x120] sm:$0xf] %v2668
          %2925 = vst [vmem:[%s219 + $0x124] sm:$0xf] %v2669
          %2926 = vst [vmem:[%s219 + $0x128] sm:$0xf] %v2670
          %2927 = vst [vmem:[%s219 + $0x12c] sm:$0xf] %v2671
          %2928 = vst [vmem:[%s219 + $0x130] sm:$0xf] %v2672
          %2929 = vst [vmem:[%s219 + $0x134] sm:$0xf] %v2673
          %2930 = vst [vmem:[%s219 + $0x138] sm:$0xf] %v2674
          %2931 = vst [vmem:[%s219 + $0x13c] sm:$0xf] %v2675
          %2932 = vst [vmem:[%s219 + $0x140] sm:$0xf] %v2676
          %2933 = vst [vmem:[%s219 + $0x144] sm:$0xf] %v2677
          %2934 = vst [vmem:[%s219 + $0x148] sm:$0xf] %v2678
          %2935 = vst [vmem:[%s219 + $0x14c] sm:$0xf] %v2679
          %2936 = vst [vmem:[%s219 + $0x150] sm:$0xf] %v2680
          %2937 = vst [vmem:[%s219 + $0x154] sm:$0xf] %v2681
          %2938 = vst [vmem:[%s219 + $0x158] sm:$0xf] %v2682
          %2939 = vst [vmem:[%s219 + $0x15c] sm:$0xf] %v2683
          %2940 = vst [vmem:[%s219 + $0x160] sm:$0xf] %v2684
          %2941 = vst [vmem:[%s219 + $0x164] sm:$0xf] %v2685
          %2942 = vst [vmem:[%s219 + $0x168] sm:$0xf] %v2686
          %2943 = vst [vmem:[%s219 + $0x16c] sm:$0xf] %v2687
          %2944 = vst [vmem:[%s219 + $0x170] sm:$0xf] %v2688
          %2945 = vst [vmem:[%s219 + $0x174] sm:$0xf] %v2689
          %2946 = vst [vmem:[%s219 + $0x178] sm:$0xf] %v2690
          %2947 = vst [vmem:[%s219 + $0x17c] sm:$0xf] %v2691
          %2948 = vst [vmem:[%s219 + $0x180] sm:$0xf] %v2692
          %2949 = vst [vmem:[%s219 + $0x184] sm:$0xf] %v2693
          %2950 = vst [vmem:[%s219 + $0x188] sm:$0xf] %v2694
          %2951 = vst [vmem:[%s219 + $0x18c] sm:$0xf] %v2695
          %2952 = vst [vmem:[%s219 + $0x190] sm:$0xf] %v2696
          %2953 = vst [vmem:[%s219 + $0x194] sm:$0xf] %v2697
          %2954 = vst [vmem:[%s219 + $0x198] sm:$0xf] %v2698
          %2955 = vst [vmem:[%s219 + $0x19c] sm:$0xf] %v2699
          %2956 = vst [vmem:[%s219 + $0x1a0] sm:$0xf] %v2700
          %2957 = vst [vmem:[%s219 + $0x1a4] sm:$0xf] %v2701
          %2958 = vst [vmem:[%s219 + $0x1a8] sm:$0xf] %v2702
          %2959 = vst [vmem:[%s219 + $0x1ac] sm:$0xf] %v2703
          %2960 = vst [vmem:[%s219 + $0x1b0] sm:$0xf] %v2704
          %2961 = vst [vmem:[%s219 + $0x1b4] sm:$0xf] %v2705
          %2962 = vst [vmem:[%s219 + $0x1b8] sm:$0xf] %v2706
          %2963 = vst [vmem:[%s219 + $0x1bc] sm:$0xf] %v2707
          %2964 = vst [vmem:[%s219 + $0x1c0] sm:$0xf] %v2708
          %2965 = vst [vmem:[%s219 + $0x1c4] sm:$0xf] %v2709
          %2966 = vst [vmem:[%s219 + $0x1c8] sm:$0xf] %v2710
          %2967 = vst [vmem:[%s219 + $0x1cc] sm:$0xf] %v2711
          %2968 = vst [vmem:[%s219 + $0x1d0] sm:$0xf] %v2712
          %2969 = vst [vmem:[%s219 + $0x1d4] sm:$0xf] %v2713
          %2970 = vst [vmem:[%s219 + $0x1d8] sm:$0xf] %v2714
          %2971 = vst [vmem:[%s219 + $0x1dc] sm:$0xf] %v2715
          %2972 = vst [vmem:[%s219 + $0x1e0] sm:$0xf] %v2716
          %2973 = vst [vmem:[%s219 + $0x1e4] sm:$0xf] %v2717
          %2974 = vst [vmem:[%s219 + $0x1e8] sm:$0xf] %v2718
          %2975 = vst [vmem:[%s219 + $0x1ec] sm:$0xf] %v2719
          %2976 = vst [vmem:[%s219 + $0x1f0] sm:$0xf] %v2720
          %2977 = vst [vmem:[%s219 + $0x1f4] sm:$0xf] %v2721
          %2978 = vst [vmem:[%s219 + $0x1f8] sm:$0xf] %v2722
          %2979 = vst [vmem:[%s219 + $0x1fc] sm:$0xf] %v2723
        $region44: #{faster_rcnn_forward.6} parent=31 // pred_fallthru
          _
        %s2980 = smul.u32 128, %s19
        %p2981 = scmp.lt.s32.totalorder %s2980, 255
        %s2982 = scalar_select %p2981, %s2980, 255
        %s2983 = smul.addr %s2982, 4
        %s2984 = scalar_lea.vmem %s3, %s2983
        // Predicated region
        $region45: #{faster_rcnn_forward.6} parent=31 // pred_check
          %p2985 = pneg %p120
        $region46: #{faster_rcnn_forward.6} parent=31 // pred_check_branch
          %2987 = sbr.rel (%p2985) target = $region48
        $region47: #{faster_rcnn_forward.6} parent=31 // pred_region
          %s2988 = smul.u32 128, %s19
        $region48: #{faster_rcnn_forward.6} parent=31 // pred_fallthru
          _
      $region32: #{faster_rcnn_forward.6} parent=5 // pred_fallthru
        _
      %p2989 = scmp.le.s32.totalorder 2, %s10
      // Predicated region
      $region49: #{faster_rcnn_forward.6} parent=5 // pred_check
        %p2990 = pneg %p2989
      $region50: #{faster_rcnn_forward.6} parent=5 // pred_check_branch
        %2992 = sbr.rel (%p2990) target = $region52
      $region51: #{faster_rcnn_forward.6} parent=5 // pred_region
        %s2993 = ssub.s32 %s10, 2
        // Predicated region
        $region53: #{faster_rcnn_forward.6} parent=51 // pred_check
          %p2994 = pneg %p126
        $region54: #{faster_rcnn_forward.6} parent=51 // pred_check_branch
          %2996 = sbr.rel (%p2994) target = $region56
        $region55: #{faster_rcnn_forward.6} parent=51 // pred_region
          %s2997 = smul.u32 128, %s21
          %p2998 = scmp.lt.s32.totalorder %s2997, 255
          %s2999 = scalar_select %p2998, %s2997, 255
          %s3000 = smul.addr %s2999, 4
          %s3001 = scalar_lea.vmem %s3, %s3000
        $region56: #{faster_rcnn_forward.6} parent=51 // pred_fallthru
          _
      $region52: #{faster_rcnn_forward.6} parent=5 // pred_fallthru
        _
    $region6: #{faster_rcnn_forward.6} parent=1 // loop_footer
      %s14 = sadd.s32 1, %s10
    $region7: #{faster_rcnn_forward.6} parent=1 // loop_footer_branch
      %9 = sbr.rel target = $region3
    $region8: #{faster_rcnn_forward.6} parent=1 // loop_exit
      _
    %3002 = vsyncpa [#allocation4], 1
    %s3003 = scalar_lea.sflag [#allocation4], 1
    %3004 = vsyncpa %s3003, 1

// kernel: faster_rcnn_forward.7
$region0: #{faster_rcnn_forward.7}
  #allocation0 [shape = 'u32[]', space=smem, size = 0x4, offset = 0x4, fixed_abs, tag = 'smem constant byte address 0x4 - core index']
  #allocation1 [shape = 'u32[144,128]{1,0:T(1,128)}', space=vmem, size = 0x12000, scoped, tag = 'internal scratch']
  #allocation2 [shape = 'f32[256,128]{1,0:T(8,128)}', space=vmem, size = 0x20000, scoped, tag = 'scratch operand']
  %s0 = inlined_call_operand.vmem [shape: bf16[512,72], index: 0, kind: input, shape index: {}]
  %s1 = inlined_call_operand.vmem [shape: bf16[72,128], index: 1, kind: input, shape index: {}]
  %s2 = inlined_call_operand.vmem [shape: f32[1,128], index: 2, kind: input, shape index: {}]
  %s3 = inlined_call_operand.vmem [shape: bf16[512,128], index: 3, kind: output, shape index: {}]
  %s4 = sld [smem:[#allocation0]]
  $region53: #{faster_rcnn_forward.7} parent=0
    _
  %s6 = ssub.s32 1, %s4
  %s7 = scalar_select 0, %s6, %s4
  loop: start=0, step=1, limit=4
  $region2: #{faster_rcnn_forward.7} parent=0 // loop_pre_header
    _
  $region3: #{faster_rcnn_forward.7} parent=0 // loop_header
    %s9 = sphi 0, %s13
    %p10 = scmp.ge.s32.totalorder %s9, 4
    %s16 = sphi 0, %s28
    %s17 = sphi 0, %s24
    %s18 = sphi 0, %s16
    %s19 = sphi 0, %s17
    %s20 = sphi 0, %s18
    %s21 = sphi 0, %s19
    %s33 = sphi 0, %s35
    %s36 = sphi 0, %s33
    %s37 = sphi 0, %s36
    %s53 = sphi 0, %s37
    %s59 = sphi 0, %s61
    %s62 = sphi 0, %s59
    %s63 = sphi 0, %s62
    %s79 = sphi 0, %s63
    %s83 = sphi 0, %s83
    %s85 = sphi 0, %s83
    %s86 = sphi 0, %s85
    %s100 = sphi 0, %s86
    %s106 = sphi 0, %s108
    %s109 = sphi 0, %s106
    %s110 = sphi 0, %s109
    %s126 = sphi 0, %s110
  $region4: #{faster_rcnn_forward.7} parent=0 // loop_header_branch
    %12 = sbr.rel (%p10) target = $region8
  $region5: #{faster_rcnn_forward.7} parent=0 // loop_body
    %s14 = ssub.s32 %s9, 1
    %s15 = ssub.s32 %s9, 2
    %s22 = sadd.s32 1, %s17
    %p23 = scmp.ge.s32.totalorder %s22, 1
    %s24 = scalar_select %p23, 0, %s22
    %s25 = sadd.s32 1, %s16
    %s26 = scalar_select %p23, %s25, %s16
    %p27 = scmp.ge.s32.totalorder %s26, 2
    %s28 = scalar_select %p27, 0, %s26
    %s29 = ssub.s32 %s16, %s28
    %s30 = ssub.s32 %s17, %s24
    %s31 = sor.u32 %s29, %s30
    %p32 = scmp.eq.s32.totalorder %s31, 0
    %s34 = sadd.s32 %s33, 1
    %s35 = scalar_select %p32, %s33, %s34
    %p38 = pneg %p32
    %p39 = scmp.eq.s32.totalorder %s9, 1
    %p40 = por %p38, %p39
    %p41 = scmp.ne.s32.totalorder %s33, %s36
    %p42 = scmp.eq.s32.totalorder %s9, 0
    %p43 = por %p41, %p42
    %p44 = scmp.ne.s32.totalorder %s33, %s36
    %p45 = scmp.eq.s32.totalorder %s14, 1
    %p46 = por %p44, %p45
    %p47 = scmp.ne.s32.totalorder %s36, %s37
    %p48 = scmp.eq.s32.totalorder %s14, 0
    %p49 = por %p47, %p48
    %p50 = scmp.ne.s32.totalorder %s36, %s37
    %p51 = scmp.eq.s32.totalorder %s15, 1
    %p52 = por %p50, %p51
    %p54 = scmp.ne.s32.totalorder %s37, %s53
    %p55 = scmp.eq.s32.totalorder %s15, 0
    %p56 = por %p54, %p55
    %s57 = ssub.s32 %s17, %s24
    %p58 = scmp.eq.s32.totalorder %s57, 0
    %s60 = sadd.s32 %s59, 1
    %s61 = scalar_select %p58, %s59, %s60
    %p64 = pneg %p58
    %p65 = scmp.eq.s32.totalorder %s9, 1
    %p66 = por %p64, %p65
    %p67 = scmp.ne.s32.totalorder %s59, %s62
    %p68 = scmp.eq.s32.totalorder %s9, 0
    %p69 = por %p67, %p68
    %p70 = scmp.ne.s32.totalorder %s59, %s62
    %p71 = scmp.eq.s32.totalorder %s14, 1
    %p72 = por %p70, %p71
    %p73 = scmp.ne.s32.totalorder %s62, %s63
    %p74 = scmp.eq.s32.totalorder %s14, 0
    %p75 = por %p73, %p74
    %p76 = scmp.ne.s32.totalorder %s62, %s63
    %p77 = scmp.eq.s32.totalorder %s15, 1
    %p78 = por %p76, %p77
    %p80 = scmp.ne.s32.totalorder %s63, %s79
    %p81 = scmp.eq.s32.totalorder %s15, 0
    %p82 = por %p80, %p81
    %s84 = sadd.s32 %s83, 1
    %p87 = scmp.eq.s32.totalorder %s9, 1
    %p88 = scmp.ne.s32.totalorder %s83, %s85
    %p89 = scmp.eq.s32.totalorder %s9, 0
    %p90 = por %p88, %p89
    %p91 = scmp.ne.s32.totalorder %s83, %s85
    %p92 = scmp.eq.s32.totalorder %s14, 1
    %p93 = por %p91, %p92
    %p94 = scmp.ne.s32.totalorder %s85, %s86
    %p95 = scmp.eq.s32.totalorder %s14, 0
    %p96 = por %p94, %p95
    %p97 = scmp.ne.s32.totalorder %s85, %s86
    %p98 = scmp.eq.s32.totalorder %s15, 1
    %p99 = por %p97, %p98
    %p101 = scmp.ne.s32.totalorder %s86, %s100
    %p102 = scmp.eq.s32.totalorder %s15, 0
    %p103 = por %p101, %p102
    %s104 = ssub.s32 %s16, %s28
    %p105 = scmp.eq.s32.totalorder %s104, 0
    %s107 = sadd.s32 %s106, 1
    %s108 = scalar_select %p105, %s106, %s107
    %p111 = pneg %p105
    %p112 = scmp.eq.s32.totalorder %s9, 1
    %p113 = por %p111, %p112
    %p114 = scmp.ne.s32.totalorder %s106, %s109
    %p115 = scmp.eq.s32.totalorder %s9, 0
    %p116 = por %p114, %p115
    %p117 = scmp.ne.s32.totalorder %s106, %s109
    %p118 = scmp.eq.s32.totalorder %s14, 1
    %p119 = por %p117, %p118
    %p120 = scmp.ne.s32.totalorder %s109, %s110
    %p121 = scmp.eq.s32.totalorder %s14, 0
    %p122 = por %p120, %p121
    %p123 = scmp.ne.s32.totalorder %s109, %s110
    %p124 = scmp.eq.s32.totalorder %s15, 1
    %p125 = por %p123, %p124
    %p127 = scmp.ne.s32.totalorder %s110, %s126
    %p128 = scmp.eq.s32.totalorder %s15, 0
    %p129 = por %p127, %p128
    %p130 = scmp.le.s32.totalorder 1, %s9
    %p131 = scmp.lt.s32.totalorder %s9, 3
    %p132 = pnand %p130, %p131
    %p133 = pneg %p132
    // Predicated region
    $region9: #{faster_rcnn_forward.7} parent=5 // pred_check
      _
    $region10: #{faster_rcnn_forward.7} parent=5 // pred_check_branch
      %135 = sbr.rel (%p132) target = $region12
    $region11: #{faster_rcnn_forward.7} parent=5 // pred_region
      %s136 = ssub.s32 %s9, 1
      // Predicated region
      $region13: #{faster_rcnn_forward.7} parent=11 // pred_check
        %p137 = pneg %p75
      $region14: #{faster_rcnn_forward.7} parent=11 // pred_check_branch
        %139 = sbr.rel (%p137) target = $region16
      $region15: #{faster_rcnn_forward.7} parent=11 // pred_region
        %s140 = smul.u32 9, %s19
        %p141 = scmp.lt.s32.totalorder %s140, 8
        %s142 = scalar_select %p141, %s140, 8
        %s143 = smul.addr %s142, 4
        %s144 = scalar_lea.vmem %s1, %s143
        %s145 = smul.u32 9, %s19
      $region16: #{faster_rcnn_forward.7} parent=11 // pred_fallthru
        _
      // Predicated region
      $region17: #{faster_rcnn_forward.7} parent=11 // pred_check
        %p146 = pneg %p96
      $region18: #{faster_rcnn_forward.7} parent=11 // pred_check_branch
        %148 = sbr.rel (%p146) target = $region20
      $region19: #{faster_rcnn_forward.7} parent=11 // pred_region
        _
      $region20: #{faster_rcnn_forward.7} parent=11 // pred_fallthru
        _
    $region12: #{faster_rcnn_forward.7} parent=5 // pred_fallthru
      _
    %p149 = scmp.lt.s32.totalorder %s9, 2
    // Predicated region
    $region21: #{faster_rcnn_forward.7} parent=5 // pred_check
      %p150 = pneg %p149
    $region22: #{faster_rcnn_forward.7} parent=5 // pred_check_branch
      %152 = sbr.rel (%p150) target = $region24
    $region23: #{faster_rcnn_forward.7} parent=5 // pred_region
      // Predicated region
      $region25: #{faster_rcnn_forward.7} parent=23 // pred_check
        %p153 = pneg %p43
      $region26: #{faster_rcnn_forward.7} parent=23 // pred_check_branch
        %155 = sbr.rel (%p153) target = $region28
      $region27: #{faster_rcnn_forward.7} parent=23 // pred_region
        %s156 = smul.u32 32, %s16
        %p157 = scmp.lt.s32.totalorder %s156, 63
        %s158 = scalar_select %p157, %s156, 63
        %p159 = scmp.lt.s32.totalorder %s17, 0
        %s160 = scalar_select %p159, %s17, 0
        %s161 = sadd.s32 %s160, %s158
        %s162 = smul.addr %s161, 4
        %s163 = scalar_lea.vmem %s0, %s162
        %s164 = smul.u32 32, %s16
      $region28: #{faster_rcnn_forward.7} parent=23 // pred_fallthru
        _
    $region24: #{faster_rcnn_forward.7} parent=5 // pred_fallthru
      _
    %p165 = scmp.le.s32.totalorder 1, %s9
    %p166 = scmp.lt.s32.totalorder %s9, 3
    %p167 = pnand %p165, %p166
    %p168 = pneg %p167
    // Predicated region
    $region29: #{faster_rcnn_forward.7} parent=5 // pred_check
      _
    $region30: #{faster_rcnn_forward.7} parent=5 // pred_check_branch
      %170 = sbr.rel (%p167) target = $region32
    $region31: #{faster_rcnn_forward.7} parent=5 // pred_region
      %s171 = ssub.s32 %s9, 1
      %s172 = smul.u32 32, %s18
      %p173 = scmp.lt.s32.totalorder %s172, 63
      %s174 = scalar_select %p173, %s172, 63
      %p175 = scmp.lt.s32.totalorder %s19, 0
      %s176 = scalar_select %p175, %s19, 0
      %s177 = sadd.s32 %s176, %s174
      %s178 = smul.addr %s177, 4
      %s179 = scalar_lea.vmem %s0, %s178
      %p180 = pneg %p49
      %p181 = pneg %p46
      %s182 = smul.u32 9, %s19
      %p183 = scmp.lt.s32.totalorder %s182, 8
      %s184 = scalar_select %p183, %s182, 8
      %s185 = smul.addr %s184, 4
      %s186 = scalar_lea.vmem %s1, %s185
      %p187 = pneg %p75
      %p188 = pneg %p72
      %p189 = pneg %p96
      %p190 = pneg %p93
      %p191 = pneg %p122
      %p192 = pneg %p119
      %s193 = smul.u32 32, %s18
      %p194 = scmp.lt.s32.totalorder %s193, 63
      %s195 = scalar_select %p194, %s193, 63
      %s196 = smul.addr %s195, 4
      %s197 = scalar_lea.vmem %s3, %s196
      %s198 = smul.u32 32, %s18
      %p199 = scmp.lt.s32.totalorder %s198, 63
      %s200 = scalar_select %p199, %s198, 63
      %p201 = scmp.lt.s32.totalorder %s19, 0
      %s202 = scalar_select %p201, %s19, 0
      %s203 = sadd.s32 %s202, %s200
      %s204 = smul.addr %s203, 4
      %s205 = scalar_lea.vmem %s0, %s204
      %s206 = smul.u32 32, %s18
      %s207 = smul.u32 9, %s19
      %p208 = scmp.lt.s32.totalorder %s207, 8
      %s209 = scalar_select %p208, %s207, 8
      %s210 = smul.addr %s209, 4
      %s211 = scalar_lea.vmem %s1, %s210
      %s212 = smul.u32 9, %s19
      %s213 = smul.u32 32, %s18
      %p214 = scmp.lt.s32.totalorder %s213, 63
      %s215 = scalar_select %p214, %s213, 63
      %s216 = smul.addr %s215, 4
      %s217 = scalar_lea.vmem %s3, %s216
      %s218 = smul.u32 32, %s18
      %p220 = scmp.eq.s32.totalorder %s19, 0
      // Predicated region
      $region33: #{faster_rcnn_forward.7} parent=31 // pred_check
        %p221 = pneg %p220
      $region34: #{faster_rcnn_forward.7} parent=31 // pred_check_branch
        %223 = sbr.rel (%p221) target = $region36
      $region35: #{faster_rcnn_forward.7} parent=31 // pred_region
        %224 = vst [vmem:[#allocation2] sm:$0xff] 0.0
        %225 = vst [vmem:[#allocation2 + $0x8] sm:$0xff] 0.0
        %226 = vst [vmem:[#allocation2 + $0x10] sm:$0xff] 0.0
        %227 = vst [vmem:[#allocation2 + $0x18] sm:$0xff] 0.0
        %228 = vst [vmem:[#allocation2 + $0x20] sm:$0xff] 0.0
        %229 = vst [vmem:[#allocation2 + $0x28] sm:$0xff] 0.0
        %230 = vst [vmem:[#allocation2 + $0x30] sm:$0xff] 0.0
        %231 = vst [vmem:[#allocation2 + $0x38] sm:$0xff] 0.0
        %232 = vst [vmem:[#allocation2 + $0x40] sm:$0xff] 0.0
        %233 = vst [vmem:[#allocation2 + $0x48] sm:$0xff] 0.0
        %234 = vst [vmem:[#allocation2 + $0x50] sm:$0xff] 0.0
        %235 = vst [vmem:[#allocation2 + $0x58] sm:$0xff] 0.0
        %236 = vst [vmem:[#allocation2 + $0x60] sm:$0xff] 0.0
        %237 = vst [vmem:[#allocation2 + $0x68] sm:$0xff] 0.0
        %238 = vst [vmem:[#allocation2 + $0x70] sm:$0xff] 0.0
        %239 = vst [vmem:[#allocation2 + $0x78] sm:$0xff] 0.0
        %240 = vst [vmem:[#allocation2 + $0x80] sm:$0xff] 0.0
        %241 = vst [vmem:[#allocation2 + $0x88] sm:$0xff] 0.0
        %242 = vst [vmem:[#allocation2 + $0x90] sm:$0xff] 0.0
        %243 = vst [vmem:[#allocation2 + $0x98] sm:$0xff] 0.0
        %244 = vst [vmem:[#allocation2 + $0xa0] sm:$0xff] 0.0
        %245 = vst [vmem:[#allocation2 + $0xa8] sm:$0xff] 0.0
        %246 = vst [vmem:[#allocation2 + $0xb0] sm:$0xff] 0.0
        %247 = vst [vmem:[#allocation2 + $0xb8] sm:$0xff] 0.0
        %248 = vst [vmem:[#allocation2 + $0xc0] sm:$0xff] 0.0
        %249 = vst [vmem:[#allocation2 + $0xc8] sm:$0xff] 0.0
        %250 = vst [vmem:[#allocation2 + $0xd0] sm:$0xff] 0.0
        %251 = vst [vmem:[#allocation2 + $0xd8] sm:$0xff] 0.0
        %252 = vst [vmem:[#allocation2 + $0xe0] sm:$0xff] 0.0
        %253 = vst [vmem:[#allocation2 + $0xe8] sm:$0xff] 0.0
        %254 = vst [vmem:[#allocation2 + $0xf0] sm:$0xff] 0.0
        %255 = vst [vmem:[#allocation2 + $0xf8] sm:$0xff] 0.0
      $region36: #{faster_rcnn_forward.7} parent=31 // pred_fallthru
        _
      %v256 = vld [vmem:[#allocation2] sm:$0xff]
      %v257 = vld [vmem:[#allocation2 + $0x8] sm:$0xff]
      %v258 = vld [vmem:[#allocation2 + $0x10] sm:$0xff]
      %v259 = vld [vmem:[#allocation2 + $0x18] sm:$0xff]
      %v260 = vld [vmem:[#allocation2 + $0x20] sm:$0xff]
      %v261 = vld [vmem:[#allocation2 + $0x28] sm:$0xff]
      %v262 = vld [vmem:[#allocation2 + $0x30] sm:$0xff]
      %v263 = vld [vmem:[#allocation2 + $0x38] sm:$0xff]
      %v264 = vld [vmem:[#allocation2 + $0x40] sm:$0xff]
      %v265 = vld [vmem:[#allocation2 + $0x48] sm:$0xff]
      %v266 = vld [vmem:[#allocation2 + $0x50] sm:$0xff]
      %v267 = vld [vmem:[#allocation2 + $0x58] sm:$0xff]
      %v268 = vld [vmem:[#allocation2 + $0x60] sm:$0xff]
      %v269 = vld [vmem:[#allocation2 + $0x68] sm:$0xff]
      %v270 = vld [vmem:[#allocation2 + $0x70] sm:$0xff]
      %v271 = vld [vmem:[#allocation2 + $0x78] sm:$0xff]
      %v272 = vld [vmem:[#allocation2 + $0x80] sm:$0xff]
      %v273 = vld [vmem:[#allocation2 + $0x88] sm:$0xff]
      %v274 = vld [vmem:[#allocation2 + $0x90] sm:$0xff]
      %v275 = vld [vmem:[#allocation2 + $0x98] sm:$0xff]
      %v276 = vld [vmem:[#allocation2 + $0xa0] sm:$0xff]
      %v277 = vld [vmem:[#allocation2 + $0xa8] sm:$0xff]
      %v278 = vld [vmem:[#allocation2 + $0xb0] sm:$0xff]
      %v279 = vld [vmem:[#allocation2 + $0xb8] sm:$0xff]
      %v280 = vld [vmem:[#allocation2 + $0xc0] sm:$0xff]
      %v281 = vld [vmem:[#allocation2 + $0xc8] sm:$0xff]
      %v282 = vld [vmem:[#allocation2 + $0xd0] sm:$0xff]
      %v283 = vld [vmem:[#allocation2 + $0xd8] sm:$0xff]
      %v284 = vld [vmem:[#allocation2 + $0xe0] sm:$0xff]
      %v285 = vld [vmem:[#allocation2 + $0xe8] sm:$0xff]
      %v286 = vld [vmem:[#allocation2 + $0xf0] sm:$0xff]
      %v287 = vld [vmem:[#allocation2 + $0xf8] sm:$0xff]
      %v288 = vld [vmem:[%s205] sm:$0xf]
      %v289 = vld [vmem:[%s205 + $0x4] sm:$0xf]
      %v290 = vld [vmem:[%s205 + $0x8] sm:$0xf]
      %v291 = vld [vmem:[%s205 + $0xc] sm:$0xf]
      %v292 = vld [vmem:[%s205 + $0x10] sm:$0xf]
      %v293 = vld [vmem:[%s205 + $0x14] sm:$0xf]
      %v294 = vld [vmem:[%s205 + $0x18] sm:$0xf]
      %v295 = vld [vmem:[%s205 + $0x1c] sm:$0xf]
      %v296 = vld [vmem:[%s205 + $0x20] sm:$0xf]
      %v297 = vld [vmem:[%s205 + $0x24] sm:$0xf]
      %v298 = vld [vmem:[%s205 + $0x28] sm:$0xf]
      %v299 = vld [vmem:[%s205 + $0x2c] sm:$0xf]
      %v300 = vld [vmem:[%s205 + $0x30] sm:$0xf]
      %v301 = vld [vmem:[%s205 + $0x34] sm:$0xf]
      %v302 = vld [vmem:[%s205 + $0x38] sm:$0xf]
      %v303 = vld [vmem:[%s205 + $0x3c] sm:$0xf]
      %v304 = vld [vmem:[%s205 + $0x40] sm:$0xf]
      %v305 = vld [vmem:[%s205 + $0x44] sm:$0xf]
      %v306 = vld [vmem:[%s205 + $0x48] sm:$0xf]
      %v307 = vld [vmem:[%s205 + $0x4c] sm:$0xf]
      %v308 = vld [vmem:[%s205 + $0x50] sm:$0xf]
      %v309 = vld [vmem:[%s205 + $0x54] sm:$0xf]
      %v310 = vld [vmem:[%s205 + $0x58] sm:$0xf]
      %v311 = vld [vmem:[%s205 + $0x5c] sm:$0xf]
      %v312 = vld [vmem:[%s205 + $0x60] sm:$0xf]
      %v313 = vld [vmem:[%s205 + $0x64] sm:$0xf]
      %v314 = vld [vmem:[%s205 + $0x68] sm:$0xf]
      %v315 = vld [vmem:[%s205 + $0x6c] sm:$0xf]
      %v316 = vld [vmem:[%s205 + $0x70] sm:$0xf]
      %v317 = vld [vmem:[%s205 + $0x74] sm:$0xf]
      %v318 = vld [vmem:[%s205 + $0x78] sm:$0xf]
      %v319 = vld [vmem:[%s205 + $0x7c] sm:$0xf]
      %v320 = vld [vmem:[%s211] sm:$0xf]
      %v321 = vld [vmem:[%s211 + $0x4] sm:$0xf]
      %v322 = vld [vmem:[%s211 + $0x8] sm:$0xf]
      %v323 = vld [vmem:[%s211 + $0xc] sm:$0xf]
      %v324 = vld [vmem:[%s211 + $0x10] sm:$0xf]
      %v325 = vld [vmem:[%s211 + $0x14] sm:$0xf]
      %v326 = vld [vmem:[%s211 + $0x18] sm:$0xf]
      %v327 = vld [vmem:[%s211 + $0x1c] sm:$0xf]
      %v328 = vld [vmem:[%s211 + $0x20] sm:$0xf]
      %v361 = vunpack.c.l.b16 %v288
      %v362 = vunpack.c.l.b16 %v289
      %v363 = vunpack.c.l.b16 %v290
      %v364 = vunpack.c.l.b16 %v291
      %v365 = vunpack.c.l.b16 %v292
      %v366 = vunpack.c.l.b16 %v293
      %v367 = vunpack.c.l.b16 %v294
      %v368 = vunpack.c.l.b16 %v295
      %v369 = vunpack.c.l.b16 %v296
      %v370 = vunpack.c.l.b16 %v297
      %v371 = vunpack.c.l.b16 %v298
      %v372 = vunpack.c.l.b16 %v299
      %v373 = vunpack.c.l.b16 %v300
      %v374 = vunpack.c.l.b16 %v301
      %v375 = vunpack.c.l.b16 %v302
      %v376 = vunpack.c.l.b16 %v303
      %v377 = vunpack.c.l.b16 %v304
      %v378 = vunpack.c.l.b16 %v305
      %v379 = vunpack.c.l.b16 %v306
      %v380 = vunpack.c.l.b16 %v307
      %v381 = vunpack.c.l.b16 %v308
      %v382 = vunpack.c.l.b16 %v309
      %v383 = vunpack.c.l.b16 %v310
      %v384 = vunpack.c.l.b16 %v311
      %v385 = vunpack.c.l.b16 %v312
      %v386 = vunpack.c.l.b16 %v313
      %v387 = vunpack.c.l.b16 %v314
      %v388 = vunpack.c.l.b16 %v315
      %v389 = vunpack.c.l.b16 %v316
      %v390 = vunpack.c.l.b16 %v317
      %v391 = vunpack.c.l.b16 %v318
      %v392 = vunpack.c.l.b16 %v319
      %v393 = vpack.c.b16 %v362, %v361
      %v394 = vpack.c.b16 %v364, %v363
      %v395 = vpack.c.b16 %v366, %v365
      %v396 = vpack.c.b16 %v368, %v367
      %v397 = vpack.c.b16 %v370, %v369
      %v398 = vpack.c.b16 %v372, %v371
      %v399 = vpack.c.b16 %v374, %v373
      %v400 = vpack.c.b16 %v376, %v375
      %v401 = vpack.c.b16 %v378, %v377
      %v402 = vpack.c.b16 %v380, %v379
      %v403 = vpack.c.b16 %v382, %v381
      %v404 = vpack.c.b16 %v384, %v383
      %v405 = vpack.c.b16 %v386, %v385
      %v406 = vpack.c.b16 %v388, %v387
      %v407 = vpack.c.b16 %v390, %v389
      %v408 = vpack.c.b16 %v392, %v391
      %v418 = vunpack.c.l.b16 %v320
      %v419 = vunpack.c.l.b16 %v321
      %v420 = vunpack.c.l.b16 %v322
      %v421 = vunpack.c.l.b16 %v323
      %v422 = vunpack.c.l.b16 %v324
      %v423 = vunpack.c.l.b16 %v325
      %v424 = vunpack.c.l.b16 %v326
      %v425 = vunpack.c.l.b16 %v327
      %v426 = vunpack.c.l.b16 %v328
      %v427 = vpack.c.b16 %v419, %v418
      %v428 = vpack.c.b16 %v421, %v420
      %v429 = vpack.c.b16 %v423, %v422
      %v430 = vpack.c.b16 %v425, %v424
      %v431 = vpack.c.b16 %v426, %v426
      %vm436 = vcmask 588800
      %v438 = vsel %vm436, %v393, 0
      %v441 = vsel %vm436, %v394, 0
      %v444 = vsel %vm436, %v395, 0
      %v447 = vsel %vm436, %v396, 0
      %v450 = vsel %vm436, %v397, 0
      %v453 = vsel %vm436, %v398, 0
      %v456 = vsel %vm436, %v399, 0
      %v459 = vsel %vm436, %v400, 0
      %v462 = vsel %vm436, %v401, 0
      %v465 = vsel %vm436, %v402, 0
      %v468 = vsel %vm436, %v403, 0
      %v471 = vsel %vm436, %v404, 0
      %v474 = vsel %vm436, %v405, 0
      %v477 = vsel %vm436, %v406, 0
      %v480 = vsel %vm436, %v407, 0
      %v483 = vsel %vm436, %v408, 0
      %vm485 = vcmask 1043456
      %v487 = vsel %vm485, %v431, 0
      %489 = vmatprep.subr.bf16.mxu0 0
      %490 = vmatpush1.bf16.msra.mxu0 0
      %491 = vmatprep.subr.bf16.mxu0 0
      %492 = vmatpush1.bf16.msra.mxu0 0
      %493 = vmatprep.subr.bf16.mxu0 0
      %494 = vmatpush1.bf16.msra.mxu0 0
      %495 = vmatprep.subr.bf16.mxu0 0
      %496 = vmatpush1.bf16.msra.mxu0 %v487
      %497 = vmatprep.subr.bf16.mxu0 0
      %498 = vmatpush1.bf16.msra.mxu0 %v430
      %499 = vmatprep.subr.bf16.mxu0 0
      %500 = vmatpush1.bf16.msra.mxu0 %v429
      %501 = vmatprep.subr.bf16.mxu0 0
      %502 = vmatpush1.bf16.msra.mxu0 %v428
      %503 = vmatprep.subr.bf16.mxu0 0
      %504 = vmatpush1.bf16.msra.mxu0 %v427
      %505 = vmatprep.subr.bf16.mxu0 0
      %506 = vmatpush2.bf16.msra.mxu0 0
      %507 = vmatprep.subr.bf16.mxu0 0
      %508 = vmatpush2.bf16.msra.mxu0 0
      %509 = vmatprep.subr.bf16.mxu0 0
      %510 = vmatpush2.bf16.msra.mxu0 0
      %511 = vmatprep.subr.bf16.mxu0 0
      %512 = vmatpush2.bf16.msra.mxu0 0
      %513 = vmatprep.subr.bf16.mxu0 0
      %514 = vmatpush2.bf16.msra.mxu0 0
      %515 = vmatprep.subr.bf16.mxu0 0
      %516 = vmatpush2.bf16.msra.mxu0 0
      %517 = vmatprep.subr.bf16.mxu0 0
      %518 = vmatpush2.bf16.msra.mxu0 0
      %519 = vmatprep.subr.bf16.mxu0 0
      %520 = vmatpush2.bf16.msra.mxu0 0
      %521 = vmatprep.mubr.bf16.mxu0 0
      %522 = vmatmul.mubr.bf16.gmra.mxu0 %v438
      %v523 = vpop.f32.mrf.mxu0
      %v524 = vadd.f32 0.0, %v523
      %v525 = vpop.f32.mrf.mxu0
      %v526 = vpop.f32.mrf.mxu0
      %v527 = vadd.f32 0.0, %v526
      %v528 = vpop.f32.mrf.mxu0
      %529 = vmatprep.mubr.bf16.mxu0 0
      %530 = vmatmul.mubr.bf16.gmra.mxu0 %v441
      %v531 = vpop.f32.mrf.mxu0
      %v532 = vadd.f32 0.0, %v531
      %v533 = vpop.f32.mrf.mxu0
      %v534 = vpop.f32.mrf.mxu0
      %v535 = vadd.f32 0.0, %v534
      %v536 = vpop.f32.mrf.mxu0
      %537 = vmatprep.mubr.bf16.mxu0 0
      %538 = vmatmul.mubr.bf16.gmra.mxu0 %v444
      %v539 = vpop.f32.mrf.mxu0
      %v540 = vadd.f32 0.0, %v539
      %v541 = vpop.f32.mrf.mxu0
      %v542 = vpop.f32.mrf.mxu0
      %v543 = vadd.f32 0.0, %v542
      %v544 = vpop.f32.mrf.mxu0
      %545 = vmatprep.mubr.bf16.mxu0 0
      %546 = vmatmul.mubr.bf16.gmra.mxu0 %v447
      %v547 = vpop.f32.mrf.mxu0
      %v548 = vadd.f32 0.0, %v547
      %v549 = vpop.f32.mrf.mxu0
      %v550 = vpop.f32.mrf.mxu0
      %v551 = vadd.f32 0.0, %v550
      %v552 = vpop.f32.mrf.mxu0
      %553 = vmatprep.mubr.bf16.mxu0 0
      %554 = vmatmul.mubr.bf16.gmra.mxu0 %v450
      %v555 = vpop.f32.mrf.mxu0
      %v556 = vadd.f32 0.0, %v555
      %v557 = vpop.f32.mrf.mxu0
      %v558 = vpop.f32.mrf.mxu0
      %v559 = vadd.f32 0.0, %v558
      %v560 = vpop.f32.mrf.mxu0
      %561 = vmatprep.mubr.bf16.mxu0 0
      %562 = vmatmul.mubr.bf16.gmra.mxu0 %v453
      %v563 = vpop.f32.mrf.mxu0
      %v564 = vadd.f32 0.0, %v563
      %v565 = vpop.f32.mrf.mxu0
      %v566 = vpop.f32.mrf.mxu0
      %v567 = vadd.f32 0.0, %v566
      %v568 = vpop.f32.mrf.mxu0
      %569 = vmatprep.mubr.bf16.mxu0 0
      %570 = vmatmul.mubr.bf16.gmra.mxu0 %v456
      %v571 = vpop.f32.mrf.mxu0
      %v572 = vadd.f32 0.0, %v571
      %v573 = vpop.f32.mrf.mxu0
      %v574 = vpop.f32.mrf.mxu0
      %v575 = vadd.f32 0.0, %v574
      %v576 = vpop.f32.mrf.mxu0
      %577 = vmatprep.mubr.bf16.mxu0 0
      %578 = vmatmul.mubr.bf16.gmra.mxu0 %v459
      %v579 = vpop.f32.mrf.mxu0
      %v580 = vadd.f32 0.0, %v579
      %v581 = vpop.f32.mrf.mxu0
      %v582 = vpop.f32.mrf.mxu0
      %v583 = vadd.f32 0.0, %v582
      %v584 = vpop.f32.mrf.mxu0
      %585 = vmatprep.mubr.bf16.mxu0 0
      %586 = vmatmul.mubr.bf16.gmra.mxu0 %v462
      %v587 = vpop.f32.mrf.mxu0
      %v588 = vadd.f32 0.0, %v587
      %v589 = vpop.f32.mrf.mxu0
      %v590 = vpop.f32.mrf.mxu0
      %v591 = vadd.f32 0.0, %v590
      %v592 = vpop.f32.mrf.mxu0
      %593 = vmatprep.mubr.bf16.mxu0 0
      %594 = vmatmul.mubr.bf16.gmra.mxu0 %v465
      %v595 = vpop.f32.mrf.mxu0
      %v596 = vadd.f32 0.0, %v595
      %v597 = vpop.f32.mrf.mxu0
      %v598 = vpop.f32.mrf.mxu0
      %v599 = vadd.f32 0.0, %v598
      %v600 = vpop.f32.mrf.mxu0
      %601 = vmatprep.mubr.bf16.mxu0 0
      %602 = vmatmul.mubr.bf16.gmra.mxu0 %v468
      %v603 = vpop.f32.mrf.mxu0
      %v604 = vadd.f32 0.0, %v603
      %v605 = vpop.f32.mrf.mxu0
      %v606 = vpop.f32.mrf.mxu0
      %v607 = vadd.f32 0.0, %v606
      %v608 = vpop.f32.mrf.mxu0
      %609 = vmatprep.mubr.bf16.mxu0 0
      %610 = vmatmul.mubr.bf16.gmra.mxu0 %v471
      %v611 = vpop.f32.mrf.mxu0
      %v612 = vadd.f32 0.0, %v611
      %v613 = vpop.f32.mrf.mxu0
      %v614 = vpop.f32.mrf.mxu0
      %v615 = vadd.f32 0.0, %v614
      %v616 = vpop.f32.mrf.mxu0
      %617 = vmatprep.mubr.bf16.mxu0 0
      %618 = vmatmul.mubr.bf16.gmra.mxu0 %v474
      %v619 = vpop.f32.mrf.mxu0
      %v620 = vadd.f32 0.0, %v619
      %v621 = vpop.f32.mrf.mxu0
      %v622 = vpop.f32.mrf.mxu0
      %v623 = vadd.f32 0.0, %v622
      %v624 = vpop.f32.mrf.mxu0
      %625 = vmatprep.mubr.bf16.mxu0 0
      %626 = vmatmul.mubr.bf16.gmra.mxu0 %v477
      %v627 = vpop.f32.mrf.mxu0
      %v628 = vadd.f32 0.0, %v627
      %v629 = vpop.f32.mrf.mxu0
      %v630 = vpop.f32.mrf.mxu0
      %v631 = vadd.f32 0.0, %v630
      %v632 = vpop.f32.mrf.mxu0
      %633 = vmatprep.mubr.bf16.mxu0 0
      %634 = vmatmul.mubr.bf16.gmra.mxu0 %v480
      %v635 = vpop.f32.mrf.mxu0
      %v636 = vadd.f32 0.0, %v635
      %v637 = vpop.f32.mrf.mxu0
      %v638 = vpop.f32.mrf.mxu0
      %v639 = vadd.f32 0.0, %v638
      %v640 = vpop.f32.mrf.mxu0
      %641 = vmatprep.mubr.bf16.mxu0 0
      %642 = vmatmul.mubr.bf16.gmra.mxu0 %v483
      %v643 = vpop.f32.mrf.mxu0
      %v644 = vadd.f32 0.0, %v643
      %v645 = vpop.f32.mrf.mxu0
      %v646 = vpop.f32.mrf.mxu0
      %v647 = vadd.f32 0.0, %v646
      %v648 = vpop.f32.mrf.mxu0
      %649 = vdwg.mxu0
      %v650 = vadd.f32 %v256, %v524
      %v651 = vadd.f32 %v257, %v527
      %v652 = vadd.f32 %v258, %v532
      %v653 = vadd.f32 %v259, %v535
      %v654 = vadd.f32 %v260, %v540
      %v655 = vadd.f32 %v261, %v543
      %v656 = vadd.f32 %v262, %v548
      %v657 = vadd.f32 %v263, %v551
      %v658 = vadd.f32 %v264, %v556
      %v659 = vadd.f32 %v265, %v559
      %v660 = vadd.f32 %v266, %v564
      %v661 = vadd.f32 %v267, %v567
      %v662 = vadd.f32 %v268, %v572
      %v663 = vadd.f32 %v269, %v575
      %v664 = vadd.f32 %v270, %v580
      %v665 = vadd.f32 %v271, %v583
      %v666 = vadd.f32 %v272, %v588
      %v667 = vadd.f32 %v273, %v591
      %v668 = vadd.f32 %v274, %v596
      %v669 = vadd.f32 %v275, %v599
      %v670 = vadd.f32 %v276, %v604
      %v671 = vadd.f32 %v277, %v607
      %v672 = vadd.f32 %v278, %v612
      %v673 = vadd.f32 %v279, %v615
      %v674 = vadd.f32 %v280, %v620
      %v675 = vadd.f32 %v281, %v623
      %v676 = vadd.f32 %v282, %v628
      %v677 = vadd.f32 %v283, %v631
      %v678 = vadd.f32 %v284, %v636
      %v679 = vadd.f32 %v285, %v639
      %v680 = vadd.f32 %v286, %v644
      %v681 = vadd.f32 %v287, %v647
      %682 = vst [vmem:[#allocation2] sm:$0xff] %v650
      %683 = vst [vmem:[#allocation2 + $0x8] sm:$0xff] %v651
      %684 = vst [vmem:[#allocation2 + $0x10] sm:$0xff] %v652
      %685 = vst [vmem:[#allocation2 + $0x18] sm:$0xff] %v653
      %686 = vst [vmem:[#allocation2 + $0x20] sm:$0xff] %v654
      %687 = vst [vmem:[#allocation2 + $0x28] sm:$0xff] %v655
      %688 = vst [vmem:[#allocation2 + $0x30] sm:$0xff] %v656
      %689 = vst [vmem:[#allocation2 + $0x38] sm:$0xff] %v657
      %690 = vst [vmem:[#allocation2 + $0x40] sm:$0xff] %v658
      %691 = vst [vmem:[#allocation2 + $0x48] sm:$0xff] %v659
      %692 = vst [vmem:[#allocation2 + $0x50] sm:$0xff] %v660
      %693 = vst [vmem:[#allocation2 + $0x58] sm:$0xff] %v661
      %694 = vst [vmem:[#allocation2 + $0x60] sm:$0xff] %v662
      %695 = vst [vmem:[#allocation2 + $0x68] sm:$0xff] %v663
      %696 = vst [vmem:[#allocation2 + $0x70] sm:$0xff] %v664
      %697 = vst [vmem:[#allocation2 + $0x78] sm:$0xff] %v665
      %698 = vst [vmem:[#allocation2 + $0x80] sm:$0xff] %v666
      %699 = vst [vmem:[#allocation2 + $0x88] sm:$0xff] %v667
      %700 = vst [vmem:[#allocation2 + $0x90] sm:$0xff] %v668
      %701 = vst [vmem:[#allocation2 + $0x98] sm:$0xff] %v669
      %702 = vst [vmem:[#allocation2 + $0xa0] sm:$0xff] %v670
      %703 = vst [vmem:[#allocation2 + $0xa8] sm:$0xff] %v671
      %704 = vst [vmem:[#allocation2 + $0xb0] sm:$0xff] %v672
      %705 = vst [vmem:[#allocation2 + $0xb8] sm:$0xff] %v673
      %706 = vst [vmem:[#allocation2 + $0xc0] sm:$0xff] %v674
      %707 = vst [vmem:[#allocation2 + $0xc8] sm:$0xff] %v675
      %708 = vst [vmem:[#allocation2 + $0xd0] sm:$0xff] %v676
      %709 = vst [vmem:[#allocation2 + $0xd8] sm:$0xff] %v677
      %710 = vst [vmem:[#allocation2 + $0xe0] sm:$0xff] %v678
      %711 = vst [vmem:[#allocation2 + $0xe8] sm:$0xff] %v679
      %712 = vst [vmem:[#allocation2 + $0xf0] sm:$0xff] %v680
      %713 = vst [vmem:[#allocation2 + $0xf8] sm:$0xff] %v681
      // Predicated region
      $region37: #{faster_rcnn_forward.7} parent=31 // pred_check
        %p714 = pneg %p220
      $region38: #{faster_rcnn_forward.7} parent=31 // pred_check_branch
        %716 = sbr.rel (%p714) target = $region40
      $region39: #{faster_rcnn_forward.7} parent=31 // pred_region
        %v717 = vld [vmem:[#allocation2] sm:$0xff]
        %v718 = vld [vmem:[#allocation2 + $0x8] sm:$0xff]
        %v719 = vld [vmem:[#allocation2 + $0x10] sm:$0xff]
        %v720 = vld [vmem:[#allocation2 + $0x18] sm:$0xff]
        %v721 = vld [vmem:[#allocation2 + $0x20] sm:$0xff]
        %v722 = vld [vmem:[#allocation2 + $0x28] sm:$0xff]
        %v723 = vld [vmem:[#allocation2 + $0x30] sm:$0xff]
        %v724 = vld [vmem:[#allocation2 + $0x38] sm:$0xff]
        %v725 = vld [vmem:[#allocation2 + $0x40] sm:$0xff]
        %v726 = vld [vmem:[#allocation2 + $0x48] sm:$0xff]
        %v727 = vld [vmem:[#allocation2 + $0x50] sm:$0xff]
        %v728 = vld [vmem:[#allocation2 + $0x58] sm:$0xff]
        %v729 = vld [vmem:[#allocation2 + $0x60] sm:$0xff]
        %v730 = vld [vmem:[#allocation2 + $0x68] sm:$0xff]
        %v731 = vld [vmem:[#allocation2 + $0x70] sm:$0xff]
        %v732 = vld [vmem:[#allocation2 + $0x78] sm:$0xff]
        %v733 = vld [vmem:[#allocation2 + $0x80] sm:$0xff]
        %v734 = vld [vmem:[#allocation2 + $0x88] sm:$0xff]
        %v735 = vld [vmem:[#allocation2 + $0x90] sm:$0xff]
        %v736 = vld [vmem:[#allocation2 + $0x98] sm:$0xff]
        %v737 = vld [vmem:[#allocation2 + $0xa0] sm:$0xff]
        %v738 = vld [vmem:[#allocation2 + $0xa8] sm:$0xff]
        %v739 = vld [vmem:[#allocation2 + $0xb0] sm:$0xff]
        %v740 = vld [vmem:[#allocation2 + $0xb8] sm:$0xff]
        %v741 = vld [vmem:[#allocation2 + $0xc0] sm:$0xff]
        %v742 = vld [vmem:[#allocation2 + $0xc8] sm:$0xff]
        %v743 = vld [vmem:[#allocation2 + $0xd0] sm:$0xff]
        %v744 = vld [vmem:[#allocation2 + $0xd8] sm:$0xff]
        %v745 = vld [vmem:[#allocation2 + $0xe0] sm:$0xff]
        %v746 = vld [vmem:[#allocation2 + $0xe8] sm:$0xff]
        %v747 = vld [vmem:[#allocation2 + $0xf0] sm:$0xff]
        %v748 = vld [vmem:[#allocation2 + $0xf8] sm:$0xff]
        %v749 = vld [vmem:[%s2] sm:$0x1]
        %v751 = vlaneseq
        %v752 = vshrl.u32 %v751, 7
        %v753 = vsub.s32 0, %v752
        %v754 = vrot.slane %v749, %v753
        %v756 = vadd.f32 %v717, %v754
        %v757 = vadd.f32 %v718, %v754
        %v758 = vadd.f32 %v719, %v754
        %v759 = vadd.f32 %v720, %v754
        %v760 = vadd.f32 %v721, %v754
        %v761 = vadd.f32 %v722, %v754
        %v762 = vadd.f32 %v723, %v754
        %v763 = vadd.f32 %v724, %v754
        %v764 = vadd.f32 %v725, %v754
        %v765 = vadd.f32 %v726, %v754
        %v766 = vadd.f32 %v727, %v754
        %v767 = vadd.f32 %v728, %v754
        %v768 = vadd.f32 %v729, %v754
        %v769 = vadd.f32 %v730, %v754
        %v770 = vadd.f32 %v731, %v754
        %v771 = vadd.f32 %v732, %v754
        %v772 = vadd.f32 %v733, %v754
        %v773 = vadd.f32 %v734, %v754
        %v774 = vadd.f32 %v735, %v754
        %v775 = vadd.f32 %v736, %v754
        %v776 = vadd.f32 %v737, %v754
        %v777 = vadd.f32 %v738, %v754
        %v778 = vadd.f32 %v739, %v754
        %v779 = vadd.f32 %v740, %v754
        %v780 = vadd.f32 %v741, %v754
        %v781 = vadd.f32 %v742, %v754
        %v782 = vadd.f32 %v743, %v754
        %v783 = vadd.f32 %v744, %v754
        %v784 = vadd.f32 %v745, %v754
        %v785 = vadd.f32 %v746, %v754
        %v786 = vadd.f32 %v747, %v754
        %v787 = vadd.f32 %v748, %v754
        %v788 = vmax.f32 %v756, 0.0
        %v789 = vmax.f32 %v757, 0.0
        %v790 = vmax.f32 %v758, 0.0
        %v791 = vmax.f32 %v759, 0.0
        %v792 = vmax.f32 %v760, 0.0
        %v793 = vmax.f32 %v761, 0.0
        %v794 = vmax.f32 %v762, 0.0
        %v795 = vmax.f32 %v763, 0.0
        %v796 = vmax.f32 %v764, 0.0
        %v797 = vmax.f32 %v765, 0.0
        %v798 = vmax.f32 %v766, 0.0
        %v799 = vmax.f32 %v767, 0.0
        %v800 = vmax.f32 %v768, 0.0
        %v801 = vmax.f32 %v769, 0.0
        %v802 = vmax.f32 %v770, 0.0
        %v803 = vmax.f32 %v771, 0.0
        %v804 = vmax.f32 %v772, 0.0
        %v805 = vmax.f32 %v773, 0.0
        %v806 = vmax.f32 %v774, 0.0
        %v807 = vmax.f32 %v775, 0.0
        %v808 = vmax.f32 %v776, 0.0
        %v809 = vmax.f32 %v777, 0.0
        %v810 = vmax.f32 %v778, 0.0
        %v811 = vmax.f32 %v779, 0.0
        %v812 = vmax.f32 %v780, 0.0
        %v813 = vmax.f32 %v781, 0.0
        %v814 = vmax.f32 %v782, 0.0
        %v815 = vmax.f32 %v783, 0.0
        %v816 = vmax.f32 %v784, 0.0
        %v817 = vmax.f32 %v785, 0.0
        %v818 = vmax.f32 %v786, 0.0
        %v819 = vmax.f32 %v787, 0.0
        %v820 = vpack.c.bf16 %v789, %v788
        %v821 = vpack.c.bf16 %v791, %v790
        %v822 = vpack.c.bf16 %v793, %v792
        %v823 = vpack.c.bf16 %v795, %v794
        %v824 = vpack.c.bf16 %v797, %v796
        %v825 = vpack.c.bf16 %v799, %v798
        %v826 = vpack.c.bf16 %v801, %v800
        %v827 = vpack.c.bf16 %v803, %v802
        %v828 = vpack.c.bf16 %v805, %v804
        %v829 = vpack.c.bf16 %v807, %v806
        %v830 = vpack.c.bf16 %v809, %v808
        %v831 = vpack.c.bf16 %v811, %v810
        %v832 = vpack.c.bf16 %v813, %v812
        %v833 = vpack.c.bf16 %v815, %v814
        %v834 = vpack.c.bf16 %v817, %v816
        %v835 = vpack.c.bf16 %v819, %v818
        %v852 = vunpack.c.l.b16 %v820
        %v853 = vunpack.c.h.b16 %v820
        %v854 = vunpack.c.l.b16 %v821
        %v855 = vunpack.c.h.b16 %v821
        %v856 = vunpack.c.l.b16 %v822
        %v857 = vunpack.c.h.b16 %v822
        %v858 = vunpack.c.l.b16 %v823
        %v859 = vunpack.c.h.b16 %v823
        %v860 = vunpack.c.l.b16 %v824
        %v861 = vunpack.c.h.b16 %v824
        %v862 = vunpack.c.l.b16 %v825
        %v863 = vunpack.c.h.b16 %v825
        %v864 = vunpack.c.l.b16 %v826
        %v865 = vunpack.c.h.b16 %v826
        %v866 = vunpack.c.l.b16 %v827
        %v867 = vunpack.c.h.b16 %v827
        %v868 = vunpack.c.l.b16 %v828
        %v869 = vunpack.c.h.b16 %v828
        %v870 = vunpack.c.l.b16 %v829
        %v871 = vunpack.c.h.b16 %v829
        %v872 = vunpack.c.l.b16 %v830
        %v873 = vunpack.c.h.b16 %v830
        %v874 = vunpack.c.l.b16 %v831
        %v875 = vunpack.c.h.b16 %v831
        %v876 = vunpack.c.l.b16 %v832
        %v877 = vunpack.c.h.b16 %v832
        %v878 = vunpack.c.l.b16 %v833
        %v879 = vunpack.c.h.b16 %v833
        %v880 = vunpack.c.l.b16 %v834
        %v881 = vunpack.c.h.b16 %v834
        %v882 = vunpack.c.l.b16 %v835
        %v883 = vunpack.c.h.b16 %v835
        %v884 = vpack.c.b16 %v852, %v852
        %v885 = vpack.c.b16 %v853, %v853
        %v886 = vpack.c.b16 %v854, %v854
        %v887 = vpack.c.b16 %v855, %v855
        %v888 = vpack.c.b16 %v856, %v856
        %v889 = vpack.c.b16 %v857, %v857
        %v890 = vpack.c.b16 %v858, %v858
        %v891 = vpack.c.b16 %v859, %v859
        %v892 = vpack.c.b16 %v860, %v860
        %v893 = vpack.c.b16 %v861, %v861
        %v894 = vpack.c.b16 %v862, %v862
        %v895 = vpack.c.b16 %v863, %v863
        %v896 = vpack.c.b16 %v864, %v864
        %v897 = vpack.c.b16 %v865, %v865
        %v898 = vpack.c.b16 %v866, %v866
        %v899 = vpack.c.b16 %v867, %v867
        %v900 = vpack.c.b16 %v868, %v868
        %v901 = vpack.c.b16 %v869, %v869
        %v902 = vpack.c.b16 %v870, %v870
        %v903 = vpack.c.b16 %v871, %v871
        %v904 = vpack.c.b16 %v872, %v872
        %v905 = vpack.c.b16 %v873, %v873
        %v906 = vpack.c.b16 %v874, %v874
        %v907 = vpack.c.b16 %v875, %v875
        %v908 = vpack.c.b16 %v876, %v876
        %v909 = vpack.c.b16 %v877, %v877
        %v910 = vpack.c.b16 %v878, %v878
        %v911 = vpack.c.b16 %v879, %v879
        %v912 = vpack.c.b16 %v880, %v880
        %v913 = vpack.c.b16 %v881, %v881
        %v914 = vpack.c.b16 %v882, %v882
        %v915 = vpack.c.b16 %v883, %v883
        %948 = vst [vmem:[%s217] sm:$0xf] %v884
        %949 = vst [vmem:[%s217 + $0x4] sm:$0xf] %v885
        %950 = vst [vmem:[%s217 + $0x8] sm:$0xf] %v886
        %951 = vst [vmem:[%s217 + $0xc] sm:$0xf] %v887
        %952 = vst [vmem:[%s217 + $0x10] sm:$0xf] %v888
        %953 = vst [vmem:[%s217 + $0x14] sm:$0xf] %v889
        %954 = vst [vmem:[%s217 + $0x18] sm:$0xf] %v890
        %955 = vst [vmem:[%s217 + $0x1c] sm:$0xf] %v891
        %956 = vst [vmem:[%s217 + $0x20] sm:$0xf] %v892
        %957 = vst [vmem:[%s217 + $0x24] sm:$0xf] %v893
        %958 = vst [vmem:[%s217 + $0x28] sm:$0xf] %v894
        %959 = vst [vmem:[%s217 + $0x2c] sm:$0xf] %v895
        %960 = vst [vmem:[%s217 + $0x30] sm:$0xf] %v896
        %961 = vst [vmem:[%s217 + $0x34] sm:$0xf] %v897
        %962 = vst [vmem:[%s217 + $0x38] sm:$0xf] %v898
        %963 = vst [vmem:[%s217 + $0x3c] sm:$0xf] %v899
        %964 = vst [vmem:[%s217 + $0x40] sm:$0xf] %v900
        %965 = vst [vmem:[%s217 + $0x44] sm:$0xf] %v901
        %966 = vst [vmem:[%s217 + $0x48] sm:$0xf] %v902
        %967 = vst [vmem:[%s217 + $0x4c] sm:$0xf] %v903
        %968 = vst [vmem:[%s217 + $0x50] sm:$0xf] %v904
        %969 = vst [vmem:[%s217 + $0x54] sm:$0xf] %v905
        %970 = vst [vmem:[%s217 + $0x58] sm:$0xf] %v906
        %971 = vst [vmem:[%s217 + $0x5c] sm:$0xf] %v907
        %972 = vst [vmem:[%s217 + $0x60] sm:$0xf] %v908
        %973 = vst [vmem:[%s217 + $0x64] sm:$0xf] %v909
        %974 = vst [vmem:[%s217 + $0x68] sm:$0xf] %v910
        %975 = vst [vmem:[%s217 + $0x6c] sm:$0xf] %v911
        %976 = vst [vmem:[%s217 + $0x70] sm:$0xf] %v912
        %977 = vst [vmem:[%s217 + $0x74] sm:$0xf] %v913
        %978 = vst [vmem:[%s217 + $0x78] sm:$0xf] %v914
        %979 = vst [vmem:[%s217 + $0x7c] sm:$0xf] %v915
      $region40: #{faster_rcnn_forward.7} parent=31 // pred_fallthru
        _
      %s980 = smul.u32 32, %s18
      %p981 = scmp.lt.s32.totalorder %s980, 63
      %s982 = scalar_select %p981, %s980, 63
      %s983 = smul.addr %s982, 4
      %s984 = scalar_lea.vmem %s3, %s983
      // Predicated region
      $region41: #{faster_rcnn_forward.7} parent=31 // pred_check
        %p985 = pneg %p119
      $region42: #{faster_rcnn_forward.7} parent=31 // pred_check_branch
        %987 = sbr.rel (%p985) target = $region44
      $region43: #{faster_rcnn_forward.7} parent=31 // pred_region
        %s988 = smul.u32 32, %s18
      $region44: #{faster_rcnn_forward.7} parent=31 // pred_fallthru
        _
    $region32: #{faster_rcnn_forward.7} parent=5 // pred_fallthru
      _
    %p989 = scmp.le.s32.totalorder 2, %s9
    // Predicated region
    $region45: #{faster_rcnn_forward.7} parent=5 // pred_check
      %p990 = pneg %p989
    $region46: #{faster_rcnn_forward.7} parent=5 // pred_check_branch
      %992 = sbr.rel (%p990) target = $region48
    $region47: #{faster_rcnn_forward.7} parent=5 // pred_region
      %s993 = ssub.s32 %s9, 2
      // Predicated region
      $region49: #{faster_rcnn_forward.7} parent=47 // pred_check
        %p994 = pneg %p125
      $region50: #{faster_rcnn_forward.7} parent=47 // pred_check_branch
        %996 = sbr.rel (%p994) target = $region52
      $region51: #{faster_rcnn_forward.7} parent=47 // pred_region
        %s997 = smul.u32 32, %s20
        %p998 = scmp.lt.s32.totalorder %s997, 63
        %s999 = scalar_select %p998, %s997, 63
        %s1000 = smul.addr %s999, 4
        %s1001 = scalar_lea.vmem %s3, %s1000
      $region52: #{faster_rcnn_forward.7} parent=47 // pred_fallthru
        _
    $region48: #{faster_rcnn_forward.7} parent=5 // pred_fallthru
      _
  $region6: #{faster_rcnn_forward.7} parent=0 // loop_footer
    %s13 = sadd.s32 1, %s9
  $region7: #{faster_rcnn_forward.7} parent=0 // loop_footer_branch
    %8 = sbr.rel target = $region3
  $region8: #{faster_rcnn_forward.7} parent=0 // loop_exit
    _

// kernel: faster_rcnn_forward.8
$region0: #{faster_rcnn_forward.8}
  #allocation0 [shape = 'u32[]', space=smem, size = 0x4, offset = 0x4, fixed_abs, tag = 'smem constant byte address 0x4 - core index']
  #allocation1 [shape = 'u32[144,128]{1,0:T(1,128)}', space=vmem, size = 0x12000, scoped, tag = 'internal scratch']
  #allocation2 [shape = 'f32[128,128]{1,0:T(8,128)}', space=vmem, size = 0x10000, scoped, tag = 'scratch operand']
  %s0 = inlined_call_operand.vmem [shape: bf16[128,144], index: 0, kind: input, shape index: {}]
  %s1 = inlined_call_operand.vmem [shape: bf16[144,128], index: 1, kind: input, shape index: {}]
  %s2 = inlined_call_operand.vmem [shape: f32[1,128], index: 2, kind: input, shape index: {}]
  %s3 = inlined_call_operand.vmem [shape: bf16[128,128], index: 3, kind: output, shape index: {}]
  %s4 = sld [smem:[#allocation0]]
  $region30: #{faster_rcnn_forward.8} parent=0
    _
  %s6 = ssub.s32 1, %s4
  %s7 = scalar_select 0, %s6, %s4
  // Predicated region
  $region2: #{faster_rcnn_forward.8} parent=0 // pred_check
    _
  $region3: #{faster_rcnn_forward.8} parent=0 // pred_check_branch
    %9 = sbr.rel (0) target = $region5
  $region4: #{faster_rcnn_forward.8} parent=0 // pred_region
    _
  $region5: #{faster_rcnn_forward.8} parent=0 // pred_fallthru
    _
  // Predicated region
  $region6: #{faster_rcnn_forward.8} parent=0 // pred_check
    _
  $region7: #{faster_rcnn_forward.8} parent=0 // pred_check_branch
    %11 = sbr.rel (0) target = $region9
  $region8: #{faster_rcnn_forward.8} parent=0 // pred_region
    _
  $region9: #{faster_rcnn_forward.8} parent=0 // pred_fallthru
    _
  // Predicated region
  $region10: #{faster_rcnn_forward.8} parent=0 // pred_check
    _
  $region11: #{faster_rcnn_forward.8} parent=0 // pred_check_branch
    %13 = sbr.rel (0) target = $region13
  $region12: #{faster_rcnn_forward.8} parent=0 // pred_region
    _
  $region13: #{faster_rcnn_forward.8} parent=0 // pred_fallthru
    _
  %p15 = scmp.eq.s32.totalorder 0, 0
  // Predicated region
  $region14: #{faster_rcnn_forward.8} parent=0 // pred_check
    %p16 = pneg %p15
  $region15: #{faster_rcnn_forward.8} parent=0 // pred_check_branch
    %18 = sbr.rel (%p16) target = $region17
  $region16: #{faster_rcnn_forward.8} parent=0 // pred_region
    %19 = vst [vmem:[#allocation2] sm:$0xff] 0.0
    %20 = vst [vmem:[#allocation2 + $0x8] sm:$0xff] 0.0
    %21 = vst [vmem:[#allocation2 + $0x10] sm:$0xff] 0.0
    %22 = vst [vmem:[#allocation2 + $0x18] sm:$0xff] 0.0
    %23 = vst [vmem:[#allocation2 + $0x20] sm:$0xff] 0.0
    %24 = vst [vmem:[#allocation2 + $0x28] sm:$0xff] 0.0
    %25 = vst [vmem:[#allocation2 + $0x30] sm:$0xff] 0.0
    %26 = vst [vmem:[#allocation2 + $0x38] sm:$0xff] 0.0
    %27 = vst [vmem:[#allocation2 + $0x40] sm:$0xff] 0.0
    %28 = vst [vmem:[#allocation2 + $0x48] sm:$0xff] 0.0
    %29 = vst [vmem:[#allocation2 + $0x50] sm:$0xff] 0.0
    %30 = vst [vmem:[#allocation2 + $0x58] sm:$0xff] 0.0
    %31 = vst [vmem:[#allocation2 + $0x60] sm:$0xff] 0.0
    %32 = vst [vmem:[#allocation2 + $0x68] sm:$0xff] 0.0
    %33 = vst [vmem:[#allocation2 + $0x70] sm:$0xff] 0.0
    %34 = vst [vmem:[#allocation2 + $0x78] sm:$0xff] 0.0
  $region17: #{faster_rcnn_forward.8} parent=0 // pred_fallthru
    _
  %v35 = vld [vmem:[#allocation2] sm:$0xff]
  %v36 = vld [vmem:[#allocation2 + $0x8] sm:$0xff]
  %v37 = vld [vmem:[#allocation2 + $0x10] sm:$0xff]
  %v38 = vld [vmem:[#allocation2 + $0x18] sm:$0xff]
  %v39 = vld [vmem:[#allocation2 + $0x20] sm:$0xff]
  %v40 = vld [vmem:[#allocation2 + $0x28] sm:$0xff]
  %v41 = vld [vmem:[#allocation2 + $0x30] sm:$0xff]
  %v42 = vld [vmem:[#allocation2 + $0x38] sm:$0xff]
  %v43 = vld [vmem:[#allocation2 + $0x40] sm:$0xff]
  %v44 = vld [vmem:[#allocation2 + $0x48] sm:$0xff]
  %v45 = vld [vmem:[#allocation2 + $0x50] sm:$0xff]
  %v46 = vld [vmem:[#allocation2 + $0x58] sm:$0xff]
  %v47 = vld [vmem:[#allocation2 + $0x60] sm:$0xff]
  %v48 = vld [vmem:[#allocation2 + $0x68] sm:$0xff]
  %v49 = vld [vmem:[#allocation2 + $0x70] sm:$0xff]
  %v50 = vld [vmem:[#allocation2 + $0x78] sm:$0xff]
  %v51 = vld [vmem:[%s0] sm:$0xff]
  %v52 = vld [vmem:[%s0 + $0x8] sm:$0xff]
  %v53 = vld [vmem:[%s0 + $0x10] sm:$0xff]
  %v54 = vld [vmem:[%s0 + $0x18] sm:$0xff]
  %v55 = vld [vmem:[%s0 + $0x20] sm:$0xff]
  %v56 = vld [vmem:[%s0 + $0x28] sm:$0xff]
  %v57 = vld [vmem:[%s0 + $0x30] sm:$0xff]
  %v58 = vld [vmem:[%s0 + $0x38] sm:$0xff]
  %v59 = vld [vmem:[%s0 + $0x40] sm:$0xff]
  %v60 = vld [vmem:[%s0 + $0x48] sm:$0xff]
  %v61 = vld [vmem:[%s0 + $0x50] sm:$0xff]
  %v62 = vld [vmem:[%s0 + $0x58] sm:$0xff]
  %v63 = vld [vmem:[%s0 + $0x60] sm:$0xff]
  %v64 = vld [vmem:[%s0 + $0x68] sm:$0xff]
  %v65 = vld [vmem:[%s0 + $0x70] sm:$0xff]
  %v66 = vld [vmem:[%s0 + $0x78] sm:$0xff]
  %v67 = vld [vmem:[%s1] sm:$0xf]
  %v68 = vld [vmem:[%s1 + $0x4] sm:$0xf]
  %v69 = vld [vmem:[%s1 + $0x8] sm:$0xf]
  %v70 = vld [vmem:[%s1 + $0xc] sm:$0xf]
  %v71 = vld [vmem:[%s1 + $0x10] sm:$0xf]
  %v72 = vld [vmem:[%s1 + $0x14] sm:$0xf]
  %v73 = vld [vmem:[%s1 + $0x18] sm:$0xf]
  %v74 = vld [vmem:[%s1 + $0x1c] sm:$0xf]
  %v75 = vld [vmem:[%s1 + $0x20] sm:$0xf]
  %v76 = vld [vmem:[%s1 + $0x24] sm:$0xf]
  %v77 = vld [vmem:[%s1 + $0x28] sm:$0xf]
  %v78 = vld [vmem:[%s1 + $0x2c] sm:$0xf]
  %v79 = vld [vmem:[%s1 + $0x30] sm:$0xf]
  %v80 = vld [vmem:[%s1 + $0x34] sm:$0xf]
  %v81 = vld [vmem:[%s1 + $0x38] sm:$0xf]
  %v82 = vld [vmem:[%s1 + $0x3c] sm:$0xf]
  %v83 = vld [vmem:[%s1 + $0x40] sm:$0xf]
  %v84 = vld [vmem:[%s1 + $0x44] sm:$0xf]
  %v101 = vunpack.c.l.b16 %v51
  %v102 = vunpack.c.h.b16 %v51
  %v103 = vunpack.c.l.b16 %v52
  %v104 = vunpack.c.h.b16 %v52
  %v105 = vunpack.c.l.b16 %v53
  %v106 = vunpack.c.h.b16 %v53
  %v107 = vunpack.c.l.b16 %v54
  %v108 = vunpack.c.h.b16 %v54
  %v109 = vunpack.c.l.b16 %v55
  %v110 = vunpack.c.h.b16 %v55
  %v111 = vunpack.c.l.b16 %v56
  %v112 = vunpack.c.h.b16 %v56
  %v113 = vunpack.c.l.b16 %v57
  %v114 = vunpack.c.h.b16 %v57
  %v115 = vunpack.c.l.b16 %v58
  %v116 = vunpack.c.h.b16 %v58
  %v117 = vunpack.c.l.b16 %v59
  %v118 = vunpack.c.h.b16 %v59
  %v119 = vunpack.c.l.b16 %v60
  %v120 = vunpack.c.h.b16 %v60
  %v121 = vunpack.c.l.b16 %v61
  %v122 = vunpack.c.h.b16 %v61
  %v123 = vunpack.c.l.b16 %v62
  %v124 = vunpack.c.h.b16 %v62
  %v125 = vunpack.c.l.b16 %v63
  %v126 = vunpack.c.h.b16 %v63
  %v127 = vunpack.c.l.b16 %v64
  %v128 = vunpack.c.h.b16 %v64
  %v129 = vunpack.c.l.b16 %v65
  %v130 = vunpack.c.h.b16 %v65
  %v131 = vunpack.c.l.b16 %v66
  %v132 = vunpack.c.h.b16 %v66
  %v133 = vpack.c.b16 %v103, %v101
  %v134 = vpack.c.b16 %v104, %v102
  %v135 = vpack.c.b16 %v107, %v105
  %v136 = vpack.c.b16 %v108, %v106
  %v137 = vpack.c.b16 %v111, %v109
  %v138 = vpack.c.b16 %v112, %v110
  %v139 = vpack.c.b16 %v115, %v113
  %v140 = vpack.c.b16 %v116, %v114
  %v141 = vpack.c.b16 %v119, %v117
  %v142 = vpack.c.b16 %v120, %v118
  %v143 = vpack.c.b16 %v123, %v121
  %v144 = vpack.c.b16 %v124, %v122
  %v145 = vpack.c.b16 %v127, %v125
  %v146 = vpack.c.b16 %v128, %v126
  %v147 = vpack.c.b16 %v131, %v129
  %v148 = vpack.c.b16 %v132, %v130
  %v175 = vunpack.c.l.b16 %v67
  %v176 = vunpack.c.l.b16 %v68
  %v177 = vunpack.c.l.b16 %v69
  %v178 = vunpack.c.l.b16 %v70
  %v179 = vunpack.c.l.b16 %v71
  %v180 = vunpack.c.l.b16 %v72
  %v181 = vunpack.c.l.b16 %v73
  %v182 = vunpack.c.l.b16 %v74
  %v183 = vunpack.c.l.b16 %v75
  %v184 = vunpack.c.l.b16 %v76
  %v185 = vunpack.c.l.b16 %v77
  %v186 = vunpack.c.l.b16 %v78
  %v187 = vunpack.c.l.b16 %v79
  %v188 = vunpack.c.l.b16 %v80
  %v189 = vunpack.c.l.b16 %v81
  %v190 = vunpack.c.l.b16 %v82
  %v191 = vunpack.c.l.b16 %v83
  %v192 = vunpack.c.l.b16 %v84
  %v193 = vpack.c.b16 %v176, %v175
  %v194 = vpack.c.b16 %v178, %v177
  %v195 = vpack.c.b16 %v180, %v179
  %v196 = vpack.c.b16 %v182, %v181
  %v197 = vpack.c.b16 %v184, %v183
  %v198 = vpack.c.b16 %v186, %v185
  %v199 = vpack.c.b16 %v188, %v187
  %v200 = vpack.c.b16 %v190, %v189
  %v201 = vpack.c.b16 %v192, %v191
  %vm211 = vcmask 130048
  %v213 = vsel %vm211, %v134, 0
  %v216 = vsel %vm211, %v136, 0
  %v219 = vsel %vm211, %v138, 0
  %v222 = vsel %vm211, %v140, 0
  %v225 = vsel %vm211, %v142, 0
  %v228 = vsel %vm211, %v144, 0
  %v231 = vsel %vm211, %v146, 0
  %v234 = vsel %vm211, %v148, 0
  %236 = vmatprep.subr.bf16.mxu0 0
  %237 = vmatpush1.bf16.msra.mxu0 %v200
  %238 = vmatprep.subr.bf16.mxu0 0
  %239 = vmatpush1.bf16.msra.mxu0 %v199
  %240 = vmatprep.subr.bf16.mxu0 0
  %241 = vmatpush1.bf16.msra.mxu0 %v198
  %242 = vmatprep.subr.bf16.mxu0 0
  %243 = vmatpush1.bf16.msra.mxu0 %v197
  %244 = vmatprep.subr.bf16.mxu0 0
  %245 = vmatpush1.bf16.msra.mxu0 %v196
  %246 = vmatprep.subr.bf16.mxu0 0
  %247 = vmatpush1.bf16.msra.mxu0 %v195
  %248 = vmatprep.subr.bf16.mxu0 0
  %249 = vmatpush1.bf16.msra.mxu0 %v194
  %250 = vmatprep.subr.bf16.mxu0 0
  %251 = vmatpush1.bf16.msra.mxu0 %v193
  %252 = vmatprep.subr.bf16.mxu0 0
  %253 = vmatpush2.bf16.msra.mxu0 0
  %254 = vmatprep.subr.bf16.mxu0 0
  %255 = vmatpush2.bf16.msra.mxu0 0
  %256 = vmatprep.subr.bf16.mxu0 0
  %257 = vmatpush2.bf16.msra.mxu0 0
  %258 = vmatprep.subr.bf16.mxu0 0
  %259 = vmatpush2.bf16.msra.mxu0 0
  %260 = vmatprep.subr.bf16.mxu0 0
  %261 = vmatpush2.bf16.msra.mxu0 0
  %262 = vmatprep.subr.bf16.mxu0 0
  %263 = vmatpush2.bf16.msra.mxu0 0
  %264 = vmatprep.subr.bf16.mxu0 0
  %265 = vmatpush2.bf16.msra.mxu0 0
  %266 = vmatprep.subr.bf16.mxu0 0
  %267 = vmatpush2.bf16.msra.mxu0 %v201
  %268 = vmatprep.mubr.bf16.mxu0 %v213
  %269 = vmatmul.mubr.bf16.gmra.mxu0 %v133
  %v270 = vpop.f32.mrf.mxu0
  %v271 = vadd.f32 0.0, %v270
  %v272 = vpop.f32.mrf.mxu0
  %v273 = vpop.f32.mrf.mxu0
  %v274 = vadd.f32 0.0, %v273
  %v275 = vpop.f32.mrf.mxu0
  %276 = vmatprep.mubr.bf16.mxu0 %v216
  %277 = vmatmul.mubr.bf16.gmra.mxu0 %v135
  %v278 = vpop.f32.mrf.mxu0
  %v279 = vadd.f32 0.0, %v278
  %v280 = vpop.f32.mrf.mxu0
  %v281 = vpop.f32.mrf.mxu0
  %v282 = vadd.f32 0.0, %v281
  %v283 = vpop.f32.mrf.mxu0
  %284 = vmatprep.mubr.bf16.mxu0 %v219
  %285 = vmatmul.mubr.bf16.gmra.mxu0 %v137
  %v286 = vpop.f32.mrf.mxu0
  %v287 = vadd.f32 0.0, %v286
  %v288 = vpop.f32.mrf.mxu0
  %v289 = vpop.f32.mrf.mxu0
  %v290 = vadd.f32 0.0, %v289
  %v291 = vpop.f32.mrf.mxu0
  %292 = vmatprep.mubr.bf16.mxu0 %v222
  %293 = vmatmul.mubr.bf16.gmra.mxu0 %v139
  %v294 = vpop.f32.mrf.mxu0
  %v295 = vadd.f32 0.0, %v294
  %v296 = vpop.f32.mrf.mxu0
  %v297 = vpop.f32.mrf.mxu0
  %v298 = vadd.f32 0.0, %v297
  %v299 = vpop.f32.mrf.mxu0
  %300 = vmatprep.mubr.bf16.mxu0 %v225
  %301 = vmatmul.mubr.bf16.gmra.mxu0 %v141
  %v302 = vpop.f32.mrf.mxu0
  %v303 = vadd.f32 0.0, %v302
  %v304 = vpop.f32.mrf.mxu0
  %v305 = vpop.f32.mrf.mxu0
  %v306 = vadd.f32 0.0, %v305
  %v307 = vpop.f32.mrf.mxu0
  %308 = vmatprep.mubr.bf16.mxu0 %v228
  %309 = vmatmul.mubr.bf16.gmra.mxu0 %v143
  %v310 = vpop.f32.mrf.mxu0
  %v311 = vadd.f32 0.0, %v310
  %v312 = vpop.f32.mrf.mxu0
  %v313 = vpop.f32.mrf.mxu0
  %v314 = vadd.f32 0.0, %v313
  %v315 = vpop.f32.mrf.mxu0
  %316 = vmatprep.mubr.bf16.mxu0 %v231
  %317 = vmatmul.mubr.bf16.gmra.mxu0 %v145
  %v318 = vpop.f32.mrf.mxu0
  %v319 = vadd.f32 0.0, %v318
  %v320 = vpop.f32.mrf.mxu0
  %v321 = vpop.f32.mrf.mxu0
  %v322 = vadd.f32 0.0, %v321
  %v323 = vpop.f32.mrf.mxu0
  %324 = vmatprep.mubr.bf16.mxu0 %v234
  %325 = vmatmul.mubr.bf16.gmra.mxu0 %v147
  %v326 = vpop.f32.mrf.mxu0
  %v327 = vadd.f32 0.0, %v326
  %v328 = vpop.f32.mrf.mxu0
  %v329 = vpop.f32.mrf.mxu0
  %v330 = vadd.f32 0.0, %v329
  %v331 = vpop.f32.mrf.mxu0
  %332 = vdwg.mxu0
  %v333 = vadd.f32 %v35, %v271
  %v334 = vadd.f32 %v36, %v274
  %v335 = vadd.f32 %v37, %v279
  %v336 = vadd.f32 %v38, %v282
  %v337 = vadd.f32 %v39, %v287
  %v338 = vadd.f32 %v40, %v290
  %v339 = vadd.f32 %v41, %v295
  %v340 = vadd.f32 %v42, %v298
  %v341 = vadd.f32 %v43, %v303
  %v342 = vadd.f32 %v44, %v306
  %v343 = vadd.f32 %v45, %v311
  %v344 = vadd.f32 %v46, %v314
  %v345 = vadd.f32 %v47, %v319
  %v346 = vadd.f32 %v48, %v322
  %v347 = vadd.f32 %v49, %v327
  %v348 = vadd.f32 %v50, %v330
  %349 = vst [vmem:[#allocation2] sm:$0xff] %v333
  %350 = vst [vmem:[#allocation2 + $0x8] sm:$0xff] %v334
  %351 = vst [vmem:[#allocation2 + $0x10] sm:$0xff] %v335
  %352 = vst [vmem:[#allocation2 + $0x18] sm:$0xff] %v336
  %353 = vst [vmem:[#allocation2 + $0x20] sm:$0xff] %v337
  %354 = vst [vmem:[#allocation2 + $0x28] sm:$0xff] %v338
  %355 = vst [vmem:[#allocation2 + $0x30] sm:$0xff] %v339
  %356 = vst [vmem:[#allocation2 + $0x38] sm:$0xff] %v340
  %357 = vst [vmem:[#allocation2 + $0x40] sm:$0xff] %v341
  %358 = vst [vmem:[#allocation2 + $0x48] sm:$0xff] %v342
  %359 = vst [vmem:[#allocation2 + $0x50] sm:$0xff] %v343
  %360 = vst [vmem:[#allocation2 + $0x58] sm:$0xff] %v344
  %361 = vst [vmem:[#allocation2 + $0x60] sm:$0xff] %v345
  %362 = vst [vmem:[#allocation2 + $0x68] sm:$0xff] %v346
  %363 = vst [vmem:[#allocation2 + $0x70] sm:$0xff] %v347
  %364 = vst [vmem:[#allocation2 + $0x78] sm:$0xff] %v348
  // Predicated region
  $region18: #{faster_rcnn_forward.8} parent=0 // pred_check
    %p365 = pneg %p15
  $region19: #{faster_rcnn_forward.8} parent=0 // pred_check_branch
    %367 = sbr.rel (%p365) target = $region21
  $region20: #{faster_rcnn_forward.8} parent=0 // pred_region
    %v368 = vld [vmem:[#allocation2] sm:$0xff]
    %v369 = vld [vmem:[#allocation2 + $0x8] sm:$0xff]
    %v370 = vld [vmem:[#allocation2 + $0x10] sm:$0xff]
    %v371 = vld [vmem:[#allocation2 + $0x18] sm:$0xff]
    %v372 = vld [vmem:[#allocation2 + $0x20] sm:$0xff]
    %v373 = vld [vmem:[#allocation2 + $0x28] sm:$0xff]
    %v374 = vld [vmem:[#allocation2 + $0x30] sm:$0xff]
    %v375 = vld [vmem:[#allocation2 + $0x38] sm:$0xff]
    %v376 = vld [vmem:[#allocation2 + $0x40] sm:$0xff]
    %v377 = vld [vmem:[#allocation2 + $0x48] sm:$0xff]
    %v378 = vld [vmem:[#allocation2 + $0x50] sm:$0xff]
    %v379 = vld [vmem:[#allocation2 + $0x58] sm:$0xff]
    %v380 = vld [vmem:[#allocation2 + $0x60] sm:$0xff]
    %v381 = vld [vmem:[#allocation2 + $0x68] sm:$0xff]
    %v382 = vld [vmem:[#allocation2 + $0x70] sm:$0xff]
    %v383 = vld [vmem:[#allocation2 + $0x78] sm:$0xff]
    %v384 = vld [vmem:[%s2] sm:$0x1]
    %v386 = vlaneseq
    %v387 = vshrl.u32 %v386, 7
    %v388 = vsub.s32 0, %v387
    %v389 = vrot.slane %v384, %v388
    %v391 = vadd.f32 %v368, %v389
    %v392 = vadd.f32 %v369, %v389
    %v393 = vadd.f32 %v370, %v389
    %v394 = vadd.f32 %v371, %v389
    %v395 = vadd.f32 %v372, %v389
    %v396 = vadd.f32 %v373, %v389
    %v397 = vadd.f32 %v374, %v389
    %v398 = vadd.f32 %v375, %v389
    %v399 = vadd.f32 %v376, %v389
    %v400 = vadd.f32 %v377, %v389
    %v401 = vadd.f32 %v378, %v389
    %v402 = vadd.f32 %v379, %v389
    %v403 = vadd.f32 %v380, %v389
    %v404 = vadd.f32 %v381, %v389
    %v405 = vadd.f32 %v382, %v389
    %v406 = vadd.f32 %v383, %v389
    %v407 = vmax.f32 %v391, 0.0
    %v408 = vmax.f32 %v392, 0.0
    %v409 = vmax.f32 %v393, 0.0
    %v410 = vmax.f32 %v394, 0.0
    %v411 = vmax.f32 %v395, 0.0
    %v412 = vmax.f32 %v396, 0.0
    %v413 = vmax.f32 %v397, 0.0
    %v414 = vmax.f32 %v398, 0.0
    %v415 = vmax.f32 %v399, 0.0
    %v416 = vmax.f32 %v400, 0.0
    %v417 = vmax.f32 %v401, 0.0
    %v418 = vmax.f32 %v402, 0.0
    %v419 = vmax.f32 %v403, 0.0
    %v420 = vmax.f32 %v404, 0.0
    %v421 = vmax.f32 %v405, 0.0
    %v422 = vmax.f32 %v406, 0.0
    %v423 = vpack.c.bf16 %v408, %v407
    %v424 = vpack.c.bf16 %v410, %v409
    %v425 = vpack.c.bf16 %v412, %v411
    %v426 = vpack.c.bf16 %v414, %v413
    %v427 = vpack.c.bf16 %v416, %v415
    %v428 = vpack.c.bf16 %v418, %v417
    %v429 = vpack.c.bf16 %v420, %v419
    %v430 = vpack.c.bf16 %v422, %v421
    %v439 = vunpack.c.l.b16 %v423
    %v440 = vunpack.c.h.b16 %v423
    %v441 = vunpack.c.l.b16 %v424
    %v442 = vunpack.c.h.b16 %v424
    %v443 = vunpack.c.l.b16 %v425
    %v444 = vunpack.c.h.b16 %v425
    %v445 = vunpack.c.l.b16 %v426
    %v446 = vunpack.c.h.b16 %v426
    %v447 = vunpack.c.l.b16 %v427
    %v448 = vunpack.c.h.b16 %v427
    %v449 = vunpack.c.l.b16 %v428
    %v450 = vunpack.c.h.b16 %v428
    %v451 = vunpack.c.l.b16 %v429
    %v452 = vunpack.c.h.b16 %v429
    %v453 = vunpack.c.l.b16 %v430
    %v454 = vunpack.c.h.b16 %v430
    %v455 = vpack.c.b16 %v439, %v439
    %v456 = vpack.c.b16 %v440, %v440
    %v457 = vpack.c.b16 %v441, %v441
    %v458 = vpack.c.b16 %v442, %v442
    %v459 = vpack.c.b16 %v443, %v443
    %v460 = vpack.c.b16 %v444, %v444
    %v461 = vpack.c.b16 %v445, %v445
    %v462 = vpack.c.b16 %v446, %v446
    %v463 = vpack.c.b16 %v447, %v447
    %v464 = vpack.c.b16 %v448, %v448
    %v465 = vpack.c.b16 %v449, %v449
    %v466 = vpack.c.b16 %v450, %v450
    %v467 = vpack.c.b16 %v451, %v451
    %v468 = vpack.c.b16 %v452, %v452
    %v469 = vpack.c.b16 %v453, %v453
    %v470 = vpack.c.b16 %v454, %v454
    %487 = vst [vmem:[%s3] sm:$0xf] %v455
    %488 = vst [vmem:[%s3 + $0x4] sm:$0xf] %v456
    %489 = vst [vmem:[%s3 + $0x8] sm:$0xf] %v457
    %490 = vst [vmem:[%s3 + $0xc] sm:$0xf] %v458
    %491 = vst [vmem:[%s3 + $0x10] sm:$0xf] %v459
    %492 = vst [vmem:[%s3 + $0x14] sm:$0xf] %v460
    %493 = vst [vmem:[%s3 + $0x18] sm:$0xf] %v461
    %494 = vst [vmem:[%s3 + $0x1c] sm:$0xf] %v462
    %495 = vst [vmem:[%s3 + $0x20] sm:$0xf] %v463
    %496 = vst [vmem:[%s3 + $0x24] sm:$0xf] %v464
    %497 = vst [vmem:[%s3 + $0x28] sm:$0xf] %v465
    %498 = vst [vmem:[%s3 + $0x2c] sm:$0xf] %v466
    %499 = vst [vmem:[%s3 + $0x30] sm:$0xf] %v467
    %500 = vst [vmem:[%s3 + $0x34] sm:$0xf] %v468
    %501 = vst [vmem:[%s3 + $0x38] sm:$0xf] %v469
    %502 = vst [vmem:[%s3 + $0x3c] sm:$0xf] %v470
  $region21: #{faster_rcnn_forward.8} parent=0 // pred_fallthru
    _
  // Predicated region
  $region22: #{faster_rcnn_forward.8} parent=0 // pred_check
    _
  $region23: #{faster_rcnn_forward.8} parent=0 // pred_check_branch
    %504 = sbr.rel (0) target = $region25
  $region24: #{faster_rcnn_forward.8} parent=0 // pred_region
    _
  $region25: #{faster_rcnn_forward.8} parent=0 // pred_fallthru
    _
  // Predicated region
  $region26: #{faster_rcnn_forward.8} parent=0 // pred_check
    _
  $region27: #{faster_rcnn_forward.8} parent=0 // pred_check_branch
    %506 = sbr.rel (0) target = $region29
  $region28: #{faster_rcnn_forward.8} parent=0 // pred_region
    _
  $region29: #{faster_rcnn_forward.8} parent=0 // pred_fallthru
    _

// kernel: faster_rcnn_forward.9
$region0: #{faster_rcnn_forward.9}
  #allocation0 [shape = 'u32[]', space=smem, size = 0x4, offset = 0x4, fixed_abs, tag = 'smem constant byte address 0x4 - core index']
  #allocation1 [shape = 'u32[144,128]{1,0:T(1,128)}', space=vmem, size = 0x12000, scoped, tag = 'internal scratch']
  #allocation2 [shape = 'f32[32,128]{1,0:T(8,128)}', space=vmem, size = 0x4000, scoped, tag = 'scratch operand']
  %s0 = inlined_call_operand.vmem [shape: bf16[32,288], index: 0, kind: input, shape index: {}]
  %s1 = inlined_call_operand.vmem [shape: bf16[288,128], index: 1, kind: input, shape index: {}]
  %s2 = inlined_call_operand.vmem [shape: f32[1,128], index: 2, kind: input, shape index: {}]
  %s3 = inlined_call_operand.vmem [shape: bf16[32,128], index: 3, kind: output, shape index: {}]
  %s4 = sld [smem:[#allocation0]]
  $region30: #{faster_rcnn_forward.9} parent=0
    _
  %s6 = ssub.s32 1, %s4
  %s7 = scalar_select 0, %s6, %s4
  // Predicated region
  $region2: #{faster_rcnn_forward.9} parent=0 // pred_check
    _
  $region3: #{faster_rcnn_forward.9} parent=0 // pred_check_branch
    %9 = sbr.rel (0) target = $region5
  $region4: #{faster_rcnn_forward.9} parent=0 // pred_region
    _
  $region5: #{faster_rcnn_forward.9} parent=0 // pred_fallthru
    _
  // Predicated region
  $region6: #{faster_rcnn_forward.9} parent=0 // pred_check
    _
  $region7: #{faster_rcnn_forward.9} parent=0 // pred_check_branch
    %11 = sbr.rel (0) target = $region9
  $region8: #{faster_rcnn_forward.9} parent=0 // pred_region
    _
  $region9: #{faster_rcnn_forward.9} parent=0 // pred_fallthru
    _
  // Predicated region
  $region10: #{faster_rcnn_forward.9} parent=0 // pred_check
    _
  $region11: #{faster_rcnn_forward.9} parent=0 // pred_check_branch
    %13 = sbr.rel (0) target = $region13
  $region12: #{faster_rcnn_forward.9} parent=0 // pred_region
    _
  $region13: #{faster_rcnn_forward.9} parent=0 // pred_fallthru
    _
  %p15 = scmp.eq.s32.totalorder 0, 0
  // Predicated region
  $region14: #{faster_rcnn_forward.9} parent=0 // pred_check
    %p16 = pneg %p15
  $region15: #{faster_rcnn_forward.9} parent=0 // pred_check_branch
    %18 = sbr.rel (%p16) target = $region17
  $region16: #{faster_rcnn_forward.9} parent=0 // pred_region
    %19 = vst [vmem:[#allocation2] sm:$0xff] 0.0
    %20 = vst [vmem:[#allocation2 + $0x8] sm:$0xff] 0.0
    %21 = vst [vmem:[#allocation2 + $0x10] sm:$0xff] 0.0
    %22 = vst [vmem:[#allocation2 + $0x18] sm:$0xff] 0.0
  $region17: #{faster_rcnn_forward.9} parent=0 // pred_fallthru
    _
  %v23 = vld [vmem:[#allocation2] sm:$0xff]
  %v24 = vld [vmem:[#allocation2 + $0x8] sm:$0xff]
  %v25 = vld [vmem:[#allocation2 + $0x10] sm:$0xff]
  %v26 = vld [vmem:[#allocation2 + $0x18] sm:$0xff]
  %v27 = vld [vmem:[%s0] sm:$0xff]
  %v28 = vld [vmem:[%s0 + $0x8] sm:$0xf]
  %v29 = vld [vmem:[%s0 + $0xc] sm:$0xff]
  %v30 = vld [vmem:[%s0 + $0x14] sm:$0xf]
  %v31 = vld [vmem:[%s0 + $0x18] sm:$0xff]
  %v32 = vld [vmem:[%s0 + $0x20] sm:$0xf]
  %v33 = vld [vmem:[%s0 + $0x24] sm:$0xff]
  %v34 = vld [vmem:[%s0 + $0x2c] sm:$0xf]
  %v35 = vld [vmem:[%s1] sm:$0xf]
  %v36 = vld [vmem:[%s1 + $0x4] sm:$0xf]
  %v37 = vld [vmem:[%s1 + $0x8] sm:$0xf]
  %v38 = vld [vmem:[%s1 + $0xc] sm:$0xf]
  %v39 = vld [vmem:[%s1 + $0x10] sm:$0xf]
  %v40 = vld [vmem:[%s1 + $0x14] sm:$0xf]
  %v41 = vld [vmem:[%s1 + $0x18] sm:$0xf]
  %v42 = vld [vmem:[%s1 + $0x1c] sm:$0xf]
  %v43 = vld [vmem:[%s1 + $0x20] sm:$0xf]
  %v44 = vld [vmem:[%s1 + $0x24] sm:$0xf]
  %v45 = vld [vmem:[%s1 + $0x28] sm:$0xf]
  %v46 = vld [vmem:[%s1 + $0x2c] sm:$0xf]
  %v47 = vld [vmem:[%s1 + $0x30] sm:$0xf]
  %v48 = vld [vmem:[%s1 + $0x34] sm:$0xf]
  %v49 = vld [vmem:[%s1 + $0x38] sm:$0xf]
  %v50 = vld [vmem:[%s1 + $0x3c] sm:$0xf]
  %v51 = vld [vmem:[%s1 + $0x40] sm:$0xf]
  %v52 = vld [vmem:[%s1 + $0x44] sm:$0xf]
  %v53 = vld [vmem:[%s1 + $0x48] sm:$0xf]
  %v54 = vld [vmem:[%s1 + $0x4c] sm:$0xf]
  %v55 = vld [vmem:[%s1 + $0x50] sm:$0xf]
  %v56 = vld [vmem:[%s1 + $0x54] sm:$0xf]
  %v57 = vld [vmem:[%s1 + $0x58] sm:$0xf]
  %v58 = vld [vmem:[%s1 + $0x5c] sm:$0xf]
  %v59 = vld [vmem:[%s1 + $0x60] sm:$0xf]
  %v60 = vld [vmem:[%s1 + $0x64] sm:$0xf]
  %v61 = vld [vmem:[%s1 + $0x68] sm:$0xf]
  %v62 = vld [vmem:[%s1 + $0x6c] sm:$0xf]
  %v63 = vld [vmem:[%s1 + $0x70] sm:$0xf]
  %v64 = vld [vmem:[%s1 + $0x74] sm:$0xf]
  %v65 = vld [vmem:[%s1 + $0x78] sm:$0xf]
  %v66 = vld [vmem:[%s1 + $0x7c] sm:$0xf]
  %v67 = vld [vmem:[%s1 + $0x80] sm:$0xf]
  %v68 = vld [vmem:[%s1 + $0x84] sm:$0xf]
  %v69 = vld [vmem:[%s1 + $0x88] sm:$0xf]
  %v70 = vld [vmem:[%s1 + $0x8c] sm:$0xf]
  %v79 = vunpack.c.l.b16 %v27
  %v80 = vunpack.c.h.b16 %v27
  %v81 = vunpack.c.l.b16 %v28
  %v82 = vunpack.c.l.b16 %v29
  %v83 = vunpack.c.h.b16 %v29
  %v84 = vunpack.c.l.b16 %v30
  %v85 = vunpack.c.l.b16 %v31
  %v86 = vunpack.c.h.b16 %v31
  %v87 = vunpack.c.l.b16 %v32
  %v88 = vunpack.c.l.b16 %v33
  %v89 = vunpack.c.h.b16 %v33
  %v90 = vunpack.c.l.b16 %v34
  %v91 = vpack.c.b16 %v82, %v79
  %v92 = vpack.c.b16 %v83, %v80
  %v93 = vpack.c.b16 %v84, %v81
  %v94 = vpack.c.b16 %v88, %v85
  %v95 = vpack.c.b16 %v89, %v86
  %v96 = vpack.c.b16 %v90, %v87
  %v137 = vunpack.c.l.b16 %v35
  %v138 = vunpack.c.l.b16 %v36
  %v139 = vunpack.c.l.b16 %v37
  %v140 = vunpack.c.l.b16 %v38
  %v141 = vunpack.c.l.b16 %v39
  %v142 = vunpack.c.l.b16 %v40
  %v143 = vunpack.c.l.b16 %v41
  %v144 = vunpack.c.l.b16 %v42
  %v145 = vunpack.c.l.b16 %v43
  %v146 = vunpack.c.l.b16 %v44
  %v147 = vunpack.c.l.b16 %v45
  %v148 = vunpack.c.l.b16 %v46
  %v149 = vunpack.c.l.b16 %v47
  %v150 = vunpack.c.l.b16 %v48
  %v151 = vunpack.c.l.b16 %v49
  %v152 = vunpack.c.l.b16 %v50
  %v153 = vunpack.c.l.b16 %v51
  %v154 = vunpack.c.l.b16 %v52
  %v155 = vunpack.c.l.b16 %v53
  %v156 = vunpack.c.l.b16 %v54
  %v157 = vunpack.c.l.b16 %v55
  %v158 = vunpack.c.l.b16 %v56
  %v159 = vunpack.c.l.b16 %v57
  %v160 = vunpack.c.l.b16 %v58
  %v161 = vunpack.c.l.b16 %v59
  %v162 = vunpack.c.l.b16 %v60
  %v163 = vunpack.c.l.b16 %v61
  %v164 = vunpack.c.l.b16 %v62
  %v165 = vunpack.c.l.b16 %v63
  %v166 = vunpack.c.l.b16 %v64
  %v167 = vunpack.c.l.b16 %v65
  %v168 = vunpack.c.l.b16 %v66
  %v169 = vunpack.c.l.b16 %v67
  %v170 = vunpack.c.l.b16 %v68
  %v171 = vunpack.c.l.b16 %v69
  %v172 = vunpack.c.l.b16 %v70
  %v173 = vpack.c.b16 %v138, %v137
  %v174 = vpack.c.b16 %v140, %v139
  %v175 = vpack.c.b16 %v142, %v141
  %v176 = vpack.c.b16 %v144, %v143
  %v177 = vpack.c.b16 %v146, %v145
  %v178 = vpack.c.b16 %v148, %v147
  %v179 = vpack.c.b16 %v150, %v149
  %v180 = vpack.c.b16 %v152, %v151
  %v181 = vpack.c.b16 %v154, %v153
  %v182 = vpack.c.b16 %v156, %v155
  %v183 = vpack.c.b16 %v158, %v157
  %v184 = vpack.c.b16 %v160, %v159
  %v185 = vpack.c.b16 %v162, %v161
  %v186 = vpack.c.b16 %v164, %v163
  %v187 = vpack.c.b16 %v166, %v165
  %v188 = vpack.c.b16 %v168, %v167
  %v189 = vpack.c.b16 %v170, %v169
  %v190 = vpack.c.b16 %v172, %v171
  %vm209 = vcmask 261120
  %v211 = vsel %vm209, %v93, 0
  %v214 = vsel %vm209, %v96, 0
  %216 = vmatprep.subr.bf16.mxu0 0
  %217 = vmatpush1.bf16.msra.mxu0 %v180
  %218 = vmatprep.subr.bf16.mxu0 0
  %219 = vmatpush1.bf16.msra.mxu0 %v179
  %220 = vmatprep.subr.bf16.mxu0 0
  %221 = vmatpush1.bf16.msra.mxu0 %v178
  %222 = vmatprep.subr.bf16.mxu0 0
  %223 = vmatpush1.bf16.msra.mxu0 %v177
  %224 = vmatprep.subr.bf16.mxu0 0
  %225 = vmatpush1.bf16.msra.mxu0 %v176
  %226 = vmatprep.subr.bf16.mxu0 0
  %227 = vmatpush1.bf16.msra.mxu0 %v175
  %228 = vmatprep.subr.bf16.mxu0 0
  %229 = vmatpush1.bf16.msra.mxu0 %v174
  %230 = vmatprep.subr.bf16.mxu0 0
  %231 = vmatpush1.bf16.msra.mxu0 %v173
  %232 = vmatprep.subr.bf16.mxu0 0
  %233 = vmatpush2.bf16.msra.mxu0 %v188
  %234 = vmatprep.subr.bf16.mxu0 0
  %235 = vmatpush2.bf16.msra.mxu0 %v187
  %236 = vmatprep.subr.bf16.mxu0 0
  %237 = vmatpush2.bf16.msra.mxu0 %v186
  %238 = vmatprep.subr.bf16.mxu0 0
  %239 = vmatpush2.bf16.msra.mxu0 %v185
  %240 = vmatprep.subr.bf16.mxu0 0
  %241 = vmatpush2.bf16.msra.mxu0 %v184
  %242 = vmatprep.subr.bf16.mxu0 0
  %243 = vmatpush2.bf16.msra.mxu0 %v183
  %244 = vmatprep.subr.bf16.mxu0 0
  %245 = vmatpush2.bf16.msra.mxu0 %v182
  %246 = vmatprep.subr.bf16.mxu0 0
  %247 = vmatpush2.bf16.msra.mxu0 %v181
  %248 = vmatprep.mubr.bf16.mxu0 %v92
  %249 = vmatmul.mubr.bf16.gmra.mxu0 %v91
  %v250 = vpop.f32.mrf.mxu0
  %v251 = vadd.f32 0.0, %v250
  %v252 = vpop.f32.mrf.mxu0
  %v253 = vpop.f32.mrf.mxu0
  %v254 = vadd.f32 0.0, %v253
  %v255 = vpop.f32.mrf.mxu0
  %256 = vmatprep.mubr.bf16.mxu0 %v95
  %257 = vmatmul.mubr.bf16.gmra.mxu0 %v94
  %v258 = vpop.f32.mrf.mxu0
  %v259 = vadd.f32 0.0, %v258
  %v260 = vpop.f32.mrf.mxu0
  %v261 = vpop.f32.mrf.mxu0
  %v262 = vadd.f32 0.0, %v261
  %v263 = vpop.f32.mrf.mxu0
  %264 = vdwg.mxu0
  %265 = vmatprep.subr.bf16.mxu0 0
  %266 = vmatpush1.bf16.msra.mxu0 0
  %267 = vmatprep.subr.bf16.mxu0 0
  %268 = vmatpush1.bf16.msra.mxu0 0
  %269 = vmatprep.subr.bf16.mxu0 0
  %270 = vmatpush1.bf16.msra.mxu0 0
  %271 = vmatprep.subr.bf16.mxu0 0
  %272 = vmatpush1.bf16.msra.mxu0 0
  %273 = vmatprep.subr.bf16.mxu0 0
  %274 = vmatpush1.bf16.msra.mxu0 0
  %275 = vmatprep.subr.bf16.mxu0 0
  %276 = vmatpush1.bf16.msra.mxu0 0
  %277 = vmatprep.subr.bf16.mxu0 0
  %278 = vmatpush1.bf16.msra.mxu0 %v190
  %279 = vmatprep.subr.bf16.mxu0 0
  %280 = vmatpush1.bf16.msra.mxu0 %v189
  %281 = vmatprep.subr.bf16.mxu0 0
  %282 = vmatpush2.bf16.msra.mxu0 0
  %283 = vmatprep.subr.bf16.mxu0 0
  %284 = vmatpush2.bf16.msra.mxu0 0
  %285 = vmatprep.subr.bf16.mxu0 0
  %286 = vmatpush2.bf16.msra.mxu0 0
  %287 = vmatprep.subr.bf16.mxu0 0
  %288 = vmatpush2.bf16.msra.mxu0 0
  %289 = vmatprep.subr.bf16.mxu0 0
  %290 = vmatpush2.bf16.msra.mxu0 0
  %291 = vmatprep.subr.bf16.mxu0 0
  %292 = vmatpush2.bf16.msra.mxu0 0
  %293 = vmatprep.subr.bf16.mxu0 0
  %294 = vmatpush2.bf16.msra.mxu0 0
  %295 = vmatprep.subr.bf16.mxu0 0
  %296 = vmatpush2.bf16.msra.mxu0 0
  %297 = vmatprep.mubr.bf16.mxu0 0
  %298 = vmatmul.mubr.bf16.gmra.mxu0 %v211
  %v299 = vpop.f32.mrf.mxu0
  %v300 = vadd.f32 %v251, %v299
  %v301 = vpop.f32.mrf.mxu0
  %v302 = vpop.f32.mrf.mxu0
  %v303 = vadd.f32 %v254, %v302
  %v304 = vpop.f32.mrf.mxu0
  %305 = vmatprep.mubr.bf16.mxu0 0
  %306 = vmatmul.mubr.bf16.gmra.mxu0 %v214
  %v307 = vpop.f32.mrf.mxu0
  %v308 = vadd.f32 %v259, %v307
  %v309 = vpop.f32.mrf.mxu0
  %v310 = vpop.f32.mrf.mxu0
  %v311 = vadd.f32 %v262, %v310
  %v312 = vpop.f32.mrf.mxu0
  %313 = vdwg.mxu0
  %v314 = vadd.f32 %v23, %v300
  %v315 = vadd.f32 %v24, %v303
  %v316 = vadd.f32 %v25, %v308
  %v317 = vadd.f32 %v26, %v311
  %318 = vst [vmem:[#allocation2] sm:$0xff] %v314
  %319 = vst [vmem:[#allocation2 + $0x8] sm:$0xff] %v315
  %320 = vst [vmem:[#allocation2 + $0x10] sm:$0xff] %v316
  %321 = vst [vmem:[#allocation2 + $0x18] sm:$0xff] %v317
  // Predicated region
  $region18: #{faster_rcnn_forward.9} parent=0 // pred_check
    %p322 = pneg %p15
  $region19: #{faster_rcnn_forward.9} parent=0 // pred_check_branch
    %324 = sbr.rel (%p322) target = $region21
  $region20: #{faster_rcnn_forward.9} parent=0 // pred_region
    %v325 = vld [vmem:[#allocation2] sm:$0xff]
    %v326 = vld [vmem:[#allocation2 + $0x8] sm:$0xff]
    %v327 = vld [vmem:[#allocation2 + $0x10] sm:$0xff]
    %v328 = vld [vmem:[#allocation2 + $0x18] sm:$0xff]
    %v329 = vld [vmem:[%s2] sm:$0x1]
    %v331 = vlaneseq
    %v332 = vshrl.u32 %v331, 7
    %v333 = vsub.s32 0, %v332
    %v334 = vrot.slane %v329, %v333
    %v336 = vadd.f32 %v325, %v334
    %v337 = vadd.f32 %v326, %v334
    %v338 = vadd.f32 %v327, %v334
    %v339 = vadd.f32 %v328, %v334
    %v340 = vmax.f32 %v336, 0.0
    %v341 = vmax.f32 %v337, 0.0
    %v342 = vmax.f32 %v338, 0.0
    %v343 = vmax.f32 %v339, 0.0
    %v344 = vpack.c.bf16 %v341, %v340
    %v345 = vpack.c.bf16 %v343, %v342
    %v348 = vunpack.c.l.b16 %v344
    %v349 = vunpack.c.h.b16 %v344
    %v350 = vunpack.c.l.b16 %v345
    %v351 = vunpack.c.h.b16 %v345
    %v352 = vpack.c.b16 %v348, %v348
    %v353 = vpack.c.b16 %v349, %v349
    %v354 = vpack.c.b16 %v350, %v350
    %v355 = vpack.c.b16 %v351, %v351
    %360 = vst [vmem:[%s3] sm:$0xf] %v352
    %361 = vst [vmem:[%s3 + $0x4] sm:$0xf] %v353
    %362 = vst [vmem:[%s3 + $0x8] sm:$0xf] %v354
    %363 = vst [vmem:[%s3 + $0xc] sm:$0xf] %v355
  $region21: #{faster_rcnn_forward.9} parent=0 // pred_fallthru
    _
  // Predicated region
  $region22: #{faster_rcnn_forward.9} parent=0 // pred_check
    _
  $region23: #{faster_rcnn_forward.9} parent=0 // pred_check_branch
    %365 = sbr.rel (0) target = $region25
  $region24: #{faster_rcnn_forward.9} parent=0 // pred_region
    _
  $region25: #{faster_rcnn_forward.9} parent=0 // pred_fallthru
    _
  // Predicated region
  $region26: #{faster_rcnn_forward.9} parent=0 // pred_check
    _
  $region27: #{faster_rcnn_forward.9} parent=0 // pred_check_branch
    %367 = sbr.rel (0) target = $region29
  $region28: #{faster_rcnn_forward.9} parent=0 // pred_region
    _
  $region29: #{faster_rcnn_forward.9} parent=0 // pred_fallthru
    _

// kernel: squeeze.15
$region0: #{squeeze.15}
  %s0 = inlined_call_operand.vmem [shape: f32[2,4,4,9,1], index: 0, kind: input, shape index: {}]
  %s1 = inlined_call_operand.vmem [shape: f32[2,144], index: 1, kind: output, shape index: {}]
  $region1: #{squeeze.15} parent=0
    #allocation0 [shape = 'u8[8192]{0}', space=vmem, size = 0x2000, scoped, tag = 'scoped mem for output reshape']
    #allocation1 [shape = 'u8[32768]{0}', space=vmem, size = 0x8000, scoped, tag = 'scoped mem for input reshape']
    %s3 = sshll.u32 1, 4
    %s4 = ssub.s32 %s3, 1
    %s5 = smul.addr 4, 7
    %s6 = scalar_lea.vmem %s0, %s5
    %v7 = vld [vmem:[%s6] sm:%s4]
    %s8 = scalar_lea.vmem [#allocation1], 56
    %9 = vst [vmem:[%s8] sm:%s4] %v7
    %s10 = smul.addr 4, 6
    %s11 = scalar_lea.vmem %s0, %s10
    %v12 = vld [vmem:[%s11] sm:%s4]
    %s13 = scalar_lea.vmem [#allocation1], 48
    %14 = vst [vmem:[%s13] sm:%s4] %v12
    %s15 = smul.addr 4, 5
    %s16 = scalar_lea.vmem %s0, %s15
    %v17 = vld [vmem:[%s16] sm:%s4]
    %s18 = scalar_lea.vmem [#allocation1], 40
    %19 = vst [vmem:[%s18] sm:%s4] %v17
    %s20 = smul.addr 4, 4
    %s21 = scalar_lea.vmem %s0, %s20
    %v22 = vld [vmem:[%s21] sm:%s4]
    %s23 = scalar_lea.vmem [#allocation1], 32
    %24 = vst [vmem:[%s23] sm:%s4] %v22
    %s25 = smul.addr 4, 3
    %s26 = scalar_lea.vmem %s0, %s25
    %v27 = vld [vmem:[%s26] sm:%s4]
    %s28 = scalar_lea.vmem [#allocation1], 24
    %29 = vst [vmem:[%s28] sm:%s4] %v27
    %s30 = smul.addr 4, 2
    %s31 = scalar_lea.vmem %s0, %s30
    %v32 = vld [vmem:[%s31] sm:%s4]
    %s33 = scalar_lea.vmem [#allocation1], 16
    %34 = vst [vmem:[%s33] sm:%s4] %v32
    %s35 = scalar_lea.vmem %s0, 4
    %v36 = vld [vmem:[%s35] sm:%s4]
    %s37 = scalar_lea.vmem [#allocation1], 8
    %38 = vst [vmem:[%s37] sm:%s4] %v36
    %v39 = vld [vmem:[%s0] sm:%s4]
    %40 = vst [vmem:[#allocation1] sm:%s4] %v39
    %v41 = vld [vmem:[#allocation1] sm:$0x1]
    %s42 = scalar_lea.vmem [#allocation1], 31
    %v43 = vld [vmem:[%s42] sm:$0x2]
    %vm44 = vcmask 1041409
    %v45 = vsel %vm44, %v43, %v41
    %vm46 = vcmask 72704
    %47 = vst.msk [vmem:[#allocation0] sm:$0x3] %vm46, %v45
    %s48 = scalar_lea.vmem [#allocation1], 26
    %v49 = vld [vmem:[%s48] sm:$0x1]
    %s50 = scalar_lea.vmem [#allocation1], 57
    %v51 = vld [vmem:[%s50] sm:$0x2]
    %vm52 = vcmask 1041409
    %v53 = vsel %vm52, %v51, %v49
    %s54 = scalar_lea.vmem [#allocation1], 26
    %v55 = vld [vmem:[%s54] sm:$0x1]
    %s56 = scalar_lea.vmem [#allocation1], 57
    %v57 = vld [vmem:[%s56] sm:$0x2]
    %vm58 = vcmask 1041409
    %v59 = vsel %vm58, %v57, %v55
    %vm60 = vcmask 15360
    %v61 = vsel %vm60, %v59, %v53
    %62 = vrot.lane.b32.xlu0 %v61, 126
    %v63 = vpop.permute.xlu0 %62
    %vm64 = vcmask 56320
    %s65 = scalar_lea.vmem [#allocation0], 8
    %66 = vst.msk [vmem:[%s65] sm:$0x3] %vm64, %v63
    %vm67 = vcmask 1048560
    %68 = vst.msk [vmem:[#allocation0] sm:$0x3] %vm67, %v63
    %s69 = scalar_lea.vmem [#allocation1], 25
    %v70 = vld [vmem:[%s69] sm:$0x1]
    %s71 = scalar_lea.vmem [#allocation1], 56
    %v72 = vld [vmem:[%s71] sm:$0x2]
    %vm73 = vcmask 1041409
    %v74 = vsel %vm73, %v72, %v70
    %75 = vrot.lane.b32.xlu0 %v74, 117
    %v76 = vpop.permute.xlu0 %75
    %vm77 = vcmask 1032104
    %78 = vst.msk [vmem:[#allocation0] sm:$0x3] %vm77, %v76
    %s79 = scalar_lea.vmem [#allocation1], 24
    %v80 = vld [vmem:[%s79] sm:$0x1]
    %s81 = scalar_lea.vmem [#allocation1], 55
    %v82 = vld [vmem:[%s81] sm:$0x2]
    %vm83 = vcmask 1041409
    %v84 = vsel %vm83, %v82, %v80
    %85 = vrot.lane.b32.xlu0 %v84, 108
    %v86 = vpop.permute.xlu0 %85
    %vm87 = vcmask 958304
    %88 = vst.msk [vmem:[#allocation0] sm:$0x3] %vm87, %v86
    %s89 = scalar_lea.vmem [#allocation1], 19
    %v90 = vld [vmem:[%s89] sm:$0x1]
    %s91 = scalar_lea.vmem [#allocation1], 50
    %v92 = vld [vmem:[%s91] sm:$0x2]
    %vm93 = vcmask 1041409
    %v94 = vsel %vm93, %v92, %v90
    %95 = vrot.lane.b32.xlu0 %v94, 99
    %v96 = vpop.permute.xlu0 %95
    %vm97 = vcmask 884504
    %98 = vst.msk [vmem:[#allocation0] sm:$0x3] %vm97, %v96
    %s99 = scalar_lea.vmem [#allocation1], 18
    %v100 = vld [vmem:[%s99] sm:$0x1]
    %s101 = scalar_lea.vmem [#allocation1], 49
    %v102 = vld [vmem:[%s101] sm:$0x2]
    %vm103 = vcmask 1041409
    %v104 = vsel %vm103, %v102, %v100
    %105 = vrot.lane.b32.xlu0 %v104, 90
    %v106 = vpop.permute.xlu0 %105
    %vm107 = vcmask 810704
    %108 = vst.msk [vmem:[#allocation0] sm:$0x3] %vm107, %v106
    %s109 = scalar_lea.vmem [#allocation1], 17
    %v110 = vld [vmem:[%s109] sm:$0x1]
    %s111 = scalar_lea.vmem [#allocation1], 48
    %v112 = vld [vmem:[%s111] sm:$0x2]
    %vm113 = vcmask 1041409
    %v114 = vsel %vm113, %v112, %v110
    %115 = vrot.lane.b32.xlu0 %v114, 81
    %v116 = vpop.permute.xlu0 %115
    %vm117 = vcmask 736904
    %118 = vst.msk [vmem:[#allocation0] sm:$0x3] %vm117, %v116
    %s119 = scalar_lea.vmem [#allocation1], 16
    %v120 = vld [vmem:[%s119] sm:$0x1]
    %s121 = scalar_lea.vmem [#allocation1], 47
    %v122 = vld [vmem:[%s121] sm:$0x2]
    %vm123 = vcmask 1041409
    %v124 = vsel %vm123, %v122, %v120
    %125 = vrot.lane.b32.xlu0 %v124, 72
    %v126 = vpop.permute.xlu0 %125
    %vm127 = vcmask 663104
    %128 = vst.msk [vmem:[#allocation0] sm:$0x3] %vm127, %v126
    %s129 = scalar_lea.vmem [#allocation1], 11
    %v130 = vld [vmem:[%s129] sm:$0x1]
    %s131 = scalar_lea.vmem [#allocation1], 42
    %v132 = vld [vmem:[%s131] sm:$0x2]
    %vm133 = vcmask 1041409
    %v134 = vsel %vm133, %v132, %v130
    %135 = vrot.lane.b32.xlu0 %v134, 63
    %v136 = vpop.permute.xlu0 %135
    %vm137 = vcmask 589304
    %138 = vst.msk [vmem:[#allocation0] sm:$0x3] %vm137, %v136
    %s139 = scalar_lea.vmem [#allocation1], 10
    %v140 = vld [vmem:[%s139] sm:$0x1]
    %s141 = scalar_lea.vmem [#allocation1], 41
    %v142 = vld [vmem:[%s141] sm:$0x2]
    %vm143 = vcmask 1041409
    %v144 = vsel %vm143, %v142, %v140
    %145 = vrot.lane.b32.xlu0 %v144, 54
    %v146 = vpop.permute.xlu0 %145
    %vm147 = vcmask 515504
    %148 = vst.msk [vmem:[#allocation0] sm:$0x3] %vm147, %v146
    %s149 = scalar_lea.vmem [#allocation1], 9
    %v150 = vld [vmem:[%s149] sm:$0x1]
    %s151 = scalar_lea.vmem [#allocation1], 40
    %v152 = vld [vmem:[%s151] sm:$0x2]
    %vm153 = vcmask 1041409
    %v154 = vsel %vm153, %v152, %v150
    %155 = vrot.lane.b32.xlu0 %v154, 45
    %v156 = vpop.permute.xlu0 %155
    %vm157 = vcmask 441704
    %158 = vst.msk [vmem:[#allocation0] sm:$0x3] %vm157, %v156
    %s159 = scalar_lea.vmem [#allocation1], 8
    %v160 = vld [vmem:[%s159] sm:$0x1]
    %s161 = scalar_lea.vmem [#allocation1], 39
    %v162 = vld [vmem:[%s161] sm:$0x2]
    %vm163 = vcmask 1041409
    %v164 = vsel %vm163, %v162, %v160
    %165 = vrot.lane.b32.xlu0 %v164, 36
    %v166 = vpop.permute.xlu0 %165
    %vm167 = vcmask 367904
    %168 = vst.msk [vmem:[#allocation0] sm:$0x3] %vm167, %v166
    %s169 = scalar_lea.vmem [#allocation1], 3
    %v170 = vld [vmem:[%s169] sm:$0x1]
    %s171 = scalar_lea.vmem [#allocation1], 34
    %v172 = vld [vmem:[%s171] sm:$0x2]
    %vm173 = vcmask 1041409
    %v174 = vsel %vm173, %v172, %v170
    %175 = vrot.lane.b32.xlu0 %v174, 27
    %v176 = vpop.permute.xlu0 %175
    %vm177 = vcmask 294104
    %178 = vst.msk [vmem:[#allocation0] sm:$0x3] %vm177, %v176
    %s179 = scalar_lea.vmem [#allocation1], 2
    %v180 = vld [vmem:[%s179] sm:$0x1]
    %s181 = scalar_lea.vmem [#allocation1], 33
    %v182 = vld [vmem:[%s181] sm:$0x2]
    %vm183 = vcmask 1041409
    %v184 = vsel %vm183, %v182, %v180
    %185 = vrot.lane.b32.xlu0 %v184, 18
    %v186 = vpop.permute.xlu0 %185
    %vm187 = vcmask 220304
    %188 = vst.msk [vmem:[#allocation0] sm:$0x3] %vm187, %v186
    %s189 = scalar_lea.vmem [#allocation1], 1
    %v190 = vld [vmem:[%s189] sm:$0x1]
    %s191 = scalar_lea.vmem [#allocation1], 32
    %v192 = vld [vmem:[%s191] sm:$0x2]
    %vm193 = vcmask 1041409
    %v194 = vsel %vm193, %v192, %v190
    %195 = vrot.lane.b32.xlu0 %v194, 9
    %v196 = vpop.permute.xlu0 %195
    %vm197 = vcmask 146504
    %198 = vst.msk [vmem:[#allocation0] sm:$0x3] %vm197, %v196
    %s199 = scalar_lea.vmem [#allocation1], 27
    %v200 = vld [vmem:[%s199] sm:$0x1]
    %s201 = scalar_lea.vmem [#allocation1], 58
    %v202 = vld [vmem:[%s201] sm:$0x2]
    %vm203 = vcmask 1041409
    %v204 = vsel %vm203, %v202, %v200
    %205 = vrot.lane.b32.xlu0 %v204, 7
    %v206 = vpop.permute.xlu0 %205
    %vm207 = vcmask 130104
    %s208 = scalar_lea.vmem [#allocation0], 8
    %209 = vst.msk [vmem:[%s208] sm:$0x3] %vm207, %v206
    %s211 = sshll.u32 1, 2
    %s212 = ssub.s32 %s211, 1
    %v214 = vld [vmem:[#allocation0] sm:%s212]
    %s215 = sshll.u32 1, 2
    %s216 = ssub.s32 %s215, 1
    %217 = vst [vmem:[%s1] sm:%s216] %v214
    %s218 = scalar_lea.vmem [#allocation0], 8
    %v219 = vld [vmem:[%s218] sm:%s212]
    %s220 = sshll.u32 1, 2
    %s221 = ssub.s32 %s220, 1
    %s222 = scalar_lea.vmem %s1, 2
    %223 = vst [vmem:[%s222] sm:%s221] %v219

// kernel: faster_rcnn_forward.10
$region0: #{faster_rcnn_forward.10}
  #allocation0 [shape = 'u32[]', space=smem, size = 0x4, offset = 0x4, fixed_abs, tag = 'smem constant byte address 0x4 - core index']
  #allocation1 [shape = 'u32[144,128]{1,0:T(1,128)}', space=vmem, size = 0x12000, scoped, tag = 'internal scratch']
  %s0 = inlined_call_operand.vmem [shape: bf16[32,288], index: 0, kind: input, shape index: {}]
  %s1 = inlined_call_operand.vmem [shape: bf16[288,32], index: 1, kind: input, shape index: {}]
  %s2 = inlined_call_operand.vmem [shape: f32[1,32], index: 2, kind: input, shape index: {}]
  %s3 = inlined_call_operand.vmem [shape: bf16[32,54], index: 3, kind: input, shape index: {}]
  %s4 = inlined_call_operand.vmem [shape: f32[1,54], index: 4, kind: input, shape index: {}]
  %s5 = inlined_call_operand.vmem [shape: f32[32,54], index: 5, kind: output, shape index: {}]
  %s6 = sld [smem:[#allocation0]]
  $region30: #{faster_rcnn_forward.10} parent=0
    _
  %s8 = ssub.s32 1, %s6
  %s9 = scalar_select 0, %s8, %s6
  // Predicated region
  $region2: #{faster_rcnn_forward.10} parent=0 // pred_check
    _
  $region3: #{faster_rcnn_forward.10} parent=0 // pred_check_branch
    %11 = sbr.rel (0) target = $region5
  $region4: #{faster_rcnn_forward.10} parent=0 // pred_region
    _
  $region5: #{faster_rcnn_forward.10} parent=0 // pred_fallthru
    _
  // Predicated region
  $region6: #{faster_rcnn_forward.10} parent=0 // pred_check
    _
  $region7: #{faster_rcnn_forward.10} parent=0 // pred_check_branch
    %13 = sbr.rel (0) target = $region9
  $region8: #{faster_rcnn_forward.10} parent=0 // pred_region
    _
  $region9: #{faster_rcnn_forward.10} parent=0 // pred_fallthru
    _
  // Predicated region
  $region10: #{faster_rcnn_forward.10} parent=0 // pred_check
    _
  $region11: #{faster_rcnn_forward.10} parent=0 // pred_check_branch
    %15 = sbr.rel (0) target = $region13
  $region12: #{faster_rcnn_forward.10} parent=0 // pred_region
    _
  $region13: #{faster_rcnn_forward.10} parent=0 // pred_fallthru
    _
  // Predicated region
  $region14: #{faster_rcnn_forward.10} parent=0 // pred_check
    _
  $region15: #{faster_rcnn_forward.10} parent=0 // pred_check_branch
    %17 = sbr.rel (0) target = $region17
  $region16: #{faster_rcnn_forward.10} parent=0 // pred_region
    _
  $region17: #{faster_rcnn_forward.10} parent=0 // pred_fallthru
    _
  // Predicated region
  $region18: #{faster_rcnn_forward.10} parent=0 // pred_check
    _
  $region19: #{faster_rcnn_forward.10} parent=0 // pred_check_branch
    %19 = sbr.rel (0) target = $region21
  $region20: #{faster_rcnn_forward.10} parent=0 // pred_region
    _
  $region21: #{faster_rcnn_forward.10} parent=0 // pred_fallthru
    _
  %v21 = vld [vmem:[%s0] sm:$0xff]
  %v22 = vld [vmem:[%s0 + $0x8] sm:$0xf]
  %v23 = vld [vmem:[%s0 + $0xc] sm:$0xff]
  %v24 = vld [vmem:[%s0 + $0x14] sm:$0xf]
  %v25 = vld [vmem:[%s0 + $0x18] sm:$0xff]
  %v26 = vld [vmem:[%s0 + $0x20] sm:$0xf]
  %v27 = vld [vmem:[%s0 + $0x24] sm:$0xff]
  %v28 = vld [vmem:[%s0 + $0x2c] sm:$0xf]
  %v29 = vld [vmem:[%s1] sm:$0xf]
  %v30 = vld [vmem:[%s1 + $0x4] sm:$0xf]
  %v31 = vld [vmem:[%s1 + $0x8] sm:$0xf]
  %v32 = vld [vmem:[%s1 + $0xc] sm:$0xf]
  %v33 = vld [vmem:[%s1 + $0x10] sm:$0xf]
  %v34 = vld [vmem:[%s1 + $0x14] sm:$0xf]
  %v35 = vld [vmem:[%s1 + $0x18] sm:$0xf]
  %v36 = vld [vmem:[%s1 + $0x1c] sm:$0xf]
  %v37 = vld [vmem:[%s1 + $0x20] sm:$0xf]
  %v38 = vld [vmem:[%s1 + $0x24] sm:$0xf]
  %v39 = vld [vmem:[%s1 + $0x28] sm:$0xf]
  %v40 = vld [vmem:[%s1 + $0x2c] sm:$0xf]
  %v41 = vld [vmem:[%s1 + $0x30] sm:$0xf]
  %v42 = vld [vmem:[%s1 + $0x34] sm:$0xf]
  %v43 = vld [vmem:[%s1 + $0x38] sm:$0xf]
  %v44 = vld [vmem:[%s1 + $0x3c] sm:$0xf]
  %v45 = vld [vmem:[%s1 + $0x40] sm:$0xf]
  %v46 = vld [vmem:[%s1 + $0x44] sm:$0xf]
  %v47 = vld [vmem:[%s1 + $0x48] sm:$0xf]
  %v48 = vld [vmem:[%s1 + $0x4c] sm:$0xf]
  %v49 = vld [vmem:[%s1 + $0x50] sm:$0xf]
  %v50 = vld [vmem:[%s1 + $0x54] sm:$0xf]
  %v51 = vld [vmem:[%s1 + $0x58] sm:$0xf]
  %v52 = vld [vmem:[%s1 + $0x5c] sm:$0xf]
  %v53 = vld [vmem:[%s1 + $0x60] sm:$0xf]
  %v54 = vld [vmem:[%s1 + $0x64] sm:$0xf]
  %v55 = vld [vmem:[%s1 + $0x68] sm:$0xf]
  %v56 = vld [vmem:[%s1 + $0x6c] sm:$0xf]
  %v57 = vld [vmem:[%s1 + $0x70] sm:$0xf]
  %v58 = vld [vmem:[%s1 + $0x74] sm:$0xf]
  %v59 = vld [vmem:[%s1 + $0x78] sm:$0xf]
  %v60 = vld [vmem:[%s1 + $0x7c] sm:$0xf]
  %v61 = vld [vmem:[%s1 + $0x80] sm:$0xf]
  %v62 = vld [vmem:[%s1 + $0x84] sm:$0xf]
  %v63 = vld [vmem:[%s1 + $0x88] sm:$0xf]
  %v64 = vld [vmem:[%s1 + $0x8c] sm:$0xf]
  %v65 = vld [vmem:[%s2] sm:$0x1]
  %v67 = vlaneseq
  %v68 = vshrl.u32 %v67, 7
  %v69 = vsub.s32 0, %v68
  %v70 = vrot.slane %v65, %v69
  %v80 = vunpack.c.l.b16 %v21
  %v81 = vunpack.c.h.b16 %v21
  %v82 = vunpack.c.l.b16 %v22
  %v83 = vunpack.c.l.b16 %v23
  %v84 = vunpack.c.h.b16 %v23
  %v85 = vunpack.c.l.b16 %v24
  %v86 = vunpack.c.l.b16 %v25
  %v87 = vunpack.c.h.b16 %v25
  %v88 = vunpack.c.l.b16 %v26
  %v89 = vunpack.c.l.b16 %v27
  %v90 = vunpack.c.h.b16 %v27
  %v91 = vunpack.c.l.b16 %v28
  %v92 = vpack.c.b16 %v83, %v80
  %v93 = vpack.c.b16 %v84, %v81
  %v94 = vpack.c.b16 %v85, %v82
  %v95 = vpack.c.b16 %v89, %v86
  %v96 = vpack.c.b16 %v90, %v87
  %v97 = vpack.c.b16 %v91, %v88
  %v138 = vunpack.c.l.b16 %v29
  %v139 = vunpack.c.l.b16 %v30
  %v140 = vunpack.c.l.b16 %v31
  %v141 = vunpack.c.l.b16 %v32
  %v142 = vunpack.c.l.b16 %v33
  %v143 = vunpack.c.l.b16 %v34
  %v144 = vunpack.c.l.b16 %v35
  %v145 = vunpack.c.l.b16 %v36
  %v146 = vunpack.c.l.b16 %v37
  %v147 = vunpack.c.l.b16 %v38
  %v148 = vunpack.c.l.b16 %v39
  %v149 = vunpack.c.l.b16 %v40
  %v150 = vunpack.c.l.b16 %v41
  %v151 = vunpack.c.l.b16 %v42
  %v152 = vunpack.c.l.b16 %v43
  %v153 = vunpack.c.l.b16 %v44
  %v154 = vunpack.c.l.b16 %v45
  %v155 = vunpack.c.l.b16 %v46
  %v156 = vunpack.c.l.b16 %v47
  %v157 = vunpack.c.l.b16 %v48
  %v158 = vunpack.c.l.b16 %v49
  %v159 = vunpack.c.l.b16 %v50
  %v160 = vunpack.c.l.b16 %v51
  %v161 = vunpack.c.l.b16 %v52
  %v162 = vunpack.c.l.b16 %v53
  %v163 = vunpack.c.l.b16 %v54
  %v164 = vunpack.c.l.b16 %v55
  %v165 = vunpack.c.l.b16 %v56
  %v166 = vunpack.c.l.b16 %v57
  %v167 = vunpack.c.l.b16 %v58
  %v168 = vunpack.c.l.b16 %v59
  %v169 = vunpack.c.l.b16 %v60
  %v170 = vunpack.c.l.b16 %v61
  %v171 = vunpack.c.l.b16 %v62
  %v172 = vunpack.c.l.b16 %v63
  %v173 = vunpack.c.l.b16 %v64
  %v174 = vpack.c.b16 %v139, %v138
  %v175 = vpack.c.b16 %v141, %v140
  %v176 = vpack.c.b16 %v143, %v142
  %v177 = vpack.c.b16 %v145, %v144
  %v178 = vpack.c.b16 %v147, %v146
  %v179 = vpack.c.b16 %v149, %v148
  %v180 = vpack.c.b16 %v151, %v150
  %v181 = vpack.c.b16 %v153, %v152
  %v182 = vpack.c.b16 %v155, %v154
  %v183 = vpack.c.b16 %v157, %v156
  %v184 = vpack.c.b16 %v159, %v158
  %v185 = vpack.c.b16 %v161, %v160
  %v186 = vpack.c.b16 %v163, %v162
  %v187 = vpack.c.b16 %v165, %v164
  %v188 = vpack.c.b16 %v167, %v166
  %v189 = vpack.c.b16 %v169, %v168
  %v190 = vpack.c.b16 %v171, %v170
  %v191 = vpack.c.b16 %v173, %v172
  %vm210 = vcmask 261120
  %v212 = vsel %vm210, %v94, 0
  %v215 = vsel %vm210, %v97, 0
  %217 = vmatprep.subr.bf16.mxu0 0
  %218 = vmatpush1.bf16.msra.mxu0 %v181
  %219 = vmatprep.subr.bf16.mxu0 0
  %220 = vmatpush1.bf16.msra.mxu0 %v180
  %221 = vmatprep.subr.bf16.mxu0 0
  %222 = vmatpush1.bf16.msra.mxu0 %v179
  %223 = vmatprep.subr.bf16.mxu0 0
  %224 = vmatpush1.bf16.msra.mxu0 %v178
  %225 = vmatprep.subr.bf16.mxu0 0
  %226 = vmatpush1.bf16.msra.mxu0 %v177
  %227 = vmatprep.subr.bf16.mxu0 0
  %228 = vmatpush1.bf16.msra.mxu0 %v176
  %229 = vmatprep.subr.bf16.mxu0 0
  %230 = vmatpush1.bf16.msra.mxu0 %v175
  %231 = vmatprep.subr.bf16.mxu0 0
  %232 = vmatpush1.bf16.msra.mxu0 %v174
  %233 = vmatprep.subr.bf16.mxu0 0
  %234 = vmatpush2.bf16.msra.mxu0 %v189
  %235 = vmatprep.subr.bf16.mxu0 0
  %236 = vmatpush2.bf16.msra.mxu0 %v188
  %237 = vmatprep.subr.bf16.mxu0 0
  %238 = vmatpush2.bf16.msra.mxu0 %v187
  %239 = vmatprep.subr.bf16.mxu0 0
  %240 = vmatpush2.bf16.msra.mxu0 %v186
  %241 = vmatprep.subr.bf16.mxu0 0
  %242 = vmatpush2.bf16.msra.mxu0 %v185
  %243 = vmatprep.subr.bf16.mxu0 0
  %244 = vmatpush2.bf16.msra.mxu0 %v184
  %245 = vmatprep.subr.bf16.mxu0 0
  %246 = vmatpush2.bf16.msra.mxu0 %v183
  %247 = vmatprep.subr.bf16.mxu0 0
  %248 = vmatpush2.bf16.msra.mxu0 %v182
  %249 = vmatprep.mubr.bf16.mxu0 %v93
  %250 = vmatmul.mubr.bf16.gmra.mxu0 %v92
  %v251 = vpop.f32.mrf.mxu0
  %v252 = vadd.f32 %v70, %v251
  %v253 = vpop.f32.mrf.mxu0
  %v254 = vpop.f32.mrf.mxu0
  %v255 = vadd.f32 %v70, %v254
  %v256 = vpop.f32.mrf.mxu0
  %257 = vmatprep.mubr.bf16.mxu0 %v96
  %258 = vmatmul.mubr.bf16.gmra.mxu0 %v95
  %v259 = vpop.f32.mrf.mxu0
  %v260 = vadd.f32 %v70, %v259
  %v261 = vpop.f32.mrf.mxu0
  %v262 = vpop.f32.mrf.mxu0
  %v263 = vadd.f32 %v70, %v262
  %v264 = vpop.f32.mrf.mxu0
  %265 = vdwg.mxu0
  %266 = vmatprep.subr.bf16.mxu0 0
  %267 = vmatpush1.bf16.msra.mxu0 0
  %268 = vmatprep.subr.bf16.mxu0 0
  %269 = vmatpush1.bf16.msra.mxu0 0
  %270 = vmatprep.subr.bf16.mxu0 0
  %271 = vmatpush1.bf16.msra.mxu0 0
  %272 = vmatprep.subr.bf16.mxu0 0
  %273 = vmatpush1.bf16.msra.mxu0 0
  %274 = vmatprep.subr.bf16.mxu0 0
  %275 = vmatpush1.bf16.msra.mxu0 0
  %276 = vmatprep.subr.bf16.mxu0 0
  %277 = vmatpush1.bf16.msra.mxu0 0
  %278 = vmatprep.subr.bf16.mxu0 0
  %279 = vmatpush1.bf16.msra.mxu0 %v191
  %280 = vmatprep.subr.bf16.mxu0 0
  %281 = vmatpush1.bf16.msra.mxu0 %v190
  %282 = vmatprep.subr.bf16.mxu0 0
  %283 = vmatpush2.bf16.msra.mxu0 0
  %284 = vmatprep.subr.bf16.mxu0 0
  %285 = vmatpush2.bf16.msra.mxu0 0
  %286 = vmatprep.subr.bf16.mxu0 0
  %287 = vmatpush2.bf16.msra.mxu0 0
  %288 = vmatprep.subr.bf16.mxu0 0
  %289 = vmatpush2.bf16.msra.mxu0 0
  %290 = vmatprep.subr.bf16.mxu0 0
  %291 = vmatpush2.bf16.msra.mxu0 0
  %292 = vmatprep.subr.bf16.mxu0 0
  %293 = vmatpush2.bf16.msra.mxu0 0
  %294 = vmatprep.subr.bf16.mxu0 0
  %295 = vmatpush2.bf16.msra.mxu0 0
  %296 = vmatprep.subr.bf16.mxu0 0
  %297 = vmatpush2.bf16.msra.mxu0 0
  %298 = vmatprep.mubr.bf16.mxu0 0
  %299 = vmatmul.mubr.bf16.gmra.mxu0 %v212
  %v300 = vpop.f32.mrf.mxu0
  %v301 = vadd.f32 %v252, %v300
  %v302 = vpop.f32.mrf.mxu0
  %v303 = vpop.f32.mrf.mxu0
  %v304 = vadd.f32 %v255, %v303
  %v305 = vpop.f32.mrf.mxu0
  %306 = vmatprep.mubr.bf16.mxu0 0
  %307 = vmatmul.mubr.bf16.gmra.mxu0 %v215
  %v308 = vpop.f32.mrf.mxu0
  %v309 = vadd.f32 %v260, %v308
  %v310 = vpop.f32.mrf.mxu0
  %v311 = vpop.f32.mrf.mxu0
  %v312 = vadd.f32 %v263, %v311
  %v313 = vpop.f32.mrf.mxu0
  %314 = vdwg.mxu0
  %v315 = vmax.f32 %v301, 0.0
  %v316 = vmax.f32 %v304, 0.0
  %v317 = vmax.f32 %v309, 0.0
  %v318 = vmax.f32 %v312, 0.0
  %v319 = vpack.c.bf16 %v316, %v315
  %v320 = vpack.c.bf16 %v318, %v317
  %v321 = vld [vmem:[%s3] sm:$0xf]
  %v322 = vld [vmem:[%s3 + $0x4] sm:$0xf]
  %v323 = vld [vmem:[%s3 + $0x8] sm:$0xf]
  %v324 = vld [vmem:[%s3 + $0xc] sm:$0xf]
  %v325 = vld [vmem:[%s4] sm:$0x1]
  %v327 = vlaneseq
  %v328 = vshrl.u32 %v327, 7
  %v329 = vsub.s32 0, %v328
  %v330 = vrot.slane %v325, %v329
  %v336 = vunpack.c.l.b16 %v321
  %v337 = vunpack.c.l.b16 %v322
  %v338 = vunpack.c.l.b16 %v323
  %v339 = vunpack.c.l.b16 %v324
  %v340 = vpack.c.b16 %v337, %v336
  %v341 = vpack.c.b16 %v339, %v338
  %v345 = vsel %vm210, %v319, 0
  %v348 = vsel %vm210, %v320, 0
  %350 = vmatprep.subr.bf16.mxu0 0
  %351 = vmatpush1.bf16.msra.mxu0 0
  %352 = vmatprep.subr.bf16.mxu0 0
  %353 = vmatpush1.bf16.msra.mxu0 0
  %354 = vmatprep.subr.bf16.mxu0 0
  %355 = vmatpush1.bf16.msra.mxu0 0
  %356 = vmatprep.subr.bf16.mxu0 0
  %357 = vmatpush1.bf16.msra.mxu0 0
  %358 = vmatprep.subr.bf16.mxu0 0
  %359 = vmatpush1.bf16.msra.mxu0 0
  %360 = vmatprep.subr.bf16.mxu0 0
  %361 = vmatpush1.bf16.msra.mxu0 0
  %362 = vmatprep.subr.bf16.mxu0 0
  %363 = vmatpush1.bf16.msra.mxu0 %v341
  %364 = vmatprep.subr.bf16.mxu0 0
  %365 = vmatpush1.bf16.msra.mxu0 %v340
  %366 = vmatprep.subr.bf16.mxu0 0
  %367 = vmatpush2.bf16.msra.mxu0 0
  %368 = vmatprep.subr.bf16.mxu0 0
  %369 = vmatpush2.bf16.msra.mxu0 0
  %370 = vmatprep.subr.bf16.mxu0 0
  %371 = vmatpush2.bf16.msra.mxu0 0
  %372 = vmatprep.subr.bf16.mxu0 0
  %373 = vmatpush2.bf16.msra.mxu0 0
  %374 = vmatprep.subr.bf16.mxu0 0
  %375 = vmatpush2.bf16.msra.mxu0 0
  %376 = vmatprep.subr.bf16.mxu0 0
  %377 = vmatpush2.bf16.msra.mxu0 0
  %378 = vmatprep.subr.bf16.mxu0 0
  %379 = vmatpush2.bf16.msra.mxu0 0
  %380 = vmatprep.subr.bf16.mxu0 0
  %381 = vmatpush2.bf16.msra.mxu0 0
  %382 = vmatprep.mubr.bf16.mxu0 0
  %383 = vmatmul.mubr.bf16.gmra.mxu0 %v345
  %v384 = vpop.f32.mrf.mxu0
  %v385 = vadd.f32 %v330, %v384
  %v386 = vpop.f32.mrf.mxu0
  %v387 = vpop.f32.mrf.mxu0
  %v388 = vadd.f32 %v330, %v387
  %v389 = vpop.f32.mrf.mxu0
  %390 = vmatprep.mubr.bf16.mxu0 0
  %391 = vmatmul.mubr.bf16.gmra.mxu0 %v348
  %v392 = vpop.f32.mrf.mxu0
  %v393 = vadd.f32 %v330, %v392
  %v394 = vpop.f32.mrf.mxu0
  %v395 = vpop.f32.mrf.mxu0
  %v396 = vadd.f32 %v330, %v395
  %v397 = vpop.f32.mrf.mxu0
  %398 = vdwg.mxu0
  %vm399 = vcmask 441344
  %400 = vst.msk [vmem:[%s5] sm:$0xff] %vm399, %v385
  %401 = vst.msk [vmem:[%s5 + $0x8] sm:$0xff] %vm399, %v388
  %402 = vst.msk [vmem:[%s5 + $0x10] sm:$0xff] %vm399, %v393
  %403 = vst.msk [vmem:[%s5 + $0x18] sm:$0xff] %vm399, %v396
  // Predicated region
  $region22: #{faster_rcnn_forward.10} parent=0 // pred_check
    _
  $region23: #{faster_rcnn_forward.10} parent=0 // pred_check_branch
    %405 = sbr.rel (0) target = $region25
  $region24: #{faster_rcnn_forward.10} parent=0 // pred_region
    _
  $region25: #{faster_rcnn_forward.10} parent=0 // pred_fallthru
    _
  // Predicated region
  $region26: #{faster_rcnn_forward.10} parent=0 // pred_check
    _
  $region27: #{faster_rcnn_forward.10} parent=0 // pred_check_branch
    %407 = sbr.rel (0) target = $region29
  $region28: #{faster_rcnn_forward.10} parent=0 // pred_region
    _
  $region29: #{faster_rcnn_forward.10} parent=0 // pred_fallthru
    _

// kernel: faster_rcnn_forward.11
$region0: #{faster_rcnn_forward.11}
  #allocation0 [shape = 'u32[]', space=smem, size = 0x4, offset = 0x4, fixed_abs, tag = 'smem constant byte address 0x4 - core index']
  #allocation1 [shape = 'u32[144,128]{1,0:T(1,128)}', space=vmem, size = 0x12000, scoped, tag = 'internal scratch']
  #allocation2 [shape = 'f32[784,128]{1,0:T(8,128)}', space=vmem, size = 0x62000, scoped, tag = 'scratch operand']
  %s0 = inlined_call_operand.vmem [shape: bf16[1568,288], index: 0, kind: input, shape index: {}]
  %s1 = inlined_call_operand.vmem [shape: bf16[288,128], index: 1, kind: input, shape index: {}]
  %s2 = inlined_call_operand.vmem [shape: f32[1,128], index: 2, kind: input, shape index: {}]
  %s3 = inlined_call_operand.vmem [shape: bf16[1568,128], index: 3, kind: output, shape index: {}]
  %s4 = sld [smem:[#allocation0]]
  $region53: #{faster_rcnn_forward.11} parent=0
    _
  %s6 = ssub.s32 1, %s4
  %s7 = scalar_select 0, %s6, %s4
  loop: start=0, step=1, limit=4
  $region2: #{faster_rcnn_forward.11} parent=0 // loop_pre_header
    _
  $region3: #{faster_rcnn_forward.11} parent=0 // loop_header
    %s9 = sphi 0, %s13
    %p10 = scmp.ge.s32.totalorder %s9, 4
    %s16 = sphi 0, %s28
    %s17 = sphi 0, %s24
    %s18 = sphi 0, %s16
    %s19 = sphi 0, %s17
    %s20 = sphi 0, %s18
    %s21 = sphi 0, %s19
    %s33 = sphi 0, %s35
    %s36 = sphi 0, %s33
    %s37 = sphi 0, %s36
    %s53 = sphi 0, %s37
    %s59 = sphi 0, %s61
    %s62 = sphi 0, %s59
    %s63 = sphi 0, %s62
    %s79 = sphi 0, %s63
    %s83 = sphi 0, %s83
    %s85 = sphi 0, %s83
    %s86 = sphi 0, %s85
    %s100 = sphi 0, %s86
    %s106 = sphi 0, %s108
    %s109 = sphi 0, %s106
    %s110 = sphi 0, %s109
    %s126 = sphi 0, %s110
  $region4: #{faster_rcnn_forward.11} parent=0 // loop_header_branch
    %12 = sbr.rel (%p10) target = $region8
  $region5: #{faster_rcnn_forward.11} parent=0 // loop_body
    %s14 = ssub.s32 %s9, 1
    %s15 = ssub.s32 %s9, 2
    %s22 = sadd.s32 1, %s17
    %p23 = scmp.ge.s32.totalorder %s22, 1
    %s24 = scalar_select %p23, 0, %s22
    %s25 = sadd.s32 1, %s16
    %s26 = scalar_select %p23, %s25, %s16
    %p27 = scmp.ge.s32.totalorder %s26, 2
    %s28 = scalar_select %p27, 0, %s26
    %s29 = ssub.s32 %s16, %s28
    %s30 = ssub.s32 %s17, %s24
    %s31 = sor.u32 %s29, %s30
    %p32 = scmp.eq.s32.totalorder %s31, 0
    %s34 = sadd.s32 %s33, 1
    %s35 = scalar_select %p32, %s33, %s34
    %p38 = pneg %p32
    %p39 = scmp.eq.s32.totalorder %s9, 1
    %p40 = por %p38, %p39
    %p41 = scmp.ne.s32.totalorder %s33, %s36
    %p42 = scmp.eq.s32.totalorder %s9, 0
    %p43 = por %p41, %p42
    %p44 = scmp.ne.s32.totalorder %s33, %s36
    %p45 = scmp.eq.s32.totalorder %s14, 1
    %p46 = por %p44, %p45
    %p47 = scmp.ne.s32.totalorder %s36, %s37
    %p48 = scmp.eq.s32.totalorder %s14, 0
    %p49 = por %p47, %p48
    %p50 = scmp.ne.s32.totalorder %s36, %s37
    %p51 = scmp.eq.s32.totalorder %s15, 1
    %p52 = por %p50, %p51
    %p54 = scmp.ne.s32.totalorder %s37, %s53
    %p55 = scmp.eq.s32.totalorder %s15, 0
    %p56 = por %p54, %p55
    %s57 = ssub.s32 %s17, %s24
    %p58 = scmp.eq.s32.totalorder %s57, 0
    %s60 = sadd.s32 %s59, 1
    %s61 = scalar_select %p58, %s59, %s60
    %p64 = pneg %p58
    %p65 = scmp.eq.s32.totalorder %s9, 1
    %p66 = por %p64, %p65
    %p67 = scmp.ne.s32.totalorder %s59, %s62
    %p68 = scmp.eq.s32.totalorder %s9, 0
    %p69 = por %p67, %p68
    %p70 = scmp.ne.s32.totalorder %s59, %s62
    %p71 = scmp.eq.s32.totalorder %s14, 1
    %p72 = por %p70, %p71
    %p73 = scmp.ne.s32.totalorder %s62, %s63
    %p74 = scmp.eq.s32.totalorder %s14, 0
    %p75 = por %p73, %p74
    %p76 = scmp.ne.s32.totalorder %s62, %s63
    %p77 = scmp.eq.s32.totalorder %s15, 1
    %p78 = por %p76, %p77
    %p80 = scmp.ne.s32.totalorder %s63, %s79
    %p81 = scmp.eq.s32.totalorder %s15, 0
    %p82 = por %p80, %p81
    %s84 = sadd.s32 %s83, 1
    %p87 = scmp.eq.s32.totalorder %s9, 1
    %p88 = scmp.ne.s32.totalorder %s83, %s85
    %p89 = scmp.eq.s32.totalorder %s9, 0
    %p90 = por %p88, %p89
    %p91 = scmp.ne.s32.totalorder %s83, %s85
    %p92 = scmp.eq.s32.totalorder %s14, 1
    %p93 = por %p91, %p92
    %p94 = scmp.ne.s32.totalorder %s85, %s86
    %p95 = scmp.eq.s32.totalorder %s14, 0
    %p96 = por %p94, %p95
    %p97 = scmp.ne.s32.totalorder %s85, %s86
    %p98 = scmp.eq.s32.totalorder %s15, 1
    %p99 = por %p97, %p98
    %p101 = scmp.ne.s32.totalorder %s86, %s100
    %p102 = scmp.eq.s32.totalorder %s15, 0
    %p103 = por %p101, %p102
    %s104 = ssub.s32 %s16, %s28
    %p105 = scmp.eq.s32.totalorder %s104, 0
    %s107 = sadd.s32 %s106, 1
    %s108 = scalar_select %p105, %s106, %s107
    %p111 = pneg %p105
    %p112 = scmp.eq.s32.totalorder %s9, 1
    %p113 = por %p111, %p112
    %p114 = scmp.ne.s32.totalorder %s106, %s109
    %p115 = scmp.eq.s32.totalorder %s9, 0
    %p116 = por %p114, %p115
    %p117 = scmp.ne.s32.totalorder %s106, %s109
    %p118 = scmp.eq.s32.totalorder %s14, 1
    %p119 = por %p117, %p118
    %p120 = scmp.ne.s32.totalorder %s109, %s110
    %p121 = scmp.eq.s32.totalorder %s14, 0
    %p122 = por %p120, %p121
    %p123 = scmp.ne.s32.totalorder %s109, %s110
    %p124 = scmp.eq.s32.totalorder %s15, 1
    %p125 = por %p123, %p124
    %p127 = scmp.ne.s32.totalorder %s110, %s126
    %p128 = scmp.eq.s32.totalorder %s15, 0
    %p129 = por %p127, %p128
    %p130 = scmp.le.s32.totalorder 1, %s9
    %p131 = scmp.lt.s32.totalorder %s9, 3
    %p132 = pnand %p130, %p131
    %p133 = pneg %p132
    // Predicated region
    $region9: #{faster_rcnn_forward.11} parent=5 // pred_check
      _
    $region10: #{faster_rcnn_forward.11} parent=5 // pred_check_branch
      %135 = sbr.rel (%p132) target = $region12
    $region11: #{faster_rcnn_forward.11} parent=5 // pred_region
      %s136 = ssub.s32 %s9, 1
      // Predicated region
      $region13: #{faster_rcnn_forward.11} parent=11 // pred_check
        %p137 = pneg %p75
      $region14: #{faster_rcnn_forward.11} parent=11 // pred_check_branch
        %139 = sbr.rel (%p137) target = $region16
      $region15: #{faster_rcnn_forward.11} parent=11 // pred_region
        %s140 = smul.u32 36, %s19
        %p141 = scmp.lt.s32.totalorder %s140, 35
        %s142 = scalar_select %p141, %s140, 35
        %s143 = smul.addr %s142, 4
        %s144 = scalar_lea.vmem %s1, %s143
        %s145 = smul.u32 36, %s19
      $region16: #{faster_rcnn_forward.11} parent=11 // pred_fallthru
        _
      // Predicated region
      $region17: #{faster_rcnn_forward.11} parent=11 // pred_check
        %p146 = pneg %p96
      $region18: #{faster_rcnn_forward.11} parent=11 // pred_check_branch
        %148 = sbr.rel (%p146) target = $region20
      $region19: #{faster_rcnn_forward.11} parent=11 // pred_region
        _
      $region20: #{faster_rcnn_forward.11} parent=11 // pred_fallthru
        _
    $region12: #{faster_rcnn_forward.11} parent=5 // pred_fallthru
      _
    %p149 = scmp.lt.s32.totalorder %s9, 2
    // Predicated region
    $region21: #{faster_rcnn_forward.11} parent=5 // pred_check
      %p150 = pneg %p149
    $region22: #{faster_rcnn_forward.11} parent=5 // pred_check_branch
      %152 = sbr.rel (%p150) target = $region24
    $region23: #{faster_rcnn_forward.11} parent=5 // pred_region
      // Predicated region
      $region25: #{faster_rcnn_forward.11} parent=23 // pred_check
        %p153 = pneg %p43
      $region26: #{faster_rcnn_forward.11} parent=23 // pred_check_branch
        %155 = sbr.rel (%p153) target = $region28
      $region27: #{faster_rcnn_forward.11} parent=23 // pred_region
        %s156 = smul.u32 98, %s16
        %s157 = smul.u32 3, %s17
        %p158 = scmp.lt.s32.totalorder %s156, 195
        %s159 = scalar_select %p158, %s156, 195
        %p160 = scmp.lt.s32.totalorder %s157, 2
        %s161 = scalar_select %p160, %s157, 2
        %s162 = smul.addr %s159, 3
        %s163 = sadd.s32 %s161, %s162
        %s164 = smul.addr %s163, 4
        %s165 = scalar_lea.vmem %s0, %s164
        %s166 = smul.u32 98, %s16
        %s167 = smul.u32 3, %s17
      $region28: #{faster_rcnn_forward.11} parent=23 // pred_fallthru
        _
    $region24: #{faster_rcnn_forward.11} parent=5 // pred_fallthru
      _
    %p168 = scmp.le.s32.totalorder 1, %s9
    %p169 = scmp.lt.s32.totalorder %s9, 3
    %p170 = pnand %p168, %p169
    %p171 = pneg %p170
    // Predicated region
    $region29: #{faster_rcnn_forward.11} parent=5 // pred_check
      _
    $region30: #{faster_rcnn_forward.11} parent=5 // pred_check_branch
      %173 = sbr.rel (%p170) target = $region32
    $region31: #{faster_rcnn_forward.11} parent=5 // pred_region
      %s174 = ssub.s32 %s9, 1
      %s175 = smul.u32 98, %s18
      %s176 = smul.u32 3, %s19
      %p177 = scmp.lt.s32.totalorder %s175, 195
      %s178 = scalar_select %p177, %s175, 195
      %p179 = scmp.lt.s32.totalorder %s176, 2
      %s180 = scalar_select %p179, %s176, 2
      %s181 = smul.addr %s178, 3
      %s182 = sadd.s32 %s180, %s181
      %s183 = smul.addr %s182, 4
      %s184 = scalar_lea.vmem %s0, %s183
      %p185 = pneg %p49
      %p186 = pneg %p46
      %s187 = smul.u32 36, %s19
      %p188 = scmp.lt.s32.totalorder %s187, 35
      %s189 = scalar_select %p188, %s187, 35
      %s190 = smul.addr %s189, 4
      %s191 = scalar_lea.vmem %s1, %s190
      %p192 = pneg %p75
      %p193 = pneg %p72
      %p194 = pneg %p96
      %p195 = pneg %p93
      %p196 = pneg %p122
      %p197 = pneg %p119
      %s198 = smul.u32 98, %s18
      %p199 = scmp.lt.s32.totalorder %s198, 195
      %s200 = scalar_select %p199, %s198, 195
      %s201 = smul.addr %s200, 4
      %s202 = scalar_lea.vmem %s3, %s201
      %s203 = smul.u32 98, %s18
      %s204 = smul.u32 3, %s19
      %p205 = scmp.lt.s32.totalorder %s203, 195
      %s206 = scalar_select %p205, %s203, 195
      %p207 = scmp.lt.s32.totalorder %s204, 2
      %s208 = scalar_select %p207, %s204, 2
      %s209 = smul.addr %s206, 3
      %s210 = sadd.s32 %s208, %s209
      %s211 = smul.addr %s210, 4
      %s212 = scalar_lea.vmem %s0, %s211
      %s213 = smul.u32 98, %s18
      %s214 = smul.u32 3, %s19
      %s215 = smul.u32 36, %s19
      %p216 = scmp.lt.s32.totalorder %s215, 35
      %s217 = scalar_select %p216, %s215, 35
      %s218 = smul.addr %s217, 4
      %s219 = scalar_lea.vmem %s1, %s218
      %s220 = smul.u32 36, %s19
      %s221 = smul.u32 98, %s18
      %p222 = scmp.lt.s32.totalorder %s221, 195
      %s223 = scalar_select %p222, %s221, 195
      %s224 = smul.addr %s223, 4
      %s225 = scalar_lea.vmem %s3, %s224
      %s226 = smul.u32 98, %s18
      %p228 = scmp.eq.s32.totalorder %s19, 0
      // Predicated region
      $region33: #{faster_rcnn_forward.11} parent=31 // pred_check
        %p229 = pneg %p228
      $region34: #{faster_rcnn_forward.11} parent=31 // pred_check_branch
        %231 = sbr.rel (%p229) target = $region36
      $region35: #{faster_rcnn_forward.11} parent=31 // pred_region
        %232 = vst [vmem:[#allocation2] sm:$0xff] 0.0
        %233 = vst [vmem:[#allocation2 + $0x8] sm:$0xff] 0.0
        %234 = vst [vmem:[#allocation2 + $0x10] sm:$0xff] 0.0
        %235 = vst [vmem:[#allocation2 + $0x18] sm:$0xff] 0.0
        %236 = vst [vmem:[#allocation2 + $0x20] sm:$0xff] 0.0
        %237 = vst [vmem:[#allocation2 + $0x28] sm:$0xff] 0.0
        %238 = vst [vmem:[#allocation2 + $0x30] sm:$0xff] 0.0
        %239 = vst [vmem:[#allocation2 + $0x38] sm:$0xff] 0.0
        %240 = vst [vmem:[#allocation2 + $0x40] sm:$0xff] 0.0
        %241 = vst [vmem:[#allocation2 + $0x48] sm:$0xff] 0.0
        %242 = vst [vmem:[#allocation2 + $0x50] sm:$0xff] 0.0
        %243 = vst [vmem:[#allocation2 + $0x58] sm:$0xff] 0.0
        %244 = vst [vmem:[#allocation2 + $0x60] sm:$0xff] 0.0
        %245 = vst [vmem:[#allocation2 + $0x68] sm:$0xff] 0.0
        %246 = vst [vmem:[#allocation2 + $0x70] sm:$0xff] 0.0
        %247 = vst [vmem:[#allocation2 + $0x78] sm:$0xff] 0.0
        %248 = vst [vmem:[#allocation2 + $0x80] sm:$0xff] 0.0
        %249 = vst [vmem:[#allocation2 + $0x88] sm:$0xff] 0.0
        %250 = vst [vmem:[#allocation2 + $0x90] sm:$0xff] 0.0
        %251 = vst [vmem:[#allocation2 + $0x98] sm:$0xff] 0.0
        %252 = vst [vmem:[#allocation2 + $0xa0] sm:$0xff] 0.0
        %253 = vst [vmem:[#allocation2 + $0xa8] sm:$0xff] 0.0
        %254 = vst [vmem:[#allocation2 + $0xb0] sm:$0xff] 0.0
        %255 = vst [vmem:[#allocation2 + $0xb8] sm:$0xff] 0.0
        %256 = vst [vmem:[#allocation2 + $0xc0] sm:$0xff] 0.0
        %257 = vst [vmem:[#allocation2 + $0xc8] sm:$0xff] 0.0
        %258 = vst [vmem:[#allocation2 + $0xd0] sm:$0xff] 0.0
        %259 = vst [vmem:[#allocation2 + $0xd8] sm:$0xff] 0.0
        %260 = vst [vmem:[#allocation2 + $0xe0] sm:$0xff] 0.0
        %261 = vst [vmem:[#allocation2 + $0xe8] sm:$0xff] 0.0
        %262 = vst [vmem:[#allocation2 + $0xf0] sm:$0xff] 0.0
        %263 = vst [vmem:[#allocation2 + $0xf8] sm:$0xff] 0.0
        %264 = vst [vmem:[#allocation2 + $0x100] sm:$0xff] 0.0
        %265 = vst [vmem:[#allocation2 + $0x108] sm:$0xff] 0.0
        %266 = vst [vmem:[#allocation2 + $0x110] sm:$0xff] 0.0
        %267 = vst [vmem:[#allocation2 + $0x118] sm:$0xff] 0.0
        %268 = vst [vmem:[#allocation2 + $0x120] sm:$0xff] 0.0
        %269 = vst [vmem:[#allocation2 + $0x128] sm:$0xff] 0.0
        %270 = vst [vmem:[#allocation2 + $0x130] sm:$0xff] 0.0
        %271 = vst [vmem:[#allocation2 + $0x138] sm:$0xff] 0.0
        %272 = vst [vmem:[#allocation2 + $0x140] sm:$0xff] 0.0
        %273 = vst [vmem:[#allocation2 + $0x148] sm:$0xff] 0.0
        %274 = vst [vmem:[#allocation2 + $0x150] sm:$0xff] 0.0
        %275 = vst [vmem:[#allocation2 + $0x158] sm:$0xff] 0.0
        %276 = vst [vmem:[#allocation2 + $0x160] sm:$0xff] 0.0
        %277 = vst [vmem:[#allocation2 + $0x168] sm:$0xff] 0.0
        %278 = vst [vmem:[#allocation2 + $0x170] sm:$0xff] 0.0
        %279 = vst [vmem:[#allocation2 + $0x178] sm:$0xff] 0.0
        %280 = vst [vmem:[#allocation2 + $0x180] sm:$0xff] 0.0
        %281 = vst [vmem:[#allocation2 + $0x188] sm:$0xff] 0.0
        %282 = vst [vmem:[#allocation2 + $0x190] sm:$0xff] 0.0
        %283 = vst [vmem:[#allocation2 + $0x198] sm:$0xff] 0.0
        %284 = vst [vmem:[#allocation2 + $0x1a0] sm:$0xff] 0.0
        %285 = vst [vmem:[#allocation2 + $0x1a8] sm:$0xff] 0.0
        %286 = vst [vmem:[#allocation2 + $0x1b0] sm:$0xff] 0.0
        %287 = vst [vmem:[#allocation2 + $0x1b8] sm:$0xff] 0.0
        %288 = vst [vmem:[#allocation2 + $0x1c0] sm:$0xff] 0.0
        %289 = vst [vmem:[#allocation2 + $0x1c8] sm:$0xff] 0.0
        %290 = vst [vmem:[#allocation2 + $0x1d0] sm:$0xff] 0.0
        %291 = vst [vmem:[#allocation2 + $0x1d8] sm:$0xff] 0.0
        %292 = vst [vmem:[#allocation2 + $0x1e0] sm:$0xff] 0.0
        %293 = vst [vmem:[#allocation2 + $0x1e8] sm:$0xff] 0.0
        %294 = vst [vmem:[#allocation2 + $0x1f0] sm:$0xff] 0.0
        %295 = vst [vmem:[#allocation2 + $0x1f8] sm:$0xff] 0.0
        %296 = vst [vmem:[#allocation2 + $0x200] sm:$0xff] 0.0
        %297 = vst [vmem:[#allocation2 + $0x208] sm:$0xff] 0.0
        %298 = vst [vmem:[#allocation2 + $0x210] sm:$0xff] 0.0
        %299 = vst [vmem:[#allocation2 + $0x218] sm:$0xff] 0.0
        %300 = vst [vmem:[#allocation2 + $0x220] sm:$0xff] 0.0
        %301 = vst [vmem:[#allocation2 + $0x228] sm:$0xff] 0.0
        %302 = vst [vmem:[#allocation2 + $0x230] sm:$0xff] 0.0
        %303 = vst [vmem:[#allocation2 + $0x238] sm:$0xff] 0.0
        %304 = vst [vmem:[#allocation2 + $0x240] sm:$0xff] 0.0
        %305 = vst [vmem:[#allocation2 + $0x248] sm:$0xff] 0.0
        %306 = vst [vmem:[#allocation2 + $0x250] sm:$0xff] 0.0
        %307 = vst [vmem:[#allocation2 + $0x258] sm:$0xff] 0.0
        %308 = vst [vmem:[#allocation2 + $0x260] sm:$0xff] 0.0
        %309 = vst [vmem:[#allocation2 + $0x268] sm:$0xff] 0.0
        %310 = vst [vmem:[#allocation2 + $0x270] sm:$0xff] 0.0
        %311 = vst [vmem:[#allocation2 + $0x278] sm:$0xff] 0.0
        %312 = vst [vmem:[#allocation2 + $0x280] sm:$0xff] 0.0
        %313 = vst [vmem:[#allocation2 + $0x288] sm:$0xff] 0.0
        %314 = vst [vmem:[#allocation2 + $0x290] sm:$0xff] 0.0
        %315 = vst [vmem:[#allocation2 + $0x298] sm:$0xff] 0.0
        %316 = vst [vmem:[#allocation2 + $0x2a0] sm:$0xff] 0.0
        %317 = vst [vmem:[#allocation2 + $0x2a8] sm:$0xff] 0.0
        %318 = vst [vmem:[#allocation2 + $0x2b0] sm:$0xff] 0.0
        %319 = vst [vmem:[#allocation2 + $0x2b8] sm:$0xff] 0.0
        %320 = vst [vmem:[#allocation2 + $0x2c0] sm:$0xff] 0.0
        %321 = vst [vmem:[#allocation2 + $0x2c8] sm:$0xff] 0.0
        %322 = vst [vmem:[#allocation2 + $0x2d0] sm:$0xff] 0.0
        %323 = vst [vmem:[#allocation2 + $0x2d8] sm:$0xff] 0.0
        %324 = vst [vmem:[#allocation2 + $0x2e0] sm:$0xff] 0.0
        %325 = vst [vmem:[#allocation2 + $0x2e8] sm:$0xff] 0.0
        %326 = vst [vmem:[#allocation2 + $0x2f0] sm:$0xff] 0.0
        %327 = vst [vmem:[#allocation2 + $0x2f8] sm:$0xff] 0.0
        %328 = vst [vmem:[#allocation2 + $0x300] sm:$0xff] 0.0
        %329 = vst [vmem:[#allocation2 + $0x308] sm:$0xff] 0.0
      $region36: #{faster_rcnn_forward.11} parent=31 // pred_fallthru
        _
      %v330 = vld [vmem:[#allocation2] sm:$0xff]
      %v331 = vld [vmem:[#allocation2 + $0x8] sm:$0xff]
      %v332 = vld [vmem:[#allocation2 + $0x10] sm:$0xff]
      %v333 = vld [vmem:[#allocation2 + $0x18] sm:$0xff]
      %v334 = vld [vmem:[#allocation2 + $0x20] sm:$0xff]
      %v335 = vld [vmem:[#allocation2 + $0x28] sm:$0xff]
      %v336 = vld [vmem:[#allocation2 + $0x30] sm:$0xff]
      %v337 = vld [vmem:[#allocation2 + $0x38] sm:$0xff]
      %v338 = vld [vmem:[#allocation2 + $0x40] sm:$0xff]
      %v339 = vld [vmem:[#allocation2 + $0x48] sm:$0xff]
      %v340 = vld [vmem:[#allocation2 + $0x50] sm:$0xff]
      %v341 = vld [vmem:[#allocation2 + $0x58] sm:$0xff]
      %v342 = vld [vmem:[#allocation2 + $0x60] sm:$0xff]
      %v343 = vld [vmem:[#allocation2 + $0x68] sm:$0xff]
      %v344 = vld [vmem:[#allocation2 + $0x70] sm:$0xff]
      %v345 = vld [vmem:[#allocation2 + $0x78] sm:$0xff]
      %v346 = vld [vmem:[#allocation2 + $0x80] sm:$0xff]
      %v347 = vld [vmem:[#allocation2 + $0x88] sm:$0xff]
      %v348 = vld [vmem:[#allocation2 + $0x90] sm:$0xff]
      %v349 = vld [vmem:[#allocation2 + $0x98] sm:$0xff]
      %v350 = vld [vmem:[#allocation2 + $0xa0] sm:$0xff]
      %v351 = vld [vmem:[#allocation2 + $0xa8] sm:$0xff]
      %v352 = vld [vmem:[#allocation2 + $0xb0] sm:$0xff]
      %v353 = vld [vmem:[#allocation2 + $0xb8] sm:$0xff]
      %v354 = vld [vmem:[#allocation2 + $0xc0] sm:$0xff]
      %v355 = vld [vmem:[#allocation2 + $0xc8] sm:$0xff]
      %v356 = vld [vmem:[#allocation2 + $0xd0] sm:$0xff]
      %v357 = vld [vmem:[#allocation2 + $0xd8] sm:$0xff]
      %v358 = vld [vmem:[#allocation2 + $0xe0] sm:$0xff]
      %v359 = vld [vmem:[#allocation2 + $0xe8] sm:$0xff]
      %v360 = vld [vmem:[#allocation2 + $0xf0] sm:$0xff]
      %v361 = vld [vmem:[#allocation2 + $0xf8] sm:$0xff]
      %v362 = vld [vmem:[#allocation2 + $0x100] sm:$0xff]
      %v363 = vld [vmem:[#allocation2 + $0x108] sm:$0xff]
      %v364 = vld [vmem:[#allocation2 + $0x110] sm:$0xff]
      %v365 = vld [vmem:[#allocation2 + $0x118] sm:$0xff]
      %v366 = vld [vmem:[#allocation2 + $0x120] sm:$0xff]
      %v367 = vld [vmem:[#allocation2 + $0x128] sm:$0xff]
      %v368 = vld [vmem:[#allocation2 + $0x130] sm:$0xff]
      %v369 = vld [vmem:[#allocation2 + $0x138] sm:$0xff]
      %v370 = vld [vmem:[#allocation2 + $0x140] sm:$0xff]
      %v371 = vld [vmem:[#allocation2 + $0x148] sm:$0xff]
      %v372 = vld [vmem:[#allocation2 + $0x150] sm:$0xff]
      %v373 = vld [vmem:[#allocation2 + $0x158] sm:$0xff]
      %v374 = vld [vmem:[#allocation2 + $0x160] sm:$0xff]
      %v375 = vld [vmem:[#allocation2 + $0x168] sm:$0xff]
      %v376 = vld [vmem:[#allocation2 + $0x170] sm:$0xff]
      %v377 = vld [vmem:[#allocation2 + $0x178] sm:$0xff]
      %v378 = vld [vmem:[#allocation2 + $0x180] sm:$0xff]
      %v379 = vld [vmem:[#allocation2 + $0x188] sm:$0xff]
      %v380 = vld [vmem:[#allocation2 + $0x190] sm:$0xff]
      %v381 = vld [vmem:[#allocation2 + $0x198] sm:$0xff]
      %v382 = vld [vmem:[#allocation2 + $0x1a0] sm:$0xff]
      %v383 = vld [vmem:[#allocation2 + $0x1a8] sm:$0xff]
      %v384 = vld [vmem:[#allocation2 + $0x1b0] sm:$0xff]
      %v385 = vld [vmem:[#allocation2 + $0x1b8] sm:$0xff]
      %v386 = vld [vmem:[#allocation2 + $0x1c0] sm:$0xff]
      %v387 = vld [vmem:[#allocation2 + $0x1c8] sm:$0xff]
      %v388 = vld [vmem:[#allocation2 + $0x1d0] sm:$0xff]
      %v389 = vld [vmem:[#allocation2 + $0x1d8] sm:$0xff]
      %v390 = vld [vmem:[#allocation2 + $0x1e0] sm:$0xff]
      %v391 = vld [vmem:[#allocation2 + $0x1e8] sm:$0xff]
      %v392 = vld [vmem:[#allocation2 + $0x1f0] sm:$0xff]
      %v393 = vld [vmem:[#allocation2 + $0x1f8] sm:$0xff]
      %v394 = vld [vmem:[#allocation2 + $0x200] sm:$0xff]
      %v395 = vld [vmem:[#allocation2 + $0x208] sm:$0xff]
      %v396 = vld [vmem:[#allocation2 + $0x210] sm:$0xff]
      %v397 = vld [vmem:[#allocation2 + $0x218] sm:$0xff]
      %v398 = vld [vmem:[#allocation2 + $0x220] sm:$0xff]
      %v399 = vld [vmem:[#allocation2 + $0x228] sm:$0xff]
      %v400 = vld [vmem:[#allocation2 + $0x230] sm:$0xff]
      %v401 = vld [vmem:[#allocation2 + $0x238] sm:$0xff]
      %v402 = vld [vmem:[#allocation2 + $0x240] sm:$0xff]
      %v403 = vld [vmem:[#allocation2 + $0x248] sm:$0xff]
      %v404 = vld [vmem:[#allocation2 + $0x250] sm:$0xff]
      %v405 = vld [vmem:[#allocation2 + $0x258] sm:$0xff]
      %v406 = vld [vmem:[#allocation2 + $0x260] sm:$0xff]
      %v407 = vld [vmem:[#allocation2 + $0x268] sm:$0xff]
      %v408 = vld [vmem:[#allocation2 + $0x270] sm:$0xff]
      %v409 = vld [vmem:[#allocation2 + $0x278] sm:$0xff]
      %v410 = vld [vmem:[#allocation2 + $0x280] sm:$0xff]
      %v411 = vld [vmem:[#allocation2 + $0x288] sm:$0xff]
      %v412 = vld [vmem:[#allocation2 + $0x290] sm:$0xff]
      %v413 = vld [vmem:[#allocation2 + $0x298] sm:$0xff]
      %v414 = vld [vmem:[#allocation2 + $0x2a0] sm:$0xff]
      %v415 = vld [vmem:[#allocation2 + $0x2a8] sm:$0xff]
      %v416 = vld [vmem:[#allocation2 + $0x2b0] sm:$0xff]
      %v417 = vld [vmem:[#allocation2 + $0x2b8] sm:$0xff]
      %v418 = vld [vmem:[#allocation2 + $0x2c0] sm:$0xff]
      %v419 = vld [vmem:[#allocation2 + $0x2c8] sm:$0xff]
      %v420 = vld [vmem:[#allocation2 + $0x2d0] sm:$0xff]
      %v421 = vld [vmem:[#allocation2 + $0x2d8] sm:$0xff]
      %v422 = vld [vmem:[#allocation2 + $0x2e0] sm:$0xff]
      %v423 = vld [vmem:[#allocation2 + $0x2e8] sm:$0xff]
      %v424 = vld [vmem:[#allocation2 + $0x2f0] sm:$0xff]
      %v425 = vld [vmem:[#allocation2 + $0x2f8] sm:$0xff]
      %v426 = vld [vmem:[#allocation2 + $0x300] sm:$0xff]
      %v427 = vld [vmem:[#allocation2 + $0x308] sm:$0xff]
      %v428 = vld [vmem:[%s212] sm:$0xff]
      %v429 = vld [vmem:[%s212 + $0x8] sm:$0xf]
      %v430 = vld [vmem:[%s212 + $0xc] sm:$0xff]
      %v431 = vld [vmem:[%s212 + $0x14] sm:$0xf]
      %v432 = vld [vmem:[%s212 + $0x18] sm:$0xff]
      %v433 = vld [vmem:[%s212 + $0x20] sm:$0xf]
      %v434 = vld [vmem:[%s212 + $0x24] sm:$0xff]
      %v435 = vld [vmem:[%s212 + $0x2c] sm:$0xf]
      %v436 = vld [vmem:[%s212 + $0x30] sm:$0xff]
      %v437 = vld [vmem:[%s212 + $0x38] sm:$0xf]
      %v438 = vld [vmem:[%s212 + $0x3c] sm:$0xff]
      %v439 = vld [vmem:[%s212 + $0x44] sm:$0xf]
      %v440 = vld [vmem:[%s212 + $0x48] sm:$0xff]
      %v441 = vld [vmem:[%s212 + $0x50] sm:$0xf]
      %v442 = vld [vmem:[%s212 + $0x54] sm:$0xff]
      %v443 = vld [vmem:[%s212 + $0x5c] sm:$0xf]
      %v444 = vld [vmem:[%s212 + $0x60] sm:$0xff]
      %v445 = vld [vmem:[%s212 + $0x68] sm:$0xf]
      %v446 = vld [vmem:[%s212 + $0x6c] sm:$0xff]
      %v447 = vld [vmem:[%s212 + $0x74] sm:$0xf]
      %v448 = vld [vmem:[%s212 + $0x78] sm:$0xff]
      %v449 = vld [vmem:[%s212 + $0x80] sm:$0xf]
      %v450 = vld [vmem:[%s212 + $0x84] sm:$0xff]
      %v451 = vld [vmem:[%s212 + $0x8c] sm:$0xf]
      %v452 = vld [vmem:[%s212 + $0x90] sm:$0xff]
      %v453 = vld [vmem:[%s212 + $0x98] sm:$0xf]
      %v454 = vld [vmem:[%s212 + $0x9c] sm:$0xff]
      %v455 = vld [vmem:[%s212 + $0xa4] sm:$0xf]
      %v456 = vld [vmem:[%s212 + $0xa8] sm:$0xff]
      %v457 = vld [vmem:[%s212 + $0xb0] sm:$0xf]
      %v458 = vld [vmem:[%s212 + $0xb4] sm:$0xff]
      %v459 = vld [vmem:[%s212 + $0xbc] sm:$0xf]
      %v460 = vld [vmem:[%s212 + $0xc0] sm:$0xff]
      %v461 = vld [vmem:[%s212 + $0xc8] sm:$0xf]
      %v462 = vld [vmem:[%s212 + $0xcc] sm:$0xff]
      %v463 = vld [vmem:[%s212 + $0xd4] sm:$0xf]
      %v464 = vld [vmem:[%s212 + $0xd8] sm:$0xff]
      %v465 = vld [vmem:[%s212 + $0xe0] sm:$0xf]
      %v466 = vld [vmem:[%s212 + $0xe4] sm:$0xff]
      %v467 = vld [vmem:[%s212 + $0xec] sm:$0xf]
      %v468 = vld [vmem:[%s212 + $0xf0] sm:$0xff]
      %v469 = vld [vmem:[%s212 + $0xf8] sm:$0xf]
      %v470 = vld [vmem:[%s212 + $0xfc] sm:$0xff]
      %v471 = vld [vmem:[%s212 + $0x104] sm:$0xf]
      %v472 = vld [vmem:[%s212 + $0x108] sm:$0xff]
      %v473 = vld [vmem:[%s212 + $0x110] sm:$0xf]
      %v474 = vld [vmem:[%s212 + $0x114] sm:$0xff]
      %v475 = vld [vmem:[%s212 + $0x11c] sm:$0xf]
      %v476 = vld [vmem:[%s212 + $0x120] sm:$0xff]
      %v477 = vld [vmem:[%s212 + $0x128] sm:$0xf]
      %v478 = vld [vmem:[%s212 + $0x12c] sm:$0xff]
      %v479 = vld [vmem:[%s212 + $0x134] sm:$0xf]
      %v480 = vld [vmem:[%s212 + $0x138] sm:$0xff]
      %v481 = vld [vmem:[%s212 + $0x140] sm:$0xf]
      %v482 = vld [vmem:[%s212 + $0x144] sm:$0xff]
      %v483 = vld [vmem:[%s212 + $0x14c] sm:$0xf]
      %v484 = vld [vmem:[%s212 + $0x150] sm:$0xff]
      %v485 = vld [vmem:[%s212 + $0x158] sm:$0xf]
      %v486 = vld [vmem:[%s212 + $0x15c] sm:$0xff]
      %v487 = vld [vmem:[%s212 + $0x164] sm:$0xf]
      %v488 = vld [vmem:[%s212 + $0x168] sm:$0xff]
      %v489 = vld [vmem:[%s212 + $0x170] sm:$0xf]
      %v490 = vld [vmem:[%s212 + $0x174] sm:$0xff]
      %v491 = vld [vmem:[%s212 + $0x17c] sm:$0xf]
      %v492 = vld [vmem:[%s212 + $0x180] sm:$0xff]
      %v493 = vld [vmem:[%s212 + $0x188] sm:$0xf]
      %v494 = vld [vmem:[%s212 + $0x18c] sm:$0xff]
      %v495 = vld [vmem:[%s212 + $0x194] sm:$0xf]
      %v496 = vld [vmem:[%s212 + $0x198] sm:$0xff]
      %v497 = vld [vmem:[%s212 + $0x1a0] sm:$0xf]
      %v498 = vld [vmem:[%s212 + $0x1a4] sm:$0xff]
      %v499 = vld [vmem:[%s212 + $0x1ac] sm:$0xf]
      %v500 = vld [vmem:[%s212 + $0x1b0] sm:$0xff]
      %v501 = vld [vmem:[%s212 + $0x1b8] sm:$0xf]
      %v502 = vld [vmem:[%s212 + $0x1bc] sm:$0xff]
      %v503 = vld [vmem:[%s212 + $0x1c4] sm:$0xf]
      %v504 = vld [vmem:[%s212 + $0x1c8] sm:$0xff]
      %v505 = vld [vmem:[%s212 + $0x1d0] sm:$0xf]
      %v506 = vld [vmem:[%s212 + $0x1d4] sm:$0xff]
      %v507 = vld [vmem:[%s212 + $0x1dc] sm:$0xf]
      %v508 = vld [vmem:[%s212 + $0x1e0] sm:$0xff]
      %v509 = vld [vmem:[%s212 + $0x1e8] sm:$0xf]
      %v510 = vld [vmem:[%s212 + $0x1ec] sm:$0xff]
      %v511 = vld [vmem:[%s212 + $0x1f4] sm:$0xf]
      %v512 = vld [vmem:[%s212 + $0x1f8] sm:$0xff]
      %v513 = vld [vmem:[%s212 + $0x200] sm:$0xf]
      %v514 = vld [vmem:[%s212 + $0x204] sm:$0xff]
      %v515 = vld [vmem:[%s212 + $0x20c] sm:$0xf]
      %v516 = vld [vmem:[%s212 + $0x210] sm:$0xff]
      %v517 = vld [vmem:[%s212 + $0x218] sm:$0xf]
      %v518 = vld [vmem:[%s212 + $0x21c] sm:$0xff]
      %v519 = vld [vmem:[%s212 + $0x224] sm:$0xf]
      %v520 = vld [vmem:[%s212 + $0x228] sm:$0xff]
      %v521 = vld [vmem:[%s212 + $0x230] sm:$0xf]
      %v522 = vld [vmem:[%s212 + $0x234] sm:$0xff]
      %v523 = vld [vmem:[%s212 + $0x23c] sm:$0xf]
      %v524 = vld [vmem:[%s212 + $0x240] sm:$0xff]
      %v525 = vld [vmem:[%s212 + $0x248] sm:$0xf]
      %v526 = vld [vmem:[%s212 + $0x24c] sm:$0xff]
      %v527 = vld [vmem:[%s212 + $0x254] sm:$0xf]
      %v528 = vld [vmem:[%s212 + $0x258] sm:$0xff]
      %v529 = vld [vmem:[%s212 + $0x260] sm:$0xf]
      %v530 = vld [vmem:[%s212 + $0x264] sm:$0xff]
      %v531 = vld [vmem:[%s212 + $0x26c] sm:$0xf]
      %v532 = vld [vmem:[%s212 + $0x270] sm:$0xff]
      %v533 = vld [vmem:[%s212 + $0x278] sm:$0xf]
      %v534 = vld [vmem:[%s212 + $0x27c] sm:$0xff]
      %v535 = vld [vmem:[%s212 + $0x284] sm:$0xf]
      %v536 = vld [vmem:[%s212 + $0x288] sm:$0xff]
      %v537 = vld [vmem:[%s212 + $0x290] sm:$0xf]
      %v538 = vld [vmem:[%s212 + $0x294] sm:$0xff]
      %v539 = vld [vmem:[%s212 + $0x29c] sm:$0xf]
      %v540 = vld [vmem:[%s212 + $0x2a0] sm:$0xff]
      %v541 = vld [vmem:[%s212 + $0x2a8] sm:$0xf]
      %v542 = vld [vmem:[%s212 + $0x2ac] sm:$0xff]
      %v543 = vld [vmem:[%s212 + $0x2b4] sm:$0xf]
      %v544 = vld [vmem:[%s212 + $0x2b8] sm:$0xff]
      %v545 = vld [vmem:[%s212 + $0x2c0] sm:$0xf]
      %v546 = vld [vmem:[%s212 + $0x2c4] sm:$0xff]
      %v547 = vld [vmem:[%s212 + $0x2cc] sm:$0xf]
      %v548 = vld [vmem:[%s212 + $0x2d0] sm:$0xff]
      %v549 = vld [vmem:[%s212 + $0x2d8] sm:$0xf]
      %v550 = vld [vmem:[%s212 + $0x2dc] sm:$0xff]
      %v551 = vld [vmem:[%s212 + $0x2e4] sm:$0xf]
      %v552 = vld [vmem:[%s212 + $0x2e8] sm:$0xff]
      %v553 = vld [vmem:[%s212 + $0x2f0] sm:$0xf]
      %v554 = vld [vmem:[%s212 + $0x2f4] sm:$0xff]
      %v555 = vld [vmem:[%s212 + $0x2fc] sm:$0xf]
      %v556 = vld [vmem:[%s212 + $0x300] sm:$0xff]
      %v557 = vld [vmem:[%s212 + $0x308] sm:$0xf]
      %v558 = vld [vmem:[%s212 + $0x30c] sm:$0xff]
      %v559 = vld [vmem:[%s212 + $0x314] sm:$0xf]
      %v560 = vld [vmem:[%s212 + $0x318] sm:$0xff]
      %v561 = vld [vmem:[%s212 + $0x320] sm:$0xf]
      %v562 = vld [vmem:[%s212 + $0x324] sm:$0xff]
      %v563 = vld [vmem:[%s212 + $0x32c] sm:$0xf]
      %v564 = vld [vmem:[%s212 + $0x330] sm:$0xff]
      %v565 = vld [vmem:[%s212 + $0x338] sm:$0xf]
      %v566 = vld [vmem:[%s212 + $0x33c] sm:$0xff]
      %v567 = vld [vmem:[%s212 + $0x344] sm:$0xf]
      %v568 = vld [vmem:[%s212 + $0x348] sm:$0xff]
      %v569 = vld [vmem:[%s212 + $0x350] sm:$0xf]
      %v570 = vld [vmem:[%s212 + $0x354] sm:$0xff]
      %v571 = vld [vmem:[%s212 + $0x35c] sm:$0xf]
      %v572 = vld [vmem:[%s212 + $0x360] sm:$0xff]
      %v573 = vld [vmem:[%s212 + $0x368] sm:$0xf]
      %v574 = vld [vmem:[%s212 + $0x36c] sm:$0xff]
      %v575 = vld [vmem:[%s212 + $0x374] sm:$0xf]
      %v576 = vld [vmem:[%s212 + $0x378] sm:$0xff]
      %v577 = vld [vmem:[%s212 + $0x380] sm:$0xf]
      %v578 = vld [vmem:[%s212 + $0x384] sm:$0xff]
      %v579 = vld [vmem:[%s212 + $0x38c] sm:$0xf]
      %v580 = vld [vmem:[%s212 + $0x390] sm:$0xff]
      %v581 = vld [vmem:[%s212 + $0x398] sm:$0xf]
      %v582 = vld [vmem:[%s212 + $0x39c] sm:$0xff]
      %v583 = vld [vmem:[%s212 + $0x3a4] sm:$0xf]
      %v584 = vld [vmem:[%s212 + $0x3a8] sm:$0xff]
      %v585 = vld [vmem:[%s212 + $0x3b0] sm:$0xf]
      %v586 = vld [vmem:[%s212 + $0x3b4] sm:$0xff]
      %v587 = vld [vmem:[%s212 + $0x3bc] sm:$0xf]
      %v588 = vld [vmem:[%s212 + $0x3c0] sm:$0xff]
      %v589 = vld [vmem:[%s212 + $0x3c8] sm:$0xf]
      %v590 = vld [vmem:[%s212 + $0x3cc] sm:$0xff]
      %v591 = vld [vmem:[%s212 + $0x3d4] sm:$0xf]
      %v592 = vld [vmem:[%s212 + $0x3d8] sm:$0xff]
      %v593 = vld [vmem:[%s212 + $0x3e0] sm:$0xf]
      %v594 = vld [vmem:[%s212 + $0x3e4] sm:$0xff]
      %v595 = vld [vmem:[%s212 + $0x3ec] sm:$0xf]
      %v596 = vld [vmem:[%s212 + $0x3f0] sm:$0xff]
      %v597 = vld [vmem:[%s212 + $0x3f8] sm:$0xf]
      %v598 = vld [vmem:[%s212 + $0x3fc] sm:$0xff]
      %v599 = vld [vmem:[%s212 + $0x404] sm:$0xf]
      %v600 = vld [vmem:[%s212 + $0x408] sm:$0xff]
      %v601 = vld [vmem:[%s212 + $0x410] sm:$0xf]
      %v602 = vld [vmem:[%s212 + $0x414] sm:$0xff]
      %v603 = vld [vmem:[%s212 + $0x41c] sm:$0xf]
      %v604 = vld [vmem:[%s212 + $0x420] sm:$0xff]
      %v605 = vld [vmem:[%s212 + $0x428] sm:$0xf]
      %v606 = vld [vmem:[%s212 + $0x42c] sm:$0xff]
      %v607 = vld [vmem:[%s212 + $0x434] sm:$0xf]
      %v608 = vld [vmem:[%s212 + $0x438] sm:$0xff]
      %v609 = vld [vmem:[%s212 + $0x440] sm:$0xf]
      %v610 = vld [vmem:[%s212 + $0x444] sm:$0xff]
      %v611 = vld [vmem:[%s212 + $0x44c] sm:$0xf]
      %v612 = vld [vmem:[%s212 + $0x450] sm:$0xff]
      %v613 = vld [vmem:[%s212 + $0x458] sm:$0xf]
      %v614 = vld [vmem:[%s212 + $0x45c] sm:$0xff]
      %v615 = vld [vmem:[%s212 + $0x464] sm:$0xf]
      %v616 = vld [vmem:[%s212 + $0x468] sm:$0xff]
      %v617 = vld [vmem:[%s212 + $0x470] sm:$0xf]
      %v618 = vld [vmem:[%s212 + $0x474] sm:$0xff]
      %v619 = vld [vmem:[%s212 + $0x47c] sm:$0xf]
      %v620 = vld [vmem:[%s212 + $0x480] sm:$0xff]
      %v621 = vld [vmem:[%s212 + $0x488] sm:$0xf]
      %v622 = vld [vmem:[%s212 + $0x48c] sm:$0xff]
      %v623 = vld [vmem:[%s212 + $0x494] sm:$0xf]
      %v624 = vld [vmem:[%s219] sm:$0xf]
      %v625 = vld [vmem:[%s219 + $0x4] sm:$0xf]
      %v626 = vld [vmem:[%s219 + $0x8] sm:$0xf]
      %v627 = vld [vmem:[%s219 + $0xc] sm:$0xf]
      %v628 = vld [vmem:[%s219 + $0x10] sm:$0xf]
      %v629 = vld [vmem:[%s219 + $0x14] sm:$0xf]
      %v630 = vld [vmem:[%s219 + $0x18] sm:$0xf]
      %v631 = vld [vmem:[%s219 + $0x1c] sm:$0xf]
      %v632 = vld [vmem:[%s219 + $0x20] sm:$0xf]
      %v633 = vld [vmem:[%s219 + $0x24] sm:$0xf]
      %v634 = vld [vmem:[%s219 + $0x28] sm:$0xf]
      %v635 = vld [vmem:[%s219 + $0x2c] sm:$0xf]
      %v636 = vld [vmem:[%s219 + $0x30] sm:$0xf]
      %v637 = vld [vmem:[%s219 + $0x34] sm:$0xf]
      %v638 = vld [vmem:[%s219 + $0x38] sm:$0xf]
      %v639 = vld [vmem:[%s219 + $0x3c] sm:$0xf]
      %v640 = vld [vmem:[%s219 + $0x40] sm:$0xf]
      %v641 = vld [vmem:[%s219 + $0x44] sm:$0xf]
      %v642 = vld [vmem:[%s219 + $0x48] sm:$0xf]
      %v643 = vld [vmem:[%s219 + $0x4c] sm:$0xf]
      %v644 = vld [vmem:[%s219 + $0x50] sm:$0xf]
      %v645 = vld [vmem:[%s219 + $0x54] sm:$0xf]
      %v646 = vld [vmem:[%s219 + $0x58] sm:$0xf]
      %v647 = vld [vmem:[%s219 + $0x5c] sm:$0xf]
      %v648 = vld [vmem:[%s219 + $0x60] sm:$0xf]
      %v649 = vld [vmem:[%s219 + $0x64] sm:$0xf]
      %v650 = vld [vmem:[%s219 + $0x68] sm:$0xf]
      %v651 = vld [vmem:[%s219 + $0x6c] sm:$0xf]
      %v652 = vld [vmem:[%s219 + $0x70] sm:$0xf]
      %v653 = vld [vmem:[%s219 + $0x74] sm:$0xf]
      %v654 = vld [vmem:[%s219 + $0x78] sm:$0xf]
      %v655 = vld [vmem:[%s219 + $0x7c] sm:$0xf]
      %v656 = vld [vmem:[%s219 + $0x80] sm:$0xf]
      %v657 = vld [vmem:[%s219 + $0x84] sm:$0xf]
      %v658 = vld [vmem:[%s219 + $0x88] sm:$0xf]
      %v659 = vld [vmem:[%s219 + $0x8c] sm:$0xf]
      %v856 = vunpack.c.l.b16 %v428
      %v857 = vunpack.c.h.b16 %v428
      %v858 = vunpack.c.l.b16 %v429
      %v859 = vunpack.c.l.b16 %v430
      %v860 = vunpack.c.h.b16 %v430
      %v861 = vunpack.c.l.b16 %v431
      %v862 = vunpack.c.l.b16 %v432
      %v863 = vunpack.c.h.b16 %v432
      %v864 = vunpack.c.l.b16 %v433
      %v865 = vunpack.c.l.b16 %v434
      %v866 = vunpack.c.h.b16 %v434
      %v867 = vunpack.c.l.b16 %v435
      %v868 = vunpack.c.l.b16 %v436
      %v869 = vunpack.c.h.b16 %v436
      %v870 = vunpack.c.l.b16 %v437
      %v871 = vunpack.c.l.b16 %v438
      %v872 = vunpack.c.h.b16 %v438
      %v873 = vunpack.c.l.b16 %v439
      %v874 = vunpack.c.l.b16 %v440
      %v875 = vunpack.c.h.b16 %v440
      %v876 = vunpack.c.l.b16 %v441
      %v877 = vunpack.c.l.b16 %v442
      %v878 = vunpack.c.h.b16 %v442
      %v879 = vunpack.c.l.b16 %v443
      %v880 = vunpack.c.l.b16 %v444
      %v881 = vunpack.c.h.b16 %v444
      %v882 = vunpack.c.l.b16 %v445
      %v883 = vunpack.c.l.b16 %v446
      %v884 = vunpack.c.h.b16 %v446
      %v885 = vunpack.c.l.b16 %v447
      %v886 = vunpack.c.l.b16 %v448
      %v887 = vunpack.c.h.b16 %v448
      %v888 = vunpack.c.l.b16 %v449
      %v889 = vunpack.c.l.b16 %v450
      %v890 = vunpack.c.h.b16 %v450
      %v891 = vunpack.c.l.b16 %v451
      %v892 = vunpack.c.l.b16 %v452
      %v893 = vunpack.c.h.b16 %v452
      %v894 = vunpack.c.l.b16 %v453
      %v895 = vunpack.c.l.b16 %v454
      %v896 = vunpack.c.h.b16 %v454
      %v897 = vunpack.c.l.b16 %v455
      %v898 = vunpack.c.l.b16 %v456
      %v899 = vunpack.c.h.b16 %v456
      %v900 = vunpack.c.l.b16 %v457
      %v901 = vunpack.c.l.b16 %v458
      %v902 = vunpack.c.h.b16 %v458
      %v903 = vunpack.c.l.b16 %v459
      %v904 = vunpack.c.l.b16 %v460
      %v905 = vunpack.c.h.b16 %v460
      %v906 = vunpack.c.l.b16 %v461
      %v907 = vunpack.c.l.b16 %v462
      %v908 = vunpack.c.h.b16 %v462
      %v909 = vunpack.c.l.b16 %v463
      %v910 = vunpack.c.l.b16 %v464
      %v911 = vunpack.c.h.b16 %v464
      %v912 = vunpack.c.l.b16 %v465
      %v913 = vunpack.c.l.b16 %v466
      %v914 = vunpack.c.h.b16 %v466
      %v915 = vunpack.c.l.b16 %v467
      %v916 = vunpack.c.l.b16 %v468
      %v917 = vunpack.c.h.b16 %v468
      %v918 = vunpack.c.l.b16 %v469
      %v919 = vunpack.c.l.b16 %v470
      %v920 = vunpack.c.h.b16 %v470
      %v921 = vunpack.c.l.b16 %v471
      %v922 = vunpack.c.l.b16 %v472
      %v923 = vunpack.c.h.b16 %v472
      %v924 = vunpack.c.l.b16 %v473
      %v925 = vunpack.c.l.b16 %v474
      %v926 = vunpack.c.h.b16 %v474
      %v927 = vunpack.c.l.b16 %v475
      %v928 = vunpack.c.l.b16 %v476
      %v929 = vunpack.c.h.b16 %v476
      %v930 = vunpack.c.l.b16 %v477
      %v931 = vunpack.c.l.b16 %v478
      %v932 = vunpack.c.h.b16 %v478
      %v933 = vunpack.c.l.b16 %v479
      %v934 = vunpack.c.l.b16 %v480
      %v935 = vunpack.c.h.b16 %v480
      %v936 = vunpack.c.l.b16 %v481
      %v937 = vunpack.c.l.b16 %v482
      %v938 = vunpack.c.h.b16 %v482
      %v939 = vunpack.c.l.b16 %v483
      %v940 = vunpack.c.l.b16 %v484
      %v941 = vunpack.c.h.b16 %v484
      %v942 = vunpack.c.l.b16 %v485
      %v943 = vunpack.c.l.b16 %v486
      %v944 = vunpack.c.h.b16 %v486
      %v945 = vunpack.c.l.b16 %v487
      %v946 = vunpack.c.l.b16 %v488
      %v947 = vunpack.c.h.b16 %v488
      %v948 = vunpack.c.l.b16 %v489
      %v949 = vunpack.c.l.b16 %v490
      %v950 = vunpack.c.h.b16 %v490
      %v951 = vunpack.c.l.b16 %v491
      %v952 = vunpack.c.l.b16 %v492
      %v953 = vunpack.c.h.b16 %v492
      %v954 = vunpack.c.l.b16 %v493
      %v955 = vunpack.c.l.b16 %v494
      %v956 = vunpack.c.h.b16 %v494
      %v957 = vunpack.c.l.b16 %v495
      %v958 = vunpack.c.l.b16 %v496
      %v959 = vunpack.c.h.b16 %v496
      %v960 = vunpack.c.l.b16 %v497
      %v961 = vunpack.c.l.b16 %v498
      %v962 = vunpack.c.h.b16 %v498
      %v963 = vunpack.c.l.b16 %v499
      %v964 = vunpack.c.l.b16 %v500
      %v965 = vunpack.c.h.b16 %v500
      %v966 = vunpack.c.l.b16 %v501
      %v967 = vunpack.c.l.b16 %v502
      %v968 = vunpack.c.h.b16 %v502
      %v969 = vunpack.c.l.b16 %v503
      %v970 = vunpack.c.l.b16 %v504
      %v971 = vunpack.c.h.b16 %v504
      %v972 = vunpack.c.l.b16 %v505
      %v973 = vunpack.c.l.b16 %v506
      %v974 = vunpack.c.h.b16 %v506
      %v975 = vunpack.c.l.b16 %v507
      %v976 = vunpack.c.l.b16 %v508
      %v977 = vunpack.c.h.b16 %v508
      %v978 = vunpack.c.l.b16 %v509
      %v979 = vunpack.c.l.b16 %v510
      %v980 = vunpack.c.h.b16 %v510
      %v981 = vunpack.c.l.b16 %v511
      %v982 = vunpack.c.l.b16 %v512
      %v983 = vunpack.c.h.b16 %v512
      %v984 = vunpack.c.l.b16 %v513
      %v985 = vunpack.c.l.b16 %v514
      %v986 = vunpack.c.h.b16 %v514
      %v987 = vunpack.c.l.b16 %v515
      %v988 = vunpack.c.l.b16 %v516
      %v989 = vunpack.c.h.b16 %v516
      %v990 = vunpack.c.l.b16 %v517
      %v991 = vunpack.c.l.b16 %v518
      %v992 = vunpack.c.h.b16 %v518
      %v993 = vunpack.c.l.b16 %v519
      %v994 = vunpack.c.l.b16 %v520
      %v995 = vunpack.c.h.b16 %v520
      %v996 = vunpack.c.l.b16 %v521
      %v997 = vunpack.c.l.b16 %v522
      %v998 = vunpack.c.h.b16 %v522
      %v999 = vunpack.c.l.b16 %v523
      %v1000 = vunpack.c.l.b16 %v524
      %v1001 = vunpack.c.h.b16 %v524
      %v1002 = vunpack.c.l.b16 %v525
      %v1003 = vunpack.c.l.b16 %v526
      %v1004 = vunpack.c.h.b16 %v526
      %v1005 = vunpack.c.l.b16 %v527
      %v1006 = vunpack.c.l.b16 %v528
      %v1007 = vunpack.c.h.b16 %v528
      %v1008 = vunpack.c.l.b16 %v529
      %v1009 = vunpack.c.l.b16 %v530
      %v1010 = vunpack.c.h.b16 %v530
      %v1011 = vunpack.c.l.b16 %v531
      %v1012 = vunpack.c.l.b16 %v532
      %v1013 = vunpack.c.h.b16 %v532
      %v1014 = vunpack.c.l.b16 %v533
      %v1015 = vunpack.c.l.b16 %v534
      %v1016 = vunpack.c.h.b16 %v534
      %v1017 = vunpack.c.l.b16 %v535
      %v1018 = vunpack.c.l.b16 %v536
      %v1019 = vunpack.c.h.b16 %v536
      %v1020 = vunpack.c.l.b16 %v537
      %v1021 = vunpack.c.l.b16 %v538
      %v1022 = vunpack.c.h.b16 %v538
      %v1023 = vunpack.c.l.b16 %v539
      %v1024 = vunpack.c.l.b16 %v540
      %v1025 = vunpack.c.h.b16 %v540
      %v1026 = vunpack.c.l.b16 %v541
      %v1027 = vunpack.c.l.b16 %v542
      %v1028 = vunpack.c.h.b16 %v542
      %v1029 = vunpack.c.l.b16 %v543
      %v1030 = vunpack.c.l.b16 %v544
      %v1031 = vunpack.c.h.b16 %v544
      %v1032 = vunpack.c.l.b16 %v545
      %v1033 = vunpack.c.l.b16 %v546
      %v1034 = vunpack.c.h.b16 %v546
      %v1035 = vunpack.c.l.b16 %v547
      %v1036 = vunpack.c.l.b16 %v548
      %v1037 = vunpack.c.h.b16 %v548
      %v1038 = vunpack.c.l.b16 %v549
      %v1039 = vunpack.c.l.b16 %v550
      %v1040 = vunpack.c.h.b16 %v550
      %v1041 = vunpack.c.l.b16 %v551
      %v1042 = vunpack.c.l.b16 %v552
      %v1043 = vunpack.c.h.b16 %v552
      %v1044 = vunpack.c.l.b16 %v553
      %v1045 = vunpack.c.l.b16 %v554
      %v1046 = vunpack.c.h.b16 %v554
      %v1047 = vunpack.c.l.b16 %v555
      %v1048 = vunpack.c.l.b16 %v556
      %v1049 = vunpack.c.h.b16 %v556
      %v1050 = vunpack.c.l.b16 %v557
      %v1051 = vunpack.c.l.b16 %v558
      %v1052 = vunpack.c.h.b16 %v558
      %v1053 = vunpack.c.l.b16 %v559
      %v1054 = vunpack.c.l.b16 %v560
      %v1055 = vunpack.c.h.b16 %v560
      %v1056 = vunpack.c.l.b16 %v561
      %v1057 = vunpack.c.l.b16 %v562
      %v1058 = vunpack.c.h.b16 %v562
      %v1059 = vunpack.c.l.b16 %v563
      %v1060 = vunpack.c.l.b16 %v564
      %v1061 = vunpack.c.h.b16 %v564
      %v1062 = vunpack.c.l.b16 %v565
      %v1063 = vunpack.c.l.b16 %v566
      %v1064 = vunpack.c.h.b16 %v566
      %v1065 = vunpack.c.l.b16 %v567
      %v1066 = vunpack.c.l.b16 %v568
      %v1067 = vunpack.c.h.b16 %v568
      %v1068 = vunpack.c.l.b16 %v569
      %v1069 = vunpack.c.l.b16 %v570
      %v1070 = vunpack.c.h.b16 %v570
      %v1071 = vunpack.c.l.b16 %v571
      %v1072 = vunpack.c.l.b16 %v572
      %v1073 = vunpack.c.h.b16 %v572
      %v1074 = vunpack.c.l.b16 %v573
      %v1075 = vunpack.c.l.b16 %v574
      %v1076 = vunpack.c.h.b16 %v574
      %v1077 = vunpack.c.l.b16 %v575
      %v1078 = vunpack.c.l.b16 %v576
      %v1079 = vunpack.c.h.b16 %v576
      %v1080 = vunpack.c.l.b16 %v577
      %v1081 = vunpack.c.l.b16 %v578
      %v1082 = vunpack.c.h.b16 %v578
      %v1083 = vunpack.c.l.b16 %v579
      %v1084 = vunpack.c.l.b16 %v580
      %v1085 = vunpack.c.h.b16 %v580
      %v1086 = vunpack.c.l.b16 %v581
      %v1087 = vunpack.c.l.b16 %v582
      %v1088 = vunpack.c.h.b16 %v582
      %v1089 = vunpack.c.l.b16 %v583
      %v1090 = vunpack.c.l.b16 %v584
      %v1091 = vunpack.c.h.b16 %v584
      %v1092 = vunpack.c.l.b16 %v585
      %v1093 = vunpack.c.l.b16 %v586
      %v1094 = vunpack.c.h.b16 %v586
      %v1095 = vunpack.c.l.b16 %v587
      %v1096 = vunpack.c.l.b16 %v588
      %v1097 = vunpack.c.h.b16 %v588
      %v1098 = vunpack.c.l.b16 %v589
      %v1099 = vunpack.c.l.b16 %v590
      %v1100 = vunpack.c.h.b16 %v590
      %v1101 = vunpack.c.l.b16 %v591
      %v1102 = vunpack.c.l.b16 %v592
      %v1103 = vunpack.c.h.b16 %v592
      %v1104 = vunpack.c.l.b16 %v593
      %v1105 = vunpack.c.l.b16 %v594
      %v1106 = vunpack.c.h.b16 %v594
      %v1107 = vunpack.c.l.b16 %v595
      %v1108 = vunpack.c.l.b16 %v596
      %v1109 = vunpack.c.h.b16 %v596
      %v1110 = vunpack.c.l.b16 %v597
      %v1111 = vunpack.c.l.b16 %v598
      %v1112 = vunpack.c.h.b16 %v598
      %v1113 = vunpack.c.l.b16 %v599
      %v1114 = vunpack.c.l.b16 %v600
      %v1115 = vunpack.c.h.b16 %v600
      %v1116 = vunpack.c.l.b16 %v601
      %v1117 = vunpack.c.l.b16 %v602
      %v1118 = vunpack.c.h.b16 %v602
      %v1119 = vunpack.c.l.b16 %v603
      %v1120 = vunpack.c.l.b16 %v604
      %v1121 = vunpack.c.h.b16 %v604
      %v1122 = vunpack.c.l.b16 %v605
      %v1123 = vunpack.c.l.b16 %v606
      %v1124 = vunpack.c.h.b16 %v606
      %v1125 = vunpack.c.l.b16 %v607
      %v1126 = vunpack.c.l.b16 %v608
      %v1127 = vunpack.c.h.b16 %v608
      %v1128 = vunpack.c.l.b16 %v609
      %v1129 = vunpack.c.l.b16 %v610
      %v1130 = vunpack.c.h.b16 %v610
      %v1131 = vunpack.c.l.b16 %v611
      %v1132 = vunpack.c.l.b16 %v612
      %v1133 = vunpack.c.h.b16 %v612
      %v1134 = vunpack.c.l.b16 %v613
      %v1135 = vunpack.c.l.b16 %v614
      %v1136 = vunpack.c.h.b16 %v614
      %v1137 = vunpack.c.l.b16 %v615
      %v1138 = vunpack.c.l.b16 %v616
      %v1139 = vunpack.c.h.b16 %v616
      %v1140 = vunpack.c.l.b16 %v617
      %v1141 = vunpack.c.l.b16 %v618
      %v1142 = vunpack.c.h.b16 %v618
      %v1143 = vunpack.c.l.b16 %v619
      %v1144 = vunpack.c.l.b16 %v620
      %v1145 = vunpack.c.h.b16 %v620
      %v1146 = vunpack.c.l.b16 %v621
      %v1147 = vunpack.c.l.b16 %v622
      %v1148 = vunpack.c.h.b16 %v622
      %v1149 = vunpack.c.l.b16 %v623
      %v1150 = vpack.c.b16 %v859, %v856
      %v1151 = vpack.c.b16 %v860, %v857
      %v1152 = vpack.c.b16 %v861, %v858
      %v1153 = vpack.c.b16 %v865, %v862
      %v1154 = vpack.c.b16 %v866, %v863
      %v1155 = vpack.c.b16 %v867, %v864
      %v1156 = vpack.c.b16 %v871, %v868
      %v1157 = vpack.c.b16 %v872, %v869
      %v1158 = vpack.c.b16 %v873, %v870
      %v1159 = vpack.c.b16 %v877, %v874
      %v1160 = vpack.c.b16 %v878, %v875
      %v1161 = vpack.c.b16 %v879, %v876
      %v1162 = vpack.c.b16 %v883, %v880
      %v1163 = vpack.c.b16 %v884, %v881
      %v1164 = vpack.c.b16 %v885, %v882
      %v1165 = vpack.c.b16 %v889, %v886
      %v1166 = vpack.c.b16 %v890, %v887
      %v1167 = vpack.c.b16 %v891, %v888
      %v1168 = vpack.c.b16 %v895, %v892
      %v1169 = vpack.c.b16 %v896, %v893
      %v1170 = vpack.c.b16 %v897, %v894
      %v1171 = vpack.c.b16 %v901, %v898
      %v1172 = vpack.c.b16 %v902, %v899
      %v1173 = vpack.c.b16 %v903, %v900
      %v1174 = vpack.c.b16 %v907, %v904
      %v1175 = vpack.c.b16 %v908, %v905
      %v1176 = vpack.c.b16 %v909, %v906
      %v1177 = vpack.c.b16 %v913, %v910
      %v1178 = vpack.c.b16 %v914, %v911
      %v1179 = vpack.c.b16 %v915, %v912
      %v1180 = vpack.c.b16 %v919, %v916
      %v1181 = vpack.c.b16 %v920, %v917
      %v1182 = vpack.c.b16 %v921, %v918
      %v1183 = vpack.c.b16 %v925, %v922
      %v1184 = vpack.c.b16 %v926, %v923
      %v1185 = vpack.c.b16 %v927, %v924
      %v1186 = vpack.c.b16 %v931, %v928
      %v1187 = vpack.c.b16 %v932, %v929
      %v1188 = vpack.c.b16 %v933, %v930
      %v1189 = vpack.c.b16 %v937, %v934
      %v1190 = vpack.c.b16 %v938, %v935
      %v1191 = vpack.c.b16 %v939, %v936
      %v1192 = vpack.c.b16 %v943, %v940
      %v1193 = vpack.c.b16 %v944, %v941
      %v1194 = vpack.c.b16 %v945, %v942
      %v1195 = vpack.c.b16 %v949, %v946
      %v1196 = vpack.c.b16 %v950, %v947
      %v1197 = vpack.c.b16 %v951, %v948
      %v1198 = vpack.c.b16 %v955, %v952
      %v1199 = vpack.c.b16 %v956, %v953
      %v1200 = vpack.c.b16 %v957, %v954
      %v1201 = vpack.c.b16 %v961, %v958
      %v1202 = vpack.c.b16 %v962, %v959
      %v1203 = vpack.c.b16 %v963, %v960
      %v1204 = vpack.c.b16 %v967, %v964
      %v1205 = vpack.c.b16 %v968, %v965
      %v1206 = vpack.c.b16 %v969, %v966
      %v1207 = vpack.c.b16 %v973, %v970
      %v1208 = vpack.c.b16 %v974, %v971
      %v1209 = vpack.c.b16 %v975, %v972
      %v1210 = vpack.c.b16 %v979, %v976
      %v1211 = vpack.c.b16 %v980, %v977
      %v1212 = vpack.c.b16 %v981, %v978
      %v1213 = vpack.c.b16 %v985, %v982
      %v1214 = vpack.c.b16 %v986, %v983
      %v1215 = vpack.c.b16 %v987, %v984
      %v1216 = vpack.c.b16 %v991, %v988
      %v1217 = vpack.c.b16 %v992, %v989
      %v1218 = vpack.c.b16 %v993, %v990
      %v1219 = vpack.c.b16 %v997, %v994
      %v1220 = vpack.c.b16 %v998, %v995
      %v1221 = vpack.c.b16 %v999, %v996
      %v1222 = vpack.c.b16 %v1003, %v1000
      %v1223 = vpack.c.b16 %v1004, %v1001
      %v1224 = vpack.c.b16 %v1005, %v1002
      %v1225 = vpack.c.b16 %v1009, %v1006
      %v1226 = vpack.c.b16 %v1010, %v1007
      %v1227 = vpack.c.b16 %v1011, %v1008
      %v1228 = vpack.c.b16 %v1015, %v1012
      %v1229 = vpack.c.b16 %v1016, %v1013
      %v1230 = vpack.c.b16 %v1017, %v1014
      %v1231 = vpack.c.b16 %v1021, %v1018
      %v1232 = vpack.c.b16 %v1022, %v1019
      %v1233 = vpack.c.b16 %v1023, %v1020
      %v1234 = vpack.c.b16 %v1027, %v1024
      %v1235 = vpack.c.b16 %v1028, %v1025
      %v1236 = vpack.c.b16 %v1029, %v1026
      %v1237 = vpack.c.b16 %v1033, %v1030
      %v1238 = vpack.c.b16 %v1034, %v1031
      %v1239 = vpack.c.b16 %v1035, %v1032
      %v1240 = vpack.c.b16 %v1039, %v1036
      %v1241 = vpack.c.b16 %v1040, %v1037
      %v1242 = vpack.c.b16 %v1041, %v1038
      %v1243 = vpack.c.b16 %v1045, %v1042
      %v1244 = vpack.c.b16 %v1046, %v1043
      %v1245 = vpack.c.b16 %v1047, %v1044
      %v1246 = vpack.c.b16 %v1051, %v1048
      %v1247 = vpack.c.b16 %v1052, %v1049
      %v1248 = vpack.c.b16 %v1053, %v1050
      %v1249 = vpack.c.b16 %v1057, %v1054
      %v1250 = vpack.c.b16 %v1058, %v1055
      %v1251 = vpack.c.b16 %v1059, %v1056
      %v1252 = vpack.c.b16 %v1063, %v1060
      %v1253 = vpack.c.b16 %v1064, %v1061
      %v1254 = vpack.c.b16 %v1065, %v1062
      %v1255 = vpack.c.b16 %v1069, %v1066
      %v1256 = vpack.c.b16 %v1070, %v1067
      %v1257 = vpack.c.b16 %v1071, %v1068
      %v1258 = vpack.c.b16 %v1075, %v1072
      %v1259 = vpack.c.b16 %v1076, %v1073
      %v1260 = vpack.c.b16 %v1077, %v1074
      %v1261 = vpack.c.b16 %v1081, %v1078
      %v1262 = vpack.c.b16 %v1082, %v1079
      %v1263 = vpack.c.b16 %v1083, %v1080
      %v1264 = vpack.c.b16 %v1087, %v1084
      %v1265 = vpack.c.b16 %v1088, %v1085
      %v1266 = vpack.c.b16 %v1089, %v1086
      %v1267 = vpack.c.b16 %v1093, %v1090
      %v1268 = vpack.c.b16 %v1094, %v1091
      %v1269 = vpack.c.b16 %v1095, %v1092
      %v1270 = vpack.c.b16 %v1099, %v1096
      %v1271 = vpack.c.b16 %v1100, %v1097
      %v1272 = vpack.c.b16 %v1101, %v1098
      %v1273 = vpack.c.b16 %v1105, %v1102
      %v1274 = vpack.c.b16 %v1106, %v1103
      %v1275 = vpack.c.b16 %v1107, %v1104
      %v1276 = vpack.c.b16 %v1111, %v1108
      %v1277 = vpack.c.b16 %v1112, %v1109
      %v1278 = vpack.c.b16 %v1113, %v1110
      %v1279 = vpack.c.b16 %v1117, %v1114
      %v1280 = vpack.c.b16 %v1118, %v1115
      %v1281 = vpack.c.b16 %v1119, %v1116
      %v1282 = vpack.c.b16 %v1123, %v1120
      %v1283 = vpack.c.b16 %v1124, %v1121
      %v1284 = vpack.c.b16 %v1125, %v1122
      %v1285 = vpack.c.b16 %v1129, %v1126
      %v1286 = vpack.c.b16 %v1130, %v1127
      %v1287 = vpack.c.b16 %v1131, %v1128
      %v1288 = vpack.c.b16 %v1135, %v1132
      %v1289 = vpack.c.b16 %v1136, %v1133
      %v1290 = vpack.c.b16 %v1137, %v1134
      %v1291 = vpack.c.b16 %v1141, %v1138
      %v1292 = vpack.c.b16 %v1142, %v1139
      %v1293 = vpack.c.b16 %v1143, %v1140
      %v1294 = vpack.c.b16 %v1147, %v1144
      %v1295 = vpack.c.b16 %v1148, %v1145
      %v1296 = vpack.c.b16 %v1149, %v1146
      %v1431 = vunpack.c.l.b16 %v624
      %v1432 = vunpack.c.l.b16 %v625
      %v1433 = vunpack.c.l.b16 %v626
      %v1434 = vunpack.c.l.b16 %v627
      %v1435 = vunpack.c.l.b16 %v628
      %v1436 = vunpack.c.l.b16 %v629
      %v1437 = vunpack.c.l.b16 %v630
      %v1438 = vunpack.c.l.b16 %v631
      %v1439 = vunpack.c.l.b16 %v632
      %v1440 = vunpack.c.l.b16 %v633
      %v1441 = vunpack.c.l.b16 %v634
      %v1442 = vunpack.c.l.b16 %v635
      %v1443 = vunpack.c.l.b16 %v636
      %v1444 = vunpack.c.l.b16 %v637
      %v1445 = vunpack.c.l.b16 %v638
      %v1446 = vunpack.c.l.b16 %v639
      %v1447 = vunpack.c.l.b16 %v640
      %v1448 = vunpack.c.l.b16 %v641
      %v1449 = vunpack.c.l.b16 %v642
      %v1450 = vunpack.c.l.b16 %v643
      %v1451 = vunpack.c.l.b16 %v644
      %v1452 = vunpack.c.l.b16 %v645
      %v1453 = vunpack.c.l.b16 %v646
      %v1454 = vunpack.c.l.b16 %v647
      %v1455 = vunpack.c.l.b16 %v648
      %v1456 = vunpack.c.l.b16 %v649
      %v1457 = vunpack.c.l.b16 %v650
      %v1458 = vunpack.c.l.b16 %v651
      %v1459 = vunpack.c.l.b16 %v652
      %v1460 = vunpack.c.l.b16 %v653
      %v1461 = vunpack.c.l.b16 %v654
      %v1462 = vunpack.c.l.b16 %v655
      %v1463 = vunpack.c.l.b16 %v656
      %v1464 = vunpack.c.l.b16 %v657
      %v1465 = vunpack.c.l.b16 %v658
      %v1466 = vunpack.c.l.b16 %v659
      %v1467 = vpack.c.b16 %v1432, %v1431
      %v1468 = vpack.c.b16 %v1434, %v1433
      %v1469 = vpack.c.b16 %v1436, %v1435
      %v1470 = vpack.c.b16 %v1438, %v1437
      %v1471 = vpack.c.b16 %v1440, %v1439
      %v1472 = vpack.c.b16 %v1442, %v1441
      %v1473 = vpack.c.b16 %v1444, %v1443
      %v1474 = vpack.c.b16 %v1446, %v1445
      %v1475 = vpack.c.b16 %v1448, %v1447
      %v1476 = vpack.c.b16 %v1450, %v1449
      %v1477 = vpack.c.b16 %v1452, %v1451
      %v1478 = vpack.c.b16 %v1454, %v1453
      %v1479 = vpack.c.b16 %v1456, %v1455
      %v1480 = vpack.c.b16 %v1458, %v1457
      %v1481 = vpack.c.b16 %v1460, %v1459
      %v1482 = vpack.c.b16 %v1462, %v1461
      %v1483 = vpack.c.b16 %v1464, %v1463
      %v1484 = vpack.c.b16 %v1466, %v1465
      %vm1503 = vcmask 261120
      %v1505 = vsel %vm1503, %v1152, 0
      %v1508 = vsel %vm1503, %v1155, 0
      %v1511 = vsel %vm1503, %v1158, 0
      %v1514 = vsel %vm1503, %v1161, 0
      %v1517 = vsel %vm1503, %v1164, 0
      %v1520 = vsel %vm1503, %v1167, 0
      %v1523 = vsel %vm1503, %v1170, 0
      %v1526 = vsel %vm1503, %v1173, 0
      %v1529 = vsel %vm1503, %v1176, 0
      %v1532 = vsel %vm1503, %v1179, 0
      %v1535 = vsel %vm1503, %v1182, 0
      %v1538 = vsel %vm1503, %v1185, 0
      %v1541 = vsel %vm1503, %v1188, 0
      %v1544 = vsel %vm1503, %v1191, 0
      %v1547 = vsel %vm1503, %v1194, 0
      %v1550 = vsel %vm1503, %v1197, 0
      %v1553 = vsel %vm1503, %v1200, 0
      %v1556 = vsel %vm1503, %v1203, 0
      %v1559 = vsel %vm1503, %v1206, 0
      %v1562 = vsel %vm1503, %v1209, 0
      %v1565 = vsel %vm1503, %v1212, 0
      %v1568 = vsel %vm1503, %v1215, 0
      %v1571 = vsel %vm1503, %v1218, 0
      %v1574 = vsel %vm1503, %v1221, 0
      %v1577 = vsel %vm1503, %v1224, 0
      %v1580 = vsel %vm1503, %v1227, 0
      %v1583 = vsel %vm1503, %v1230, 0
      %v1586 = vsel %vm1503, %v1233, 0
      %v1589 = vsel %vm1503, %v1236, 0
      %v1592 = vsel %vm1503, %v1239, 0
      %v1595 = vsel %vm1503, %v1242, 0
      %v1598 = vsel %vm1503, %v1245, 0
      %v1601 = vsel %vm1503, %v1248, 0
      %v1604 = vsel %vm1503, %v1251, 0
      %v1607 = vsel %vm1503, %v1254, 0
      %v1610 = vsel %vm1503, %v1257, 0
      %v1613 = vsel %vm1503, %v1260, 0
      %v1616 = vsel %vm1503, %v1263, 0
      %v1619 = vsel %vm1503, %v1266, 0
      %v1622 = vsel %vm1503, %v1269, 0
      %v1625 = vsel %vm1503, %v1272, 0
      %v1628 = vsel %vm1503, %v1275, 0
      %v1631 = vsel %vm1503, %v1278, 0
      %v1634 = vsel %vm1503, %v1281, 0
      %v1637 = vsel %vm1503, %v1284, 0
      %v1640 = vsel %vm1503, %v1287, 0
      %v1643 = vsel %vm1503, %v1290, 0
      %v1646 = vsel %vm1503, %v1293, 0
      %v1649 = vsel %vm1503, %v1296, 0
      %1651 = vmatprep.subr.bf16.mxu0 0
      %1652 = vmatpush1.bf16.msra.mxu0 %v1474
      %1653 = vmatprep.subr.bf16.mxu0 0
      %1654 = vmatpush1.bf16.msra.mxu0 %v1473
      %1655 = vmatprep.subr.bf16.mxu0 0
      %1656 = vmatpush1.bf16.msra.mxu0 %v1472
      %1657 = vmatprep.subr.bf16.mxu0 0
      %1658 = vmatpush1.bf16.msra.mxu0 %v1471
      %1659 = vmatprep.subr.bf16.mxu0 0
      %1660 = vmatpush1.bf16.msra.mxu0 %v1470
      %1661 = vmatprep.subr.bf16.mxu0 0
      %1662 = vmatpush1.bf16.msra.mxu0 %v1469
      %1663 = vmatprep.subr.bf16.mxu0 0
      %1664 = vmatpush1.bf16.msra.mxu0 %v1468
      %1665 = vmatprep.subr.bf16.mxu0 0
      %1666 = vmatpush1.bf16.msra.mxu0 %v1467
      %1667 = vmatprep.subr.bf16.mxu0 0
      %1668 = vmatpush2.bf16.msra.mxu0 %v1482
      %1669 = vmatprep.subr.bf16.mxu0 0
      %1670 = vmatpush2.bf16.msra.mxu0 %v1481
      %1671 = vmatprep.subr.bf16.mxu0 0
      %1672 = vmatpush2.bf16.msra.mxu0 %v1480
      %1673 = vmatprep.subr.bf16.mxu0 0
      %1674 = vmatpush2.bf16.msra.mxu0 %v1479
      %1675 = vmatprep.subr.bf16.mxu0 0
      %1676 = vmatpush2.bf16.msra.mxu0 %v1478
      %1677 = vmatprep.subr.bf16.mxu0 0
      %1678 = vmatpush2.bf16.msra.mxu0 %v1477
      %1679 = vmatprep.subr.bf16.mxu0 0
      %1680 = vmatpush2.bf16.msra.mxu0 %v1476
      %1681 = vmatprep.subr.bf16.mxu0 0
      %1682 = vmatpush2.bf16.msra.mxu0 %v1475
      %1683 = vmatprep.mubr.bf16.mxu0 %v1151
      %1684 = vmatmul.mubr.bf16.gmra.mxu0 %v1150
      %v1685 = vpop.f32.mrf.mxu0
      %v1686 = vadd.f32 0.0, %v1685
      %v1687 = vpop.f32.mrf.mxu0
      %v1688 = vpop.f32.mrf.mxu0
      %v1689 = vadd.f32 0.0, %v1688
      %v1690 = vpop.f32.mrf.mxu0
      %1691 = vmatprep.mubr.bf16.mxu0 %v1154
      %1692 = vmatmul.mubr.bf16.gmra.mxu0 %v1153
      %v1693 = vpop.f32.mrf.mxu0
      %v1694 = vadd.f32 0.0, %v1693
      %v1695 = vpop.f32.mrf.mxu0
      %v1696 = vpop.f32.mrf.mxu0
      %v1697 = vadd.f32 0.0, %v1696
      %v1698 = vpop.f32.mrf.mxu0
      %1699 = vmatprep.mubr.bf16.mxu0 %v1157
      %1700 = vmatmul.mubr.bf16.gmra.mxu0 %v1156
      %v1701 = vpop.f32.mrf.mxu0
      %v1702 = vadd.f32 0.0, %v1701
      %v1703 = vpop.f32.mrf.mxu0
      %v1704 = vpop.f32.mrf.mxu0
      %v1705 = vadd.f32 0.0, %v1704
      %v1706 = vpop.f32.mrf.mxu0
      %1707 = vmatprep.mubr.bf16.mxu0 %v1160
      %1708 = vmatmul.mubr.bf16.gmra.mxu0 %v1159
      %v1709 = vpop.f32.mrf.mxu0
      %v1710 = vadd.f32 0.0, %v1709
      %v1711 = vpop.f32.mrf.mxu0
      %v1712 = vpop.f32.mrf.mxu0
      %v1713 = vadd.f32 0.0, %v1712
      %v1714 = vpop.f32.mrf.mxu0
      %1715 = vmatprep.mubr.bf16.mxu0 %v1163
      %1716 = vmatmul.mubr.bf16.gmra.mxu0 %v1162
      %v1717 = vpop.f32.mrf.mxu0
      %v1718 = vadd.f32 0.0, %v1717
      %v1719 = vpop.f32.mrf.mxu0
      %v1720 = vpop.f32.mrf.mxu0
      %v1721 = vadd.f32 0.0, %v1720
      %v1722 = vpop.f32.mrf.mxu0
      %1723 = vmatprep.mubr.bf16.mxu0 %v1166
      %1724 = vmatmul.mubr.bf16.gmra.mxu0 %v1165
      %v1725 = vpop.f32.mrf.mxu0
      %v1726 = vadd.f32 0.0, %v1725
      %v1727 = vpop.f32.mrf.mxu0
      %v1728 = vpop.f32.mrf.mxu0
      %v1729 = vadd.f32 0.0, %v1728
      %v1730 = vpop.f32.mrf.mxu0
      %1731 = vmatprep.mubr.bf16.mxu0 %v1169
      %1732 = vmatmul.mubr.bf16.gmra.mxu0 %v1168
      %v1733 = vpop.f32.mrf.mxu0
      %v1734 = vadd.f32 0.0, %v1733
      %v1735 = vpop.f32.mrf.mxu0
      %v1736 = vpop.f32.mrf.mxu0
      %v1737 = vadd.f32 0.0, %v1736
      %v1738 = vpop.f32.mrf.mxu0
      %1739 = vmatprep.mubr.bf16.mxu0 %v1172
      %1740 = vmatmul.mubr.bf16.gmra.mxu0 %v1171
      %v1741 = vpop.f32.mrf.mxu0
      %v1742 = vadd.f32 0.0, %v1741
      %v1743 = vpop.f32.mrf.mxu0
      %v1744 = vpop.f32.mrf.mxu0
      %v1745 = vadd.f32 0.0, %v1744
      %v1746 = vpop.f32.mrf.mxu0
      %1747 = vmatprep.mubr.bf16.mxu0 %v1175
      %1748 = vmatmul.mubr.bf16.gmra.mxu0 %v1174
      %v1749 = vpop.f32.mrf.mxu0
      %v1750 = vadd.f32 0.0, %v1749
      %v1751 = vpop.f32.mrf.mxu0
      %v1752 = vpop.f32.mrf.mxu0
      %v1753 = vadd.f32 0.0, %v1752
      %v1754 = vpop.f32.mrf.mxu0
      %1755 = vmatprep.mubr.bf16.mxu0 %v1178
      %1756 = vmatmul.mubr.bf16.gmra.mxu0 %v1177
      %v1757 = vpop.f32.mrf.mxu0
      %v1758 = vadd.f32 0.0, %v1757
      %v1759 = vpop.f32.mrf.mxu0
      %v1760 = vpop.f32.mrf.mxu0
      %v1761 = vadd.f32 0.0, %v1760
      %v1762 = vpop.f32.mrf.mxu0
      %1763 = vmatprep.mubr.bf16.mxu0 %v1181
      %1764 = vmatmul.mubr.bf16.gmra.mxu0 %v1180
      %v1765 = vpop.f32.mrf.mxu0
      %v1766 = vadd.f32 0.0, %v1765
      %v1767 = vpop.f32.mrf.mxu0
      %v1768 = vpop.f32.mrf.mxu0
      %v1769 = vadd.f32 0.0, %v1768
      %v1770 = vpop.f32.mrf.mxu0
      %1771 = vmatprep.mubr.bf16.mxu0 %v1184
      %1772 = vmatmul.mubr.bf16.gmra.mxu0 %v1183
      %v1773 = vpop.f32.mrf.mxu0
      %v1774 = vadd.f32 0.0, %v1773
      %v1775 = vpop.f32.mrf.mxu0
      %v1776 = vpop.f32.mrf.mxu0
      %v1777 = vadd.f32 0.0, %v1776
      %v1778 = vpop.f32.mrf.mxu0
      %1779 = vmatprep.mubr.bf16.mxu0 %v1187
      %1780 = vmatmul.mubr.bf16.gmra.mxu0 %v1186
      %v1781 = vpop.f32.mrf.mxu0
      %v1782 = vadd.f32 0.0, %v1781
      %v1783 = vpop.f32.mrf.mxu0
      %v1784 = vpop.f32.mrf.mxu0
      %v1785 = vadd.f32 0.0, %v1784
      %v1786 = vpop.f32.mrf.mxu0
      %1787 = vmatprep.mubr.bf16.mxu0 %v1190
      %1788 = vmatmul.mubr.bf16.gmra.mxu0 %v1189
      %v1789 = vpop.f32.mrf.mxu0
      %v1790 = vadd.f32 0.0, %v1789
      %v1791 = vpop.f32.mrf.mxu0
      %v1792 = vpop.f32.mrf.mxu0
      %v1793 = vadd.f32 0.0, %v1792
      %v1794 = vpop.f32.mrf.mxu0
      %1795 = vmatprep.mubr.bf16.mxu0 %v1193
      %1796 = vmatmul.mubr.bf16.gmra.mxu0 %v1192
      %v1797 = vpop.f32.mrf.mxu0
      %v1798 = vadd.f32 0.0, %v1797
      %v1799 = vpop.f32.mrf.mxu0
      %v1800 = vpop.f32.mrf.mxu0
      %v1801 = vadd.f32 0.0, %v1800
      %v1802 = vpop.f32.mrf.mxu0
      %1803 = vmatprep.mubr.bf16.mxu0 %v1196
      %1804 = vmatmul.mubr.bf16.gmra.mxu0 %v1195
      %v1805 = vpop.f32.mrf.mxu0
      %v1806 = vadd.f32 0.0, %v1805
      %v1807 = vpop.f32.mrf.mxu0
      %v1808 = vpop.f32.mrf.mxu0
      %v1809 = vadd.f32 0.0, %v1808
      %v1810 = vpop.f32.mrf.mxu0
      %1811 = vmatprep.mubr.bf16.mxu0 %v1199
      %1812 = vmatmul.mubr.bf16.gmra.mxu0 %v1198
      %v1813 = vpop.f32.mrf.mxu0
      %v1814 = vadd.f32 0.0, %v1813
      %v1815 = vpop.f32.mrf.mxu0
      %v1816 = vpop.f32.mrf.mxu0
      %v1817 = vadd.f32 0.0, %v1816
      %v1818 = vpop.f32.mrf.mxu0
      %1819 = vmatprep.mubr.bf16.mxu0 %v1202
      %1820 = vmatmul.mubr.bf16.gmra.mxu0 %v1201
      %v1821 = vpop.f32.mrf.mxu0
      %v1822 = vadd.f32 0.0, %v1821
      %v1823 = vpop.f32.mrf.mxu0
      %v1824 = vpop.f32.mrf.mxu0
      %v1825 = vadd.f32 0.0, %v1824
      %v1826 = vpop.f32.mrf.mxu0
      %1827 = vmatprep.mubr.bf16.mxu0 %v1205
      %1828 = vmatmul.mubr.bf16.gmra.mxu0 %v1204
      %v1829 = vpop.f32.mrf.mxu0
      %v1830 = vadd.f32 0.0, %v1829
      %v1831 = vpop.f32.mrf.mxu0
      %v1832 = vpop.f32.mrf.mxu0
      %v1833 = vadd.f32 0.0, %v1832
      %v1834 = vpop.f32.mrf.mxu0
      %1835 = vmatprep.mubr.bf16.mxu0 %v1208
      %1836 = vmatmul.mubr.bf16.gmra.mxu0 %v1207
      %v1837 = vpop.f32.mrf.mxu0
      %v1838 = vadd.f32 0.0, %v1837
      %v1839 = vpop.f32.mrf.mxu0
      %v1840 = vpop.f32.mrf.mxu0
      %v1841 = vadd.f32 0.0, %v1840
      %v1842 = vpop.f32.mrf.mxu0
      %1843 = vmatprep.mubr.bf16.mxu0 %v1211
      %1844 = vmatmul.mubr.bf16.gmra.mxu0 %v1210
      %v1845 = vpop.f32.mrf.mxu0
      %v1846 = vadd.f32 0.0, %v1845
      %v1847 = vpop.f32.mrf.mxu0
      %v1848 = vpop.f32.mrf.mxu0
      %v1849 = vadd.f32 0.0, %v1848
      %v1850 = vpop.f32.mrf.mxu0
      %1851 = vmatprep.mubr.bf16.mxu0 %v1214
      %1852 = vmatmul.mubr.bf16.gmra.mxu0 %v1213
      %v1853 = vpop.f32.mrf.mxu0
      %v1854 = vadd.f32 0.0, %v1853
      %v1855 = vpop.f32.mrf.mxu0
      %v1856 = vpop.f32.mrf.mxu0
      %v1857 = vadd.f32 0.0, %v1856
      %v1858 = vpop.f32.mrf.mxu0
      %1859 = vmatprep.mubr.bf16.mxu0 %v1217
      %1860 = vmatmul.mubr.bf16.gmra.mxu0 %v1216
      %v1861 = vpop.f32.mrf.mxu0
      %v1862 = vadd.f32 0.0, %v1861
      %v1863 = vpop.f32.mrf.mxu0
      %v1864 = vpop.f32.mrf.mxu0
      %v1865 = vadd.f32 0.0, %v1864
      %v1866 = vpop.f32.mrf.mxu0
      %1867 = vmatprep.mubr.bf16.mxu0 %v1220
      %1868 = vmatmul.mubr.bf16.gmra.mxu0 %v1219
      %v1869 = vpop.f32.mrf.mxu0
      %v1870 = vadd.f32 0.0, %v1869
      %v1871 = vpop.f32.mrf.mxu0
      %v1872 = vpop.f32.mrf.mxu0
      %v1873 = vadd.f32 0.0, %v1872
      %v1874 = vpop.f32.mrf.mxu0
      %1875 = vmatprep.mubr.bf16.mxu0 %v1223
      %1876 = vmatmul.mubr.bf16.gmra.mxu0 %v1222
      %v1877 = vpop.f32.mrf.mxu0
      %v1878 = vadd.f32 0.0, %v1877
      %v1879 = vpop.f32.mrf.mxu0
      %v1880 = vpop.f32.mrf.mxu0
      %v1881 = vadd.f32 0.0, %v1880
      %v1882 = vpop.f32.mrf.mxu0
      %1883 = vmatprep.mubr.bf16.mxu0 %v1226
      %1884 = vmatmul.mubr.bf16.gmra.mxu0 %v1225
      %v1885 = vpop.f32.mrf.mxu0
      %v1886 = vadd.f32 0.0, %v1885
      %v1887 = vpop.f32.mrf.mxu0
      %v1888 = vpop.f32.mrf.mxu0
      %v1889 = vadd.f32 0.0, %v1888
      %v1890 = vpop.f32.mrf.mxu0
      %1891 = vmatprep.mubr.bf16.mxu0 %v1229
      %1892 = vmatmul.mubr.bf16.gmra.mxu0 %v1228
      %v1893 = vpop.f32.mrf.mxu0
      %v1894 = vadd.f32 0.0, %v1893
      %v1895 = vpop.f32.mrf.mxu0
      %v1896 = vpop.f32.mrf.mxu0
      %v1897 = vadd.f32 0.0, %v1896
      %v1898 = vpop.f32.mrf.mxu0
      %1899 = vmatprep.mubr.bf16.mxu0 %v1232
      %1900 = vmatmul.mubr.bf16.gmra.mxu0 %v1231
      %v1901 = vpop.f32.mrf.mxu0
      %v1902 = vadd.f32 0.0, %v1901
      %v1903 = vpop.f32.mrf.mxu0
      %v1904 = vpop.f32.mrf.mxu0
      %v1905 = vadd.f32 0.0, %v1904
      %v1906 = vpop.f32.mrf.mxu0
      %1907 = vmatprep.mubr.bf16.mxu0 %v1235
      %1908 = vmatmul.mubr.bf16.gmra.mxu0 %v1234
      %v1909 = vpop.f32.mrf.mxu0
      %v1910 = vadd.f32 0.0, %v1909
      %v1911 = vpop.f32.mrf.mxu0
      %v1912 = vpop.f32.mrf.mxu0
      %v1913 = vadd.f32 0.0, %v1912
      %v1914 = vpop.f32.mrf.mxu0
      %1915 = vmatprep.mubr.bf16.mxu0 %v1238
      %1916 = vmatmul.mubr.bf16.gmra.mxu0 %v1237
      %v1917 = vpop.f32.mrf.mxu0
      %v1918 = vadd.f32 0.0, %v1917
      %v1919 = vpop.f32.mrf.mxu0
      %v1920 = vpop.f32.mrf.mxu0
      %v1921 = vadd.f32 0.0, %v1920
      %v1922 = vpop.f32.mrf.mxu0
      %1923 = vmatprep.mubr.bf16.mxu0 %v1241
      %1924 = vmatmul.mubr.bf16.gmra.mxu0 %v1240
      %v1925 = vpop.f32.mrf.mxu0
      %v1926 = vadd.f32 0.0, %v1925
      %v1927 = vpop.f32.mrf.mxu0
      %v1928 = vpop.f32.mrf.mxu0
      %v1929 = vadd.f32 0.0, %v1928
      %v1930 = vpop.f32.mrf.mxu0
      %1931 = vmatprep.mubr.bf16.mxu0 %v1244
      %1932 = vmatmul.mubr.bf16.gmra.mxu0 %v1243
      %v1933 = vpop.f32.mrf.mxu0
      %v1934 = vadd.f32 0.0, %v1933
      %v1935 = vpop.f32.mrf.mxu0
      %v1936 = vpop.f32.mrf.mxu0
      %v1937 = vadd.f32 0.0, %v1936
      %v1938 = vpop.f32.mrf.mxu0
      %1939 = vmatprep.mubr.bf16.mxu0 %v1247
      %1940 = vmatmul.mubr.bf16.gmra.mxu0 %v1246
      %v1941 = vpop.f32.mrf.mxu0
      %v1942 = vadd.f32 0.0, %v1941
      %v1943 = vpop.f32.mrf.mxu0
      %v1944 = vpop.f32.mrf.mxu0
      %v1945 = vadd.f32 0.0, %v1944
      %v1946 = vpop.f32.mrf.mxu0
      %1947 = vmatprep.mubr.bf16.mxu0 %v1250
      %1948 = vmatmul.mubr.bf16.gmra.mxu0 %v1249
      %v1949 = vpop.f32.mrf.mxu0
      %v1950 = vadd.f32 0.0, %v1949
      %v1951 = vpop.f32.mrf.mxu0
      %v1952 = vpop.f32.mrf.mxu0
      %v1953 = vadd.f32 0.0, %v1952
      %v1954 = vpop.f32.mrf.mxu0
      %1955 = vmatprep.mubr.bf16.mxu0 %v1253
      %1956 = vmatmul.mubr.bf16.gmra.mxu0 %v1252
      %v1957 = vpop.f32.mrf.mxu0
      %v1958 = vadd.f32 0.0, %v1957
      %v1959 = vpop.f32.mrf.mxu0
      %v1960 = vpop.f32.mrf.mxu0
      %v1961 = vadd.f32 0.0, %v1960
      %v1962 = vpop.f32.mrf.mxu0
      %1963 = vmatprep.mubr.bf16.mxu0 %v1256
      %1964 = vmatmul.mubr.bf16.gmra.mxu0 %v1255
      %v1965 = vpop.f32.mrf.mxu0
      %v1966 = vadd.f32 0.0, %v1965
      %v1967 = vpop.f32.mrf.mxu0
      %v1968 = vpop.f32.mrf.mxu0
      %v1969 = vadd.f32 0.0, %v1968
      %v1970 = vpop.f32.mrf.mxu0
      %1971 = vmatprep.mubr.bf16.mxu0 %v1259
      %1972 = vmatmul.mubr.bf16.gmra.mxu0 %v1258
      %v1973 = vpop.f32.mrf.mxu0
      %v1974 = vadd.f32 0.0, %v1973
      %v1975 = vpop.f32.mrf.mxu0
      %v1976 = vpop.f32.mrf.mxu0
      %v1977 = vadd.f32 0.0, %v1976
      %v1978 = vpop.f32.mrf.mxu0
      %1979 = vmatprep.mubr.bf16.mxu0 %v1262
      %1980 = vmatmul.mubr.bf16.gmra.mxu0 %v1261
      %v1981 = vpop.f32.mrf.mxu0
      %v1982 = vadd.f32 0.0, %v1981
      %v1983 = vpop.f32.mrf.mxu0
      %v1984 = vpop.f32.mrf.mxu0
      %v1985 = vadd.f32 0.0, %v1984
      %v1986 = vpop.f32.mrf.mxu0
      %1987 = vmatprep.mubr.bf16.mxu0 %v1265
      %1988 = vmatmul.mubr.bf16.gmra.mxu0 %v1264
      %v1989 = vpop.f32.mrf.mxu0
      %v1990 = vadd.f32 0.0, %v1989
      %v1991 = vpop.f32.mrf.mxu0
      %v1992 = vpop.f32.mrf.mxu0
      %v1993 = vadd.f32 0.0, %v1992
      %v1994 = vpop.f32.mrf.mxu0
      %1995 = vmatprep.mubr.bf16.mxu0 %v1268
      %1996 = vmatmul.mubr.bf16.gmra.mxu0 %v1267
      %v1997 = vpop.f32.mrf.mxu0
      %v1998 = vadd.f32 0.0, %v1997
      %v1999 = vpop.f32.mrf.mxu0
      %v2000 = vpop.f32.mrf.mxu0
      %v2001 = vadd.f32 0.0, %v2000
      %v2002 = vpop.f32.mrf.mxu0
      %2003 = vmatprep.mubr.bf16.mxu0 %v1271
      %2004 = vmatmul.mubr.bf16.gmra.mxu0 %v1270
      %v2005 = vpop.f32.mrf.mxu0
      %v2006 = vadd.f32 0.0, %v2005
      %v2007 = vpop.f32.mrf.mxu0
      %v2008 = vpop.f32.mrf.mxu0
      %v2009 = vadd.f32 0.0, %v2008
      %v2010 = vpop.f32.mrf.mxu0
      %2011 = vmatprep.mubr.bf16.mxu0 %v1274
      %2012 = vmatmul.mubr.bf16.gmra.mxu0 %v1273
      %v2013 = vpop.f32.mrf.mxu0
      %v2014 = vadd.f32 0.0, %v2013
      %v2015 = vpop.f32.mrf.mxu0
      %v2016 = vpop.f32.mrf.mxu0
      %v2017 = vadd.f32 0.0, %v2016
      %v2018 = vpop.f32.mrf.mxu0
      %2019 = vmatprep.mubr.bf16.mxu0 %v1277
      %2020 = vmatmul.mubr.bf16.gmra.mxu0 %v1276
      %v2021 = vpop.f32.mrf.mxu0
      %v2022 = vadd.f32 0.0, %v2021
      %v2023 = vpop.f32.mrf.mxu0
      %v2024 = vpop.f32.mrf.mxu0
      %v2025 = vadd.f32 0.0, %v2024
      %v2026 = vpop.f32.mrf.mxu0
      %2027 = vmatprep.mubr.bf16.mxu0 %v1280
      %2028 = vmatmul.mubr.bf16.gmra.mxu0 %v1279
      %v2029 = vpop.f32.mrf.mxu0
      %v2030 = vadd.f32 0.0, %v2029
      %v2031 = vpop.f32.mrf.mxu0
      %v2032 = vpop.f32.mrf.mxu0
      %v2033 = vadd.f32 0.0, %v2032
      %v2034 = vpop.f32.mrf.mxu0
      %2035 = vmatprep.mubr.bf16.mxu0 %v1283
      %2036 = vmatmul.mubr.bf16.gmra.mxu0 %v1282
      %v2037 = vpop.f32.mrf.mxu0
      %v2038 = vadd.f32 0.0, %v2037
      %v2039 = vpop.f32.mrf.mxu0
      %v2040 = vpop.f32.mrf.mxu0
      %v2041 = vadd.f32 0.0, %v2040
      %v2042 = vpop.f32.mrf.mxu0
      %2043 = vmatprep.mubr.bf16.mxu0 %v1286
      %2044 = vmatmul.mubr.bf16.gmra.mxu0 %v1285
      %v2045 = vpop.f32.mrf.mxu0
      %v2046 = vadd.f32 0.0, %v2045
      %v2047 = vpop.f32.mrf.mxu0
      %v2048 = vpop.f32.mrf.mxu0
      %v2049 = vadd.f32 0.0, %v2048
      %v2050 = vpop.f32.mrf.mxu0
      %2051 = vmatprep.mubr.bf16.mxu0 %v1289
      %2052 = vmatmul.mubr.bf16.gmra.mxu0 %v1288
      %v2053 = vpop.f32.mrf.mxu0
      %v2054 = vadd.f32 0.0, %v2053
      %v2055 = vpop.f32.mrf.mxu0
      %v2056 = vpop.f32.mrf.mxu0
      %v2057 = vadd.f32 0.0, %v2056
      %v2058 = vpop.f32.mrf.mxu0
      %2059 = vmatprep.mubr.bf16.mxu0 %v1292
      %2060 = vmatmul.mubr.bf16.gmra.mxu0 %v1291
      %v2061 = vpop.f32.mrf.mxu0
      %v2062 = vadd.f32 0.0, %v2061
      %v2063 = vpop.f32.mrf.mxu0
      %v2064 = vpop.f32.mrf.mxu0
      %v2065 = vadd.f32 0.0, %v2064
      %v2066 = vpop.f32.mrf.mxu0
      %2067 = vmatprep.mubr.bf16.mxu0 %v1295
      %2068 = vmatmul.mubr.bf16.gmra.mxu0 %v1294
      %v2069 = vpop.f32.mrf.mxu0
      %v2070 = vadd.f32 0.0, %v2069
      %v2071 = vpop.f32.mrf.mxu0
      %v2072 = vpop.f32.mrf.mxu0
      %v2073 = vadd.f32 0.0, %v2072
      %v2074 = vpop.f32.mrf.mxu0
      %2075 = vdwg.mxu0
      %2076 = vmatprep.subr.bf16.mxu0 0
      %2077 = vmatpush1.bf16.msra.mxu0 0
      %2078 = vmatprep.subr.bf16.mxu0 0
      %2079 = vmatpush1.bf16.msra.mxu0 0
      %2080 = vmatprep.subr.bf16.mxu0 0
      %2081 = vmatpush1.bf16.msra.mxu0 0
      %2082 = vmatprep.subr.bf16.mxu0 0
      %2083 = vmatpush1.bf16.msra.mxu0 0
      %2084 = vmatprep.subr.bf16.mxu0 0
      %2085 = vmatpush1.bf16.msra.mxu0 0
      %2086 = vmatprep.subr.bf16.mxu0 0
      %2087 = vmatpush1.bf16.msra.mxu0 0
      %2088 = vmatprep.subr.bf16.mxu0 0
      %2089 = vmatpush1.bf16.msra.mxu0 %v1484
      %2090 = vmatprep.subr.bf16.mxu0 0
      %2091 = vmatpush1.bf16.msra.mxu0 %v1483
      %2092 = vmatprep.subr.bf16.mxu0 0
      %2093 = vmatpush2.bf16.msra.mxu0 0
      %2094 = vmatprep.subr.bf16.mxu0 0
      %2095 = vmatpush2.bf16.msra.mxu0 0
      %2096 = vmatprep.subr.bf16.mxu0 0
      %2097 = vmatpush2.bf16.msra.mxu0 0
      %2098 = vmatprep.subr.bf16.mxu0 0
      %2099 = vmatpush2.bf16.msra.mxu0 0
      %2100 = vmatprep.subr.bf16.mxu0 0
      %2101 = vmatpush2.bf16.msra.mxu0 0
      %2102 = vmatprep.subr.bf16.mxu0 0
      %2103 = vmatpush2.bf16.msra.mxu0 0
      %2104 = vmatprep.subr.bf16.mxu0 0
      %2105 = vmatpush2.bf16.msra.mxu0 0
      %2106 = vmatprep.subr.bf16.mxu0 0
      %2107 = vmatpush2.bf16.msra.mxu0 0
      %2108 = vmatprep.mubr.bf16.mxu0 0
      %2109 = vmatmul.mubr.bf16.gmra.mxu0 %v1505
      %v2110 = vpop.f32.mrf.mxu0
      %v2111 = vadd.f32 %v1686, %v2110
      %v2112 = vpop.f32.mrf.mxu0
      %v2113 = vpop.f32.mrf.mxu0
      %v2114 = vadd.f32 %v1689, %v2113
      %v2115 = vpop.f32.mrf.mxu0
      %2116 = vmatprep.mubr.bf16.mxu0 0
      %2117 = vmatmul.mubr.bf16.gmra.mxu0 %v1508
      %v2118 = vpop.f32.mrf.mxu0
      %v2119 = vadd.f32 %v1694, %v2118
      %v2120 = vpop.f32.mrf.mxu0
      %v2121 = vpop.f32.mrf.mxu0
      %v2122 = vadd.f32 %v1697, %v2121
      %v2123 = vpop.f32.mrf.mxu0
      %2124 = vmatprep.mubr.bf16.mxu0 0
      %2125 = vmatmul.mubr.bf16.gmra.mxu0 %v1511
      %v2126 = vpop.f32.mrf.mxu0
      %v2127 = vadd.f32 %v1702, %v2126
      %v2128 = vpop.f32.mrf.mxu0
      %v2129 = vpop.f32.mrf.mxu0
      %v2130 = vadd.f32 %v1705, %v2129
      %v2131 = vpop.f32.mrf.mxu0
      %2132 = vmatprep.mubr.bf16.mxu0 0
      %2133 = vmatmul.mubr.bf16.gmra.mxu0 %v1514
      %v2134 = vpop.f32.mrf.mxu0
      %v2135 = vadd.f32 %v1710, %v2134
      %v2136 = vpop.f32.mrf.mxu0
      %v2137 = vpop.f32.mrf.mxu0
      %v2138 = vadd.f32 %v1713, %v2137
      %v2139 = vpop.f32.mrf.mxu0
      %2140 = vmatprep.mubr.bf16.mxu0 0
      %2141 = vmatmul.mubr.bf16.gmra.mxu0 %v1517
      %v2142 = vpop.f32.mrf.mxu0
      %v2143 = vadd.f32 %v1718, %v2142
      %v2144 = vpop.f32.mrf.mxu0
      %v2145 = vpop.f32.mrf.mxu0
      %v2146 = vadd.f32 %v1721, %v2145
      %v2147 = vpop.f32.mrf.mxu0
      %2148 = vmatprep.mubr.bf16.mxu0 0
      %2149 = vmatmul.mubr.bf16.gmra.mxu0 %v1520
      %v2150 = vpop.f32.mrf.mxu0
      %v2151 = vadd.f32 %v1726, %v2150
      %v2152 = vpop.f32.mrf.mxu0
      %v2153 = vpop.f32.mrf.mxu0
      %v2154 = vadd.f32 %v1729, %v2153
      %v2155 = vpop.f32.mrf.mxu0
      %2156 = vmatprep.mubr.bf16.mxu0 0
      %2157 = vmatmul.mubr.bf16.gmra.mxu0 %v1523
      %v2158 = vpop.f32.mrf.mxu0
      %v2159 = vadd.f32 %v1734, %v2158
      %v2160 = vpop.f32.mrf.mxu0
      %v2161 = vpop.f32.mrf.mxu0
      %v2162 = vadd.f32 %v1737, %v2161
      %v2163 = vpop.f32.mrf.mxu0
      %2164 = vmatprep.mubr.bf16.mxu0 0
      %2165 = vmatmul.mubr.bf16.gmra.mxu0 %v1526
      %v2166 = vpop.f32.mrf.mxu0
      %v2167 = vadd.f32 %v1742, %v2166
      %v2168 = vpop.f32.mrf.mxu0
      %v2169 = vpop.f32.mrf.mxu0
      %v2170 = vadd.f32 %v1745, %v2169
      %v2171 = vpop.f32.mrf.mxu0
      %2172 = vmatprep.mubr.bf16.mxu0 0
      %2173 = vmatmul.mubr.bf16.gmra.mxu0 %v1529
      %v2174 = vpop.f32.mrf.mxu0
      %v2175 = vadd.f32 %v1750, %v2174
      %v2176 = vpop.f32.mrf.mxu0
      %v2177 = vpop.f32.mrf.mxu0
      %v2178 = vadd.f32 %v1753, %v2177
      %v2179 = vpop.f32.mrf.mxu0
      %2180 = vmatprep.mubr.bf16.mxu0 0
      %2181 = vmatmul.mubr.bf16.gmra.mxu0 %v1532
      %v2182 = vpop.f32.mrf.mxu0
      %v2183 = vadd.f32 %v1758, %v2182
      %v2184 = vpop.f32.mrf.mxu0
      %v2185 = vpop.f32.mrf.mxu0
      %v2186 = vadd.f32 %v1761, %v2185
      %v2187 = vpop.f32.mrf.mxu0
      %2188 = vmatprep.mubr.bf16.mxu0 0
      %2189 = vmatmul.mubr.bf16.gmra.mxu0 %v1535
      %v2190 = vpop.f32.mrf.mxu0
      %v2191 = vadd.f32 %v1766, %v2190
      %v2192 = vpop.f32.mrf.mxu0
      %v2193 = vpop.f32.mrf.mxu0
      %v2194 = vadd.f32 %v1769, %v2193
      %v2195 = vpop.f32.mrf.mxu0
      %2196 = vmatprep.mubr.bf16.mxu0 0
      %2197 = vmatmul.mubr.bf16.gmra.mxu0 %v1538
      %v2198 = vpop.f32.mrf.mxu0
      %v2199 = vadd.f32 %v1774, %v2198
      %v2200 = vpop.f32.mrf.mxu0
      %v2201 = vpop.f32.mrf.mxu0
      %v2202 = vadd.f32 %v1777, %v2201
      %v2203 = vpop.f32.mrf.mxu0
      %2204 = vmatprep.mubr.bf16.mxu0 0
      %2205 = vmatmul.mubr.bf16.gmra.mxu0 %v1541
      %v2206 = vpop.f32.mrf.mxu0
      %v2207 = vadd.f32 %v1782, %v2206
      %v2208 = vpop.f32.mrf.mxu0
      %v2209 = vpop.f32.mrf.mxu0
      %v2210 = vadd.f32 %v1785, %v2209
      %v2211 = vpop.f32.mrf.mxu0
      %2212 = vmatprep.mubr.bf16.mxu0 0
      %2213 = vmatmul.mubr.bf16.gmra.mxu0 %v1544
      %v2214 = vpop.f32.mrf.mxu0
      %v2215 = vadd.f32 %v1790, %v2214
      %v2216 = vpop.f32.mrf.mxu0
      %v2217 = vpop.f32.mrf.mxu0
      %v2218 = vadd.f32 %v1793, %v2217
      %v2219 = vpop.f32.mrf.mxu0
      %2220 = vmatprep.mubr.bf16.mxu0 0
      %2221 = vmatmul.mubr.bf16.gmra.mxu0 %v1547
      %v2222 = vpop.f32.mrf.mxu0
      %v2223 = vadd.f32 %v1798, %v2222
      %v2224 = vpop.f32.mrf.mxu0
      %v2225 = vpop.f32.mrf.mxu0
      %v2226 = vadd.f32 %v1801, %v2225
      %v2227 = vpop.f32.mrf.mxu0
      %2228 = vmatprep.mubr.bf16.mxu0 0
      %2229 = vmatmul.mubr.bf16.gmra.mxu0 %v1550
      %v2230 = vpop.f32.mrf.mxu0
      %v2231 = vadd.f32 %v1806, %v2230
      %v2232 = vpop.f32.mrf.mxu0
      %v2233 = vpop.f32.mrf.mxu0
      %v2234 = vadd.f32 %v1809, %v2233
      %v2235 = vpop.f32.mrf.mxu0
      %2236 = vmatprep.mubr.bf16.mxu0 0
      %2237 = vmatmul.mubr.bf16.gmra.mxu0 %v1553
      %v2238 = vpop.f32.mrf.mxu0
      %v2239 = vadd.f32 %v1814, %v2238
      %v2240 = vpop.f32.mrf.mxu0
      %v2241 = vpop.f32.mrf.mxu0
      %v2242 = vadd.f32 %v1817, %v2241
      %v2243 = vpop.f32.mrf.mxu0
      %2244 = vmatprep.mubr.bf16.mxu0 0
      %2245 = vmatmul.mubr.bf16.gmra.mxu0 %v1556
      %v2246 = vpop.f32.mrf.mxu0
      %v2247 = vadd.f32 %v1822, %v2246
      %v2248 = vpop.f32.mrf.mxu0
      %v2249 = vpop.f32.mrf.mxu0
      %v2250 = vadd.f32 %v1825, %v2249
      %v2251 = vpop.f32.mrf.mxu0
      %2252 = vmatprep.mubr.bf16.mxu0 0
      %2253 = vmatmul.mubr.bf16.gmra.mxu0 %v1559
      %v2254 = vpop.f32.mrf.mxu0
      %v2255 = vadd.f32 %v1830, %v2254
      %v2256 = vpop.f32.mrf.mxu0
      %v2257 = vpop.f32.mrf.mxu0
      %v2258 = vadd.f32 %v1833, %v2257
      %v2259 = vpop.f32.mrf.mxu0
      %2260 = vmatprep.mubr.bf16.mxu0 0
      %2261 = vmatmul.mubr.bf16.gmra.mxu0 %v1562
      %v2262 = vpop.f32.mrf.mxu0
      %v2263 = vadd.f32 %v1838, %v2262
      %v2264 = vpop.f32.mrf.mxu0
      %v2265 = vpop.f32.mrf.mxu0
      %v2266 = vadd.f32 %v1841, %v2265
      %v2267 = vpop.f32.mrf.mxu0
      %2268 = vmatprep.mubr.bf16.mxu0 0
      %2269 = vmatmul.mubr.bf16.gmra.mxu0 %v1565
      %v2270 = vpop.f32.mrf.mxu0
      %v2271 = vadd.f32 %v1846, %v2270
      %v2272 = vpop.f32.mrf.mxu0
      %v2273 = vpop.f32.mrf.mxu0
      %v2274 = vadd.f32 %v1849, %v2273
      %v2275 = vpop.f32.mrf.mxu0
      %2276 = vmatprep.mubr.bf16.mxu0 0
      %2277 = vmatmul.mubr.bf16.gmra.mxu0 %v1568
      %v2278 = vpop.f32.mrf.mxu0
      %v2279 = vadd.f32 %v1854, %v2278
      %v2280 = vpop.f32.mrf.mxu0
      %v2281 = vpop.f32.mrf.mxu0
      %v2282 = vadd.f32 %v1857, %v2281
      %v2283 = vpop.f32.mrf.mxu0
      %2284 = vmatprep.mubr.bf16.mxu0 0
      %2285 = vmatmul.mubr.bf16.gmra.mxu0 %v1571
      %v2286 = vpop.f32.mrf.mxu0
      %v2287 = vadd.f32 %v1862, %v2286
      %v2288 = vpop.f32.mrf.mxu0
      %v2289 = vpop.f32.mrf.mxu0
      %v2290 = vadd.f32 %v1865, %v2289
      %v2291 = vpop.f32.mrf.mxu0
      %2292 = vmatprep.mubr.bf16.mxu0 0
      %2293 = vmatmul.mubr.bf16.gmra.mxu0 %v1574
      %v2294 = vpop.f32.mrf.mxu0
      %v2295 = vadd.f32 %v1870, %v2294
      %v2296 = vpop.f32.mrf.mxu0
      %v2297 = vpop.f32.mrf.mxu0
      %v2298 = vadd.f32 %v1873, %v2297
      %v2299 = vpop.f32.mrf.mxu0
      %2300 = vmatprep.mubr.bf16.mxu0 0
      %2301 = vmatmul.mubr.bf16.gmra.mxu0 %v1577
      %v2302 = vpop.f32.mrf.mxu0
      %v2303 = vadd.f32 %v1878, %v2302
      %v2304 = vpop.f32.mrf.mxu0
      %v2305 = vpop.f32.mrf.mxu0
      %v2306 = vadd.f32 %v1881, %v2305
      %v2307 = vpop.f32.mrf.mxu0
      %2308 = vmatprep.mubr.bf16.mxu0 0
      %2309 = vmatmul.mubr.bf16.gmra.mxu0 %v1580
      %v2310 = vpop.f32.mrf.mxu0
      %v2311 = vadd.f32 %v1886, %v2310
      %v2312 = vpop.f32.mrf.mxu0
      %v2313 = vpop.f32.mrf.mxu0
      %v2314 = vadd.f32 %v1889, %v2313
      %v2315 = vpop.f32.mrf.mxu0
      %2316 = vmatprep.mubr.bf16.mxu0 0
      %2317 = vmatmul.mubr.bf16.gmra.mxu0 %v1583
      %v2318 = vpop.f32.mrf.mxu0
      %v2319 = vadd.f32 %v1894, %v2318
      %v2320 = vpop.f32.mrf.mxu0
      %v2321 = vpop.f32.mrf.mxu0
      %v2322 = vadd.f32 %v1897, %v2321
      %v2323 = vpop.f32.mrf.mxu0
      %2324 = vmatprep.mubr.bf16.mxu0 0
      %2325 = vmatmul.mubr.bf16.gmra.mxu0 %v1586
      %v2326 = vpop.f32.mrf.mxu0
      %v2327 = vadd.f32 %v1902, %v2326
      %v2328 = vpop.f32.mrf.mxu0
      %v2329 = vpop.f32.mrf.mxu0
      %v2330 = vadd.f32 %v1905, %v2329
      %v2331 = vpop.f32.mrf.mxu0
      %2332 = vmatprep.mubr.bf16.mxu0 0
      %2333 = vmatmul.mubr.bf16.gmra.mxu0 %v1589
      %v2334 = vpop.f32.mrf.mxu0
      %v2335 = vadd.f32 %v1910, %v2334
      %v2336 = vpop.f32.mrf.mxu0
      %v2337 = vpop.f32.mrf.mxu0
      %v2338 = vadd.f32 %v1913, %v2337
      %v2339 = vpop.f32.mrf.mxu0
      %2340 = vmatprep.mubr.bf16.mxu0 0
      %2341 = vmatmul.mubr.bf16.gmra.mxu0 %v1592
      %v2342 = vpop.f32.mrf.mxu0
      %v2343 = vadd.f32 %v1918, %v2342
      %v2344 = vpop.f32.mrf.mxu0
      %v2345 = vpop.f32.mrf.mxu0
      %v2346 = vadd.f32 %v1921, %v2345
      %v2347 = vpop.f32.mrf.mxu0
      %2348 = vmatprep.mubr.bf16.mxu0 0
      %2349 = vmatmul.mubr.bf16.gmra.mxu0 %v1595
      %v2350 = vpop.f32.mrf.mxu0
      %v2351 = vadd.f32 %v1926, %v2350
      %v2352 = vpop.f32.mrf.mxu0
      %v2353 = vpop.f32.mrf.mxu0
      %v2354 = vadd.f32 %v1929, %v2353
      %v2355 = vpop.f32.mrf.mxu0
      %2356 = vmatprep.mubr.bf16.mxu0 0
      %2357 = vmatmul.mubr.bf16.gmra.mxu0 %v1598
      %v2358 = vpop.f32.mrf.mxu0
      %v2359 = vadd.f32 %v1934, %v2358
      %v2360 = vpop.f32.mrf.mxu0
      %v2361 = vpop.f32.mrf.mxu0
      %v2362 = vadd.f32 %v1937, %v2361
      %v2363 = vpop.f32.mrf.mxu0
      %2364 = vmatprep.mubr.bf16.mxu0 0
      %2365 = vmatmul.mubr.bf16.gmra.mxu0 %v1601
      %v2366 = vpop.f32.mrf.mxu0
      %v2367 = vadd.f32 %v1942, %v2366
      %v2368 = vpop.f32.mrf.mxu0
      %v2369 = vpop.f32.mrf.mxu0
      %v2370 = vadd.f32 %v1945, %v2369
      %v2371 = vpop.f32.mrf.mxu0
      %2372 = vmatprep.mubr.bf16.mxu0 0
      %2373 = vmatmul.mubr.bf16.gmra.mxu0 %v1604
      %v2374 = vpop.f32.mrf.mxu0
      %v2375 = vadd.f32 %v1950, %v2374
      %v2376 = vpop.f32.mrf.mxu0
      %v2377 = vpop.f32.mrf.mxu0
      %v2378 = vadd.f32 %v1953, %v2377
      %v2379 = vpop.f32.mrf.mxu0
      %2380 = vmatprep.mubr.bf16.mxu0 0
      %2381 = vmatmul.mubr.bf16.gmra.mxu0 %v1607
      %v2382 = vpop.f32.mrf.mxu0
      %v2383 = vadd.f32 %v1958, %v2382
      %v2384 = vpop.f32.mrf.mxu0
      %v2385 = vpop.f32.mrf.mxu0
      %v2386 = vadd.f32 %v1961, %v2385
      %v2387 = vpop.f32.mrf.mxu0
      %2388 = vmatprep.mubr.bf16.mxu0 0
      %2389 = vmatmul.mubr.bf16.gmra.mxu0 %v1610
      %v2390 = vpop.f32.mrf.mxu0
      %v2391 = vadd.f32 %v1966, %v2390
      %v2392 = vpop.f32.mrf.mxu0
      %v2393 = vpop.f32.mrf.mxu0
      %v2394 = vadd.f32 %v1969, %v2393
      %v2395 = vpop.f32.mrf.mxu0
      %2396 = vmatprep.mubr.bf16.mxu0 0
      %2397 = vmatmul.mubr.bf16.gmra.mxu0 %v1613
      %v2398 = vpop.f32.mrf.mxu0
      %v2399 = vadd.f32 %v1974, %v2398
      %v2400 = vpop.f32.mrf.mxu0
      %v2401 = vpop.f32.mrf.mxu0
      %v2402 = vadd.f32 %v1977, %v2401
      %v2403 = vpop.f32.mrf.mxu0
      %2404 = vmatprep.mubr.bf16.mxu0 0
      %2405 = vmatmul.mubr.bf16.gmra.mxu0 %v1616
      %v2406 = vpop.f32.mrf.mxu0
      %v2407 = vadd.f32 %v1982, %v2406
      %v2408 = vpop.f32.mrf.mxu0
      %v2409 = vpop.f32.mrf.mxu0
      %v2410 = vadd.f32 %v1985, %v2409
      %v2411 = vpop.f32.mrf.mxu0
      %2412 = vmatprep.mubr.bf16.mxu0 0
      %2413 = vmatmul.mubr.bf16.gmra.mxu0 %v1619
      %v2414 = vpop.f32.mrf.mxu0
      %v2415 = vadd.f32 %v1990, %v2414
      %v2416 = vpop.f32.mrf.mxu0
      %v2417 = vpop.f32.mrf.mxu0
      %v2418 = vadd.f32 %v1993, %v2417
      %v2419 = vpop.f32.mrf.mxu0
      %2420 = vmatprep.mubr.bf16.mxu0 0
      %2421 = vmatmul.mubr.bf16.gmra.mxu0 %v1622
      %v2422 = vpop.f32.mrf.mxu0
      %v2423 = vadd.f32 %v1998, %v2422
      %v2424 = vpop.f32.mrf.mxu0
      %v2425 = vpop.f32.mrf.mxu0
      %v2426 = vadd.f32 %v2001, %v2425
      %v2427 = vpop.f32.mrf.mxu0
      %2428 = vmatprep.mubr.bf16.mxu0 0
      %2429 = vmatmul.mubr.bf16.gmra.mxu0 %v1625
      %v2430 = vpop.f32.mrf.mxu0
      %v2431 = vadd.f32 %v2006, %v2430
      %v2432 = vpop.f32.mrf.mxu0
      %v2433 = vpop.f32.mrf.mxu0
      %v2434 = vadd.f32 %v2009, %v2433
      %v2435 = vpop.f32.mrf.mxu0
      %2436 = vmatprep.mubr.bf16.mxu0 0
      %2437 = vmatmul.mubr.bf16.gmra.mxu0 %v1628
      %v2438 = vpop.f32.mrf.mxu0
      %v2439 = vadd.f32 %v2014, %v2438
      %v2440 = vpop.f32.mrf.mxu0
      %v2441 = vpop.f32.mrf.mxu0
      %v2442 = vadd.f32 %v2017, %v2441
      %v2443 = vpop.f32.mrf.mxu0
      %2444 = vmatprep.mubr.bf16.mxu0 0
      %2445 = vmatmul.mubr.bf16.gmra.mxu0 %v1631
      %v2446 = vpop.f32.mrf.mxu0
      %v2447 = vadd.f32 %v2022, %v2446
      %v2448 = vpop.f32.mrf.mxu0
      %v2449 = vpop.f32.mrf.mxu0
      %v2450 = vadd.f32 %v2025, %v2449
      %v2451 = vpop.f32.mrf.mxu0
      %2452 = vmatprep.mubr.bf16.mxu0 0
      %2453 = vmatmul.mubr.bf16.gmra.mxu0 %v1634
      %v2454 = vpop.f32.mrf.mxu0
      %v2455 = vadd.f32 %v2030, %v2454
      %v2456 = vpop.f32.mrf.mxu0
      %v2457 = vpop.f32.mrf.mxu0
      %v2458 = vadd.f32 %v2033, %v2457
      %v2459 = vpop.f32.mrf.mxu0
      %2460 = vmatprep.mubr.bf16.mxu0 0
      %2461 = vmatmul.mubr.bf16.gmra.mxu0 %v1637
      %v2462 = vpop.f32.mrf.mxu0
      %v2463 = vadd.f32 %v2038, %v2462
      %v2464 = vpop.f32.mrf.mxu0
      %v2465 = vpop.f32.mrf.mxu0
      %v2466 = vadd.f32 %v2041, %v2465
      %v2467 = vpop.f32.mrf.mxu0
      %2468 = vmatprep.mubr.bf16.mxu0 0
      %2469 = vmatmul.mubr.bf16.gmra.mxu0 %v1640
      %v2470 = vpop.f32.mrf.mxu0
      %v2471 = vadd.f32 %v2046, %v2470
      %v2472 = vpop.f32.mrf.mxu0
      %v2473 = vpop.f32.mrf.mxu0
      %v2474 = vadd.f32 %v2049, %v2473
      %v2475 = vpop.f32.mrf.mxu0
      %2476 = vmatprep.mubr.bf16.mxu0 0
      %2477 = vmatmul.mubr.bf16.gmra.mxu0 %v1643
      %v2478 = vpop.f32.mrf.mxu0
      %v2479 = vadd.f32 %v2054, %v2478
      %v2480 = vpop.f32.mrf.mxu0
      %v2481 = vpop.f32.mrf.mxu0
      %v2482 = vadd.f32 %v2057, %v2481
      %v2483 = vpop.f32.mrf.mxu0
      %2484 = vmatprep.mubr.bf16.mxu0 0
      %2485 = vmatmul.mubr.bf16.gmra.mxu0 %v1646
      %v2486 = vpop.f32.mrf.mxu0
      %v2487 = vadd.f32 %v2062, %v2486
      %v2488 = vpop.f32.mrf.mxu0
      %v2489 = vpop.f32.mrf.mxu0
      %v2490 = vadd.f32 %v2065, %v2489
      %v2491 = vpop.f32.mrf.mxu0
      %2492 = vmatprep.mubr.bf16.mxu0 0
      %2493 = vmatmul.mubr.bf16.gmra.mxu0 %v1649
      %v2494 = vpop.f32.mrf.mxu0
      %v2495 = vadd.f32 %v2070, %v2494
      %v2496 = vpop.f32.mrf.mxu0
      %v2497 = vpop.f32.mrf.mxu0
      %v2498 = vadd.f32 %v2073, %v2497
      %v2499 = vpop.f32.mrf.mxu0
      %2500 = vdwg.mxu0
      %v2501 = vadd.f32 %v330, %v2111
      %v2502 = vadd.f32 %v331, %v2114
      %v2503 = vadd.f32 %v332, %v2119
      %v2504 = vadd.f32 %v333, %v2122
      %v2505 = vadd.f32 %v334, %v2127
      %v2506 = vadd.f32 %v335, %v2130
      %v2507 = vadd.f32 %v336, %v2135
      %v2508 = vadd.f32 %v337, %v2138
      %v2509 = vadd.f32 %v338, %v2143
      %v2510 = vadd.f32 %v339, %v2146
      %v2511 = vadd.f32 %v340, %v2151
      %v2512 = vadd.f32 %v341, %v2154
      %v2513 = vadd.f32 %v342, %v2159
      %v2514 = vadd.f32 %v343, %v2162
      %v2515 = vadd.f32 %v344, %v2167
      %v2516 = vadd.f32 %v345, %v2170
      %v2517 = vadd.f32 %v346, %v2175
      %v2518 = vadd.f32 %v347, %v2178
      %v2519 = vadd.f32 %v348, %v2183
      %v2520 = vadd.f32 %v349, %v2186
      %v2521 = vadd.f32 %v350, %v2191
      %v2522 = vadd.f32 %v351, %v2194
      %v2523 = vadd.f32 %v352, %v2199
      %v2524 = vadd.f32 %v353, %v2202
      %v2525 = vadd.f32 %v354, %v2207
      %v2526 = vadd.f32 %v355, %v2210
      %v2527 = vadd.f32 %v356, %v2215
      %v2528 = vadd.f32 %v357, %v2218
      %v2529 = vadd.f32 %v358, %v2223
      %v2530 = vadd.f32 %v359, %v2226
      %v2531 = vadd.f32 %v360, %v2231
      %v2532 = vadd.f32 %v361, %v2234
      %v2533 = vadd.f32 %v362, %v2239
      %v2534 = vadd.f32 %v363, %v2242
      %v2535 = vadd.f32 %v364, %v2247
      %v2536 = vadd.f32 %v365, %v2250
      %v2537 = vadd.f32 %v366, %v2255
      %v2538 = vadd.f32 %v367, %v2258
      %v2539 = vadd.f32 %v368, %v2263
      %v2540 = vadd.f32 %v369, %v2266
      %v2541 = vadd.f32 %v370, %v2271
      %v2542 = vadd.f32 %v371, %v2274
      %v2543 = vadd.f32 %v372, %v2279
      %v2544 = vadd.f32 %v373, %v2282
      %v2545 = vadd.f32 %v374, %v2287
      %v2546 = vadd.f32 %v375, %v2290
      %v2547 = vadd.f32 %v376, %v2295
      %v2548 = vadd.f32 %v377, %v2298
      %v2549 = vadd.f32 %v378, %v2303
      %v2550 = vadd.f32 %v379, %v2306
      %v2551 = vadd.f32 %v380, %v2311
      %v2552 = vadd.f32 %v381, %v2314
      %v2553 = vadd.f32 %v382, %v2319
      %v2554 = vadd.f32 %v383, %v2322
      %v2555 = vadd.f32 %v384, %v2327
      %v2556 = vadd.f32 %v385, %v2330
      %v2557 = vadd.f32 %v386, %v2335
      %v2558 = vadd.f32 %v387, %v2338
      %v2559 = vadd.f32 %v388, %v2343
      %v2560 = vadd.f32 %v389, %v2346
      %v2561 = vadd.f32 %v390, %v2351
      %v2562 = vadd.f32 %v391, %v2354
      %v2563 = vadd.f32 %v392, %v2359
      %v2564 = vadd.f32 %v393, %v2362
      %v2565 = vadd.f32 %v394, %v2367
      %v2566 = vadd.f32 %v395, %v2370
      %v2567 = vadd.f32 %v396, %v2375
      %v2568 = vadd.f32 %v397, %v2378
      %v2569 = vadd.f32 %v398, %v2383
      %v2570 = vadd.f32 %v399, %v2386
      %v2571 = vadd.f32 %v400, %v2391
      %v2572 = vadd.f32 %v401, %v2394
      %v2573 = vadd.f32 %v402, %v2399
      %v2574 = vadd.f32 %v403, %v2402
      %v2575 = vadd.f32 %v404, %v2407
      %v2576 = vadd.f32 %v405, %v2410
      %v2577 = vadd.f32 %v406, %v2415
      %v2578 = vadd.f32 %v407, %v2418
      %v2579 = vadd.f32 %v408, %v2423
      %v2580 = vadd.f32 %v409, %v2426
      %v2581 = vadd.f32 %v410, %v2431
      %v2582 = vadd.f32 %v411, %v2434
      %v2583 = vadd.f32 %v412, %v2439
      %v2584 = vadd.f32 %v413, %v2442
      %v2585 = vadd.f32 %v414, %v2447
      %v2586 = vadd.f32 %v415, %v2450
      %v2587 = vadd.f32 %v416, %v2455
      %v2588 = vadd.f32 %v417, %v2458
      %v2589 = vadd.f32 %v418, %v2463
      %v2590 = vadd.f32 %v419, %v2466
      %v2591 = vadd.f32 %v420, %v2471
      %v2592 = vadd.f32 %v421, %v2474
      %v2593 = vadd.f32 %v422, %v2479
      %v2594 = vadd.f32 %v423, %v2482
      %v2595 = vadd.f32 %v424, %v2487
      %v2596 = vadd.f32 %v425, %v2490
      %v2597 = vadd.f32 %v426, %v2495
      %v2598 = vadd.f32 %v427, %v2498
      %2599 = vst [vmem:[#allocation2] sm:$0xff] %v2501
      %2600 = vst [vmem:[#allocation2 + $0x8] sm:$0xff] %v2502
      %2601 = vst [vmem:[#allocation2 + $0x10] sm:$0xff] %v2503
      %2602 = vst [vmem:[#allocation2 + $0x18] sm:$0xff] %v2504
      %2603 = vst [vmem:[#allocation2 + $0x20] sm:$0xff] %v2505
      %2604 = vst [vmem:[#allocation2 + $0x28] sm:$0xff] %v2506
      %2605 = vst [vmem:[#allocation2 + $0x30] sm:$0xff] %v2507
      %2606 = vst [vmem:[#allocation2 + $0x38] sm:$0xff] %v2508
      %2607 = vst [vmem:[#allocation2 + $0x40] sm:$0xff] %v2509
      %2608 = vst [vmem:[#allocation2 + $0x48] sm:$0xff] %v2510
      %2609 = vst [vmem:[#allocation2 + $0x50] sm:$0xff] %v2511
      %2610 = vst [vmem:[#allocation2 + $0x58] sm:$0xff] %v2512
      %2611 = vst [vmem:[#allocation2 + $0x60] sm:$0xff] %v2513
      %2612 = vst [vmem:[#allocation2 + $0x68] sm:$0xff] %v2514
      %2613 = vst [vmem:[#allocation2 + $0x70] sm:$0xff] %v2515
      %2614 = vst [vmem:[#allocation2 + $0x78] sm:$0xff] %v2516
      %2615 = vst [vmem:[#allocation2 + $0x80] sm:$0xff] %v2517
      %2616 = vst [vmem:[#allocation2 + $0x88] sm:$0xff] %v2518
      %2617 = vst [vmem:[#allocation2 + $0x90] sm:$0xff] %v2519
      %2618 = vst [vmem:[#allocation2 + $0x98] sm:$0xff] %v2520
      %2619 = vst [vmem:[#allocation2 + $0xa0] sm:$0xff] %v2521
      %2620 = vst [vmem:[#allocation2 + $0xa8] sm:$0xff] %v2522
      %2621 = vst [vmem:[#allocation2 + $0xb0] sm:$0xff] %v2523
      %2622 = vst [vmem:[#allocation2 + $0xb8] sm:$0xff] %v2524
      %2623 = vst [vmem:[#allocation2 + $0xc0] sm:$0xff] %v2525
      %2624 = vst [vmem:[#allocation2 + $0xc8] sm:$0xff] %v2526
      %2625 = vst [vmem:[#allocation2 + $0xd0] sm:$0xff] %v2527
      %2626 = vst [vmem:[#allocation2 + $0xd8] sm:$0xff] %v2528
      %2627 = vst [vmem:[#allocation2 + $0xe0] sm:$0xff] %v2529
      %2628 = vst [vmem:[#allocation2 + $0xe8] sm:$0xff] %v2530
      %2629 = vst [vmem:[#allocation2 + $0xf0] sm:$0xff] %v2531
      %2630 = vst [vmem:[#allocation2 + $0xf8] sm:$0xff] %v2532
      %2631 = vst [vmem:[#allocation2 + $0x100] sm:$0xff] %v2533
      %2632 = vst [vmem:[#allocation2 + $0x108] sm:$0xff] %v2534
      %2633 = vst [vmem:[#allocation2 + $0x110] sm:$0xff] %v2535
      %2634 = vst [vmem:[#allocation2 + $0x118] sm:$0xff] %v2536
      %2635 = vst [vmem:[#allocation2 + $0x120] sm:$0xff] %v2537
      %2636 = vst [vmem:[#allocation2 + $0x128] sm:$0xff] %v2538
      %2637 = vst [vmem:[#allocation2 + $0x130] sm:$0xff] %v2539
      %2638 = vst [vmem:[#allocation2 + $0x138] sm:$0xff] %v2540
      %2639 = vst [vmem:[#allocation2 + $0x140] sm:$0xff] %v2541
      %2640 = vst [vmem:[#allocation2 + $0x148] sm:$0xff] %v2542
      %2641 = vst [vmem:[#allocation2 + $0x150] sm:$0xff] %v2543
      %2642 = vst [vmem:[#allocation2 + $0x158] sm:$0xff] %v2544
      %2643 = vst [vmem:[#allocation2 + $0x160] sm:$0xff] %v2545
      %2644 = vst [vmem:[#allocation2 + $0x168] sm:$0xff] %v2546
      %2645 = vst [vmem:[#allocation2 + $0x170] sm:$0xff] %v2547
      %2646 = vst [vmem:[#allocation2 + $0x178] sm:$0xff] %v2548
      %2647 = vst [vmem:[#allocation2 + $0x180] sm:$0xff] %v2549
      %2648 = vst [vmem:[#allocation2 + $0x188] sm:$0xff] %v2550
      %2649 = vst [vmem:[#allocation2 + $0x190] sm:$0xff] %v2551
      %2650 = vst [vmem:[#allocation2 + $0x198] sm:$0xff] %v2552
      %2651 = vst [vmem:[#allocation2 + $0x1a0] sm:$0xff] %v2553
      %2652 = vst [vmem:[#allocation2 + $0x1a8] sm:$0xff] %v2554
      %2653 = vst [vmem:[#allocation2 + $0x1b0] sm:$0xff] %v2555
      %2654 = vst [vmem:[#allocation2 + $0x1b8] sm:$0xff] %v2556
      %2655 = vst [vmem:[#allocation2 + $0x1c0] sm:$0xff] %v2557
      %2656 = vst [vmem:[#allocation2 + $0x1c8] sm:$0xff] %v2558
      %2657 = vst [vmem:[#allocation2 + $0x1d0] sm:$0xff] %v2559
      %2658 = vst [vmem:[#allocation2 + $0x1d8] sm:$0xff] %v2560
      %2659 = vst [vmem:[#allocation2 + $0x1e0] sm:$0xff] %v2561
      %2660 = vst [vmem:[#allocation2 + $0x1e8] sm:$0xff] %v2562
      %2661 = vst [vmem:[#allocation2 + $0x1f0] sm:$0xff] %v2563
      %2662 = vst [vmem:[#allocation2 + $0x1f8] sm:$0xff] %v2564
      %2663 = vst [vmem:[#allocation2 + $0x200] sm:$0xff] %v2565
      %2664 = vst [vmem:[#allocation2 + $0x208] sm:$0xff] %v2566
      %2665 = vst [vmem:[#allocation2 + $0x210] sm:$0xff] %v2567
      %2666 = vst [vmem:[#allocation2 + $0x218] sm:$0xff] %v2568
      %2667 = vst [vmem:[#allocation2 + $0x220] sm:$0xff] %v2569
      %2668 = vst [vmem:[#allocation2 + $0x228] sm:$0xff] %v2570
      %2669 = vst [vmem:[#allocation2 + $0x230] sm:$0xff] %v2571
      %2670 = vst [vmem:[#allocation2 + $0x238] sm:$0xff] %v2572
      %2671 = vst [vmem:[#allocation2 + $0x240] sm:$0xff] %v2573
      %2672 = vst [vmem:[#allocation2 + $0x248] sm:$0xff] %v2574
      %2673 = vst [vmem:[#allocation2 + $0x250] sm:$0xff] %v2575
      %2674 = vst [vmem:[#allocation2 + $0x258] sm:$0xff] %v2576
      %2675 = vst [vmem:[#allocation2 + $0x260] sm:$0xff] %v2577
      %2676 = vst [vmem:[#allocation2 + $0x268] sm:$0xff] %v2578
      %2677 = vst [vmem:[#allocation2 + $0x270] sm:$0xff] %v2579
      %2678 = vst [vmem:[#allocation2 + $0x278] sm:$0xff] %v2580
      %2679 = vst [vmem:[#allocation2 + $0x280] sm:$0xff] %v2581
      %2680 = vst [vmem:[#allocation2 + $0x288] sm:$0xff] %v2582
      %2681 = vst [vmem:[#allocation2 + $0x290] sm:$0xff] %v2583
      %2682 = vst [vmem:[#allocation2 + $0x298] sm:$0xff] %v2584
      %2683 = vst [vmem:[#allocation2 + $0x2a0] sm:$0xff] %v2585
      %2684 = vst [vmem:[#allocation2 + $0x2a8] sm:$0xff] %v2586
      %2685 = vst [vmem:[#allocation2 + $0x2b0] sm:$0xff] %v2587
      %2686 = vst [vmem:[#allocation2 + $0x2b8] sm:$0xff] %v2588
      %2687 = vst [vmem:[#allocation2 + $0x2c0] sm:$0xff] %v2589
      %2688 = vst [vmem:[#allocation2 + $0x2c8] sm:$0xff] %v2590
      %2689 = vst [vmem:[#allocation2 + $0x2d0] sm:$0xff] %v2591
      %2690 = vst [vmem:[#allocation2 + $0x2d8] sm:$0xff] %v2592
      %2691 = vst [vmem:[#allocation2 + $0x2e0] sm:$0xff] %v2593
      %2692 = vst [vmem:[#allocation2 + $0x2e8] sm:$0xff] %v2594
      %2693 = vst [vmem:[#allocation2 + $0x2f0] sm:$0xff] %v2595
      %2694 = vst [vmem:[#allocation2 + $0x2f8] sm:$0xff] %v2596
      %2695 = vst [vmem:[#allocation2 + $0x300] sm:$0xff] %v2597
      %2696 = vst [vmem:[#allocation2 + $0x308] sm:$0xff] %v2598
      // Predicated region
      $region37: #{faster_rcnn_forward.11} parent=31 // pred_check
        %p2697 = pneg %p228
      $region38: #{faster_rcnn_forward.11} parent=31 // pred_check_branch
        %2699 = sbr.rel (%p2697) target = $region40
      $region39: #{faster_rcnn_forward.11} parent=31 // pred_region
        %v2700 = vld [vmem:[#allocation2] sm:$0xff]
        %v2701 = vld [vmem:[#allocation2 + $0x8] sm:$0xff]
        %v2702 = vld [vmem:[#allocation2 + $0x10] sm:$0xff]
        %v2703 = vld [vmem:[#allocation2 + $0x18] sm:$0xff]
        %v2704 = vld [vmem:[#allocation2 + $0x20] sm:$0xff]
        %v2705 = vld [vmem:[#allocation2 + $0x28] sm:$0xff]
        %v2706 = vld [vmem:[#allocation2 + $0x30] sm:$0xff]
        %v2707 = vld [vmem:[#allocation2 + $0x38] sm:$0xff]
        %v2708 = vld [vmem:[#allocation2 + $0x40] sm:$0xff]
        %v2709 = vld [vmem:[#allocation2 + $0x48] sm:$0xff]
        %v2710 = vld [vmem:[#allocation2 + $0x50] sm:$0xff]
        %v2711 = vld [vmem:[#allocation2 + $0x58] sm:$0xff]
        %v2712 = vld [vmem:[#allocation2 + $0x60] sm:$0xff]
        %v2713 = vld [vmem:[#allocation2 + $0x68] sm:$0xff]
        %v2714 = vld [vmem:[#allocation2 + $0x70] sm:$0xff]
        %v2715 = vld [vmem:[#allocation2 + $0x78] sm:$0xff]
        %v2716 = vld [vmem:[#allocation2 + $0x80] sm:$0xff]
        %v2717 = vld [vmem:[#allocation2 + $0x88] sm:$0xff]
        %v2718 = vld [vmem:[#allocation2 + $0x90] sm:$0xff]
        %v2719 = vld [vmem:[#allocation2 + $0x98] sm:$0xff]
        %v2720 = vld [vmem:[#allocation2 + $0xa0] sm:$0xff]
        %v2721 = vld [vmem:[#allocation2 + $0xa8] sm:$0xff]
        %v2722 = vld [vmem:[#allocation2 + $0xb0] sm:$0xff]
        %v2723 = vld [vmem:[#allocation2 + $0xb8] sm:$0xff]
        %v2724 = vld [vmem:[#allocation2 + $0xc0] sm:$0xff]
        %v2725 = vld [vmem:[#allocation2 + $0xc8] sm:$0xff]
        %v2726 = vld [vmem:[#allocation2 + $0xd0] sm:$0xff]
        %v2727 = vld [vmem:[#allocation2 + $0xd8] sm:$0xff]
        %v2728 = vld [vmem:[#allocation2 + $0xe0] sm:$0xff]
        %v2729 = vld [vmem:[#allocation2 + $0xe8] sm:$0xff]
        %v2730 = vld [vmem:[#allocation2 + $0xf0] sm:$0xff]
        %v2731 = vld [vmem:[#allocation2 + $0xf8] sm:$0xff]
        %v2732 = vld [vmem:[#allocation2 + $0x100] sm:$0xff]
        %v2733 = vld [vmem:[#allocation2 + $0x108] sm:$0xff]
        %v2734 = vld [vmem:[#allocation2 + $0x110] sm:$0xff]
        %v2735 = vld [vmem:[#allocation2 + $0x118] sm:$0xff]
        %v2736 = vld [vmem:[#allocation2 + $0x120] sm:$0xff]
        %v2737 = vld [vmem:[#allocation2 + $0x128] sm:$0xff]
        %v2738 = vld [vmem:[#allocation2 + $0x130] sm:$0xff]
        %v2739 = vld [vmem:[#allocation2 + $0x138] sm:$0xff]
        %v2740 = vld [vmem:[#allocation2 + $0x140] sm:$0xff]
        %v2741 = vld [vmem:[#allocation2 + $0x148] sm:$0xff]
        %v2742 = vld [vmem:[#allocation2 + $0x150] sm:$0xff]
        %v2743 = vld [vmem:[#allocation2 + $0x158] sm:$0xff]
        %v2744 = vld [vmem:[#allocation2 + $0x160] sm:$0xff]
        %v2745 = vld [vmem:[#allocation2 + $0x168] sm:$0xff]
        %v2746 = vld [vmem:[#allocation2 + $0x170] sm:$0xff]
        %v2747 = vld [vmem:[#allocation2 + $0x178] sm:$0xff]
        %v2748 = vld [vmem:[#allocation2 + $0x180] sm:$0xff]
        %v2749 = vld [vmem:[#allocation2 + $0x188] sm:$0xff]
        %v2750 = vld [vmem:[#allocation2 + $0x190] sm:$0xff]
        %v2751 = vld [vmem:[#allocation2 + $0x198] sm:$0xff]
        %v2752 = vld [vmem:[#allocation2 + $0x1a0] sm:$0xff]
        %v2753 = vld [vmem:[#allocation2 + $0x1a8] sm:$0xff]
        %v2754 = vld [vmem:[#allocation2 + $0x1b0] sm:$0xff]
        %v2755 = vld [vmem:[#allocation2 + $0x1b8] sm:$0xff]
        %v2756 = vld [vmem:[#allocation2 + $0x1c0] sm:$0xff]
        %v2757 = vld [vmem:[#allocation2 + $0x1c8] sm:$0xff]
        %v2758 = vld [vmem:[#allocation2 + $0x1d0] sm:$0xff]
        %v2759 = vld [vmem:[#allocation2 + $0x1d8] sm:$0xff]
        %v2760 = vld [vmem:[#allocation2 + $0x1e0] sm:$0xff]
        %v2761 = vld [vmem:[#allocation2 + $0x1e8] sm:$0xff]
        %v2762 = vld [vmem:[#allocation2 + $0x1f0] sm:$0xff]
        %v2763 = vld [vmem:[#allocation2 + $0x1f8] sm:$0xff]
        %v2764 = vld [vmem:[#allocation2 + $0x200] sm:$0xff]
        %v2765 = vld [vmem:[#allocation2 + $0x208] sm:$0xff]
        %v2766 = vld [vmem:[#allocation2 + $0x210] sm:$0xff]
        %v2767 = vld [vmem:[#allocation2 + $0x218] sm:$0xff]
        %v2768 = vld [vmem:[#allocation2 + $0x220] sm:$0xff]
        %v2769 = vld [vmem:[#allocation2 + $0x228] sm:$0xff]
        %v2770 = vld [vmem:[#allocation2 + $0x230] sm:$0xff]
        %v2771 = vld [vmem:[#allocation2 + $0x238] sm:$0xff]
        %v2772 = vld [vmem:[#allocation2 + $0x240] sm:$0xff]
        %v2773 = vld [vmem:[#allocation2 + $0x248] sm:$0xff]
        %v2774 = vld [vmem:[#allocation2 + $0x250] sm:$0xff]
        %v2775 = vld [vmem:[#allocation2 + $0x258] sm:$0xff]
        %v2776 = vld [vmem:[#allocation2 + $0x260] sm:$0xff]
        %v2777 = vld [vmem:[#allocation2 + $0x268] sm:$0xff]
        %v2778 = vld [vmem:[#allocation2 + $0x270] sm:$0xff]
        %v2779 = vld [vmem:[#allocation2 + $0x278] sm:$0xff]
        %v2780 = vld [vmem:[#allocation2 + $0x280] sm:$0xff]
        %v2781 = vld [vmem:[#allocation2 + $0x288] sm:$0xff]
        %v2782 = vld [vmem:[#allocation2 + $0x290] sm:$0xff]
        %v2783 = vld [vmem:[#allocation2 + $0x298] sm:$0xff]
        %v2784 = vld [vmem:[#allocation2 + $0x2a0] sm:$0xff]
        %v2785 = vld [vmem:[#allocation2 + $0x2a8] sm:$0xff]
        %v2786 = vld [vmem:[#allocation2 + $0x2b0] sm:$0xff]
        %v2787 = vld [vmem:[#allocation2 + $0x2b8] sm:$0xff]
        %v2788 = vld [vmem:[#allocation2 + $0x2c0] sm:$0xff]
        %v2789 = vld [vmem:[#allocation2 + $0x2c8] sm:$0xff]
        %v2790 = vld [vmem:[#allocation2 + $0x2d0] sm:$0xff]
        %v2791 = vld [vmem:[#allocation2 + $0x2d8] sm:$0xff]
        %v2792 = vld [vmem:[#allocation2 + $0x2e0] sm:$0xff]
        %v2793 = vld [vmem:[#allocation2 + $0x2e8] sm:$0xff]
        %v2794 = vld [vmem:[#allocation2 + $0x2f0] sm:$0xff]
        %v2795 = vld [vmem:[#allocation2 + $0x2f8] sm:$0xff]
        %v2796 = vld [vmem:[#allocation2 + $0x300] sm:$0xff]
        %v2797 = vld [vmem:[#allocation2 + $0x308] sm:$0xff]
        %v2798 = vld [vmem:[%s2] sm:$0x1]
        %v2800 = vlaneseq
        %v2801 = vshrl.u32 %v2800, 7
        %v2802 = vsub.s32 0, %v2801
        %v2803 = vrot.slane %v2798, %v2802
        %v2805 = vadd.f32 %v2700, %v2803
        %v2806 = vadd.f32 %v2701, %v2803
        %v2807 = vadd.f32 %v2702, %v2803
        %v2808 = vadd.f32 %v2703, %v2803
        %v2809 = vadd.f32 %v2704, %v2803
        %v2810 = vadd.f32 %v2705, %v2803
        %v2811 = vadd.f32 %v2706, %v2803
        %v2812 = vadd.f32 %v2707, %v2803
        %v2813 = vadd.f32 %v2708, %v2803
        %v2814 = vadd.f32 %v2709, %v2803
        %v2815 = vadd.f32 %v2710, %v2803
        %v2816 = vadd.f32 %v2711, %v2803
        %v2817 = vadd.f32 %v2712, %v2803
        %v2818 = vadd.f32 %v2713, %v2803
        %v2819 = vadd.f32 %v2714, %v2803
        %v2820 = vadd.f32 %v2715, %v2803
        %v2821 = vadd.f32 %v2716, %v2803
        %v2822 = vadd.f32 %v2717, %v2803
        %v2823 = vadd.f32 %v2718, %v2803
        %v2824 = vadd.f32 %v2719, %v2803
        %v2825 = vadd.f32 %v2720, %v2803
        %v2826 = vadd.f32 %v2721, %v2803
        %v2827 = vadd.f32 %v2722, %v2803
        %v2828 = vadd.f32 %v2723, %v2803
        %v2829 = vadd.f32 %v2724, %v2803
        %v2830 = vadd.f32 %v2725, %v2803
        %v2831 = vadd.f32 %v2726, %v2803
        %v2832 = vadd.f32 %v2727, %v2803
        %v2833 = vadd.f32 %v2728, %v2803
        %v2834 = vadd.f32 %v2729, %v2803
        %v2835 = vadd.f32 %v2730, %v2803
        %v2836 = vadd.f32 %v2731, %v2803
        %v2837 = vadd.f32 %v2732, %v2803
        %v2838 = vadd.f32 %v2733, %v2803
        %v2839 = vadd.f32 %v2734, %v2803
        %v2840 = vadd.f32 %v2735, %v2803
        %v2841 = vadd.f32 %v2736, %v2803
        %v2842 = vadd.f32 %v2737, %v2803
        %v2843 = vadd.f32 %v2738, %v2803
        %v2844 = vadd.f32 %v2739, %v2803
        %v2845 = vadd.f32 %v2740, %v2803
        %v2846 = vadd.f32 %v2741, %v2803
        %v2847 = vadd.f32 %v2742, %v2803
        %v2848 = vadd.f32 %v2743, %v2803
        %v2849 = vadd.f32 %v2744, %v2803
        %v2850 = vadd.f32 %v2745, %v2803
        %v2851 = vadd.f32 %v2746, %v2803
        %v2852 = vadd.f32 %v2747, %v2803
        %v2853 = vadd.f32 %v2748, %v2803
        %v2854 = vadd.f32 %v2749, %v2803
        %v2855 = vadd.f32 %v2750, %v2803
        %v2856 = vadd.f32 %v2751, %v2803
        %v2857 = vadd.f32 %v2752, %v2803
        %v2858 = vadd.f32 %v2753, %v2803
        %v2859 = vadd.f32 %v2754, %v2803
        %v2860 = vadd.f32 %v2755, %v2803
        %v2861 = vadd.f32 %v2756, %v2803
        %v2862 = vadd.f32 %v2757, %v2803
        %v2863 = vadd.f32 %v2758, %v2803
        %v2864 = vadd.f32 %v2759, %v2803
        %v2865 = vadd.f32 %v2760, %v2803
        %v2866 = vadd.f32 %v2761, %v2803
        %v2867 = vadd.f32 %v2762, %v2803
        %v2868 = vadd.f32 %v2763, %v2803
        %v2869 = vadd.f32 %v2764, %v2803
        %v2870 = vadd.f32 %v2765, %v2803
        %v2871 = vadd.f32 %v2766, %v2803
        %v2872 = vadd.f32 %v2767, %v2803
        %v2873 = vadd.f32 %v2768, %v2803
        %v2874 = vadd.f32 %v2769, %v2803
        %v2875 = vadd.f32 %v2770, %v2803
        %v2876 = vadd.f32 %v2771, %v2803
        %v2877 = vadd.f32 %v2772, %v2803
        %v2878 = vadd.f32 %v2773, %v2803
        %v2879 = vadd.f32 %v2774, %v2803
        %v2880 = vadd.f32 %v2775, %v2803
        %v2881 = vadd.f32 %v2776, %v2803
        %v2882 = vadd.f32 %v2777, %v2803
        %v2883 = vadd.f32 %v2778, %v2803
        %v2884 = vadd.f32 %v2779, %v2803
        %v2885 = vadd.f32 %v2780, %v2803
        %v2886 = vadd.f32 %v2781, %v2803
        %v2887 = vadd.f32 %v2782, %v2803
        %v2888 = vadd.f32 %v2783, %v2803
        %v2889 = vadd.f32 %v2784, %v2803
        %v2890 = vadd.f32 %v2785, %v2803
        %v2891 = vadd.f32 %v2786, %v2803
        %v2892 = vadd.f32 %v2787, %v2803
        %v2893 = vadd.f32 %v2788, %v2803
        %v2894 = vadd.f32 %v2789, %v2803
        %v2895 = vadd.f32 %v2790, %v2803
        %v2896 = vadd.f32 %v2791, %v2803
        %v2897 = vadd.f32 %v2792, %v2803
        %v2898 = vadd.f32 %v2793, %v2803
        %v2899 = vadd.f32 %v2794, %v2803
        %v2900 = vadd.f32 %v2795, %v2803
        %v2901 = vadd.f32 %v2796, %v2803
        %v2902 = vadd.f32 %v2797, %v2803
        %v2903 = vmax.f32 %v2805, 0.0
        %v2904 = vmax.f32 %v2806, 0.0
        %v2905 = vmax.f32 %v2807, 0.0
        %v2906 = vmax.f32 %v2808, 0.0
        %v2907 = vmax.f32 %v2809, 0.0
        %v2908 = vmax.f32 %v2810, 0.0
        %v2909 = vmax.f32 %v2811, 0.0
        %v2910 = vmax.f32 %v2812, 0.0
        %v2911 = vmax.f32 %v2813, 0.0
        %v2912 = vmax.f32 %v2814, 0.0
        %v2913 = vmax.f32 %v2815, 0.0
        %v2914 = vmax.f32 %v2816, 0.0
        %v2915 = vmax.f32 %v2817, 0.0
        %v2916 = vmax.f32 %v2818, 0.0
        %v2917 = vmax.f32 %v2819, 0.0
        %v2918 = vmax.f32 %v2820, 0.0
        %v2919 = vmax.f32 %v2821, 0.0
        %v2920 = vmax.f32 %v2822, 0.0
        %v2921 = vmax.f32 %v2823, 0.0
        %v2922 = vmax.f32 %v2824, 0.0
        %v2923 = vmax.f32 %v2825, 0.0
        %v2924 = vmax.f32 %v2826, 0.0
        %v2925 = vmax.f32 %v2827, 0.0
        %v2926 = vmax.f32 %v2828, 0.0
        %v2927 = vmax.f32 %v2829, 0.0
        %v2928 = vmax.f32 %v2830, 0.0
        %v2929 = vmax.f32 %v2831, 0.0
        %v2930 = vmax.f32 %v2832, 0.0
        %v2931 = vmax.f32 %v2833, 0.0
        %v2932 = vmax.f32 %v2834, 0.0
        %v2933 = vmax.f32 %v2835, 0.0
        %v2934 = vmax.f32 %v2836, 0.0
        %v2935 = vmax.f32 %v2837, 0.0
        %v2936 = vmax.f32 %v2838, 0.0
        %v2937 = vmax.f32 %v2839, 0.0
        %v2938 = vmax.f32 %v2840, 0.0
        %v2939 = vmax.f32 %v2841, 0.0
        %v2940 = vmax.f32 %v2842, 0.0
        %v2941 = vmax.f32 %v2843, 0.0
        %v2942 = vmax.f32 %v2844, 0.0
        %v2943 = vmax.f32 %v2845, 0.0
        %v2944 = vmax.f32 %v2846, 0.0
        %v2945 = vmax.f32 %v2847, 0.0
        %v2946 = vmax.f32 %v2848, 0.0
        %v2947 = vmax.f32 %v2849, 0.0
        %v2948 = vmax.f32 %v2850, 0.0
        %v2949 = vmax.f32 %v2851, 0.0
        %v2950 = vmax.f32 %v2852, 0.0
        %v2951 = vmax.f32 %v2853, 0.0
        %v2952 = vmax.f32 %v2854, 0.0
        %v2953 = vmax.f32 %v2855, 0.0
        %v2954 = vmax.f32 %v2856, 0.0
        %v2955 = vmax.f32 %v2857, 0.0
        %v2956 = vmax.f32 %v2858, 0.0
        %v2957 = vmax.f32 %v2859, 0.0
        %v2958 = vmax.f32 %v2860, 0.0
        %v2959 = vmax.f32 %v2861, 0.0
        %v2960 = vmax.f32 %v2862, 0.0
        %v2961 = vmax.f32 %v2863, 0.0
        %v2962 = vmax.f32 %v2864, 0.0
        %v2963 = vmax.f32 %v2865, 0.0
        %v2964 = vmax.f32 %v2866, 0.0
        %v2965 = vmax.f32 %v2867, 0.0
        %v2966 = vmax.f32 %v2868, 0.0
        %v2967 = vmax.f32 %v2869, 0.0
        %v2968 = vmax.f32 %v2870, 0.0
        %v2969 = vmax.f32 %v2871, 0.0
        %v2970 = vmax.f32 %v2872, 0.0
        %v2971 = vmax.f32 %v2873, 0.0
        %v2972 = vmax.f32 %v2874, 0.0
        %v2973 = vmax.f32 %v2875, 0.0
        %v2974 = vmax.f32 %v2876, 0.0
        %v2975 = vmax.f32 %v2877, 0.0
        %v2976 = vmax.f32 %v2878, 0.0
        %v2977 = vmax.f32 %v2879, 0.0
        %v2978 = vmax.f32 %v2880, 0.0
        %v2979 = vmax.f32 %v2881, 0.0
        %v2980 = vmax.f32 %v2882, 0.0
        %v2981 = vmax.f32 %v2883, 0.0
        %v2982 = vmax.f32 %v2884, 0.0
        %v2983 = vmax.f32 %v2885, 0.0
        %v2984 = vmax.f32 %v2886, 0.0
        %v2985 = vmax.f32 %v2887, 0.0
        %v2986 = vmax.f32 %v2888, 0.0
        %v2987 = vmax.f32 %v2889, 0.0
        %v2988 = vmax.f32 %v2890, 0.0
        %v2989 = vmax.f32 %v2891, 0.0
        %v2990 = vmax.f32 %v2892, 0.0
        %v2991 = vmax.f32 %v2893, 0.0
        %v2992 = vmax.f32 %v2894, 0.0
        %v2993 = vmax.f32 %v2895, 0.0
        %v2994 = vmax.f32 %v2896, 0.0
        %v2995 = vmax.f32 %v2897, 0.0
        %v2996 = vmax.f32 %v2898, 0.0
        %v2997 = vmax.f32 %v2899, 0.0
        %v2998 = vmax.f32 %v2900, 0.0
        %v2999 = vmax.f32 %v2901, 0.0
        %v3000 = vmax.f32 %v2902, 0.0
        %v3001 = vpack.c.bf16 %v2904, %v2903
        %v3002 = vpack.c.bf16 %v2906, %v2905
        %v3003 = vpack.c.bf16 %v2908, %v2907
        %v3004 = vpack.c.bf16 %v2910, %v2909
        %v3005 = vpack.c.bf16 %v2912, %v2911
        %v3006 = vpack.c.bf16 %v2914, %v2913
        %v3007 = vpack.c.bf16 %v2916, %v2915
        %v3008 = vpack.c.bf16 %v2918, %v2917
        %v3009 = vpack.c.bf16 %v2920, %v2919
        %v3010 = vpack.c.bf16 %v2922, %v2921
        %v3011 = vpack.c.bf16 %v2924, %v2923
        %v3012 = vpack.c.bf16 %v2926, %v2925
        %v3013 = vpack.c.bf16 %v2928, %v2927
        %v3014 = vpack.c.bf16 %v2930, %v2929
        %v3015 = vpack.c.bf16 %v2932, %v2931
        %v3016 = vpack.c.bf16 %v2934, %v2933
        %v3017 = vpack.c.bf16 %v2936, %v2935
        %v3018 = vpack.c.bf16 %v2938, %v2937
        %v3019 = vpack.c.bf16 %v2940, %v2939
        %v3020 = vpack.c.bf16 %v2942, %v2941
        %v3021 = vpack.c.bf16 %v2944, %v2943
        %v3022 = vpack.c.bf16 %v2946, %v2945
        %v3023 = vpack.c.bf16 %v2948, %v2947
        %v3024 = vpack.c.bf16 %v2950, %v2949
        %v3025 = vpack.c.bf16 %v2952, %v2951
        %v3026 = vpack.c.bf16 %v2954, %v2953
        %v3027 = vpack.c.bf16 %v2956, %v2955
        %v3028 = vpack.c.bf16 %v2958, %v2957
        %v3029 = vpack.c.bf16 %v2960, %v2959
        %v3030 = vpack.c.bf16 %v2962, %v2961
        %v3031 = vpack.c.bf16 %v2964, %v2963
        %v3032 = vpack.c.bf16 %v2966, %v2965
        %v3033 = vpack.c.bf16 %v2968, %v2967
        %v3034 = vpack.c.bf16 %v2970, %v2969
        %v3035 = vpack.c.bf16 %v2972, %v2971
        %v3036 = vpack.c.bf16 %v2974, %v2973
        %v3037 = vpack.c.bf16 %v2976, %v2975
        %v3038 = vpack.c.bf16 %v2978, %v2977
        %v3039 = vpack.c.bf16 %v2980, %v2979
        %v3040 = vpack.c.bf16 %v2982, %v2981
        %v3041 = vpack.c.bf16 %v2984, %v2983
        %v3042 = vpack.c.bf16 %v2986, %v2985
        %v3043 = vpack.c.bf16 %v2988, %v2987
        %v3044 = vpack.c.bf16 %v2990, %v2989
        %v3045 = vpack.c.bf16 %v2992, %v2991
        %v3046 = vpack.c.bf16 %v2994, %v2993
        %v3047 = vpack.c.bf16 %v2996, %v2995
        %v3048 = vpack.c.bf16 %v2998, %v2997
        %v3049 = vpack.c.bf16 %v3000, %v2999
        %v3099 = vunpack.c.l.b16 %v3001
        %v3100 = vunpack.c.h.b16 %v3001
        %v3101 = vunpack.c.l.b16 %v3002
        %v3102 = vunpack.c.h.b16 %v3002
        %v3103 = vunpack.c.l.b16 %v3003
        %v3104 = vunpack.c.h.b16 %v3003
        %v3105 = vunpack.c.l.b16 %v3004
        %v3106 = vunpack.c.h.b16 %v3004
        %v3107 = vunpack.c.l.b16 %v3005
        %v3108 = vunpack.c.h.b16 %v3005
        %v3109 = vunpack.c.l.b16 %v3006
        %v3110 = vunpack.c.h.b16 %v3006
        %v3111 = vunpack.c.l.b16 %v3007
        %v3112 = vunpack.c.h.b16 %v3007
        %v3113 = vunpack.c.l.b16 %v3008
        %v3114 = vunpack.c.h.b16 %v3008
        %v3115 = vunpack.c.l.b16 %v3009
        %v3116 = vunpack.c.h.b16 %v3009
        %v3117 = vunpack.c.l.b16 %v3010
        %v3118 = vunpack.c.h.b16 %v3010
        %v3119 = vunpack.c.l.b16 %v3011
        %v3120 = vunpack.c.h.b16 %v3011
        %v3121 = vunpack.c.l.b16 %v3012
        %v3122 = vunpack.c.h.b16 %v3012
        %v3123 = vunpack.c.l.b16 %v3013
        %v3124 = vunpack.c.h.b16 %v3013
        %v3125 = vunpack.c.l.b16 %v3014
        %v3126 = vunpack.c.h.b16 %v3014
        %v3127 = vunpack.c.l.b16 %v3015
        %v3128 = vunpack.c.h.b16 %v3015
        %v3129 = vunpack.c.l.b16 %v3016
        %v3130 = vunpack.c.h.b16 %v3016
        %v3131 = vunpack.c.l.b16 %v3017
        %v3132 = vunpack.c.h.b16 %v3017
        %v3133 = vunpack.c.l.b16 %v3018
        %v3134 = vunpack.c.h.b16 %v3018
        %v3135 = vunpack.c.l.b16 %v3019
        %v3136 = vunpack.c.h.b16 %v3019
        %v3137 = vunpack.c.l.b16 %v3020
        %v3138 = vunpack.c.h.b16 %v3020
        %v3139 = vunpack.c.l.b16 %v3021
        %v3140 = vunpack.c.h.b16 %v3021
        %v3141 = vunpack.c.l.b16 %v3022
        %v3142 = vunpack.c.h.b16 %v3022
        %v3143 = vunpack.c.l.b16 %v3023
        %v3144 = vunpack.c.h.b16 %v3023
        %v3145 = vunpack.c.l.b16 %v3024
        %v3146 = vunpack.c.h.b16 %v3024
        %v3147 = vunpack.c.l.b16 %v3025
        %v3148 = vunpack.c.h.b16 %v3025
        %v3149 = vunpack.c.l.b16 %v3026
        %v3150 = vunpack.c.h.b16 %v3026
        %v3151 = vunpack.c.l.b16 %v3027
        %v3152 = vunpack.c.h.b16 %v3027
        %v3153 = vunpack.c.l.b16 %v3028
        %v3154 = vunpack.c.h.b16 %v3028
        %v3155 = vunpack.c.l.b16 %v3029
        %v3156 = vunpack.c.h.b16 %v3029
        %v3157 = vunpack.c.l.b16 %v3030
        %v3158 = vunpack.c.h.b16 %v3030
        %v3159 = vunpack.c.l.b16 %v3031
        %v3160 = vunpack.c.h.b16 %v3031
        %v3161 = vunpack.c.l.b16 %v3032
        %v3162 = vunpack.c.h.b16 %v3032
        %v3163 = vunpack.c.l.b16 %v3033
        %v3164 = vunpack.c.h.b16 %v3033
        %v3165 = vunpack.c.l.b16 %v3034
        %v3166 = vunpack.c.h.b16 %v3034
        %v3167 = vunpack.c.l.b16 %v3035
        %v3168 = vunpack.c.h.b16 %v3035
        %v3169 = vunpack.c.l.b16 %v3036
        %v3170 = vunpack.c.h.b16 %v3036
        %v3171 = vunpack.c.l.b16 %v3037
        %v3172 = vunpack.c.h.b16 %v3037
        %v3173 = vunpack.c.l.b16 %v3038
        %v3174 = vunpack.c.h.b16 %v3038
        %v3175 = vunpack.c.l.b16 %v3039
        %v3176 = vunpack.c.h.b16 %v3039
        %v3177 = vunpack.c.l.b16 %v3040
        %v3178 = vunpack.c.h.b16 %v3040
        %v3179 = vunpack.c.l.b16 %v3041
        %v3180 = vunpack.c.h.b16 %v3041
        %v3181 = vunpack.c.l.b16 %v3042
        %v3182 = vunpack.c.h.b16 %v3042
        %v3183 = vunpack.c.l.b16 %v3043
        %v3184 = vunpack.c.h.b16 %v3043
        %v3185 = vunpack.c.l.b16 %v3044
        %v3186 = vunpack.c.h.b16 %v3044
        %v3187 = vunpack.c.l.b16 %v3045
        %v3188 = vunpack.c.h.b16 %v3045
        %v3189 = vunpack.c.l.b16 %v3046
        %v3190 = vunpack.c.h.b16 %v3046
        %v3191 = vunpack.c.l.b16 %v3047
        %v3192 = vunpack.c.h.b16 %v3047
        %v3193 = vunpack.c.l.b16 %v3048
        %v3194 = vunpack.c.h.b16 %v3048
        %v3195 = vunpack.c.l.b16 %v3049
        %v3196 = vunpack.c.h.b16 %v3049
        %v3197 = vpack.c.b16 %v3099, %v3099
        %v3198 = vpack.c.b16 %v3100, %v3100
        %v3199 = vpack.c.b16 %v3101, %v3101
        %v3200 = vpack.c.b16 %v3102, %v3102
        %v3201 = vpack.c.b16 %v3103, %v3103
        %v3202 = vpack.c.b16 %v3104, %v3104
        %v3203 = vpack.c.b16 %v3105, %v3105
        %v3204 = vpack.c.b16 %v3106, %v3106
        %v3205 = vpack.c.b16 %v3107, %v3107
        %v3206 = vpack.c.b16 %v3108, %v3108
        %v3207 = vpack.c.b16 %v3109, %v3109
        %v3208 = vpack.c.b16 %v3110, %v3110
        %v3209 = vpack.c.b16 %v3111, %v3111
        %v3210 = vpack.c.b16 %v3112, %v3112
        %v3211 = vpack.c.b16 %v3113, %v3113
        %v3212 = vpack.c.b16 %v3114, %v3114
        %v3213 = vpack.c.b16 %v3115, %v3115
        %v3214 = vpack.c.b16 %v3116, %v3116
        %v3215 = vpack.c.b16 %v3117, %v3117
        %v3216 = vpack.c.b16 %v3118, %v3118
        %v3217 = vpack.c.b16 %v3119, %v3119
        %v3218 = vpack.c.b16 %v3120, %v3120
        %v3219 = vpack.c.b16 %v3121, %v3121
        %v3220 = vpack.c.b16 %v3122, %v3122
        %v3221 = vpack.c.b16 %v3123, %v3123
        %v3222 = vpack.c.b16 %v3124, %v3124
        %v3223 = vpack.c.b16 %v3125, %v3125
        %v3224 = vpack.c.b16 %v3126, %v3126
        %v3225 = vpack.c.b16 %v3127, %v3127
        %v3226 = vpack.c.b16 %v3128, %v3128
        %v3227 = vpack.c.b16 %v3129, %v3129
        %v3228 = vpack.c.b16 %v3130, %v3130
        %v3229 = vpack.c.b16 %v3131, %v3131
        %v3230 = vpack.c.b16 %v3132, %v3132
        %v3231 = vpack.c.b16 %v3133, %v3133
        %v3232 = vpack.c.b16 %v3134, %v3134
        %v3233 = vpack.c.b16 %v3135, %v3135
        %v3234 = vpack.c.b16 %v3136, %v3136
        %v3235 = vpack.c.b16 %v3137, %v3137
        %v3236 = vpack.c.b16 %v3138, %v3138
        %v3237 = vpack.c.b16 %v3139, %v3139
        %v3238 = vpack.c.b16 %v3140, %v3140
        %v3239 = vpack.c.b16 %v3141, %v3141
        %v3240 = vpack.c.b16 %v3142, %v3142
        %v3241 = vpack.c.b16 %v3143, %v3143
        %v3242 = vpack.c.b16 %v3144, %v3144
        %v3243 = vpack.c.b16 %v3145, %v3145
        %v3244 = vpack.c.b16 %v3146, %v3146
        %v3245 = vpack.c.b16 %v3147, %v3147
        %v3246 = vpack.c.b16 %v3148, %v3148
        %v3247 = vpack.c.b16 %v3149, %v3149
        %v3248 = vpack.c.b16 %v3150, %v3150
        %v3249 = vpack.c.b16 %v3151, %v3151
        %v3250 = vpack.c.b16 %v3152, %v3152
        %v3251 = vpack.c.b16 %v3153, %v3153
        %v3252 = vpack.c.b16 %v3154, %v3154
        %v3253 = vpack.c.b16 %v3155, %v3155
        %v3254 = vpack.c.b16 %v3156, %v3156
        %v3255 = vpack.c.b16 %v3157, %v3157
        %v3256 = vpack.c.b16 %v3158, %v3158
        %v3257 = vpack.c.b16 %v3159, %v3159
        %v3258 = vpack.c.b16 %v3160, %v3160
        %v3259 = vpack.c.b16 %v3161, %v3161
        %v3260 = vpack.c.b16 %v3162, %v3162
        %v3261 = vpack.c.b16 %v3163, %v3163
        %v3262 = vpack.c.b16 %v3164, %v3164
        %v3263 = vpack.c.b16 %v3165, %v3165
        %v3264 = vpack.c.b16 %v3166, %v3166
        %v3265 = vpack.c.b16 %v3167, %v3167
        %v3266 = vpack.c.b16 %v3168, %v3168
        %v3267 = vpack.c.b16 %v3169, %v3169
        %v3268 = vpack.c.b16 %v3170, %v3170
        %v3269 = vpack.c.b16 %v3171, %v3171
        %v3270 = vpack.c.b16 %v3172, %v3172
        %v3271 = vpack.c.b16 %v3173, %v3173
        %v3272 = vpack.c.b16 %v3174, %v3174
        %v3273 = vpack.c.b16 %v3175, %v3175
        %v3274 = vpack.c.b16 %v3176, %v3176
        %v3275 = vpack.c.b16 %v3177, %v3177
        %v3276 = vpack.c.b16 %v3178, %v3178
        %v3277 = vpack.c.b16 %v3179, %v3179
        %v3278 = vpack.c.b16 %v3180, %v3180
        %v3279 = vpack.c.b16 %v3181, %v3181
        %v3280 = vpack.c.b16 %v3182, %v3182
        %v3281 = vpack.c.b16 %v3183, %v3183
        %v3282 = vpack.c.b16 %v3184, %v3184
        %v3283 = vpack.c.b16 %v3185, %v3185
        %v3284 = vpack.c.b16 %v3186, %v3186
        %v3285 = vpack.c.b16 %v3187, %v3187
        %v3286 = vpack.c.b16 %v3188, %v3188
        %v3287 = vpack.c.b16 %v3189, %v3189
        %v3288 = vpack.c.b16 %v3190, %v3190
        %v3289 = vpack.c.b16 %v3191, %v3191
        %v3290 = vpack.c.b16 %v3192, %v3192
        %v3291 = vpack.c.b16 %v3193, %v3193
        %v3292 = vpack.c.b16 %v3194, %v3194
        %v3293 = vpack.c.b16 %v3195, %v3195
        %v3294 = vpack.c.b16 %v3196, %v3196
        %3393 = vst [vmem:[%s225] sm:$0xf] %v3197
        %3394 = vst [vmem:[%s225 + $0x4] sm:$0xf] %v3198
        %3395 = vst [vmem:[%s225 + $0x8] sm:$0xf] %v3199
        %3396 = vst [vmem:[%s225 + $0xc] sm:$0xf] %v3200
        %3397 = vst [vmem:[%s225 + $0x10] sm:$0xf] %v3201
        %3398 = vst [vmem:[%s225 + $0x14] sm:$0xf] %v3202
        %3399 = vst [vmem:[%s225 + $0x18] sm:$0xf] %v3203
        %3400 = vst [vmem:[%s225 + $0x1c] sm:$0xf] %v3204
        %3401 = vst [vmem:[%s225 + $0x20] sm:$0xf] %v3205
        %3402 = vst [vmem:[%s225 + $0x24] sm:$0xf] %v3206
        %3403 = vst [vmem:[%s225 + $0x28] sm:$0xf] %v3207
        %3404 = vst [vmem:[%s225 + $0x2c] sm:$0xf] %v3208
        %3405 = vst [vmem:[%s225 + $0x30] sm:$0xf] %v3209
        %3406 = vst [vmem:[%s225 + $0x34] sm:$0xf] %v3210
        %3407 = vst [vmem:[%s225 + $0x38] sm:$0xf] %v3211
        %3408 = vst [vmem:[%s225 + $0x3c] sm:$0xf] %v3212
        %3409 = vst [vmem:[%s225 + $0x40] sm:$0xf] %v3213
        %3410 = vst [vmem:[%s225 + $0x44] sm:$0xf] %v3214
        %3411 = vst [vmem:[%s225 + $0x48] sm:$0xf] %v3215
        %3412 = vst [vmem:[%s225 + $0x4c] sm:$0xf] %v3216
        %3413 = vst [vmem:[%s225 + $0x50] sm:$0xf] %v3217
        %3414 = vst [vmem:[%s225 + $0x54] sm:$0xf] %v3218
        %3415 = vst [vmem:[%s225 + $0x58] sm:$0xf] %v3219
        %3416 = vst [vmem:[%s225 + $0x5c] sm:$0xf] %v3220
        %3417 = vst [vmem:[%s225 + $0x60] sm:$0xf] %v3221
        %3418 = vst [vmem:[%s225 + $0x64] sm:$0xf] %v3222
        %3419 = vst [vmem:[%s225 + $0x68] sm:$0xf] %v3223
        %3420 = vst [vmem:[%s225 + $0x6c] sm:$0xf] %v3224
        %3421 = vst [vmem:[%s225 + $0x70] sm:$0xf] %v3225
        %3422 = vst [vmem:[%s225 + $0x74] sm:$0xf] %v3226
        %3423 = vst [vmem:[%s225 + $0x78] sm:$0xf] %v3227
        %3424 = vst [vmem:[%s225 + $0x7c] sm:$0xf] %v3228
        %3425 = vst [vmem:[%s225 + $0x80] sm:$0xf] %v3229
        %3426 = vst [vmem:[%s225 + $0x84] sm:$0xf] %v3230
        %3427 = vst [vmem:[%s225 + $0x88] sm:$0xf] %v3231
        %3428 = vst [vmem:[%s225 + $0x8c] sm:$0xf] %v3232
        %3429 = vst [vmem:[%s225 + $0x90] sm:$0xf] %v3233
        %3430 = vst [vmem:[%s225 + $0x94] sm:$0xf] %v3234
        %3431 = vst [vmem:[%s225 + $0x98] sm:$0xf] %v3235
        %3432 = vst [vmem:[%s225 + $0x9c] sm:$0xf] %v3236
        %3433 = vst [vmem:[%s225 + $0xa0] sm:$0xf] %v3237
        %3434 = vst [vmem:[%s225 + $0xa4] sm:$0xf] %v3238
        %3435 = vst [vmem:[%s225 + $0xa8] sm:$0xf] %v3239
        %3436 = vst [vmem:[%s225 + $0xac] sm:$0xf] %v3240
        %3437 = vst [vmem:[%s225 + $0xb0] sm:$0xf] %v3241
        %3438 = vst [vmem:[%s225 + $0xb4] sm:$0xf] %v3242
        %3439 = vst [vmem:[%s225 + $0xb8] sm:$0xf] %v3243
        %3440 = vst [vmem:[%s225 + $0xbc] sm:$0xf] %v3244
        %3441 = vst [vmem:[%s225 + $0xc0] sm:$0xf] %v3245
        %3442 = vst [vmem:[%s225 + $0xc4] sm:$0xf] %v3246
        %3443 = vst [vmem:[%s225 + $0xc8] sm:$0xf] %v3247
        %3444 = vst [vmem:[%s225 + $0xcc] sm:$0xf] %v3248
        %3445 = vst [vmem:[%s225 + $0xd0] sm:$0xf] %v3249
        %3446 = vst [vmem:[%s225 + $0xd4] sm:$0xf] %v3250
        %3447 = vst [vmem:[%s225 + $0xd8] sm:$0xf] %v3251
        %3448 = vst [vmem:[%s225 + $0xdc] sm:$0xf] %v3252
        %3449 = vst [vmem:[%s225 + $0xe0] sm:$0xf] %v3253
        %3450 = vst [vmem:[%s225 + $0xe4] sm:$0xf] %v3254
        %3451 = vst [vmem:[%s225 + $0xe8] sm:$0xf] %v3255
        %3452 = vst [vmem:[%s225 + $0xec] sm:$0xf] %v3256
        %3453 = vst [vmem:[%s225 + $0xf0] sm:$0xf] %v3257
        %3454 = vst [vmem:[%s225 + $0xf4] sm:$0xf] %v3258
        %3455 = vst [vmem:[%s225 + $0xf8] sm:$0xf] %v3259
        %3456 = vst [vmem:[%s225 + $0xfc] sm:$0xf] %v3260
        %3457 = vst [vmem:[%s225 + $0x100] sm:$0xf] %v3261
        %3458 = vst [vmem:[%s225 + $0x104] sm:$0xf] %v3262
        %3459 = vst [vmem:[%s225 + $0x108] sm:$0xf] %v3263
        %3460 = vst [vmem:[%s225 + $0x10c] sm:$0xf] %v3264
        %3461 = vst [vmem:[%s225 + $0x110] sm:$0xf] %v3265
        %3462 = vst [vmem:[%s225 + $0x114] sm:$0xf] %v3266
        %3463 = vst [vmem:[%s225 + $0x118] sm:$0xf] %v3267
        %3464 = vst [vmem:[%s225 + $0x11c] sm:$0xf] %v3268
        %3465 = vst [vmem:[%s225 + $0x120] sm:$0xf] %v3269
        %3466 = vst [vmem:[%s225 + $0x124] sm:$0xf] %v3270
        %3467 = vst [vmem:[%s225 + $0x128] sm:$0xf] %v3271
        %3468 = vst [vmem:[%s225 + $0x12c] sm:$0xf] %v3272
        %3469 = vst [vmem:[%s225 + $0x130] sm:$0xf] %v3273
        %3470 = vst [vmem:[%s225 + $0x134] sm:$0xf] %v3274
        %3471 = vst [vmem:[%s225 + $0x138] sm:$0xf] %v3275
        %3472 = vst [vmem:[%s225 + $0x13c] sm:$0xf] %v3276
        %3473 = vst [vmem:[%s225 + $0x140] sm:$0xf] %v3277
        %3474 = vst [vmem:[%s225 + $0x144] sm:$0xf] %v3278
        %3475 = vst [vmem:[%s225 + $0x148] sm:$0xf] %v3279
        %3476 = vst [vmem:[%s225 + $0x14c] sm:$0xf] %v3280
        %3477 = vst [vmem:[%s225 + $0x150] sm:$0xf] %v3281
        %3478 = vst [vmem:[%s225 + $0x154] sm:$0xf] %v3282
        %3479 = vst [vmem:[%s225 + $0x158] sm:$0xf] %v3283
        %3480 = vst [vmem:[%s225 + $0x15c] sm:$0xf] %v3284
        %3481 = vst [vmem:[%s225 + $0x160] sm:$0xf] %v3285
        %3482 = vst [vmem:[%s225 + $0x164] sm:$0xf] %v3286
        %3483 = vst [vmem:[%s225 + $0x168] sm:$0xf] %v3287
        %3484 = vst [vmem:[%s225 + $0x16c] sm:$0xf] %v3288
        %3485 = vst [vmem:[%s225 + $0x170] sm:$0xf] %v3289
        %3486 = vst [vmem:[%s225 + $0x174] sm:$0xf] %v3290
        %3487 = vst [vmem:[%s225 + $0x178] sm:$0xf] %v3291
        %3488 = vst [vmem:[%s225 + $0x17c] sm:$0xf] %v3292
        %3489 = vst [vmem:[%s225 + $0x180] sm:$0xf] %v3293
        %3490 = vst [vmem:[%s225 + $0x184] sm:$0xf] %v3294
      $region40: #{faster_rcnn_forward.11} parent=31 // pred_fallthru
        _
      %s3491 = smul.u32 98, %s18
      %p3492 = scmp.lt.s32.totalorder %s3491, 195
      %s3493 = scalar_select %p3492, %s3491, 195
      %s3494 = smul.addr %s3493, 4
      %s3495 = scalar_lea.vmem %s3, %s3494
      // Predicated region
      $region41: #{faster_rcnn_forward.11} parent=31 // pred_check
        %p3496 = pneg %p119
      $region42: #{faster_rcnn_forward.11} parent=31 // pred_check_branch
        %3498 = sbr.rel (%p3496) target = $region44
      $region43: #{faster_rcnn_forward.11} parent=31 // pred_region
        %s3499 = smul.u32 98, %s18
      $region44: #{faster_rcnn_forward.11} parent=31 // pred_fallthru
        _
    $region32: #{faster_rcnn_forward.11} parent=5 // pred_fallthru
      _
    %p3500 = scmp.le.s32.totalorder 2, %s9
    // Predicated region
    $region45: #{faster_rcnn_forward.11} parent=5 // pred_check
      %p3501 = pneg %p3500
    $region46: #{faster_rcnn_forward.11} parent=5 // pred_check_branch
      %3503 = sbr.rel (%p3501) target = $region48
    $region47: #{faster_rcnn_forward.11} parent=5 // pred_region
      %s3504 = ssub.s32 %s9, 2
      // Predicated region
      $region49: #{faster_rcnn_forward.11} parent=47 // pred_check
        %p3505 = pneg %p125
      $region50: #{faster_rcnn_forward.11} parent=47 // pred_check_branch
        %3507 = sbr.rel (%p3505) target = $region52
      $region51: #{faster_rcnn_forward.11} parent=47 // pred_region
        %s3508 = smul.u32 98, %s20
        %p3509 = scmp.lt.s32.totalorder %s3508, 195
        %s3510 = scalar_select %p3509, %s3508, 195
        %s3511 = smul.addr %s3510, 4
        %s3512 = scalar_lea.vmem %s3, %s3511
      $region52: #{faster_rcnn_forward.11} parent=47 // pred_fallthru
        _
    $region48: #{faster_rcnn_forward.11} parent=5 // pred_fallthru
      _
  $region6: #{faster_rcnn_forward.11} parent=0 // loop_footer
    %s13 = sadd.s32 1, %s9
  $region7: #{faster_rcnn_forward.11} parent=0 // loop_footer_branch
    %8 = sbr.rel target = $region3
  $region8: #{faster_rcnn_forward.11} parent=0 // loop_exit
    _

</llo_original>
